<compile_context>
chip_gen: v7x
topology: tpu7x:2x2x1
jax: 0.10.0
libtpu: 0.0.40
codegen_flags: <defaults>
</compile_context>

<pallas_src>
import functools

import jax
import jax.numpy as jnp
from jax import lax
from jax.experimental import pallas as pl
from jax.experimental.pallas import tpu as pltpu


# ----------------------------------------------------------------------------
# Shared LSTM-cell math (used by the Pallas kernel and the pure-JAX reference)
# ----------------------------------------------------------------------------
def _sigmoid(x):
    return 1.0 / (1.0 + jnp.exp(-x))


def _lstm_cell(x_gates, h, c, w_hh, b, K):
    """PyTorch LSTM cell. x_gates = input contribution to the 4K gate vector."""
    gates = x_gates + jnp.dot(h, w_hh, preferred_element_type=jnp.float32) + b
    i = _sigmoid(gates[:, 0 * K:1 * K])
    f = _sigmoid(gates[:, 1 * K:2 * K])
    g = jnp.tanh(gates[:, 2 * K:3 * K])
    o = _sigmoid(gates[:, 3 * K:4 * K])
    c_new = f * c + i * g
    h_new = o * jnp.tanh(c_new)
    return h_new, c_new


# ----------------------------------------------------------------------------
# Pallas kernel: full CharRNN forward for one batch (grid = (1,))
# ----------------------------------------------------------------------------
def _charrnn_kernel(x_ref,        # (T, B, 1)   input sequence (time-major)
                    ew_ih0_ref,   # (1, 4K2)    encoder layer-0 input weights
                    ew_ihd_ref,   # (NL, K2, 4K2) encoder layer>=1 input weights
                    ew_hh_ref,    # (NL, K2, 4K2) encoder hidden weights
                    eb_ref,       # (NL, 1, 4K2)  encoder bias (b_ih + b_hh)
                    dw_ih_ref,    # (K2, 4K2)   decoder LSTMCell input weights
                    dw_hh_ref,    # (K2, 4K2)   decoder LSTMCell hidden weights
                    db_ref,       # (1, 4K2)    decoder bias (b_ih + b_hh)
                    lw_ref,       # (K2, 1)     declin weight
                    lb_ref,       # (1, 1)      declin bias
                    y_ref,        # out: (T, B, 1) decoder outputs (time-major)
                    code_ref,     # out: (B, K2)   sum-pooled encoder code
                    *, n_layers, K2, T, B):
    f32 = jnp.float32

    # Hoist loop-invariant weights out of the time loops (load from VMEM once).
    ew_ih0 = ew_ih0_ref[...]
    ew_ihd = [ew_ihd_ref[l] for l in range(n_layers)]   # slot 0 unused
    ew_hh = [ew_hh_ref[l] for l in range(n_layers)]
    eb = [eb_ref[l] for l in range(n_layers)]
    dw_ih = dw_ih_ref[...]
    dw_hh = dw_hh_ref[...]
    db = db_ref[...]
    lw = lw_ref[...]
    lb = lb_ref[...]

    zeros = jnp.zeros((B, K2), f32)

    # ---------------- encoder: stacked LSTM over the scalar sequence --------
    hs = [zeros] * n_layers
    cs = [zeros] * n_layers
    code = zeros
    for t in range(T):                          # static unroll (recurrence)
        x_t = x_ref[t]                          # (B, 1)
        layer_out = None
        for l in range(n_layers):
            if l == 0:
                gx = x_t * ew_ih0               # input size 1 -> outer product
            else:
                gx = jnp.dot(layer_out, ew_ihd[l],
                             preferred_element_type=f32)
            hs[l], cs[l] = _lstm_cell(gx, hs[l], cs[l], ew_hh[l], eb[l], K2)
            layer_out = hs[l]
        code = code + layer_out                 # output.sum(dim=1)
    code_ref[...] = code

    # -------- decoder: LSTMCell fed back on itself, fused Linear(K2 -> 1) ---
    inp, h, c = code, zeros, zeros
    for t in range(T):
        gx = jnp.dot(inp, dw_ih, preferred_element_type=f32)
        h, c = _lstm_cell(gx, h, c, dw_hh, db, K2)
        inp = h                                 # next input is own hidden
        y_ref[t] = jnp.dot(h, lw, preferred_element_type=f32) + lb   # (B, 1)


# ----------------------------------------------------------------------------
# Wrappers
# ----------------------------------------------------------------------------
def _full_spec(shape):
    nd = len(shape)
    return pl.BlockSpec(shape, lambda i, nd=nd: (0,) * nd)


def charrnn_forward_pallas(params, x):
    """x: (B, T) float32.  Returns (xhat (B*T, 1), code (B, K2))."""
    (ew_ih0, ew_ihd, ew_hh, eb, dw_ih, dw_hh, db, lw, lb) = params
    B, T = x.shape
    n_layers, K2 = ew_hh.shape[0], ew_hh.shape[1]
    x_tb1 = jnp.transpose(x.astype(jnp.float32), (1, 0))[:, :, None]  # (T,B,1)

    kernel = functools.partial(_charrnn_kernel,
                               n_layers=n_layers, K2=K2, T=T, B=B)
    y_tb, code = pl.pallas_call(
        kernel,
        out_shape=(jax.ShapeDtypeStruct((T, B, 1), jnp.float32),
                   jax.ShapeDtypeStruct((B, K2), jnp.float32)),
        grid=(1,),
        in_specs=[
            _full_spec(x_tb1.shape),
            _full_spec(ew_ih0.shape),
            _full_spec(ew_ihd.shape),
            _full_spec(ew_hh.shape),
            _full_spec(eb.shape),
            _full_spec(dw_ih.shape),
            _full_spec(dw_hh.shape),
            _full_spec(db.shape),
            _full_spec(lw.shape),
            _full_spec(lb.shape),
        ],
        out_specs=(_full_spec((T, B, 1)), _full_spec((B, K2))),
        compiler_params=pltpu.CompilerParams(
            dimension_semantics=("arbitrary",)),
    )(x_tb1, ew_ih0, ew_ihd, ew_hh, eb, dw_ih, dw_hh, db, lw, lb)

    # PyTorch returns outs.view(B*T, 1) with rows ordered batch-major.
    xhat = jnp.transpose(y_tb, (1, 0, 2)).reshape(B * T, 1)
    return xhat, code


def charrnn_forward_ref(params, x):
    """Pure-JAX reference (same math, no Pallas) for numerical verification."""
    (ew_ih0, ew_ihd, ew_hh, eb, dw_ih, dw_hh, db, lw, lb) = params
    B, T = x.shape
    n_layers, K2 = ew_hh.shape[0], ew_hh.shape[1]
    x = x.astype(jnp.float32)
    zeros = jnp.zeros((B, K2), jnp.float32)

    hs = [zeros] * n_layers
    cs = [zeros] * n_layers
    code = zeros
    for t in range(T):
        x_t = x[:, t][:, None]
        layer_out = None
        for l in range(n_layers):
            gx = x_t * ew_ih0 if l == 0 else layer_out @ ew_ihd[l]
            hs[l], cs[l] = _lstm_cell(gx, hs[l], cs[l], ew_hh[l], eb[l], K2)
            layer_out = hs[l]
        code = code + layer_out

    inp, h, c = code, zeros, zeros
    outs = []
    for t in range(T):
        gx = inp @ dw_ih
        h, c = _lstm_cell(gx, h, c, dw_hh, db, K2)
        inp = h
        outs.append(h)
    H = jnp.stack(outs, axis=1).reshape(B * T, K2)      # (B, T, K2) -> flat
    xhat = H @ lw + lb
    return xhat, code


# ----------------------------------------------------------------------------
# Parameter init (deterministic, PyTorch gate order i,f,g,o; biases combined)
# ----------------------------------------------------------------------------
def init_params(key, K2, n_layers, scale=0.1):
    assert n_layers >= 1
    ks = jax.random.split(key, 8)
    f32 = jnp.float32
    ew_ih0 = scale * jax.random.normal(ks[0], (1, 4 * K2), f32)
    ew_ihd = scale * jax.random.normal(ks[1], (n_layers, K2, 4 * K2), f32)
    ew_ihd = ew_ihd.at[0].set(0.0)               # layer-0 slot unused (input=1)
    ew_hh = scale * jax.random.normal(ks[2], (n_layers, K2, 4 * K2), f32)
    eb = scale * jax.random.normal(ks[3], (n_layers, 1, 4 * K2), f32)
    dw_ih = scale * jax.random.normal(ks[4], (K2, 4 * K2), f32)
    dw_hh = scale * jax.random.normal(ks[5], (K2, 4 * K2), f32)
    db = scale * jax.random.normal(ks[6], (1, 4 * K2), f32)
    lw = scale * jax.random.normal(ks[7], (K2, 1), f32)
    lb = jnp.zeros((1, 1), f32)
    return (ew_ih0, ew_ihd, ew_hh, eb, dw_ih, dw_hh, db, lw, lb)


# ----------------------------------------------------------------------------
if __name__ == "__main__":
    # Small, module-consistent shapes: batch B=2, seq T=16, hidden K2=32, 2 layers.
    B, T, K2, n_layers = 2, 16, 32, 2
    key = jax.random.PRNGKey(0)
    kp, kx = jax.random.split(key)

    params = init_params(kp, K2, n_layers)
    x = jax.random.normal(kx, (B, T), jnp.float32)      # (batch, seq) scalars

    xhat, code = charrnn_forward_pallas(params, x)
    xhat = jax.block_until_ready(xhat)
    code = jax.block_until_ready(code)
    assert xhat.shape == (B * T, 1), xhat.shape
    assert code.shape == (B, K2), code.shape
    assert bool(jnp.all(jnp.isfinite(xhat))) and bool(jnp.all(jnp.isfinite(code)))

    xr, cr = charrnn_forward_ref(params, x)
    assert bool(jnp.allclose(xhat, xr, atol=2e-3, rtol=2e-3)), (
        float(jnp.max(jnp.abs(xhat - xr))))
    assert bool(jnp.allclose(code, cr, atol=2e-3, rtol=2e-3)), (
        float(jnp.max(jnp.abs(code - cr))))

    print("KERNEL_OK")
</pallas_src>

<mosaic_0001>
module attributes {stable_mosaic.version = 11 : i64} {
  func.func @_charrnn_kernel(%arg0: i32, %arg1: memref<16x2x1xf32, #tpu.memory_space<vmem>>, %arg2: memref<1x128xf32, #tpu.memory_space<vmem>>, %arg3: memref<2x32x128xf32, #tpu.memory_space<vmem>>, %arg4: memref<2x32x128xf32, #tpu.memory_space<vmem>>, %arg5: memref<2x1x128xf32, #tpu.memory_space<vmem>>, %arg6: memref<32x128xf32, #tpu.memory_space<vmem>>, %arg7: memref<32x128xf32, #tpu.memory_space<vmem>>, %arg8: memref<1x128xf32, #tpu.memory_space<vmem>>, %arg9: memref<32x1xf32, #tpu.memory_space<vmem>>, %arg10: memref<1x1xf32, #tpu.memory_space<vmem>>, %arg11: memref<16x2x1xf32, #tpu.memory_space<vmem>>, %arg12: memref<2x32xf32, #tpu.memory_space<vmem>>) attributes {dimension_semantics = [#tpu.dimension_semantics<arbitrary>], iteration_bounds = array<i64: 1>, scalar_prefetch = 0 : i64, scratch_operands = 0 : i64, tpu.core_type = #tpu.core_type<tc>, window_params = [{pipeline_mode = #tpu.pipeline_mode<synchronous>, transform_indices = @transform_0, window_bounds = array<i64: 16, 2, 1>}, {pipeline_mode = #tpu.pipeline_mode<synchronous>, transform_indices = @transform_1, window_bounds = array<i64: 1, 128>}, {pipeline_mode = #tpu.pipeline_mode<synchronous>, transform_indices = @transform_2, window_bounds = array<i64: 2, 32, 128>}, {pipeline_mode = #tpu.pipeline_mode<synchronous>, transform_indices = @transform_3, window_bounds = array<i64: 2, 32, 128>}, {pipeline_mode = #tpu.pipeline_mode<synchronous>, transform_indices = @transform_4, window_bounds = array<i64: 2, 1, 128>}, {pipeline_mode = #tpu.pipeline_mode<synchronous>, transform_indices = @transform_5, window_bounds = array<i64: 32, 128>}, {pipeline_mode = #tpu.pipeline_mode<synchronous>, transform_indices = @transform_6, window_bounds = array<i64: 32, 128>}, {pipeline_mode = #tpu.pipeline_mode<synchronous>, transform_indices = @transform_7, window_bounds = array<i64: 1, 128>}, {pipeline_mode = #tpu.pipeline_mode<synchronous>, transform_indices = @transform_8, window_bounds = array<i64: 32, 1>}, {pipeline_mode = #tpu.pipeline_mode<synchronous>, transform_indices = @transform_9, window_bounds = array<i64: 1, 1>}, {pipeline_mode = #tpu.pipeline_mode<synchronous>, transform_indices = @transform_10, window_bounds = array<i64: 16, 2, 1>}, {pipeline_mode = #tpu.pipeline_mode<synchronous>, transform_indices = @transform_11, window_bounds = array<i64: 2, 32>}]} {
    %c0 = arith.constant 0 : index
    %c0_0 = arith.constant 0 : index
    %0 = vector.load %arg2[%c0, %c0_0] : memref<1x128xf32, #tpu.memory_space<vmem>>, vector<1x128xf32>
    %c1 = arith.constant 1 : index
    %c0_1 = arith.constant 0 : index
    %c0_2 = arith.constant 0 : index
    %1 = vector.load %arg3[%c1, %c0_1, %c0_2] : memref<2x32x128xf32, #tpu.memory_space<vmem>>, vector<1x32x128xf32>
    %2 = vector.shape_cast %1 : vector<1x32x128xf32> to vector<32x128xf32>
    %c0_3 = arith.constant 0 : index
    %c0_4 = arith.constant 0 : index
    %c0_5 = arith.constant 0 : index
    %3 = vector.load %arg4[%c0_3, %c0_4, %c0_5] : memref<2x32x128xf32, #tpu.memory_space<vmem>>, vector<1x32x128xf32>
    %4 = vector.shape_cast %3 : vector<1x32x128xf32> to vector<32x128xf32>
    %c1_6 = arith.constant 1 : index
    %c0_7 = arith.constant 0 : index
    %c0_8 = arith.constant 0 : index
    %5 = vector.load %arg4[%c1_6, %c0_7, %c0_8] : memref<2x32x128xf32, #tpu.memory_space<vmem>>, vector<1x32x128xf32>
    %6 = vector.shape_cast %5 : vector<1x32x128xf32> to vector<32x128xf32>
    %c0_9 = arith.constant 0 : index
    %c0_10 = arith.constant 0 : index
    %c0_11 = arith.constant 0 : index
    %7 = vector.load %arg5[%c0_9, %c0_10, %c0_11] : memref<2x1x128xf32, #tpu.memory_space<vmem>>, vector<1x1x128xf32>
    %8 = vector.shape_cast %7 : vector<1x1x128xf32> to vector<1x128xf32>
    %c1_12 = arith.constant 1 : index
    %c0_13 = arith.constant 0 : index
    %c0_14 = arith.constant 0 : index
    %9 = vector.load %arg5[%c1_12, %c0_13, %c0_14] : memref<2x1x128xf32, #tpu.memory_space<vmem>>, vector<1x1x128xf32>
    %10 = vector.shape_cast %9 : vector<1x1x128xf32> to vector<1x128xf32>
    %c0_15 = arith.constant 0 : index
    %c0_16 = arith.constant 0 : index
    %11 = vector.load %arg6[%c0_15, %c0_16] : memref<32x128xf32, #tpu.memory_space<vmem>>, vector<32x128xf32>
    %c0_17 = arith.constant 0 : index
    %c0_18 = arith.constant 0 : index
    %12 = vector.load %arg7[%c0_17, %c0_18] : memref<32x128xf32, #tpu.memory_space<vmem>>, vector<32x128xf32>
    %c0_19 = arith.constant 0 : index
    %c0_20 = arith.constant 0 : index
    %13 = vector.load %arg8[%c0_19, %c0_20] : memref<1x128xf32, #tpu.memory_space<vmem>>, vector<1x128xf32>
    %c0_21 = arith.constant 0 : index
    %c0_22 = arith.constant 0 : index
    %14 = vector.load %arg9[%c0_21, %c0_22] : memref<32x1xf32, #tpu.memory_space<vmem>>, vector<32x1xf32>
    %c0_23 = arith.constant 0 : index
    %c0_24 = arith.constant 0 : index
    %15 = vector.load %arg10[%c0_23, %c0_24] : memref<1x1xf32, #tpu.memory_space<vmem>>, vector<1x1xf32>
    %cst = arith.constant 0.000000e+00 : f32
    %16 = vector.broadcast %cst : f32 to vector<2x32xf32>
    %c0_25 = arith.constant 0 : index
    %c0_26 = arith.constant 0 : index
    %c0_27 = arith.constant 0 : index
    %17 = vector.load %arg1[%c0_25, %c0_26, %c0_27] : memref<16x2x1xf32, #tpu.memory_space<vmem>>, vector<1x2x1xf32>
    %18 = vector.shape_cast %17 : vector<1x2x1xf32> to vector<2x1xf32>
    %19 = vector.broadcast %18 : vector<2x1xf32> to vector<2x128xf32>
    %20 = vector.broadcast %0 : vector<1x128xf32> to vector<2x128xf32>
    %21 = arith.mulf %19, %20 : vector<2x128xf32>
    %cst_28 = arith.constant dense<0.000000e+00> : vector<2x128xf32>
    %22 = tpu.matmul %16, %4, %cst_28 {dimension_numbers = #tpu.dot_dimension_numbers<[1], [0], [0], [1], [0, 0, 1, 1], [], []>} : vector<2x32xf32>, vector<32x128xf32>, vector<2x128xf32> -> vector<2x128xf32>
    %23 = arith.addf %21, %22 : vector<2x128xf32>
    %24 = vector.broadcast %8 : vector<1x128xf32> to vector<2x128xf32>
    %25 = arith.addf %23, %24 : vector<2x128xf32>
    %26 = vector.extract_strided_slice %25 {offsets = [0, 0], sizes = [2, 32], strides = [1, 1]} : vector<2x128xf32> to vector<2x32xf32>
    %cst_29 = arith.constant 0.000000e+00 : f32
    %27 = vector.broadcast %cst_29 : f32 to vector<2x32xf32>
    %28 = arith.subf %27, %26 : vector<2x32xf32>
    %29 = math.exp %28 : vector<2x32xf32>
    %cst_30 = arith.constant 1.000000e+00 : f32
    %30 = vector.broadcast %cst_30 : f32 to vector<2x32xf32>
    %31 = arith.addf %30, %29 : vector<2x32xf32>
    %cst_31 = arith.constant 1.000000e+00 : f32
    %32 = vector.broadcast %cst_31 : f32 to vector<2x32xf32>
    %33 = arith.divf %32, %31 : vector<2x32xf32>
    %34 = vector.extract_strided_slice %25 {offsets = [0, 32], sizes = [2, 32], strides = [1, 1]} : vector<2x128xf32> to vector<2x32xf32>
    %cst_32 = arith.constant 0.000000e+00 : f32
    %35 = vector.broadcast %cst_32 : f32 to vector<2x32xf32>
    %36 = arith.subf %35, %34 : vector<2x32xf32>
    %37 = math.exp %36 : vector<2x32xf32>
    %cst_33 = arith.constant 1.000000e+00 : f32
    %38 = vector.broadcast %cst_33 : f32 to vector<2x32xf32>
    %39 = arith.addf %38, %37 : vector<2x32xf32>
    %cst_34 = arith.constant 1.000000e+00 : f32
    %40 = vector.broadcast %cst_34 : f32 to vector<2x32xf32>
    %41 = arith.divf %40, %39 : vector<2x32xf32>
    %42 = vector.extract_strided_slice %25 {offsets = [0, 64], sizes = [2, 32], strides = [1, 1]} : vector<2x128xf32> to vector<2x32xf32>
    %43 = math.tanh %42 : vector<2x32xf32>
    %44 = vector.extract_strided_slice %25 {offsets = [0, 96], sizes = [2, 32], strides = [1, 1]} : vector<2x128xf32> to vector<2x32xf32>
    %cst_35 = arith.constant 0.000000e+00 : f32
    %45 = vector.broadcast %cst_35 : f32 to vector<2x32xf32>
    %46 = arith.subf %45, %44 : vector<2x32xf32>
    %47 = math.exp %46 : vector<2x32xf32>
    %cst_36 = arith.constant 1.000000e+00 : f32
    %48 = vector.broadcast %cst_36 : f32 to vector<2x32xf32>
    %49 = arith.addf %48, %47 : vector<2x32xf32>
    %cst_37 = arith.constant 1.000000e+00 : f32
    %50 = vector.broadcast %cst_37 : f32 to vector<2x32xf32>
    %51 = arith.divf %50, %49 : vector<2x32xf32>
    %52 = arith.mulf %41, %16 : vector<2x32xf32>
    %53 = arith.mulf %33, %43 : vector<2x32xf32>
    %54 = arith.addf %52, %53 : vector<2x32xf32>
    %55 = math.tanh %54 : vector<2x32xf32>
    %56 = arith.mulf %51, %55 : vector<2x32xf32>
    %cst_38 = arith.constant dense<0.000000e+00> : vector<2x128xf32>
    %57 = tpu.matmul %56, %2, %cst_38 {dimension_numbers = #tpu.dot_dimension_numbers<[1], [0], [0], [1], [0, 0, 1, 1], [], []>} : vector<2x32xf32>, vector<32x128xf32>, vector<2x128xf32> -> vector<2x128xf32>
    %cst_39 = arith.constant dense<0.000000e+00> : vector<2x128xf32>
    %58 = tpu.matmul %16, %6, %cst_39 {dimension_numbers = #tpu.dot_dimension_numbers<[1], [0], [0], [1], [0, 0, 1, 1], [], []>} : vector<2x32xf32>, vector<32x128xf32>, vector<2x128xf32> -> vector<2x128xf32>
    %59 = arith.addf %57, %58 : vector<2x128xf32>
    %60 = vector.broadcast %10 : vector<1x128xf32> to vector<2x128xf32>
    %61 = arith.addf %59, %60 : vector<2x128xf32>
    %62 = vector.extract_strided_slice %61 {offsets = [0, 0], sizes = [2, 32], strides = [1, 1]} : vector<2x128xf32> to vector<2x32xf32>
    %cst_40 = arith.constant 0.000000e+00 : f32
    %63 = vector.broadcast %cst_40 : f32 to vector<2x32xf32>
    %64 = arith.subf %63, %62 : vector<2x32xf32>
    %65 = math.exp %64 : vector<2x32xf32>
    %cst_41 = arith.constant 1.000000e+00 : f32
    %66 = vector.broadcast %cst_41 : f32 to vector<2x32xf32>
    %67 = arith.addf %66, %65 : vector<2x32xf32>
    %cst_42 = arith.constant 1.000000e+00 : f32
    %68 = vector.broadcast %cst_42 : f32 to vector<2x32xf32>
    %69 = arith.divf %68, %67 : vector<2x32xf32>
    %70 = vector.extract_strided_slice %61 {offsets = [0, 32], sizes = [2, 32], strides = [1, 1]} : vector<2x128xf32> to vector<2x32xf32>
    %cst_43 = arith.constant 0.000000e+00 : f32
    %71 = vector.broadcast %cst_43 : f32 to vector<2x32xf32>
    %72 = arith.subf %71, %70 : vector<2x32xf32>
    %73 = math.exp %72 : vector<2x32xf32>
    %cst_44 = arith.constant 1.000000e+00 : f32
    %74 = vector.broadcast %cst_44 : f32 to vector<2x32xf32>
    %75 = arith.addf %74, %73 : vector<2x32xf32>
    %cst_45 = arith.constant 1.000000e+00 : f32
    %76 = vector.broadcast %cst_45 : f32 to vector<2x32xf32>
    %77 = arith.divf %76, %75 : vector<2x32xf32>
    %78 = vector.extract_strided_slice %61 {offsets = [0, 64], sizes = [2, 32], strides = [1, 1]} : vector<2x128xf32> to vector<2x32xf32>
    %79 = math.tanh %78 : vector<2x32xf32>
    %80 = vector.extract_strided_slice %61 {offsets = [0, 96], sizes = [2, 32], strides = [1, 1]} : vector<2x128xf32> to vector<2x32xf32>
    %cst_46 = arith.constant 0.000000e+00 : f32
    %81 = vector.broadcast %cst_46 : f32 to vector<2x32xf32>
    %82 = arith.subf %81, %80 : vector<2x32xf32>
    %83 = math.exp %82 : vector<2x32xf32>
    %cst_47 = arith.constant 1.000000e+00 : f32
    %84 = vector.broadcast %cst_47 : f32 to vector<2x32xf32>
    %85 = arith.addf %84, %83 : vector<2x32xf32>
    %cst_48 = arith.constant 1.000000e+00 : f32
    %86 = vector.broadcast %cst_48 : f32 to vector<2x32xf32>
    %87 = arith.divf %86, %85 : vector<2x32xf32>
    %88 = arith.mulf %77, %16 : vector<2x32xf32>
    %89 = arith.mulf %69, %79 : vector<2x32xf32>
    %90 = arith.addf %88, %89 : vector<2x32xf32>
    %91 = math.tanh %90 : vector<2x32xf32>
    %92 = arith.mulf %87, %91 : vector<2x32xf32>
    %93 = arith.addf %16, %92 : vector<2x32xf32>
    %c1_49 = arith.constant 1 : index
    %c0_50 = arith.constant 0 : index
    %c0_51 = arith.constant 0 : index
    %94 = vector.load %arg1[%c1_49, %c0_50, %c0_51] : memref<16x2x1xf32, #tpu.memory_space<vmem>>, vector<1x2x1xf32>
    %95 = vector.shape_cast %94 : vector<1x2x1xf32> to vector<2x1xf32>
    %96 = vector.broadcast %95 : vector<2x1xf32> to vector<2x128xf32>
    %97 = vector.broadcast %0 : vector<1x128xf32> to vector<2x128xf32>
    %98 = arith.mulf %96, %97 : vector<2x128xf32>
    %cst_52 = arith.constant dense<0.000000e+00> : vector<2x128xf32>
    %99 = tpu.matmul %56, %4, %cst_52 {dimension_numbers = #tpu.dot_dimension_numbers<[1], [0], [0], [1], [0, 0, 1, 1], [], []>} : vector<2x32xf32>, vector<32x128xf32>, vector<2x128xf32> -> vector<2x128xf32>
    %100 = arith.addf %98, %99 : vector<2x128xf32>
    %101 = vector.broadcast %8 : vector<1x128xf32> to vector<2x128xf32>
    %102 = arith.addf %100, %101 : vector<2x128xf32>
    %103 = vector.extract_strided_slice %102 {offsets = [0, 0], sizes = [2, 32], strides = [1, 1]} : vector<2x128xf32> to vector<2x32xf32>
    %cst_53 = arith.constant 0.000000e+00 : f32
    %104 = vector.broadcast %cst_53 : f32 to vector<2x32xf32>
    %105 = arith.subf %104, %103 : vector<2x32xf32>
    %106 = math.exp %105 : vector<2x32xf32>
    %cst_54 = arith.constant 1.000000e+00 : f32
    %107 = vector.broadcast %cst_54 : f32 to vector<2x32xf32>
    %108 = arith.addf %107, %106 : vector<2x32xf32>
    %cst_55 = arith.constant 1.000000e+00 : f32
    %109 = vector.broadcast %cst_55 : f32 to vector<2x32xf32>
    %110 = arith.divf %109, %108 : vector<2x32xf32>
    %111 = vector.extract_strided_slice %102 {offsets = [0, 32], sizes = [2, 32], strides = [1, 1]} : vector<2x128xf32> to vector<2x32xf32>
    %cst_56 = arith.constant 0.000000e+00 : f32
    %112 = vector.broadcast %cst_56 : f32 to vector<2x32xf32>
    %113 = arith.subf %112, %111 : vector<2x32xf32>
    %114 = math.exp %113 : vector<2x32xf32>
    %cst_57 = arith.constant 1.000000e+00 : f32
    %115 = vector.broadcast %cst_57 : f32 to vector<2x32xf32>
    %116 = arith.addf %115, %114 : vector<2x32xf32>
    %cst_58 = arith.constant 1.000000e+00 : f32
    %117 = vector.broadcast %cst_58 : f32 to vector<2x32xf32>
    %118 = arith.divf %117, %116 : vector<2x32xf32>
    %119 = vector.extract_strided_slice %102 {offsets = [0, 64], sizes = [2, 32], strides = [1, 1]} : vector<2x128xf32> to vector<2x32xf32>
    %120 = math.tanh %119 : vector<2x32xf32>
    %121 = vector.extract_strided_slice %102 {offsets = [0, 96], sizes = [2, 32], strides = [1, 1]} : vector<2x128xf32> to vector<2x32xf32>
    %cst_59 = arith.constant 0.000000e+00 : f32
    %122 = vector.broadcast %cst_59 : f32 to vector<2x32xf32>
    %123 = arith.subf %122, %121 : vector<2x32xf32>
    %124 = math.exp %123 : vector<2x32xf32>
    %cst_60 = arith.constant 1.000000e+00 : f32
    %125 = vector.broadcast %cst_60 : f32 to vector<2x32xf32>
    %126 = arith.addf %125, %124 : vector<2x32xf32>
    %cst_61 = arith.constant 1.000000e+00 : f32
    %127 = vector.broadcast %cst_61 : f32 to vector<2x32xf32>
    %128 = arith.divf %127, %126 : vector<2x32xf32>
    %129 = arith.mulf %118, %54 : vector<2x32xf32>
    %130 = arith.mulf %110, %120 : vector<2x32xf32>
    %131 = arith.addf %129, %130 : vector<2x32xf32>
    %132 = math.tanh %131 : vector<2x32xf32>
    %133 = arith.mulf %128, %132 : vector<2x32xf32>
    %cst_62 = arith.constant dense<0.000000e+00> : vector<2x128xf32>
    %134 = tpu.matmul %133, %2, %cst_62 {dimension_numbers = #tpu.dot_dimension_numbers<[1], [0], [0], [1], [0, 0, 1, 1], [], []>} : vector<2x32xf32>, vector<32x128xf32>, vector<2x128xf32> -> vector<2x128xf32>
    %cst_63 = arith.constant dense<0.000000e+00> : vector<2x128xf32>
    %135 = tpu.matmul %92, %6, %cst_63 {dimension_numbers = #tpu.dot_dimension_numbers<[1], [0], [0], [1], [0, 0, 1, 1], [], []>} : vector<2x32xf32>, vector<32x128xf32>, vector<2x128xf32> -> vector<2x128xf32>
    %136 = arith.addf %134, %135 : vector<2x128xf32>
    %137 = vector.broadcast %10 : vector<1x128xf32> to vector<2x128xf32>
    %138 = arith.addf %136, %137 : vector<2x128xf32>
    %139 = vector.extract_strided_slice %138 {offsets = [0, 0], sizes = [2, 32], strides = [1, 1]} : vector<2x128xf32> to vector<2x32xf32>
    %cst_64 = arith.constant 0.000000e+00 : f32
    %140 = vector.broadcast %cst_64 : f32 to vector<2x32xf32>
    %141 = arith.subf %140, %139 : vector<2x32xf32>
    %142 = math.exp %141 : vector<2x32xf32>
    %cst_65 = arith.constant 1.000000e+00 : f32
    %143 = vector.broadcast %cst_65 : f32 to vector<2x32xf32>
    %144 = arith.addf %143, %142 : vector<2x32xf32>
    %cst_66 = arith.constant 1.000000e+00 : f32
    %145 = vector.broadcast %cst_66 : f32 to vector<2x32xf32>
    %146 = arith.divf %145, %144 : vector<2x32xf32>
    %147 = vector.extract_strided_slice %138 {offsets = [0, 32], sizes = [2, 32], strides = [1, 1]} : vector<2x128xf32> to vector<2x32xf32>
    %cst_67 = arith.constant 0.000000e+00 : f32
    %148 = vector.broadcast %cst_67 : f32 to vector<2x32xf32>
    %149 = arith.subf %148, %147 : vector<2x32xf32>
    %150 = math.exp %149 : vector<2x32xf32>
    %cst_68 = arith.constant 1.000000e+00 : f32
    %151 = vector.broadcast %cst_68 : f32 to vector<2x32xf32>
    %152 = arith.addf %151, %150 : vector<2x32xf32>
    %cst_69 = arith.constant 1.000000e+00 : f32
    %153 = vector.broadcast %cst_69 : f32 to vector<2x32xf32>
    %154 = arith.divf %153, %152 : vector<2x32xf32>
    %155 = vector.extract_strided_slice %138 {offsets = [0, 64], sizes = [2, 32], strides = [1, 1]} : vector<2x128xf32> to vector<2x32xf32>
    %156 = math.tanh %155 : vector<2x32xf32>
    %157 = vector.extract_strided_slice %138 {offsets = [0, 96], sizes = [2, 32], strides = [1, 1]} : vector<2x128xf32> to vector<2x32xf32>
    %cst_70 = arith.constant 0.000000e+00 : f32
    %158 = vector.broadcast %cst_70 : f32 to vector<2x32xf32>
    %159 = arith.subf %158, %157 : vector<2x32xf32>
    %160 = math.exp %159 : vector<2x32xf32>
    %cst_71 = arith.constant 1.000000e+00 : f32
    %161 = vector.broadcast %cst_71 : f32 to vector<2x32xf32>
    %162 = arith.addf %161, %160 : vector<2x32xf32>
    %cst_72 = arith.constant 1.000000e+00 : f32
    %163 = vector.broadcast %cst_72 : f32 to vector<2x32xf32>
    %164 = arith.divf %163, %162 : vector<2x32xf32>
    %165 = arith.mulf %154, %90 : vector<2x32xf32>
    %166 = arith.mulf %146, %156 : vector<2x32xf32>
    %167 = arith.addf %165, %166 : vector<2x32xf32>
    %168 = math.tanh %167 : vector<2x32xf32>
    %169 = arith.mulf %164, %168 : vector<2x32xf32>
    %170 = arith.addf %93, %169 : vector<2x32xf32>
    %c2 = arith.constant 2 : index
    %c0_73 = arith.constant 0 : index
    %c0_74 = arith.constant 0 : index
    %171 = vector.load %arg1[%c2, %c0_73, %c0_74] : memref<16x2x1xf32, #tpu.memory_space<vmem>>, vector<1x2x1xf32>
    %172 = vector.shape_cast %171 : vector<1x2x1xf32> to vector<2x1xf32>
    %173 = vector.broadcast %172 : vector<2x1xf32> to vector<2x128xf32>
    %174 = vector.broadcast %0 : vector<1x128xf32> to vector<2x128xf32>
    %175 = arith.mulf %173, %174 : vector<2x128xf32>
    %cst_75 = arith.constant dense<0.000000e+00> : vector<2x128xf32>
    %176 = tpu.matmul %133, %4, %cst_75 {dimension_numbers = #tpu.dot_dimension_numbers<[1], [0], [0], [1], [0, 0, 1, 1], [], []>} : vector<2x32xf32>, vector<32x128xf32>, vector<2x128xf32> -> vector<2x128xf32>
    %177 = arith.addf %175, %176 : vector<2x128xf32>
    %178 = vector.broadcast %8 : vector<1x128xf32> to vector<2x128xf32>
    %179 = arith.addf %177, %178 : vector<2x128xf32>
    %180 = vector.extract_strided_slice %179 {offsets = [0, 0], sizes = [2, 32], strides = [1, 1]} : vector<2x128xf32> to vector<2x32xf32>
    %cst_76 = arith.constant 0.000000e+00 : f32
    %181 = vector.broadcast %cst_76 : f32 to vector<2x32xf32>
    %182 = arith.subf %181, %180 : vector<2x32xf32>
    %183 = math.exp %182 : vector<2x32xf32>
    %cst_77 = arith.constant 1.000000e+00 : f32
    %184 = vector.broadcast %cst_77 : f32 to vector<2x32xf32>
    %185 = arith.addf %184, %183 : vector<2x32xf32>
    %cst_78 = arith.constant 1.000000e+00 : f32
    %186 = vector.broadcast %cst_78 : f32 to vector<2x32xf32>
    %187 = arith.divf %186, %185 : vector<2x32xf32>
    %188 = vector.extract_strided_slice %179 {offsets = [0, 32], sizes = [2, 32], strides = [1, 1]} : vector<2x128xf32> to vector<2x32xf32>
    %cst_79 = arith.constant 0.000000e+00 : f32
    %189 = vector.broadcast %cst_79 : f32 to vector<2x32xf32>
    %190 = arith.subf %189, %188 : vector<2x32xf32>
    %191 = math.exp %190 : vector<2x32xf32>
    %cst_80 = arith.constant 1.000000e+00 : f32
    %192 = vector.broadcast %cst_80 : f32 to vector<2x32xf32>
    %193 = arith.addf %192, %191 : vector<2x32xf32>
    %cst_81 = arith.constant 1.000000e+00 : f32
    %194 = vector.broadcast %cst_81 : f32 to vector<2x32xf32>
    %195 = arith.divf %194, %193 : vector<2x32xf32>
    %196 = vector.extract_strided_slice %179 {offsets = [0, 64], sizes = [2, 32], strides = [1, 1]} : vector<2x128xf32> to vector<2x32xf32>
    %197 = math.tanh %196 : vector<2x32xf32>
    %198 = vector.extract_strided_slice %179 {offsets = [0, 96], sizes = [2, 32], strides = [1, 1]} : vector<2x128xf32> to vector<2x32xf32>
    %cst_82 = arith.constant 0.000000e+00 : f32
    %199 = vector.broadcast %cst_82 : f32 to vector<2x32xf32>
    %200 = arith.subf %199, %198 : vector<2x32xf32>
    %201 = math.exp %200 : vector<2x32xf32>
    %cst_83 = arith.constant 1.000000e+00 : f32
    %202 = vector.broadcast %cst_83 : f32 to vector<2x32xf32>
    %203 = arith.addf %202, %201 : vector<2x32xf32>
    %cst_84 = arith.constant 1.000000e+00 : f32
    %204 = vector.broadcast %cst_84 : f32 to vector<2x32xf32>
    %205 = arith.divf %204, %203 : vector<2x32xf32>
    %206 = arith.mulf %195, %131 : vector<2x32xf32>
    %207 = arith.mulf %187, %197 : vector<2x32xf32>
    %208 = arith.addf %206, %207 : vector<2x32xf32>
    %209 = math.tanh %208 : vector<2x32xf32>
    %210 = arith.mulf %205, %209 : vector<2x32xf32>
    %cst_85 = arith.constant dense<0.000000e+00> : vector<2x128xf32>
    %211 = tpu.matmul %210, %2, %cst_85 {dimension_numbers = #tpu.dot_dimension_numbers<[1], [0], [0], [1], [0, 0, 1, 1], [], []>} : vector<2x32xf32>, vector<32x128xf32>, vector<2x128xf32> -> vector<2x128xf32>
    %cst_86 = arith.constant dense<0.000000e+00> : vector<2x128xf32>
    %212 = tpu.matmul %169, %6, %cst_86 {dimension_numbers = #tpu.dot_dimension_numbers<[1], [0], [0], [1], [0, 0, 1, 1], [], []>} : vector<2x32xf32>, vector<32x128xf32>, vector<2x128xf32> -> vector<2x128xf32>
    %213 = arith.addf %211, %212 : vector<2x128xf32>
    %214 = vector.broadcast %10 : vector<1x128xf32> to vector<2x128xf32>
    %215 = arith.addf %213, %214 : vector<2x128xf32>
    %216 = vector.extract_strided_slice %215 {offsets = [0, 0], sizes = [2, 32], strides = [1, 1]} : vector<2x128xf32> to vector<2x32xf32>
    %cst_87 = arith.constant 0.000000e+00 : f32
    %217 = vector.broadcast %cst_87 : f32 to vector<2x32xf32>
    %218 = arith.subf %217, %216 : vector<2x32xf32>
    %219 = math.exp %218 : vector<2x32xf32>
    %cst_88 = arith.constant 1.000000e+00 : f32
    %220 = vector.broadcast %cst_88 : f32 to vector<2x32xf32>
    %221 = arith.addf %220, %219 : vector<2x32xf32>
    %cst_89 = arith.constant 1.000000e+00 : f32
    %222 = vector.broadcast %cst_89 : f32 to vector<2x32xf32>
    %223 = arith.divf %222, %221 : vector<2x32xf32>
    %224 = vector.extract_strided_slice %215 {offsets = [0, 32], sizes = [2, 32], strides = [1, 1]} : vector<2x128xf32> to vector<2x32xf32>
    %cst_90 = arith.constant 0.000000e+00 : f32
    %225 = vector.broadcast %cst_90 : f32 to vector<2x32xf32>
    %226 = arith.subf %225, %224 : vector<2x32xf32>
    %227 = math.exp %226 : vector<2x32xf32>
    %cst_91 = arith.constant 1.000000e+00 : f32
    %228 = vector.broadcast %cst_91 : f32 to vector<2x32xf32>
    %229 = arith.addf %228, %227 : vector<2x32xf32>
    %cst_92 = arith.constant 1.000000e+00 : f32
    %230 = vector.broadcast %cst_92 : f32 to vector<2x32xf32>
    %231 = arith.divf %230, %229 : vector<2x32xf32>
    %232 = vector.extract_strided_slice %215 {offsets = [0, 64], sizes = [2, 32], strides = [1, 1]} : vector<2x128xf32> to vector<2x32xf32>
    %233 = math.tanh %232 : vector<2x32xf32>
    %234 = vector.extract_strided_slice %215 {offsets = [0, 96], sizes = [2, 32], strides = [1, 1]} : vector<2x128xf32> to vector<2x32xf32>
    %cst_93 = arith.constant 0.000000e+00 : f32
    %235 = vector.broadcast %cst_93 : f32 to vector<2x32xf32>
    %236 = arith.subf %235, %234 : vector<2x32xf32>
    %237 = math.exp %236 : vector<2x32xf32>
    %cst_94 = arith.constant 1.000000e+00 : f32
    %238 = vector.broadcast %cst_94 : f32 to vector<2x32xf32>
    %239 = arith.addf %238, %237 : vector<2x32xf32>
    %cst_95 = arith.constant 1.000000e+00 : f32
    %240 = vector.broadcast %cst_95 : f32 to vector<2x32xf32>
    %241 = arith.divf %240, %239 : vector<2x32xf32>
    %242 = arith.mulf %231, %167 : vector<2x32xf32>
    %243 = arith.mulf %223, %233 : vector<2x32xf32>
    %244 = arith.addf %242, %243 : vector<2x32xf32>
    %245 = math.tanh %244 : vector<2x32xf32>
    %246 = arith.mulf %241, %245 : vector<2x32xf32>
    %247 = arith.addf %170, %246 : vector<2x32xf32>
    %c3 = arith.constant 3 : index
    %c0_96 = arith.constant 0 : index
    %c0_97 = arith.constant 0 : index
    %248 = vector.load %arg1[%c3, %c0_96, %c0_97] : memref<16x2x1xf32, #tpu.memory_space<vmem>>, vector<1x2x1xf32>
    %249 = vector.shape_cast %248 : vector<1x2x1xf32> to vector<2x1xf32>
    %250 = vector.broadcast %249 : vector<2x1xf32> to vector<2x128xf32>
    %251 = vector.broadcast %0 : vector<1x128xf32> to vector<2x128xf32>
    %252 = arith.mulf %250, %251 : vector<2x128xf32>
    %cst_98 = arith.constant dense<0.000000e+00> : vector<2x128xf32>
    %253 = tpu.matmul %210, %4, %cst_98 {dimension_numbers = #tpu.dot_dimension_numbers<[1], [0], [0], [1], [0, 0, 1, 1], [], []>} : vector<2x32xf32>, vector<32x128xf32>, vector<2x128xf32> -> vector<2x128xf32>
    %254 = arith.addf %252, %253 : vector<2x128xf32>
    %255 = vector.broadcast %8 : vector<1x128xf32> to vector<2x128xf32>
    %256 = arith.addf %254, %255 : vector<2x128xf32>
    %257 = vector.extract_strided_slice %256 {offsets = [0, 0], sizes = [2, 32], strides = [1, 1]} : vector<2x128xf32> to vector<2x32xf32>
    %cst_99 = arith.constant 0.000000e+00 : f32
    %258 = vector.broadcast %cst_99 : f32 to vector<2x32xf32>
    %259 = arith.subf %258, %257 : vector<2x32xf32>
    %260 = math.exp %259 : vector<2x32xf32>
    %cst_100 = arith.constant 1.000000e+00 : f32
    %261 = vector.broadcast %cst_100 : f32 to vector<2x32xf32>
    %262 = arith.addf %261, %260 : vector<2x32xf32>
    %cst_101 = arith.constant 1.000000e+00 : f32
    %263 = vector.broadcast %cst_101 : f32 to vector<2x32xf32>
    %264 = arith.divf %263, %262 : vector<2x32xf32>
    %265 = vector.extract_strided_slice %256 {offsets = [0, 32], sizes = [2, 32], strides = [1, 1]} : vector<2x128xf32> to vector<2x32xf32>
    %cst_102 = arith.constant 0.000000e+00 : f32
    %266 = vector.broadcast %cst_102 : f32 to vector<2x32xf32>
    %267 = arith.subf %266, %265 : vector<2x32xf32>
    %268 = math.exp %267 : vector<2x32xf32>
    %cst_103 = arith.constant 1.000000e+00 : f32
    %269 = vector.broadcast %cst_103 : f32 to vector<2x32xf32>
    %270 = arith.addf %269, %268 : vector<2x32xf32>
    %cst_104 = arith.constant 1.000000e+00 : f32
    %271 = vector.broadcast %cst_104 : f32 to vector<2x32xf32>
    %272 = arith.divf %271, %270 : vector<2x32xf32>
    %273 = vector.extract_strided_slice %256 {offsets = [0, 64], sizes = [2, 32], strides = [1, 1]} : vector<2x128xf32> to vector<2x32xf32>
    %274 = math.tanh %273 : vector<2x32xf32>
    %275 = vector.extract_strided_slice %256 {offsets = [0, 96], sizes = [2, 32], strides = [1, 1]} : vector<2x128xf32> to vector<2x32xf32>
    %cst_105 = arith.constant 0.000000e+00 : f32
    %276 = vector.broadcast %cst_105 : f32 to vector<2x32xf32>
    %277 = arith.subf %276, %275 : vector<2x32xf32>
    %278 = math.exp %277 : vector<2x32xf32>
    %cst_106 = arith.constant 1.000000e+00 : f32
    %279 = vector.broadcast %cst_106 : f32 to vector<2x32xf32>
    %280 = arith.addf %279, %278 : vector<2x32xf32>
    %cst_107 = arith.constant 1.000000e+00 : f32
    %281 = vector.broadcast %cst_107 : f32 to vector<2x32xf32>
    %282 = arith.divf %281, %280 : vector<2x32xf32>
    %283 = arith.mulf %272, %208 : vector<2x32xf32>
    %284 = arith.mulf %264, %274 : vector<2x32xf32>
    %285 = arith.addf %283, %284 : vector<2x32xf32>
    %286 = math.tanh %285 : vector<2x32xf32>
    %287 = arith.mulf %282, %286 : vector<2x32xf32>
    %cst_108 = arith.constant dense<0.000000e+00> : vector<2x128xf32>
    %288 = tpu.matmul %287, %2, %cst_108 {dimension_numbers = #tpu.dot_dimension_numbers<[1], [0], [0], [1], [0, 0, 1, 1], [], []>} : vector<2x32xf32>, vector<32x128xf32>, vector<2x128xf32> -> vector<2x128xf32>
    %cst_109 = arith.constant dense<0.000000e+00> : vector<2x128xf32>
    %289 = tpu.matmul %246, %6, %cst_109 {dimension_numbers = #tpu.dot_dimension_numbers<[1], [0], [0], [1], [0, 0, 1, 1], [], []>} : vector<2x32xf32>, vector<32x128xf32>, vector<2x128xf32> -> vector<2x128xf32>
    %290 = arith.addf %288, %289 : vector<2x128xf32>
    %291 = vector.broadcast %10 : vector<1x128xf32> to vector<2x128xf32>
    %292 = arith.addf %290, %291 : vector<2x128xf32>
    %293 = vector.extract_strided_slice %292 {offsets = [0, 0], sizes = [2, 32], strides = [1, 1]} : vector<2x128xf32> to vector<2x32xf32>
    %cst_110 = arith.constant 0.000000e+00 : f32
    %294 = vector.broadcast %cst_110 : f32 to vector<2x32xf32>
    %295 = arith.subf %294, %293 : vector<2x32xf32>
    %296 = math.exp %295 : vector<2x32xf32>
    %cst_111 = arith.constant 1.000000e+00 : f32
    %297 = vector.broadcast %cst_111 : f32 to vector<2x32xf32>
    %298 = arith.addf %297, %296 : vector<2x32xf32>
    %cst_112 = arith.constant 1.000000e+00 : f32
    %299 = vector.broadcast %cst_112 : f32 to vector<2x32xf32>
    %300 = arith.divf %299, %298 : vector<2x32xf32>
    %301 = vector.extract_strided_slice %292 {offsets = [0, 32], sizes = [2, 32], strides = [1, 1]} : vector<2x128xf32> to vector<2x32xf32>
    %cst_113 = arith.constant 0.000000e+00 : f32
    %302 = vector.broadcast %cst_113 : f32 to vector<2x32xf32>
    %303 = arith.subf %302, %301 : vector<2x32xf32>
    %304 = math.exp %303 : vector<2x32xf32>
    %cst_114 = arith.constant 1.000000e+00 : f32
    %305 = vector.broadcast %cst_114 : f32 to vector<2x32xf32>
    %306 = arith.addf %305, %304 : vector<2x32xf32>
    %cst_115 = arith.constant 1.000000e+00 : f32
    %307 = vector.broadcast %cst_115 : f32 to vector<2x32xf32>
    %308 = arith.divf %307, %306 : vector<2x32xf32>
    %309 = vector.extract_strided_slice %292 {offsets = [0, 64], sizes = [2, 32], strides = [1, 1]} : vector<2x128xf32> to vector<2x32xf32>
    %310 = math.tanh %309 : vector<2x32xf32>
    %311 = vector.extract_strided_slice %292 {offsets = [0, 96], sizes = [2, 32], strides = [1, 1]} : vector<2x128xf32> to vector<2x32xf32>
    %cst_116 = arith.constant 0.000000e+00 : f32
    %312 = vector.broadcast %cst_116 : f32 to vector<2x32xf32>
    %313 = arith.subf %312, %311 : vector<2x32xf32>
    %314 = math.exp %313 : vector<2x32xf32>
    %cst_117 = arith.constant 1.000000e+00 : f32
    %315 = vector.broadcast %cst_117 : f32 to vector<2x32xf32>
    %316 = arith.addf %315, %314 : vector<2x32xf32>
    %cst_118 = arith.constant 1.000000e+00 : f32
    %317 = vector.broadcast %cst_118 : f32 to vector<2x32xf32>
    %318 = arith.divf %317, %316 : vector<2x32xf32>
    %319 = arith.mulf %308, %244 : vector<2x32xf32>
    %320 = arith.mulf %300, %310 : vector<2x32xf32>
    %321 = arith.addf %319, %320 : vector<2x32xf32>
    %322 = math.tanh %321 : vector<2x32xf32>
    %323 = arith.mulf %318, %322 : vector<2x32xf32>
    %324 = arith.addf %247, %323 : vector<2x32xf32>
    %c4 = arith.constant 4 : index
    %c0_119 = arith.constant 0 : index
    %c0_120 = arith.constant 0 : index
    %325 = vector.load %arg1[%c4, %c0_119, %c0_120] : memref<16x2x1xf32, #tpu.memory_space<vmem>>, vector<1x2x1xf32>
    %326 = vector.shape_cast %325 : vector<1x2x1xf32> to vector<2x1xf32>
    %327 = vector.broadcast %326 : vector<2x1xf32> to vector<2x128xf32>
    %328 = vector.broadcast %0 : vector<1x128xf32> to vector<2x128xf32>
    %329 = arith.mulf %327, %328 : vector<2x128xf32>
    %cst_121 = arith.constant dense<0.000000e+00> : vector<2x128xf32>
    %330 = tpu.matmul %287, %4, %cst_121 {dimension_numbers = #tpu.dot_dimension_numbers<[1], [0], [0], [1], [0, 0, 1, 1], [], []>} : vector<2x32xf32>, vector<32x128xf32>, vector<2x128xf32> -> vector<2x128xf32>
    %331 = arith.addf %329, %330 : vector<2x128xf32>
    %332 = vector.broadcast %8 : vector<1x128xf32> to vector<2x128xf32>
    %333 = arith.addf %331, %332 : vector<2x128xf32>
    %334 = vector.extract_strided_slice %333 {offsets = [0, 0], sizes = [2, 32], strides = [1, 1]} : vector<2x128xf32> to vector<2x32xf32>
    %cst_122 = arith.constant 0.000000e+00 : f32
    %335 = vector.broadcast %cst_122 : f32 to vector<2x32xf32>
    %336 = arith.subf %335, %334 : vector<2x32xf32>
    %337 = math.exp %336 : vector<2x32xf32>
    %cst_123 = arith.constant 1.000000e+00 : f32
    %338 = vector.broadcast %cst_123 : f32 to vector<2x32xf32>
    %339 = arith.addf %338, %337 : vector<2x32xf32>
    %cst_124 = arith.constant 1.000000e+00 : f32
    %340 = vector.broadcast %cst_124 : f32 to vector<2x32xf32>
    %341 = arith.divf %340, %339 : vector<2x32xf32>
    %342 = vector.extract_strided_slice %333 {offsets = [0, 32], sizes = [2, 32], strides = [1, 1]} : vector<2x128xf32> to vector<2x32xf32>
    %cst_125 = arith.constant 0.000000e+00 : f32
    %343 = vector.broadcast %cst_125 : f32 to vector<2x32xf32>
    %344 = arith.subf %343, %342 : vector<2x32xf32>
    %345 = math.exp %344 : vector<2x32xf32>
    %cst_126 = arith.constant 1.000000e+00 : f32
    %346 = vector.broadcast %cst_126 : f32 to vector<2x32xf32>
    %347 = arith.addf %346, %345 : vector<2x32xf32>
    %cst_127 = arith.constant 1.000000e+00 : f32
    %348 = vector.broadcast %cst_127 : f32 to vector<2x32xf32>
    %349 = arith.divf %348, %347 : vector<2x32xf32>
    %350 = vector.extract_strided_slice %333 {offsets = [0, 64], sizes = [2, 32], strides = [1, 1]} : vector<2x128xf32> to vector<2x32xf32>
    %351 = math.tanh %350 : vector<2x32xf32>
    %352 = vector.extract_strided_slice %333 {offsets = [0, 96], sizes = [2, 32], strides = [1, 1]} : vector<2x128xf32> to vector<2x32xf32>
    %cst_128 = arith.constant 0.000000e+00 : f32
    %353 = vector.broadcast %cst_128 : f32 to vector<2x32xf32>
    %354 = arith.subf %353, %352 : vector<2x32xf32>
    %355 = math.exp %354 : vector<2x32xf32>
    %cst_129 = arith.constant 1.000000e+00 : f32
    %356 = vector.broadcast %cst_129 : f32 to vector<2x32xf32>
    %357 = arith.addf %356, %355 : vector<2x32xf32>
    %cst_130 = arith.constant 1.000000e+00 : f32
    %358 = vector.broadcast %cst_130 : f32 to vector<2x32xf32>
    %359 = arith.divf %358, %357 : vector<2x32xf32>
    %360 = arith.mulf %349, %285 : vector<2x32xf32>
    %361 = arith.mulf %341, %351 : vector<2x32xf32>
    %362 = arith.addf %360, %361 : vector<2x32xf32>
    %363 = math.tanh %362 : vector<2x32xf32>
    %364 = arith.mulf %359, %363 : vector<2x32xf32>
    %cst_131 = arith.constant dense<0.000000e+00> : vector<2x128xf32>
    %365 = tpu.matmul %364, %2, %cst_131 {dimension_numbers = #tpu.dot_dimension_numbers<[1], [0], [0], [1], [0, 0, 1, 1], [], []>} : vector<2x32xf32>, vector<32x128xf32>, vector<2x128xf32> -> vector<2x128xf32>
    %cst_132 = arith.constant dense<0.000000e+00> : vector<2x128xf32>
    %366 = tpu.matmul %323, %6, %cst_132 {dimension_numbers = #tpu.dot_dimension_numbers<[1], [0], [0], [1], [0, 0, 1, 1], [], []>} : vector<2x32xf32>, vector<32x128xf32>, vector<2x128xf32> -> vector<2x128xf32>
    %367 = arith.addf %365, %366 : vector<2x128xf32>
    %368 = vector.broadcast %10 : vector<1x128xf32> to vector<2x128xf32>
    %369 = arith.addf %367, %368 : vector<2x128xf32>
    %370 = vector.extract_strided_slice %369 {offsets = [0, 0], sizes = [2, 32], strides = [1, 1]} : vector<2x128xf32> to vector<2x32xf32>
    %cst_133 = arith.constant 0.000000e+00 : f32
    %371 = vector.broadcast %cst_133 : f32 to vector<2x32xf32>
    %372 = arith.subf %371, %370 : vector<2x32xf32>
    %373 = math.exp %372 : vector<2x32xf32>
    %cst_134 = arith.constant 1.000000e+00 : f32
    %374 = vector.broadcast %cst_134 : f32 to vector<2x32xf32>
    %375 = arith.addf %374, %373 : vector<2x32xf32>
    %cst_135 = arith.constant 1.000000e+00 : f32
    %376 = vector.broadcast %cst_135 : f32 to vector<2x32xf32>
    %377 = arith.divf %376, %375 : vector<2x32xf32>
    %378 = vector.extract_strided_slice %369 {offsets = [0, 32], sizes = [2, 32], strides = [1, 1]} : vector<2x128xf32> to vector<2x32xf32>
    %cst_136 = arith.constant 0.000000e+00 : f32
    %379 = vector.broadcast %cst_136 : f32 to vector<2x32xf32>
    %380 = arith.subf %379, %378 : vector<2x32xf32>
    %381 = math.exp %380 : vector<2x32xf32>
    %cst_137 = arith.constant 1.000000e+00 : f32
    %382 = vector.broadcast %cst_137 : f32 to vector<2x32xf32>
    %383 = arith.addf %382, %381 : vector<2x32xf32>
    %cst_138 = arith.constant 1.000000e+00 : f32
    %384 = vector.broadcast %cst_138 : f32 to vector<2x32xf32>
    %385 = arith.divf %384, %383 : vector<2x32xf32>
    %386 = vector.extract_strided_slice %369 {offsets = [0, 64], sizes = [2, 32], strides = [1, 1]} : vector<2x128xf32> to vector<2x32xf32>
    %387 = math.tanh %386 : vector<2x32xf32>
    %388 = vector.extract_strided_slice %369 {offsets = [0, 96], sizes = [2, 32], strides = [1, 1]} : vector<2x128xf32> to vector<2x32xf32>
    %cst_139 = arith.constant 0.000000e+00 : f32
    %389 = vector.broadcast %cst_139 : f32 to vector<2x32xf32>
    %390 = arith.subf %389, %388 : vector<2x32xf32>
    %391 = math.exp %390 : vector<2x32xf32>
    %cst_140 = arith.constant 1.000000e+00 : f32
    %392 = vector.broadcast %cst_140 : f32 to vector<2x32xf32>
    %393 = arith.addf %392, %391 : vector<2x32xf32>
    %cst_141 = arith.constant 1.000000e+00 : f32
    %394 = vector.broadcast %cst_141 : f32 to vector<2x32xf32>
    %395 = arith.divf %394, %393 : vector<2x32xf32>
    %396 = arith.mulf %385, %321 : vector<2x32xf32>
    %397 = arith.mulf %377, %387 : vector<2x32xf32>
    %398 = arith.addf %396, %397 : vector<2x32xf32>
    %399 = math.tanh %398 : vector<2x32xf32>
    %400 = arith.mulf %395, %399 : vector<2x32xf32>
    %401 = arith.addf %324, %400 : vector<2x32xf32>
    %c5 = arith.constant 5 : index
    %c0_142 = arith.constant 0 : index
    %c0_143 = arith.constant 0 : index
    %402 = vector.load %arg1[%c5, %c0_142, %c0_143] : memref<16x2x1xf32, #tpu.memory_space<vmem>>, vector<1x2x1xf32>
    %403 = vector.shape_cast %402 : vector<1x2x1xf32> to vector<2x1xf32>
    %404 = vector.broadcast %403 : vector<2x1xf32> to vector<2x128xf32>
    %405 = vector.broadcast %0 : vector<1x128xf32> to vector<2x128xf32>
    %406 = arith.mulf %404, %405 : vector<2x128xf32>
    %cst_144 = arith.constant dense<0.000000e+00> : vector<2x128xf32>
    %407 = tpu.matmul %364, %4, %cst_144 {dimension_numbers = #tpu.dot_dimension_numbers<[1], [0], [0], [1], [0, 0, 1, 1], [], []>} : vector<2x32xf32>, vector<32x128xf32>, vector<2x128xf32> -> vector<2x128xf32>
    %408 = arith.addf %406, %407 : vector<2x128xf32>
    %409 = vector.broadcast %8 : vector<1x128xf32> to vector<2x128xf32>
    %410 = arith.addf %408, %409 : vector<2x128xf32>
    %411 = vector.extract_strided_slice %410 {offsets = [0, 0], sizes = [2, 32], strides = [1, 1]} : vector<2x128xf32> to vector<2x32xf32>
    %cst_145 = arith.constant 0.000000e+00 : f32
    %412 = vector.broadcast %cst_145 : f32 to vector<2x32xf32>
    %413 = arith.subf %412, %411 : vector<2x32xf32>
    %414 = math.exp %413 : vector<2x32xf32>
    %cst_146 = arith.constant 1.000000e+00 : f32
    %415 = vector.broadcast %cst_146 : f32 to vector<2x32xf32>
    %416 = arith.addf %415, %414 : vector<2x32xf32>
    %cst_147 = arith.constant 1.000000e+00 : f32
    %417 = vector.broadcast %cst_147 : f32 to vector<2x32xf32>
    %418 = arith.divf %417, %416 : vector<2x32xf32>
    %419 = vector.extract_strided_slice %410 {offsets = [0, 32], sizes = [2, 32], strides = [1, 1]} : vector<2x128xf32> to vector<2x32xf32>
    %cst_148 = arith.constant 0.000000e+00 : f32
    %420 = vector.broadcast %cst_148 : f32 to vector<2x32xf32>
    %421 = arith.subf %420, %419 : vector<2x32xf32>
    %422 = math.exp %421 : vector<2x32xf32>
    %cst_149 = arith.constant 1.000000e+00 : f32
    %423 = vector.broadcast %cst_149 : f32 to vector<2x32xf32>
    %424 = arith.addf %423, %422 : vector<2x32xf32>
    %cst_150 = arith.constant 1.000000e+00 : f32
    %425 = vector.broadcast %cst_150 : f32 to vector<2x32xf32>
    %426 = arith.divf %425, %424 : vector<2x32xf32>
    %427 = vector.extract_strided_slice %410 {offsets = [0, 64], sizes = [2, 32], strides = [1, 1]} : vector<2x128xf32> to vector<2x32xf32>
    %428 = math.tanh %427 : vector<2x32xf32>
    %429 = vector.extract_strided_slice %410 {offsets = [0, 96], sizes = [2, 32], strides = [1, 1]} : vector<2x128xf32> to vector<2x32xf32>
    %cst_151 = arith.constant 0.000000e+00 : f32
    %430 = vector.broadcast %cst_151 : f32 to vector<2x32xf32>
    %431 = arith.subf %430, %429 : vector<2x32xf32>
    %432 = math.exp %431 : vector<2x32xf32>
    %cst_152 = arith.constant 1.000000e+00 : f32
    %433 = vector.broadcast %cst_152 : f32 to vector<2x32xf32>
    %434 = arith.addf %433, %432 : vector<2x32xf32>
    %cst_153 = arith.constant 1.000000e+00 : f32
    %435 = vector.broadcast %cst_153 : f32 to vector<2x32xf32>
    %436 = arith.divf %435, %434 : vector<2x32xf32>
    %437 = arith.mulf %426, %362 : vector<2x32xf32>
    %438 = arith.mulf %418, %428 : vector<2x32xf32>
    %439 = arith.addf %437, %438 : vector<2x32xf32>
    %440 = math.tanh %439 : vector<2x32xf32>
    %441 = arith.mulf %436, %440 : vector<2x32xf32>
    %cst_154 = arith.constant dense<0.000000e+00> : vector<2x128xf32>
    %442 = tpu.matmul %441, %2, %cst_154 {dimension_numbers = #tpu.dot_dimension_numbers<[1], [0], [0], [1], [0, 0, 1, 1], [], []>} : vector<2x32xf32>, vector<32x128xf32>, vector<2x128xf32> -> vector<2x128xf32>
    %cst_155 = arith.constant dense<0.000000e+00> : vector<2x128xf32>
    %443 = tpu.matmul %400, %6, %cst_155 {dimension_numbers = #tpu.dot_dimension_numbers<[1], [0], [0], [1], [0, 0, 1, 1], [], []>} : vector<2x32xf32>, vector<32x128xf32>, vector<2x128xf32> -> vector<2x128xf32>
    %444 = arith.addf %442, %443 : vector<2x128xf32>
    %445 = vector.broadcast %10 : vector<1x128xf32> to vector<2x128xf32>
    %446 = arith.addf %444, %445 : vector<2x128xf32>
    %447 = vector.extract_strided_slice %446 {offsets = [0, 0], sizes = [2, 32], strides = [1, 1]} : vector<2x128xf32> to vector<2x32xf32>
    %cst_156 = arith.constant 0.000000e+00 : f32
    %448 = vector.broadcast %cst_156 : f32 to vector<2x32xf32>
    %449 = arith.subf %448, %447 : vector<2x32xf32>
    %450 = math.exp %449 : vector<2x32xf32>
    %cst_157 = arith.constant 1.000000e+00 : f32
    %451 = vector.broadcast %cst_157 : f32 to vector<2x32xf32>
    %452 = arith.addf %451, %450 : vector<2x32xf32>
    %cst_158 = arith.constant 1.000000e+00 : f32
    %453 = vector.broadcast %cst_158 : f32 to vector<2x32xf32>
    %454 = arith.divf %453, %452 : vector<2x32xf32>
    %455 = vector.extract_strided_slice %446 {offsets = [0, 32], sizes = [2, 32], strides = [1, 1]} : vector<2x128xf32> to vector<2x32xf32>
    %cst_159 = arith.constant 0.000000e+00 : f32
    %456 = vector.broadcast %cst_159 : f32 to vector<2x32xf32>
    %457 = arith.subf %456, %455 : vector<2x32xf32>
    %458 = math.exp %457 : vector<2x32xf32>
    %cst_160 = arith.constant 1.000000e+00 : f32
    %459 = vector.broadcast %cst_160 : f32 to vector<2x32xf32>
    %460 = arith.addf %459, %458 : vector<2x32xf32>
    %cst_161 = arith.constant 1.000000e+00 : f32
    %461 = vector.broadcast %cst_161 : f32 to vector<2x32xf32>
    %462 = arith.divf %461, %460 : vector<2x32xf32>
    %463 = vector.extract_strided_slice %446 {offsets = [0, 64], sizes = [2, 32], strides = [1, 1]} : vector<2x128xf32> to vector<2x32xf32>
    %464 = math.tanh %463 : vector<2x32xf32>
    %465 = vector.extract_strided_slice %446 {offsets = [0, 96], sizes = [2, 32], strides = [1, 1]} : vector<2x128xf32> to vector<2x32xf32>
    %cst_162 = arith.constant 0.000000e+00 : f32
    %466 = vector.broadcast %cst_162 : f32 to vector<2x32xf32>
    %467 = arith.subf %466, %465 : vector<2x32xf32>
    %468 = math.exp %467 : vector<2x32xf32>
    %cst_163 = arith.constant 1.000000e+00 : f32
    %469 = vector.broadcast %cst_163 : f32 to vector<2x32xf32>
    %470 = arith.addf %469, %468 : vector<2x32xf32>
    %cst_164 = arith.constant 1.000000e+00 : f32
    %471 = vector.broadcast %cst_164 : f32 to vector<2x32xf32>
    %472 = arith.divf %471, %470 : vector<2x32xf32>
    %473 = arith.mulf %462, %398 : vector<2x32xf32>
    %474 = arith.mulf %454, %464 : vector<2x32xf32>
    %475 = arith.addf %473, %474 : vector<2x32xf32>
    %476 = math.tanh %475 : vector<2x32xf32>
    %477 = arith.mulf %472, %476 : vector<2x32xf32>
    %478 = arith.addf %401, %477 : vector<2x32xf32>
    %c6 = arith.constant 6 : index
    %c0_165 = arith.constant 0 : index
    %c0_166 = arith.constant 0 : index
    %479 = vector.load %arg1[%c6, %c0_165, %c0_166] : memref<16x2x1xf32, #tpu.memory_space<vmem>>, vector<1x2x1xf32>
    %480 = vector.shape_cast %479 : vector<1x2x1xf32> to vector<2x1xf32>
    %481 = vector.broadcast %480 : vector<2x1xf32> to vector<2x128xf32>
    %482 = vector.broadcast %0 : vector<1x128xf32> to vector<2x128xf32>
    %483 = arith.mulf %481, %482 : vector<2x128xf32>
    %cst_167 = arith.constant dense<0.000000e+00> : vector<2x128xf32>
    %484 = tpu.matmul %441, %4, %cst_167 {dimension_numbers = #tpu.dot_dimension_numbers<[1], [0], [0], [1], [0, 0, 1, 1], [], []>} : vector<2x32xf32>, vector<32x128xf32>, vector<2x128xf32> -> vector<2x128xf32>
    %485 = arith.addf %483, %484 : vector<2x128xf32>
    %486 = vector.broadcast %8 : vector<1x128xf32> to vector<2x128xf32>
    %487 = arith.addf %485, %486 : vector<2x128xf32>
    %488 = vector.extract_strided_slice %487 {offsets = [0, 0], sizes = [2, 32], strides = [1, 1]} : vector<2x128xf32> to vector<2x32xf32>
    %cst_168 = arith.constant 0.000000e+00 : f32
    %489 = vector.broadcast %cst_168 : f32 to vector<2x32xf32>
    %490 = arith.subf %489, %488 : vector<2x32xf32>
    %491 = math.exp %490 : vector<2x32xf32>
    %cst_169 = arith.constant 1.000000e+00 : f32
    %492 = vector.broadcast %cst_169 : f32 to vector<2x32xf32>
    %493 = arith.addf %492, %491 : vector<2x32xf32>
    %cst_170 = arith.constant 1.000000e+00 : f32
    %494 = vector.broadcast %cst_170 : f32 to vector<2x32xf32>
    %495 = arith.divf %494, %493 : vector<2x32xf32>
    %496 = vector.extract_strided_slice %487 {offsets = [0, 32], sizes = [2, 32], strides = [1, 1]} : vector<2x128xf32> to vector<2x32xf32>
    %cst_171 = arith.constant 0.000000e+00 : f32
    %497 = vector.broadcast %cst_171 : f32 to vector<2x32xf32>
    %498 = arith.subf %497, %496 : vector<2x32xf32>
    %499 = math.exp %498 : vector<2x32xf32>
    %cst_172 = arith.constant 1.000000e+00 : f32
    %500 = vector.broadcast %cst_172 : f32 to vector<2x32xf32>
    %501 = arith.addf %500, %499 : vector<2x32xf32>
    %cst_173 = arith.constant 1.000000e+00 : f32
    %502 = vector.broadcast %cst_173 : f32 to vector<2x32xf32>
    %503 = arith.divf %502, %501 : vector<2x32xf32>
    %504 = vector.extract_strided_slice %487 {offsets = [0, 64], sizes = [2, 32], strides = [1, 1]} : vector<2x128xf32> to vector<2x32xf32>
    %505 = math.tanh %504 : vector<2x32xf32>
    %506 = vector.extract_strided_slice %487 {offsets = [0, 96], sizes = [2, 32], strides = [1, 1]} : vector<2x128xf32> to vector<2x32xf32>
    %cst_174 = arith.constant 0.000000e+00 : f32
    %507 = vector.broadcast %cst_174 : f32 to vector<2x32xf32>
    %508 = arith.subf %507, %506 : vector<2x32xf32>
    %509 = math.exp %508 : vector<2x32xf32>
    %cst_175 = arith.constant 1.000000e+00 : f32
    %510 = vector.broadcast %cst_175 : f32 to vector<2x32xf32>
    %511 = arith.addf %510, %509 : vector<2x32xf32>
    %cst_176 = arith.constant 1.000000e+00 : f32
    %512 = vector.broadcast %cst_176 : f32 to vector<2x32xf32>
    %513 = arith.divf %512, %511 : vector<2x32xf32>
    %514 = arith.mulf %503, %439 : vector<2x32xf32>
    %515 = arith.mulf %495, %505 : vector<2x32xf32>
    %516 = arith.addf %514, %515 : vector<2x32xf32>
    %517 = math.tanh %516 : vector<2x32xf32>
    %518 = arith.mulf %513, %517 : vector<2x32xf32>
    %cst_177 = arith.constant dense<0.000000e+00> : vector<2x128xf32>
    %519 = tpu.matmul %518, %2, %cst_177 {dimension_numbers = #tpu.dot_dimension_numbers<[1], [0], [0], [1], [0, 0, 1, 1], [], []>} : vector<2x32xf32>, vector<32x128xf32>, vector<2x128xf32> -> vector<2x128xf32>
    %cst_178 = arith.constant dense<0.000000e+00> : vector<2x128xf32>
    %520 = tpu.matmul %477, %6, %cst_178 {dimension_numbers = #tpu.dot_dimension_numbers<[1], [0], [0], [1], [0, 0, 1, 1], [], []>} : vector<2x32xf32>, vector<32x128xf32>, vector<2x128xf32> -> vector<2x128xf32>
    %521 = arith.addf %519, %520 : vector<2x128xf32>
    %522 = vector.broadcast %10 : vector<1x128xf32> to vector<2x128xf32>
    %523 = arith.addf %521, %522 : vector<2x128xf32>
    %524 = vector.extract_strided_slice %523 {offsets = [0, 0], sizes = [2, 32], strides = [1, 1]} : vector<2x128xf32> to vector<2x32xf32>
    %cst_179 = arith.constant 0.000000e+00 : f32
    %525 = vector.broadcast %cst_179 : f32 to vector<2x32xf32>
    %526 = arith.subf %525, %524 : vector<2x32xf32>
    %527 = math.exp %526 : vector<2x32xf32>
    %cst_180 = arith.constant 1.000000e+00 : f32
    %528 = vector.broadcast %cst_180 : f32 to vector<2x32xf32>
    %529 = arith.addf %528, %527 : vector<2x32xf32>
    %cst_181 = arith.constant 1.000000e+00 : f32
    %530 = vector.broadcast %cst_181 : f32 to vector<2x32xf32>
    %531 = arith.divf %530, %529 : vector<2x32xf32>
    %532 = vector.extract_strided_slice %523 {offsets = [0, 32], sizes = [2, 32], strides = [1, 1]} : vector<2x128xf32> to vector<2x32xf32>
    %cst_182 = arith.constant 0.000000e+00 : f32
    %533 = vector.broadcast %cst_182 : f32 to vector<2x32xf32>
    %534 = arith.subf %533, %532 : vector<2x32xf32>
    %535 = math.exp %534 : vector<2x32xf32>
    %cst_183 = arith.constant 1.000000e+00 : f32
    %536 = vector.broadcast %cst_183 : f32 to vector<2x32xf32>
    %537 = arith.addf %536, %535 : vector<2x32xf32>
    %cst_184 = arith.constant 1.000000e+00 : f32
    %538 = vector.broadcast %cst_184 : f32 to vector<2x32xf32>
    %539 = arith.divf %538, %537 : vector<2x32xf32>
    %540 = vector.extract_strided_slice %523 {offsets = [0, 64], sizes = [2, 32], strides = [1, 1]} : vector<2x128xf32> to vector<2x32xf32>
    %541 = math.tanh %540 : vector<2x32xf32>
    %542 = vector.extract_strided_slice %523 {offsets = [0, 96], sizes = [2, 32], strides = [1, 1]} : vector<2x128xf32> to vector<2x32xf32>
    %cst_185 = arith.constant 0.000000e+00 : f32
    %543 = vector.broadcast %cst_185 : f32 to vector<2x32xf32>
    %544 = arith.subf %543, %542 : vector<2x32xf32>
    %545 = math.exp %544 : vector<2x32xf32>
    %cst_186 = arith.constant 1.000000e+00 : f32
    %546 = vector.broadcast %cst_186 : f32 to vector<2x32xf32>
    %547 = arith.addf %546, %545 : vector<2x32xf32>
    %cst_187 = arith.constant 1.000000e+00 : f32
    %548 = vector.broadcast %cst_187 : f32 to vector<2x32xf32>
    %549 = arith.divf %548, %547 : vector<2x32xf32>
    %550 = arith.mulf %539, %475 : vector<2x32xf32>
    %551 = arith.mulf %531, %541 : vector<2x32xf32>
    %552 = arith.addf %550, %551 : vector<2x32xf32>
    %553 = math.tanh %552 : vector<2x32xf32>
    %554 = arith.mulf %549, %553 : vector<2x32xf32>
    %555 = arith.addf %478, %554 : vector<2x32xf32>
    %c7 = arith.constant 7 : index
    %c0_188 = arith.constant 0 : index
    %c0_189 = arith.constant 0 : index
    %556 = vector.load %arg1[%c7, %c0_188, %c0_189] : memref<16x2x1xf32, #tpu.memory_space<vmem>>, vector<1x2x1xf32>
    %557 = vector.shape_cast %556 : vector<1x2x1xf32> to vector<2x1xf32>
    %558 = vector.broadcast %557 : vector<2x1xf32> to vector<2x128xf32>
    %559 = vector.broadcast %0 : vector<1x128xf32> to vector<2x128xf32>
    %560 = arith.mulf %558, %559 : vector<2x128xf32>
    %cst_190 = arith.constant dense<0.000000e+00> : vector<2x128xf32>
    %561 = tpu.matmul %518, %4, %cst_190 {dimension_numbers = #tpu.dot_dimension_numbers<[1], [0], [0], [1], [0, 0, 1, 1], [], []>} : vector<2x32xf32>, vector<32x128xf32>, vector<2x128xf32> -> vector<2x128xf32>
    %562 = arith.addf %560, %561 : vector<2x128xf32>
    %563 = vector.broadcast %8 : vector<1x128xf32> to vector<2x128xf32>
    %564 = arith.addf %562, %563 : vector<2x128xf32>
    %565 = vector.extract_strided_slice %564 {offsets = [0, 0], sizes = [2, 32], strides = [1, 1]} : vector<2x128xf32> to vector<2x32xf32>
    %cst_191 = arith.constant 0.000000e+00 : f32
    %566 = vector.broadcast %cst_191 : f32 to vector<2x32xf32>
    %567 = arith.subf %566, %565 : vector<2x32xf32>
    %568 = math.exp %567 : vector<2x32xf32>
    %cst_192 = arith.constant 1.000000e+00 : f32
    %569 = vector.broadcast %cst_192 : f32 to vector<2x32xf32>
    %570 = arith.addf %569, %568 : vector<2x32xf32>
    %cst_193 = arith.constant 1.000000e+00 : f32
    %571 = vector.broadcast %cst_193 : f32 to vector<2x32xf32>
    %572 = arith.divf %571, %570 : vector<2x32xf32>
    %573 = vector.extract_strided_slice %564 {offsets = [0, 32], sizes = [2, 32], strides = [1, 1]} : vector<2x128xf32> to vector<2x32xf32>
    %cst_194 = arith.constant 0.000000e+00 : f32
    %574 = vector.broadcast %cst_194 : f32 to vector<2x32xf32>
    %575 = arith.subf %574, %573 : vector<2x32xf32>
    %576 = math.exp %575 : vector<2x32xf32>
    %cst_195 = arith.constant 1.000000e+00 : f32
    %577 = vector.broadcast %cst_195 : f32 to vector<2x32xf32>
    %578 = arith.addf %577, %576 : vector<2x32xf32>
    %cst_196 = arith.constant 1.000000e+00 : f32
    %579 = vector.broadcast %cst_196 : f32 to vector<2x32xf32>
    %580 = arith.divf %579, %578 : vector<2x32xf32>
    %581 = vector.extract_strided_slice %564 {offsets = [0, 64], sizes = [2, 32], strides = [1, 1]} : vector<2x128xf32> to vector<2x32xf32>
    %582 = math.tanh %581 : vector<2x32xf32>
    %583 = vector.extract_strided_slice %564 {offsets = [0, 96], sizes = [2, 32], strides = [1, 1]} : vector<2x128xf32> to vector<2x32xf32>
    %cst_197 = arith.constant 0.000000e+00 : f32
    %584 = vector.broadcast %cst_197 : f32 to vector<2x32xf32>
    %585 = arith.subf %584, %583 : vector<2x32xf32>
    %586 = math.exp %585 : vector<2x32xf32>
    %cst_198 = arith.constant 1.000000e+00 : f32
    %587 = vector.broadcast %cst_198 : f32 to vector<2x32xf32>
    %588 = arith.addf %587, %586 : vector<2x32xf32>
    %cst_199 = arith.constant 1.000000e+00 : f32
    %589 = vector.broadcast %cst_199 : f32 to vector<2x32xf32>
    %590 = arith.divf %589, %588 : vector<2x32xf32>
    %591 = arith.mulf %580, %516 : vector<2x32xf32>
    %592 = arith.mulf %572, %582 : vector<2x32xf32>
    %593 = arith.addf %591, %592 : vector<2x32xf32>
    %594 = math.tanh %593 : vector<2x32xf32>
    %595 = arith.mulf %590, %594 : vector<2x32xf32>
    %cst_200 = arith.constant dense<0.000000e+00> : vector<2x128xf32>
    %596 = tpu.matmul %595, %2, %cst_200 {dimension_numbers = #tpu.dot_dimension_numbers<[1], [0], [0], [1], [0, 0, 1, 1], [], []>} : vector<2x32xf32>, vector<32x128xf32>, vector<2x128xf32> -> vector<2x128xf32>
    %cst_201 = arith.constant dense<0.000000e+00> : vector<2x128xf32>
    %597 = tpu.matmul %554, %6, %cst_201 {dimension_numbers = #tpu.dot_dimension_numbers<[1], [0], [0], [1], [0, 0, 1, 1], [], []>} : vector<2x32xf32>, vector<32x128xf32>, vector<2x128xf32> -> vector<2x128xf32>
    %598 = arith.addf %596, %597 : vector<2x128xf32>
    %599 = vector.broadcast %10 : vector<1x128xf32> to vector<2x128xf32>
    %600 = arith.addf %598, %599 : vector<2x128xf32>
    %601 = vector.extract_strided_slice %600 {offsets = [0, 0], sizes = [2, 32], strides = [1, 1]} : vector<2x128xf32> to vector<2x32xf32>
    %cst_202 = arith.constant 0.000000e+00 : f32
    %602 = vector.broadcast %cst_202 : f32 to vector<2x32xf32>
    %603 = arith.subf %602, %601 : vector<2x32xf32>
    %604 = math.exp %603 : vector<2x32xf32>
    %cst_203 = arith.constant 1.000000e+00 : f32
    %605 = vector.broadcast %cst_203 : f32 to vector<2x32xf32>
    %606 = arith.addf %605, %604 : vector<2x32xf32>
    %cst_204 = arith.constant 1.000000e+00 : f32
    %607 = vector.broadcast %cst_204 : f32 to vector<2x32xf32>
    %608 = arith.divf %607, %606 : vector<2x32xf32>
    %609 = vector.extract_strided_slice %600 {offsets = [0, 32], sizes = [2, 32], strides = [1, 1]} : vector<2x128xf32> to vector<2x32xf32>
    %cst_205 = arith.constant 0.000000e+00 : f32
    %610 = vector.broadcast %cst_205 : f32 to vector<2x32xf32>
    %611 = arith.subf %610, %609 : vector<2x32xf32>
    %612 = math.exp %611 : vector<2x32xf32>
    %cst_206 = arith.constant 1.000000e+00 : f32
    %613 = vector.broadcast %cst_206 : f32 to vector<2x32xf32>
    %614 = arith.addf %613, %612 : vector<2x32xf32>
    %cst_207 = arith.constant 1.000000e+00 : f32
    %615 = vector.broadcast %cst_207 : f32 to vector<2x32xf32>
    %616 = arith.divf %615, %614 : vector<2x32xf32>
    %617 = vector.extract_strided_slice %600 {offsets = [0, 64], sizes = [2, 32], strides = [1, 1]} : vector<2x128xf32> to vector<2x32xf32>
    %618 = math.tanh %617 : vector<2x32xf32>
    %619 = vector.extract_strided_slice %600 {offsets = [0, 96], sizes = [2, 32], strides = [1, 1]} : vector<2x128xf32> to vector<2x32xf32>
    %cst_208 = arith.constant 0.000000e+00 : f32
    %620 = vector.broadcast %cst_208 : f32 to vector<2x32xf32>
    %621 = arith.subf %620, %619 : vector<2x32xf32>
    %622 = math.exp %621 : vector<2x32xf32>
    %cst_209 = arith.constant 1.000000e+00 : f32
    %623 = vector.broadcast %cst_209 : f32 to vector<2x32xf32>
    %624 = arith.addf %623, %622 : vector<2x32xf32>
    %cst_210 = arith.constant 1.000000e+00 : f32
    %625 = vector.broadcast %cst_210 : f32 to vector<2x32xf32>
    %626 = arith.divf %625, %624 : vector<2x32xf32>
    %627 = arith.mulf %616, %552 : vector<2x32xf32>
    %628 = arith.mulf %608, %618 : vector<2x32xf32>
    %629 = arith.addf %627, %628 : vector<2x32xf32>
    %630 = math.tanh %629 : vector<2x32xf32>
    %631 = arith.mulf %626, %630 : vector<2x32xf32>
    %632 = arith.addf %555, %631 : vector<2x32xf32>
    %c8 = arith.constant 8 : index
    %c0_211 = arith.constant 0 : index
    %c0_212 = arith.constant 0 : index
    %633 = vector.load %arg1[%c8, %c0_211, %c0_212] : memref<16x2x1xf32, #tpu.memory_space<vmem>>, vector<1x2x1xf32>
    %634 = vector.shape_cast %633 : vector<1x2x1xf32> to vector<2x1xf32>
    %635 = vector.broadcast %634 : vector<2x1xf32> to vector<2x128xf32>
    %636 = vector.broadcast %0 : vector<1x128xf32> to vector<2x128xf32>
    %637 = arith.mulf %635, %636 : vector<2x128xf32>
    %cst_213 = arith.constant dense<0.000000e+00> : vector<2x128xf32>
    %638 = tpu.matmul %595, %4, %cst_213 {dimension_numbers = #tpu.dot_dimension_numbers<[1], [0], [0], [1], [0, 0, 1, 1], [], []>} : vector<2x32xf32>, vector<32x128xf32>, vector<2x128xf32> -> vector<2x128xf32>
    %639 = arith.addf %637, %638 : vector<2x128xf32>
    %640 = vector.broadcast %8 : vector<1x128xf32> to vector<2x128xf32>
    %641 = arith.addf %639, %640 : vector<2x128xf32>
    %642 = vector.extract_strided_slice %641 {offsets = [0, 0], sizes = [2, 32], strides = [1, 1]} : vector<2x128xf32> to vector<2x32xf32>
    %cst_214 = arith.constant 0.000000e+00 : f32
    %643 = vector.broadcast %cst_214 : f32 to vector<2x32xf32>
    %644 = arith.subf %643, %642 : vector<2x32xf32>
    %645 = math.exp %644 : vector<2x32xf32>
    %cst_215 = arith.constant 1.000000e+00 : f32
    %646 = vector.broadcast %cst_215 : f32 to vector<2x32xf32>
    %647 = arith.addf %646, %645 : vector<2x32xf32>
    %cst_216 = arith.constant 1.000000e+00 : f32
    %648 = vector.broadcast %cst_216 : f32 to vector<2x32xf32>
    %649 = arith.divf %648, %647 : vector<2x32xf32>
    %650 = vector.extract_strided_slice %641 {offsets = [0, 32], sizes = [2, 32], strides = [1, 1]} : vector<2x128xf32> to vector<2x32xf32>
    %cst_217 = arith.constant 0.000000e+00 : f32
    %651 = vector.broadcast %cst_217 : f32 to vector<2x32xf32>
    %652 = arith.subf %651, %650 : vector<2x32xf32>
    %653 = math.exp %652 : vector<2x32xf32>
    %cst_218 = arith.constant 1.000000e+00 : f32
    %654 = vector.broadcast %cst_218 : f32 to vector<2x32xf32>
    %655 = arith.addf %654, %653 : vector<2x32xf32>
    %cst_219 = arith.constant 1.000000e+00 : f32
    %656 = vector.broadcast %cst_219 : f32 to vector<2x32xf32>
    %657 = arith.divf %656, %655 : vector<2x32xf32>
    %658 = vector.extract_strided_slice %641 {offsets = [0, 64], sizes = [2, 32], strides = [1, 1]} : vector<2x128xf32> to vector<2x32xf32>
    %659 = math.tanh %658 : vector<2x32xf32>
    %660 = vector.extract_strided_slice %641 {offsets = [0, 96], sizes = [2, 32], strides = [1, 1]} : vector<2x128xf32> to vector<2x32xf32>
    %cst_220 = arith.constant 0.000000e+00 : f32
    %661 = vector.broadcast %cst_220 : f32 to vector<2x32xf32>
    %662 = arith.subf %661, %660 : vector<2x32xf32>
    %663 = math.exp %662 : vector<2x32xf32>
    %cst_221 = arith.constant 1.000000e+00 : f32
    %664 = vector.broadcast %cst_221 : f32 to vector<2x32xf32>
    %665 = arith.addf %664, %663 : vector<2x32xf32>
    %cst_222 = arith.constant 1.000000e+00 : f32
    %666 = vector.broadcast %cst_222 : f32 to vector<2x32xf32>
    %667 = arith.divf %666, %665 : vector<2x32xf32>
    %668 = arith.mulf %657, %593 : vector<2x32xf32>
    %669 = arith.mulf %649, %659 : vector<2x32xf32>
    %670 = arith.addf %668, %669 : vector<2x32xf32>
    %671 = math.tanh %670 : vector<2x32xf32>
    %672 = arith.mulf %667, %671 : vector<2x32xf32>
    %cst_223 = arith.constant dense<0.000000e+00> : vector<2x128xf32>
    %673 = tpu.matmul %672, %2, %cst_223 {dimension_numbers = #tpu.dot_dimension_numbers<[1], [0], [0], [1], [0, 0, 1, 1], [], []>} : vector<2x32xf32>, vector<32x128xf32>, vector<2x128xf32> -> vector<2x128xf32>
    %cst_224 = arith.constant dense<0.000000e+00> : vector<2x128xf32>
    %674 = tpu.matmul %631, %6, %cst_224 {dimension_numbers = #tpu.dot_dimension_numbers<[1], [0], [0], [1], [0, 0, 1, 1], [], []>} : vector<2x32xf32>, vector<32x128xf32>, vector<2x128xf32> -> vector<2x128xf32>
    %675 = arith.addf %673, %674 : vector<2x128xf32>
    %676 = vector.broadcast %10 : vector<1x128xf32> to vector<2x128xf32>
    %677 = arith.addf %675, %676 : vector<2x128xf32>
    %678 = vector.extract_strided_slice %677 {offsets = [0, 0], sizes = [2, 32], strides = [1, 1]} : vector<2x128xf32> to vector<2x32xf32>
    %cst_225 = arith.constant 0.000000e+00 : f32
    %679 = vector.broadcast %cst_225 : f32 to vector<2x32xf32>
    %680 = arith.subf %679, %678 : vector<2x32xf32>
    %681 = math.exp %680 : vector<2x32xf32>
    %cst_226 = arith.constant 1.000000e+00 : f32
    %682 = vector.broadcast %cst_226 : f32 to vector<2x32xf32>
    %683 = arith.addf %682, %681 : vector<2x32xf32>
    %cst_227 = arith.constant 1.000000e+00 : f32
    %684 = vector.broadcast %cst_227 : f32 to vector<2x32xf32>
    %685 = arith.divf %684, %683 : vector<2x32xf32>
    %686 = vector.extract_strided_slice %677 {offsets = [0, 32], sizes = [2, 32], strides = [1, 1]} : vector<2x128xf32> to vector<2x32xf32>
    %cst_228 = arith.constant 0.000000e+00 : f32
    %687 = vector.broadcast %cst_228 : f32 to vector<2x32xf32>
    %688 = arith.subf %687, %686 : vector<2x32xf32>
    %689 = math.exp %688 : vector<2x32xf32>
    %cst_229 = arith.constant 1.000000e+00 : f32
    %690 = vector.broadcast %cst_229 : f32 to vector<2x32xf32>
    %691 = arith.addf %690, %689 : vector<2x32xf32>
    %cst_230 = arith.constant 1.000000e+00 : f32
    %692 = vector.broadcast %cst_230 : f32 to vector<2x32xf32>
    %693 = arith.divf %692, %691 : vector<2x32xf32>
    %694 = vector.extract_strided_slice %677 {offsets = [0, 64], sizes = [2, 32], strides = [1, 1]} : vector<2x128xf32> to vector<2x32xf32>
    %695 = math.tanh %694 : vector<2x32xf32>
    %696 = vector.extract_strided_slice %677 {offsets = [0, 96], sizes = [2, 32], strides = [1, 1]} : vector<2x128xf32> to vector<2x32xf32>
    %cst_231 = arith.constant 0.000000e+00 : f32
    %697 = vector.broadcast %cst_231 : f32 to vector<2x32xf32>
    %698 = arith.subf %697, %696 : vector<2x32xf32>
    %699 = math.exp %698 : vector<2x32xf32>
    %cst_232 = arith.constant 1.000000e+00 : f32
    %700 = vector.broadcast %cst_232 : f32 to vector<2x32xf32>
    %701 = arith.addf %700, %699 : vector<2x32xf32>
    %cst_233 = arith.constant 1.000000e+00 : f32
    %702 = vector.broadcast %cst_233 : f32 to vector<2x32xf32>
    %703 = arith.divf %702, %701 : vector<2x32xf32>
    %704 = arith.mulf %693, %629 : vector<2x32xf32>
    %705 = arith.mulf %685, %695 : vector<2x32xf32>
    %706 = arith.addf %704, %705 : vector<2x32xf32>
    %707 = math.tanh %706 : vector<2x32xf32>
    %708 = arith.mulf %703, %707 : vector<2x32xf32>
    %709 = arith.addf %632, %708 : vector<2x32xf32>
    %c9 = arith.constant 9 : index
    %c0_234 = arith.constant 0 : index
    %c0_235 = arith.constant 0 : index
    %710 = vector.load %arg1[%c9, %c0_234, %c0_235] : memref<16x2x1xf32, #tpu.memory_space<vmem>>, vector<1x2x1xf32>
    %711 = vector.shape_cast %710 : vector<1x2x1xf32> to vector<2x1xf32>
    %712 = vector.broadcast %711 : vector<2x1xf32> to vector<2x128xf32>
    %713 = vector.broadcast %0 : vector<1x128xf32> to vector<2x128xf32>
    %714 = arith.mulf %712, %713 : vector<2x128xf32>
    %cst_236 = arith.constant dense<0.000000e+00> : vector<2x128xf32>
    %715 = tpu.matmul %672, %4, %cst_236 {dimension_numbers = #tpu.dot_dimension_numbers<[1], [0], [0], [1], [0, 0, 1, 1], [], []>} : vector<2x32xf32>, vector<32x128xf32>, vector<2x128xf32> -> vector<2x128xf32>
    %716 = arith.addf %714, %715 : vector<2x128xf32>
    %717 = vector.broadcast %8 : vector<1x128xf32> to vector<2x128xf32>
    %718 = arith.addf %716, %717 : vector<2x128xf32>
    %719 = vector.extract_strided_slice %718 {offsets = [0, 0], sizes = [2, 32], strides = [1, 1]} : vector<2x128xf32> to vector<2x32xf32>
    %cst_237 = arith.constant 0.000000e+00 : f32
    %720 = vector.broadcast %cst_237 : f32 to vector<2x32xf32>
    %721 = arith.subf %720, %719 : vector<2x32xf32>
    %722 = math.exp %721 : vector<2x32xf32>
    %cst_238 = arith.constant 1.000000e+00 : f32
    %723 = vector.broadcast %cst_238 : f32 to vector<2x32xf32>
    %724 = arith.addf %723, %722 : vector<2x32xf32>
    %cst_239 = arith.constant 1.000000e+00 : f32
    %725 = vector.broadcast %cst_239 : f32 to vector<2x32xf32>
    %726 = arith.divf %725, %724 : vector<2x32xf32>
    %727 = vector.extract_strided_slice %718 {offsets = [0, 32], sizes = [2, 32], strides = [1, 1]} : vector<2x128xf32> to vector<2x32xf32>
    %cst_240 = arith.constant 0.000000e+00 : f32
    %728 = vector.broadcast %cst_240 : f32 to vector<2x32xf32>
    %729 = arith.subf %728, %727 : vector<2x32xf32>
    %730 = math.exp %729 : vector<2x32xf32>
    %cst_241 = arith.constant 1.000000e+00 : f32
    %731 = vector.broadcast %cst_241 : f32 to vector<2x32xf32>
    %732 = arith.addf %731, %730 : vector<2x32xf32>
    %cst_242 = arith.constant 1.000000e+00 : f32
    %733 = vector.broadcast %cst_242 : f32 to vector<2x32xf32>
    %734 = arith.divf %733, %732 : vector<2x32xf32>
    %735 = vector.extract_strided_slice %718 {offsets = [0, 64], sizes = [2, 32], strides = [1, 1]} : vector<2x128xf32> to vector<2x32xf32>
    %736 = math.tanh %735 : vector<2x32xf32>
    %737 = vector.extract_strided_slice %718 {offsets = [0, 96], sizes = [2, 32], strides = [1, 1]} : vector<2x128xf32> to vector<2x32xf32>
    %cst_243 = arith.constant 0.000000e+00 : f32
    %738 = vector.broadcast %cst_243 : f32 to vector<2x32xf32>
    %739 = arith.subf %738, %737 : vector<2x32xf32>
    %740 = math.exp %739 : vector<2x32xf32>
    %cst_244 = arith.constant 1.000000e+00 : f32
    %741 = vector.broadcast %cst_244 : f32 to vector<2x32xf32>
    %742 = arith.addf %741, %740 : vector<2x32xf32>
    %cst_245 = arith.constant 1.000000e+00 : f32
    %743 = vector.broadcast %cst_245 : f32 to vector<2x32xf32>
    %744 = arith.divf %743, %742 : vector<2x32xf32>
    %745 = arith.mulf %734, %670 : vector<2x32xf32>
    %746 = arith.mulf %726, %736 : vector<2x32xf32>
    %747 = arith.addf %745, %746 : vector<2x32xf32>
    %748 = math.tanh %747 : vector<2x32xf32>
    %749 = arith.mulf %744, %748 : vector<2x32xf32>
    %cst_246 = arith.constant dense<0.000000e+00> : vector<2x128xf32>
    %750 = tpu.matmul %749, %2, %cst_246 {dimension_numbers = #tpu.dot_dimension_numbers<[1], [0], [0], [1], [0, 0, 1, 1], [], []>} : vector<2x32xf32>, vector<32x128xf32>, vector<2x128xf32> -> vector<2x128xf32>
    %cst_247 = arith.constant dense<0.000000e+00> : vector<2x128xf32>
    %751 = tpu.matmul %708, %6, %cst_247 {dimension_numbers = #tpu.dot_dimension_numbers<[1], [0], [0], [1], [0, 0, 1, 1], [], []>} : vector<2x32xf32>, vector<32x128xf32>, vector<2x128xf32> -> vector<2x128xf32>
    %752 = arith.addf %750, %751 : vector<2x128xf32>
    %753 = vector.broadcast %10 : vector<1x128xf32> to vector<2x128xf32>
    %754 = arith.addf %752, %753 : vector<2x128xf32>
    %755 = vector.extract_strided_slice %754 {offsets = [0, 0], sizes = [2, 32], strides = [1, 1]} : vector<2x128xf32> to vector<2x32xf32>
    %cst_248 = arith.constant 0.000000e+00 : f32
    %756 = vector.broadcast %cst_248 : f32 to vector<2x32xf32>
    %757 = arith.subf %756, %755 : vector<2x32xf32>
    %758 = math.exp %757 : vector<2x32xf32>
    %cst_249 = arith.constant 1.000000e+00 : f32
    %759 = vector.broadcast %cst_249 : f32 to vector<2x32xf32>
    %760 = arith.addf %759, %758 : vector<2x32xf32>
    %cst_250 = arith.constant 1.000000e+00 : f32
    %761 = vector.broadcast %cst_250 : f32 to vector<2x32xf32>
    %762 = arith.divf %761, %760 : vector<2x32xf32>
    %763 = vector.extract_strided_slice %754 {offsets = [0, 32], sizes = [2, 32], strides = [1, 1]} : vector<2x128xf32> to vector<2x32xf32>
    %cst_251 = arith.constant 0.000000e+00 : f32
    %764 = vector.broadcast %cst_251 : f32 to vector<2x32xf32>
    %765 = arith.subf %764, %763 : vector<2x32xf32>
    %766 = math.exp %765 : vector<2x32xf32>
    %cst_252 = arith.constant 1.000000e+00 : f32
    %767 = vector.broadcast %cst_252 : f32 to vector<2x32xf32>
    %768 = arith.addf %767, %766 : vector<2x32xf32>
    %cst_253 = arith.constant 1.000000e+00 : f32
    %769 = vector.broadcast %cst_253 : f32 to vector<2x32xf32>
    %770 = arith.divf %769, %768 : vector<2x32xf32>
    %771 = vector.extract_strided_slice %754 {offsets = [0, 64], sizes = [2, 32], strides = [1, 1]} : vector<2x128xf32> to vector<2x32xf32>
    %772 = math.tanh %771 : vector<2x32xf32>
    %773 = vector.extract_strided_slice %754 {offsets = [0, 96], sizes = [2, 32], strides = [1, 1]} : vector<2x128xf32> to vector<2x32xf32>
    %cst_254 = arith.constant 0.000000e+00 : f32
    %774 = vector.broadcast %cst_254 : f32 to vector<2x32xf32>
    %775 = arith.subf %774, %773 : vector<2x32xf32>
    %776 = math.exp %775 : vector<2x32xf32>
    %cst_255 = arith.constant 1.000000e+00 : f32
    %777 = vector.broadcast %cst_255 : f32 to vector<2x32xf32>
    %778 = arith.addf %777, %776 : vector<2x32xf32>
    %cst_256 = arith.constant 1.000000e+00 : f32
    %779 = vector.broadcast %cst_256 : f32 to vector<2x32xf32>
    %780 = arith.divf %779, %778 : vector<2x32xf32>
    %781 = arith.mulf %770, %706 : vector<2x32xf32>
    %782 = arith.mulf %762, %772 : vector<2x32xf32>
    %783 = arith.addf %781, %782 : vector<2x32xf32>
    %784 = math.tanh %783 : vector<2x32xf32>
    %785 = arith.mulf %780, %784 : vector<2x32xf32>
    %786 = arith.addf %709, %785 : vector<2x32xf32>
    %c10 = arith.constant 10 : index
    %c0_257 = arith.constant 0 : index
    %c0_258 = arith.constant 0 : index
    %787 = vector.load %arg1[%c10, %c0_257, %c0_258] : memref<16x2x1xf32, #tpu.memory_space<vmem>>, vector<1x2x1xf32>
    %788 = vector.shape_cast %787 : vector<1x2x1xf32> to vector<2x1xf32>
    %789 = vector.broadcast %788 : vector<2x1xf32> to vector<2x128xf32>
    %790 = vector.broadcast %0 : vector<1x128xf32> to vector<2x128xf32>
    %791 = arith.mulf %789, %790 : vector<2x128xf32>
    %cst_259 = arith.constant dense<0.000000e+00> : vector<2x128xf32>
    %792 = tpu.matmul %749, %4, %cst_259 {dimension_numbers = #tpu.dot_dimension_numbers<[1], [0], [0], [1], [0, 0, 1, 1], [], []>} : vector<2x32xf32>, vector<32x128xf32>, vector<2x128xf32> -> vector<2x128xf32>
    %793 = arith.addf %791, %792 : vector<2x128xf32>
    %794 = vector.broadcast %8 : vector<1x128xf32> to vector<2x128xf32>
    %795 = arith.addf %793, %794 : vector<2x128xf32>
    %796 = vector.extract_strided_slice %795 {offsets = [0, 0], sizes = [2, 32], strides = [1, 1]} : vector<2x128xf32> to vector<2x32xf32>
    %cst_260 = arith.constant 0.000000e+00 : f32
    %797 = vector.broadcast %cst_260 : f32 to vector<2x32xf32>
    %798 = arith.subf %797, %796 : vector<2x32xf32>
    %799 = math.exp %798 : vector<2x32xf32>
    %cst_261 = arith.constant 1.000000e+00 : f32
    %800 = vector.broadcast %cst_261 : f32 to vector<2x32xf32>
    %801 = arith.addf %800, %799 : vector<2x32xf32>
    %cst_262 = arith.constant 1.000000e+00 : f32
    %802 = vector.broadcast %cst_262 : f32 to vector<2x32xf32>
    %803 = arith.divf %802, %801 : vector<2x32xf32>
    %804 = vector.extract_strided_slice %795 {offsets = [0, 32], sizes = [2, 32], strides = [1, 1]} : vector<2x128xf32> to vector<2x32xf32>
    %cst_263 = arith.constant 0.000000e+00 : f32
    %805 = vector.broadcast %cst_263 : f32 to vector<2x32xf32>
    %806 = arith.subf %805, %804 : vector<2x32xf32>
    %807 = math.exp %806 : vector<2x32xf32>
    %cst_264 = arith.constant 1.000000e+00 : f32
    %808 = vector.broadcast %cst_264 : f32 to vector<2x32xf32>
    %809 = arith.addf %808, %807 : vector<2x32xf32>
    %cst_265 = arith.constant 1.000000e+00 : f32
    %810 = vector.broadcast %cst_265 : f32 to vector<2x32xf32>
    %811 = arith.divf %810, %809 : vector<2x32xf32>
    %812 = vector.extract_strided_slice %795 {offsets = [0, 64], sizes = [2, 32], strides = [1, 1]} : vector<2x128xf32> to vector<2x32xf32>
    %813 = math.tanh %812 : vector<2x32xf32>
    %814 = vector.extract_strided_slice %795 {offsets = [0, 96], sizes = [2, 32], strides = [1, 1]} : vector<2x128xf32> to vector<2x32xf32>
    %cst_266 = arith.constant 0.000000e+00 : f32
    %815 = vector.broadcast %cst_266 : f32 to vector<2x32xf32>
    %816 = arith.subf %815, %814 : vector<2x32xf32>
    %817 = math.exp %816 : vector<2x32xf32>
    %cst_267 = arith.constant 1.000000e+00 : f32
    %818 = vector.broadcast %cst_267 : f32 to vector<2x32xf32>
    %819 = arith.addf %818, %817 : vector<2x32xf32>
    %cst_268 = arith.constant 1.000000e+00 : f32
    %820 = vector.broadcast %cst_268 : f32 to vector<2x32xf32>
    %821 = arith.divf %820, %819 : vector<2x32xf32>
    %822 = arith.mulf %811, %747 : vector<2x32xf32>
    %823 = arith.mulf %803, %813 : vector<2x32xf32>
    %824 = arith.addf %822, %823 : vector<2x32xf32>
    %825 = math.tanh %824 : vector<2x32xf32>
    %826 = arith.mulf %821, %825 : vector<2x32xf32>
    %cst_269 = arith.constant dense<0.000000e+00> : vector<2x128xf32>
    %827 = tpu.matmul %826, %2, %cst_269 {dimension_numbers = #tpu.dot_dimension_numbers<[1], [0], [0], [1], [0, 0, 1, 1], [], []>} : vector<2x32xf32>, vector<32x128xf32>, vector<2x128xf32> -> vector<2x128xf32>
    %cst_270 = arith.constant dense<0.000000e+00> : vector<2x128xf32>
    %828 = tpu.matmul %785, %6, %cst_270 {dimension_numbers = #tpu.dot_dimension_numbers<[1], [0], [0], [1], [0, 0, 1, 1], [], []>} : vector<2x32xf32>, vector<32x128xf32>, vector<2x128xf32> -> vector<2x128xf32>
    %829 = arith.addf %827, %828 : vector<2x128xf32>
    %830 = vector.broadcast %10 : vector<1x128xf32> to vector<2x128xf32>
    %831 = arith.addf %829, %830 : vector<2x128xf32>
    %832 = vector.extract_strided_slice %831 {offsets = [0, 0], sizes = [2, 32], strides = [1, 1]} : vector<2x128xf32> to vector<2x32xf32>
    %cst_271 = arith.constant 0.000000e+00 : f32
    %833 = vector.broadcast %cst_271 : f32 to vector<2x32xf32>
    %834 = arith.subf %833, %832 : vector<2x32xf32>
    %835 = math.exp %834 : vector<2x32xf32>
    %cst_272 = arith.constant 1.000000e+00 : f32
    %836 = vector.broadcast %cst_272 : f32 to vector<2x32xf32>
    %837 = arith.addf %836, %835 : vector<2x32xf32>
    %cst_273 = arith.constant 1.000000e+00 : f32
    %838 = vector.broadcast %cst_273 : f32 to vector<2x32xf32>
    %839 = arith.divf %838, %837 : vector<2x32xf32>
    %840 = vector.extract_strided_slice %831 {offsets = [0, 32], sizes = [2, 32], strides = [1, 1]} : vector<2x128xf32> to vector<2x32xf32>
    %cst_274 = arith.constant 0.000000e+00 : f32
    %841 = vector.broadcast %cst_274 : f32 to vector<2x32xf32>
    %842 = arith.subf %841, %840 : vector<2x32xf32>
    %843 = math.exp %842 : vector<2x32xf32>
    %cst_275 = arith.constant 1.000000e+00 : f32
    %844 = vector.broadcast %cst_275 : f32 to vector<2x32xf32>
    %845 = arith.addf %844, %843 : vector<2x32xf32>
    %cst_276 = arith.constant 1.000000e+00 : f32
    %846 = vector.broadcast %cst_276 : f32 to vector<2x32xf32>
    %847 = arith.divf %846, %845 : vector<2x32xf32>
    %848 = vector.extract_strided_slice %831 {offsets = [0, 64], sizes = [2, 32], strides = [1, 1]} : vector<2x128xf32> to vector<2x32xf32>
    %849 = math.tanh %848 : vector<2x32xf32>
    %850 = vector.extract_strided_slice %831 {offsets = [0, 96], sizes = [2, 32], strides = [1, 1]} : vector<2x128xf32> to vector<2x32xf32>
    %cst_277 = arith.constant 0.000000e+00 : f32
    %851 = vector.broadcast %cst_277 : f32 to vector<2x32xf32>
    %852 = arith.subf %851, %850 : vector<2x32xf32>
    %853 = math.exp %852 : vector<2x32xf32>
    %cst_278 = arith.constant 1.000000e+00 : f32
    %854 = vector.broadcast %cst_278 : f32 to vector<2x32xf32>
    %855 = arith.addf %854, %853 : vector<2x32xf32>
    %cst_279 = arith.constant 1.000000e+00 : f32
    %856 = vector.broadcast %cst_279 : f32 to vector<2x32xf32>
    %857 = arith.divf %856, %855 : vector<2x32xf32>
    %858 = arith.mulf %847, %783 : vector<2x32xf32>
    %859 = arith.mulf %839, %849 : vector<2x32xf32>
    %860 = arith.addf %858, %859 : vector<2x32xf32>
    %861 = math.tanh %860 : vector<2x32xf32>
    %862 = arith.mulf %857, %861 : vector<2x32xf32>
    %863 = arith.addf %786, %862 : vector<2x32xf32>
    %c11 = arith.constant 11 : index
    %c0_280 = arith.constant 0 : index
    %c0_281 = arith.constant 0 : index
    %864 = vector.load %arg1[%c11, %c0_280, %c0_281] : memref<16x2x1xf32, #tpu.memory_space<vmem>>, vector<1x2x1xf32>
    %865 = vector.shape_cast %864 : vector<1x2x1xf32> to vector<2x1xf32>
    %866 = vector.broadcast %865 : vector<2x1xf32> to vector<2x128xf32>
    %867 = vector.broadcast %0 : vector<1x128xf32> to vector<2x128xf32>
    %868 = arith.mulf %866, %867 : vector<2x128xf32>
    %cst_282 = arith.constant dense<0.000000e+00> : vector<2x128xf32>
    %869 = tpu.matmul %826, %4, %cst_282 {dimension_numbers = #tpu.dot_dimension_numbers<[1], [0], [0], [1], [0, 0, 1, 1], [], []>} : vector<2x32xf32>, vector<32x128xf32>, vector<2x128xf32> -> vector<2x128xf32>
    %870 = arith.addf %868, %869 : vector<2x128xf32>
    %871 = vector.broadcast %8 : vector<1x128xf32> to vector<2x128xf32>
    %872 = arith.addf %870, %871 : vector<2x128xf32>
    %873 = vector.extract_strided_slice %872 {offsets = [0, 0], sizes = [2, 32], strides = [1, 1]} : vector<2x128xf32> to vector<2x32xf32>
    %cst_283 = arith.constant 0.000000e+00 : f32
    %874 = vector.broadcast %cst_283 : f32 to vector<2x32xf32>
    %875 = arith.subf %874, %873 : vector<2x32xf32>
    %876 = math.exp %875 : vector<2x32xf32>
    %cst_284 = arith.constant 1.000000e+00 : f32
    %877 = vector.broadcast %cst_284 : f32 to vector<2x32xf32>
    %878 = arith.addf %877, %876 : vector<2x32xf32>
    %cst_285 = arith.constant 1.000000e+00 : f32
    %879 = vector.broadcast %cst_285 : f32 to vector<2x32xf32>
    %880 = arith.divf %879, %878 : vector<2x32xf32>
    %881 = vector.extract_strided_slice %872 {offsets = [0, 32], sizes = [2, 32], strides = [1, 1]} : vector<2x128xf32> to vector<2x32xf32>
    %cst_286 = arith.constant 0.000000e+00 : f32
    %882 = vector.broadcast %cst_286 : f32 to vector<2x32xf32>
    %883 = arith.subf %882, %881 : vector<2x32xf32>
    %884 = math.exp %883 : vector<2x32xf32>
    %cst_287 = arith.constant 1.000000e+00 : f32
    %885 = vector.broadcast %cst_287 : f32 to vector<2x32xf32>
    %886 = arith.addf %885, %884 : vector<2x32xf32>
    %cst_288 = arith.constant 1.000000e+00 : f32
    %887 = vector.broadcast %cst_288 : f32 to vector<2x32xf32>
    %888 = arith.divf %887, %886 : vector<2x32xf32>
    %889 = vector.extract_strided_slice %872 {offsets = [0, 64], sizes = [2, 32], strides = [1, 1]} : vector<2x128xf32> to vector<2x32xf32>
    %890 = math.tanh %889 : vector<2x32xf32>
    %891 = vector.extract_strided_slice %872 {offsets = [0, 96], sizes = [2, 32], strides = [1, 1]} : vector<2x128xf32> to vector<2x32xf32>
    %cst_289 = arith.constant 0.000000e+00 : f32
    %892 = vector.broadcast %cst_289 : f32 to vector<2x32xf32>
    %893 = arith.subf %892, %891 : vector<2x32xf32>
    %894 = math.exp %893 : vector<2x32xf32>
    %cst_290 = arith.constant 1.000000e+00 : f32
    %895 = vector.broadcast %cst_290 : f32 to vector<2x32xf32>
    %896 = arith.addf %895, %894 : vector<2x32xf32>
    %cst_291 = arith.constant 1.000000e+00 : f32
    %897 = vector.broadcast %cst_291 : f32 to vector<2x32xf32>
    %898 = arith.divf %897, %896 : vector<2x32xf32>
    %899 = arith.mulf %888, %824 : vector<2x32xf32>
    %900 = arith.mulf %880, %890 : vector<2x32xf32>
    %901 = arith.addf %899, %900 : vector<2x32xf32>
    %902 = math.tanh %901 : vector<2x32xf32>
    %903 = arith.mulf %898, %902 : vector<2x32xf32>
    %cst_292 = arith.constant dense<0.000000e+00> : vector<2x128xf32>
    %904 = tpu.matmul %903, %2, %cst_292 {dimension_numbers = #tpu.dot_dimension_numbers<[1], [0], [0], [1], [0, 0, 1, 1], [], []>} : vector<2x32xf32>, vector<32x128xf32>, vector<2x128xf32> -> vector<2x128xf32>
    %cst_293 = arith.constant dense<0.000000e+00> : vector<2x128xf32>
    %905 = tpu.matmul %862, %6, %cst_293 {dimension_numbers = #tpu.dot_dimension_numbers<[1], [0], [0], [1], [0, 0, 1, 1], [], []>} : vector<2x32xf32>, vector<32x128xf32>, vector<2x128xf32> -> vector<2x128xf32>
    %906 = arith.addf %904, %905 : vector<2x128xf32>
    %907 = vector.broadcast %10 : vector<1x128xf32> to vector<2x128xf32>
    %908 = arith.addf %906, %907 : vector<2x128xf32>
    %909 = vector.extract_strided_slice %908 {offsets = [0, 0], sizes = [2, 32], strides = [1, 1]} : vector<2x128xf32> to vector<2x32xf32>
    %cst_294 = arith.constant 0.000000e+00 : f32
    %910 = vector.broadcast %cst_294 : f32 to vector<2x32xf32>
    %911 = arith.subf %910, %909 : vector<2x32xf32>
    %912 = math.exp %911 : vector<2x32xf32>
    %cst_295 = arith.constant 1.000000e+00 : f32
    %913 = vector.broadcast %cst_295 : f32 to vector<2x32xf32>
    %914 = arith.addf %913, %912 : vector<2x32xf32>
    %cst_296 = arith.constant 1.000000e+00 : f32
    %915 = vector.broadcast %cst_296 : f32 to vector<2x32xf32>
    %916 = arith.divf %915, %914 : vector<2x32xf32>
    %917 = vector.extract_strided_slice %908 {offsets = [0, 32], sizes = [2, 32], strides = [1, 1]} : vector<2x128xf32> to vector<2x32xf32>
    %cst_297 = arith.constant 0.000000e+00 : f32
    %918 = vector.broadcast %cst_297 : f32 to vector<2x32xf32>
    %919 = arith.subf %918, %917 : vector<2x32xf32>
    %920 = math.exp %919 : vector<2x32xf32>
    %cst_298 = arith.constant 1.000000e+00 : f32
    %921 = vector.broadcast %cst_298 : f32 to vector<2x32xf32>
    %922 = arith.addf %921, %920 : vector<2x32xf32>
    %cst_299 = arith.constant 1.000000e+00 : f32
    %923 = vector.broadcast %cst_299 : f32 to vector<2x32xf32>
    %924 = arith.divf %923, %922 : vector<2x32xf32>
    %925 = vector.extract_strided_slice %908 {offsets = [0, 64], sizes = [2, 32], strides = [1, 1]} : vector<2x128xf32> to vector<2x32xf32>
    %926 = math.tanh %925 : vector<2x32xf32>
    %927 = vector.extract_strided_slice %908 {offsets = [0, 96], sizes = [2, 32], strides = [1, 1]} : vector<2x128xf32> to vector<2x32xf32>
    %cst_300 = arith.constant 0.000000e+00 : f32
    %928 = vector.broadcast %cst_300 : f32 to vector<2x32xf32>
    %929 = arith.subf %928, %927 : vector<2x32xf32>
    %930 = math.exp %929 : vector<2x32xf32>
    %cst_301 = arith.constant 1.000000e+00 : f32
    %931 = vector.broadcast %cst_301 : f32 to vector<2x32xf32>
    %932 = arith.addf %931, %930 : vector<2x32xf32>
    %cst_302 = arith.constant 1.000000e+00 : f32
    %933 = vector.broadcast %cst_302 : f32 to vector<2x32xf32>
    %934 = arith.divf %933, %932 : vector<2x32xf32>
    %935 = arith.mulf %924, %860 : vector<2x32xf32>
    %936 = arith.mulf %916, %926 : vector<2x32xf32>
    %937 = arith.addf %935, %936 : vector<2x32xf32>
    %938 = math.tanh %937 : vector<2x32xf32>
    %939 = arith.mulf %934, %938 : vector<2x32xf32>
    %940 = arith.addf %863, %939 : vector<2x32xf32>
    %c12 = arith.constant 12 : index
    %c0_303 = arith.constant 0 : index
    %c0_304 = arith.constant 0 : index
    %941 = vector.load %arg1[%c12, %c0_303, %c0_304] : memref<16x2x1xf32, #tpu.memory_space<vmem>>, vector<1x2x1xf32>
    %942 = vector.shape_cast %941 : vector<1x2x1xf32> to vector<2x1xf32>
    %943 = vector.broadcast %942 : vector<2x1xf32> to vector<2x128xf32>
    %944 = vector.broadcast %0 : vector<1x128xf32> to vector<2x128xf32>
    %945 = arith.mulf %943, %944 : vector<2x128xf32>
    %cst_305 = arith.constant dense<0.000000e+00> : vector<2x128xf32>
    %946 = tpu.matmul %903, %4, %cst_305 {dimension_numbers = #tpu.dot_dimension_numbers<[1], [0], [0], [1], [0, 0, 1, 1], [], []>} : vector<2x32xf32>, vector<32x128xf32>, vector<2x128xf32> -> vector<2x128xf32>
    %947 = arith.addf %945, %946 : vector<2x128xf32>
    %948 = vector.broadcast %8 : vector<1x128xf32> to vector<2x128xf32>
    %949 = arith.addf %947, %948 : vector<2x128xf32>
    %950 = vector.extract_strided_slice %949 {offsets = [0, 0], sizes = [2, 32], strides = [1, 1]} : vector<2x128xf32> to vector<2x32xf32>
    %cst_306 = arith.constant 0.000000e+00 : f32
    %951 = vector.broadcast %cst_306 : f32 to vector<2x32xf32>
    %952 = arith.subf %951, %950 : vector<2x32xf32>
    %953 = math.exp %952 : vector<2x32xf32>
    %cst_307 = arith.constant 1.000000e+00 : f32
    %954 = vector.broadcast %cst_307 : f32 to vector<2x32xf32>
    %955 = arith.addf %954, %953 : vector<2x32xf32>
    %cst_308 = arith.constant 1.000000e+00 : f32
    %956 = vector.broadcast %cst_308 : f32 to vector<2x32xf32>
    %957 = arith.divf %956, %955 : vector<2x32xf32>
    %958 = vector.extract_strided_slice %949 {offsets = [0, 32], sizes = [2, 32], strides = [1, 1]} : vector<2x128xf32> to vector<2x32xf32>
    %cst_309 = arith.constant 0.000000e+00 : f32
    %959 = vector.broadcast %cst_309 : f32 to vector<2x32xf32>
    %960 = arith.subf %959, %958 : vector<2x32xf32>
    %961 = math.exp %960 : vector<2x32xf32>
    %cst_310 = arith.constant 1.000000e+00 : f32
    %962 = vector.broadcast %cst_310 : f32 to vector<2x32xf32>
    %963 = arith.addf %962, %961 : vector<2x32xf32>
    %cst_311 = arith.constant 1.000000e+00 : f32
    %964 = vector.broadcast %cst_311 : f32 to vector<2x32xf32>
    %965 = arith.divf %964, %963 : vector<2x32xf32>
    %966 = vector.extract_strided_slice %949 {offsets = [0, 64], sizes = [2, 32], strides = [1, 1]} : vector<2x128xf32> to vector<2x32xf32>
    %967 = math.tanh %966 : vector<2x32xf32>
    %968 = vector.extract_strided_slice %949 {offsets = [0, 96], sizes = [2, 32], strides = [1, 1]} : vector<2x128xf32> to vector<2x32xf32>
    %cst_312 = arith.constant 0.000000e+00 : f32
    %969 = vector.broadcast %cst_312 : f32 to vector<2x32xf32>
    %970 = arith.subf %969, %968 : vector<2x32xf32>
    %971 = math.exp %970 : vector<2x32xf32>
    %cst_313 = arith.constant 1.000000e+00 : f32
    %972 = vector.broadcast %cst_313 : f32 to vector<2x32xf32>
    %973 = arith.addf %972, %971 : vector<2x32xf32>
    %cst_314 = arith.constant 1.000000e+00 : f32
    %974 = vector.broadcast %cst_314 : f32 to vector<2x32xf32>
    %975 = arith.divf %974, %973 : vector<2x32xf32>
    %976 = arith.mulf %965, %901 : vector<2x32xf32>
    %977 = arith.mulf %957, %967 : vector<2x32xf32>
    %978 = arith.addf %976, %977 : vector<2x32xf32>
    %979 = math.tanh %978 : vector<2x32xf32>
    %980 = arith.mulf %975, %979 : vector<2x32xf32>
    %cst_315 = arith.constant dense<0.000000e+00> : vector<2x128xf32>
    %981 = tpu.matmul %980, %2, %cst_315 {dimension_numbers = #tpu.dot_dimension_numbers<[1], [0], [0], [1], [0, 0, 1, 1], [], []>} : vector<2x32xf32>, vector<32x128xf32>, vector<2x128xf32> -> vector<2x128xf32>
    %cst_316 = arith.constant dense<0.000000e+00> : vector<2x128xf32>
    %982 = tpu.matmul %939, %6, %cst_316 {dimension_numbers = #tpu.dot_dimension_numbers<[1], [0], [0], [1], [0, 0, 1, 1], [], []>} : vector<2x32xf32>, vector<32x128xf32>, vector<2x128xf32> -> vector<2x128xf32>
    %983 = arith.addf %981, %982 : vector<2x128xf32>
    %984 = vector.broadcast %10 : vector<1x128xf32> to vector<2x128xf32>
    %985 = arith.addf %983, %984 : vector<2x128xf32>
    %986 = vector.extract_strided_slice %985 {offsets = [0, 0], sizes = [2, 32], strides = [1, 1]} : vector<2x128xf32> to vector<2x32xf32>
    %cst_317 = arith.constant 0.000000e+00 : f32
    %987 = vector.broadcast %cst_317 : f32 to vector<2x32xf32>
    %988 = arith.subf %987, %986 : vector<2x32xf32>
    %989 = math.exp %988 : vector<2x32xf32>
    %cst_318 = arith.constant 1.000000e+00 : f32
    %990 = vector.broadcast %cst_318 : f32 to vector<2x32xf32>
    %991 = arith.addf %990, %989 : vector<2x32xf32>
    %cst_319 = arith.constant 1.000000e+00 : f32
    %992 = vector.broadcast %cst_319 : f32 to vector<2x32xf32>
    %993 = arith.divf %992, %991 : vector<2x32xf32>
    %994 = vector.extract_strided_slice %985 {offsets = [0, 32], sizes = [2, 32], strides = [1, 1]} : vector<2x128xf32> to vector<2x32xf32>
    %cst_320 = arith.constant 0.000000e+00 : f32
    %995 = vector.broadcast %cst_320 : f32 to vector<2x32xf32>
    %996 = arith.subf %995, %994 : vector<2x32xf32>
    %997 = math.exp %996 : vector<2x32xf32>
    %cst_321 = arith.constant 1.000000e+00 : f32
    %998 = vector.broadcast %cst_321 : f32 to vector<2x32xf32>
    %999 = arith.addf %998, %997 : vector<2x32xf32>
    %cst_322 = arith.constant 1.000000e+00 : f32
    %1000 = vector.broadcast %cst_322 : f32 to vector<2x32xf32>
    %1001 = arith.divf %1000, %999 : vector<2x32xf32>
    %1002 = vector.extract_strided_slice %985 {offsets = [0, 64], sizes = [2, 32], strides = [1, 1]} : vector<2x128xf32> to vector<2x32xf32>
    %1003 = math.tanh %1002 : vector<2x32xf32>
    %1004 = vector.extract_strided_slice %985 {offsets = [0, 96], sizes = [2, 32], strides = [1, 1]} : vector<2x128xf32> to vector<2x32xf32>
    %cst_323 = arith.constant 0.000000e+00 : f32
    %1005 = vector.broadcast %cst_323 : f32 to vector<2x32xf32>
    %1006 = arith.subf %1005, %1004 : vector<2x32xf32>
    %1007 = math.exp %1006 : vector<2x32xf32>
    %cst_324 = arith.constant 1.000000e+00 : f32
    %1008 = vector.broadcast %cst_324 : f32 to vector<2x32xf32>
    %1009 = arith.addf %1008, %1007 : vector<2x32xf32>
    %cst_325 = arith.constant 1.000000e+00 : f32
    %1010 = vector.broadcast %cst_325 : f32 to vector<2x32xf32>
    %1011 = arith.divf %1010, %1009 : vector<2x32xf32>
    %1012 = arith.mulf %1001, %937 : vector<2x32xf32>
    %1013 = arith.mulf %993, %1003 : vector<2x32xf32>
    %1014 = arith.addf %1012, %1013 : vector<2x32xf32>
    %1015 = math.tanh %1014 : vector<2x32xf32>
    %1016 = arith.mulf %1011, %1015 : vector<2x32xf32>
    %1017 = arith.addf %940, %1016 : vector<2x32xf32>
    %c13 = arith.constant 13 : index
    %c0_326 = arith.constant 0 : index
    %c0_327 = arith.constant 0 : index
    %1018 = vector.load %arg1[%c13, %c0_326, %c0_327] : memref<16x2x1xf32, #tpu.memory_space<vmem>>, vector<1x2x1xf32>
    %1019 = vector.shape_cast %1018 : vector<1x2x1xf32> to vector<2x1xf32>
    %1020 = vector.broadcast %1019 : vector<2x1xf32> to vector<2x128xf32>
    %1021 = vector.broadcast %0 : vector<1x128xf32> to vector<2x128xf32>
    %1022 = arith.mulf %1020, %1021 : vector<2x128xf32>
    %cst_328 = arith.constant dense<0.000000e+00> : vector<2x128xf32>
    %1023 = tpu.matmul %980, %4, %cst_328 {dimension_numbers = #tpu.dot_dimension_numbers<[1], [0], [0], [1], [0, 0, 1, 1], [], []>} : vector<2x32xf32>, vector<32x128xf32>, vector<2x128xf32> -> vector<2x128xf32>
    %1024 = arith.addf %1022, %1023 : vector<2x128xf32>
    %1025 = vector.broadcast %8 : vector<1x128xf32> to vector<2x128xf32>
    %1026 = arith.addf %1024, %1025 : vector<2x128xf32>
    %1027 = vector.extract_strided_slice %1026 {offsets = [0, 0], sizes = [2, 32], strides = [1, 1]} : vector<2x128xf32> to vector<2x32xf32>
    %cst_329 = arith.constant 0.000000e+00 : f32
    %1028 = vector.broadcast %cst_329 : f32 to vector<2x32xf32>
    %1029 = arith.subf %1028, %1027 : vector<2x32xf32>
    %1030 = math.exp %1029 : vector<2x32xf32>
    %cst_330 = arith.constant 1.000000e+00 : f32
    %1031 = vector.broadcast %cst_330 : f32 to vector<2x32xf32>
    %1032 = arith.addf %1031, %1030 : vector<2x32xf32>
    %cst_331 = arith.constant 1.000000e+00 : f32
    %1033 = vector.broadcast %cst_331 : f32 to vector<2x32xf32>
    %1034 = arith.divf %1033, %1032 : vector<2x32xf32>
    %1035 = vector.extract_strided_slice %1026 {offsets = [0, 32], sizes = [2, 32], strides = [1, 1]} : vector<2x128xf32> to vector<2x32xf32>
    %cst_332 = arith.constant 0.000000e+00 : f32
    %1036 = vector.broadcast %cst_332 : f32 to vector<2x32xf32>
    %1037 = arith.subf %1036, %1035 : vector<2x32xf32>
    %1038 = math.exp %1037 : vector<2x32xf32>
    %cst_333 = arith.constant 1.000000e+00 : f32
    %1039 = vector.broadcast %cst_333 : f32 to vector<2x32xf32>
    %1040 = arith.addf %1039, %1038 : vector<2x32xf32>
    %cst_334 = arith.constant 1.000000e+00 : f32
    %1041 = vector.broadcast %cst_334 : f32 to vector<2x32xf32>
    %1042 = arith.divf %1041, %1040 : vector<2x32xf32>
    %1043 = vector.extract_strided_slice %1026 {offsets = [0, 64], sizes = [2, 32], strides = [1, 1]} : vector<2x128xf32> to vector<2x32xf32>
    %1044 = math.tanh %1043 : vector<2x32xf32>
    %1045 = vector.extract_strided_slice %1026 {offsets = [0, 96], sizes = [2, 32], strides = [1, 1]} : vector<2x128xf32> to vector<2x32xf32>
    %cst_335 = arith.constant 0.000000e+00 : f32
    %1046 = vector.broadcast %cst_335 : f32 to vector<2x32xf32>
    %1047 = arith.subf %1046, %1045 : vector<2x32xf32>
    %1048 = math.exp %1047 : vector<2x32xf32>
    %cst_336 = arith.constant 1.000000e+00 : f32
    %1049 = vector.broadcast %cst_336 : f32 to vector<2x32xf32>
    %1050 = arith.addf %1049, %1048 : vector<2x32xf32>
    %cst_337 = arith.constant 1.000000e+00 : f32
    %1051 = vector.broadcast %cst_337 : f32 to vector<2x32xf32>
    %1052 = arith.divf %1051, %1050 : vector<2x32xf32>
    %1053 = arith.mulf %1042, %978 : vector<2x32xf32>
    %1054 = arith.mulf %1034, %1044 : vector<2x32xf32>
    %1055 = arith.addf %1053, %1054 : vector<2x32xf32>
    %1056 = math.tanh %1055 : vector<2x32xf32>
    %1057 = arith.mulf %1052, %1056 : vector<2x32xf32>
    %cst_338 = arith.constant dense<0.000000e+00> : vector<2x128xf32>
    %1058 = tpu.matmul %1057, %2, %cst_338 {dimension_numbers = #tpu.dot_dimension_numbers<[1], [0], [0], [1], [0, 0, 1, 1], [], []>} : vector<2x32xf32>, vector<32x128xf32>, vector<2x128xf32> -> vector<2x128xf32>
    %cst_339 = arith.constant dense<0.000000e+00> : vector<2x128xf32>
    %1059 = tpu.matmul %1016, %6, %cst_339 {dimension_numbers = #tpu.dot_dimension_numbers<[1], [0], [0], [1], [0, 0, 1, 1], [], []>} : vector<2x32xf32>, vector<32x128xf32>, vector<2x128xf32> -> vector<2x128xf32>
    %1060 = arith.addf %1058, %1059 : vector<2x128xf32>
    %1061 = vector.broadcast %10 : vector<1x128xf32> to vector<2x128xf32>
    %1062 = arith.addf %1060, %1061 : vector<2x128xf32>
    %1063 = vector.extract_strided_slice %1062 {offsets = [0, 0], sizes = [2, 32], strides = [1, 1]} : vector<2x128xf32> to vector<2x32xf32>
    %cst_340 = arith.constant 0.000000e+00 : f32
    %1064 = vector.broadcast %cst_340 : f32 to vector<2x32xf32>
    %1065 = arith.subf %1064, %1063 : vector<2x32xf32>
    %1066 = math.exp %1065 : vector<2x32xf32>
    %cst_341 = arith.constant 1.000000e+00 : f32
    %1067 = vector.broadcast %cst_341 : f32 to vector<2x32xf32>
    %1068 = arith.addf %1067, %1066 : vector<2x32xf32>
    %cst_342 = arith.constant 1.000000e+00 : f32
    %1069 = vector.broadcast %cst_342 : f32 to vector<2x32xf32>
    %1070 = arith.divf %1069, %1068 : vector<2x32xf32>
    %1071 = vector.extract_strided_slice %1062 {offsets = [0, 32], sizes = [2, 32], strides = [1, 1]} : vector<2x128xf32> to vector<2x32xf32>
    %cst_343 = arith.constant 0.000000e+00 : f32
    %1072 = vector.broadcast %cst_343 : f32 to vector<2x32xf32>
    %1073 = arith.subf %1072, %1071 : vector<2x32xf32>
    %1074 = math.exp %1073 : vector<2x32xf32>
    %cst_344 = arith.constant 1.000000e+00 : f32
    %1075 = vector.broadcast %cst_344 : f32 to vector<2x32xf32>
    %1076 = arith.addf %1075, %1074 : vector<2x32xf32>
    %cst_345 = arith.constant 1.000000e+00 : f32
    %1077 = vector.broadcast %cst_345 : f32 to vector<2x32xf32>
    %1078 = arith.divf %1077, %1076 : vector<2x32xf32>
    %1079 = vector.extract_strided_slice %1062 {offsets = [0, 64], sizes = [2, 32], strides = [1, 1]} : vector<2x128xf32> to vector<2x32xf32>
    %1080 = math.tanh %1079 : vector<2x32xf32>
    %1081 = vector.extract_strided_slice %1062 {offsets = [0, 96], sizes = [2, 32], strides = [1, 1]} : vector<2x128xf32> to vector<2x32xf32>
    %cst_346 = arith.constant 0.000000e+00 : f32
    %1082 = vector.broadcast %cst_346 : f32 to vector<2x32xf32>
    %1083 = arith.subf %1082, %1081 : vector<2x32xf32>
    %1084 = math.exp %1083 : vector<2x32xf32>
    %cst_347 = arith.constant 1.000000e+00 : f32
    %1085 = vector.broadcast %cst_347 : f32 to vector<2x32xf32>
    %1086 = arith.addf %1085, %1084 : vector<2x32xf32>
    %cst_348 = arith.constant 1.000000e+00 : f32
    %1087 = vector.broadcast %cst_348 : f32 to vector<2x32xf32>
    %1088 = arith.divf %1087, %1086 : vector<2x32xf32>
    %1089 = arith.mulf %1078, %1014 : vector<2x32xf32>
    %1090 = arith.mulf %1070, %1080 : vector<2x32xf32>
    %1091 = arith.addf %1089, %1090 : vector<2x32xf32>
    %1092 = math.tanh %1091 : vector<2x32xf32>
    %1093 = arith.mulf %1088, %1092 : vector<2x32xf32>
    %1094 = arith.addf %1017, %1093 : vector<2x32xf32>
    %c14 = arith.constant 14 : index
    %c0_349 = arith.constant 0 : index
    %c0_350 = arith.constant 0 : index
    %1095 = vector.load %arg1[%c14, %c0_349, %c0_350] : memref<16x2x1xf32, #tpu.memory_space<vmem>>, vector<1x2x1xf32>
    %1096 = vector.shape_cast %1095 : vector<1x2x1xf32> to vector<2x1xf32>
    %1097 = vector.broadcast %1096 : vector<2x1xf32> to vector<2x128xf32>
    %1098 = vector.broadcast %0 : vector<1x128xf32> to vector<2x128xf32>
    %1099 = arith.mulf %1097, %1098 : vector<2x128xf32>
    %cst_351 = arith.constant dense<0.000000e+00> : vector<2x128xf32>
    %1100 = tpu.matmul %1057, %4, %cst_351 {dimension_numbers = #tpu.dot_dimension_numbers<[1], [0], [0], [1], [0, 0, 1, 1], [], []>} : vector<2x32xf32>, vector<32x128xf32>, vector<2x128xf32> -> vector<2x128xf32>
    %1101 = arith.addf %1099, %1100 : vector<2x128xf32>
    %1102 = vector.broadcast %8 : vector<1x128xf32> to vector<2x128xf32>
    %1103 = arith.addf %1101, %1102 : vector<2x128xf32>
    %1104 = vector.extract_strided_slice %1103 {offsets = [0, 0], sizes = [2, 32], strides = [1, 1]} : vector<2x128xf32> to vector<2x32xf32>
    %cst_352 = arith.constant 0.000000e+00 : f32
    %1105 = vector.broadcast %cst_352 : f32 to vector<2x32xf32>
    %1106 = arith.subf %1105, %1104 : vector<2x32xf32>
    %1107 = math.exp %1106 : vector<2x32xf32>
    %cst_353 = arith.constant 1.000000e+00 : f32
    %1108 = vector.broadcast %cst_353 : f32 to vector<2x32xf32>
    %1109 = arith.addf %1108, %1107 : vector<2x32xf32>
    %cst_354 = arith.constant 1.000000e+00 : f32
    %1110 = vector.broadcast %cst_354 : f32 to vector<2x32xf32>
    %1111 = arith.divf %1110, %1109 : vector<2x32xf32>
    %1112 = vector.extract_strided_slice %1103 {offsets = [0, 32], sizes = [2, 32], strides = [1, 1]} : vector<2x128xf32> to vector<2x32xf32>
    %cst_355 = arith.constant 0.000000e+00 : f32
    %1113 = vector.broadcast %cst_355 : f32 to vector<2x32xf32>
    %1114 = arith.subf %1113, %1112 : vector<2x32xf32>
    %1115 = math.exp %1114 : vector<2x32xf32>
    %cst_356 = arith.constant 1.000000e+00 : f32
    %1116 = vector.broadcast %cst_356 : f32 to vector<2x32xf32>
    %1117 = arith.addf %1116, %1115 : vector<2x32xf32>
    %cst_357 = arith.constant 1.000000e+00 : f32
    %1118 = vector.broadcast %cst_357 : f32 to vector<2x32xf32>
    %1119 = arith.divf %1118, %1117 : vector<2x32xf32>
    %1120 = vector.extract_strided_slice %1103 {offsets = [0, 64], sizes = [2, 32], strides = [1, 1]} : vector<2x128xf32> to vector<2x32xf32>
    %1121 = math.tanh %1120 : vector<2x32xf32>
    %1122 = vector.extract_strided_slice %1103 {offsets = [0, 96], sizes = [2, 32], strides = [1, 1]} : vector<2x128xf32> to vector<2x32xf32>
    %cst_358 = arith.constant 0.000000e+00 : f32
    %1123 = vector.broadcast %cst_358 : f32 to vector<2x32xf32>
    %1124 = arith.subf %1123, %1122 : vector<2x32xf32>
    %1125 = math.exp %1124 : vector<2x32xf32>
    %cst_359 = arith.constant 1.000000e+00 : f32
    %1126 = vector.broadcast %cst_359 : f32 to vector<2x32xf32>
    %1127 = arith.addf %1126, %1125 : vector<2x32xf32>
    %cst_360 = arith.constant 1.000000e+00 : f32
    %1128 = vector.broadcast %cst_360 : f32 to vector<2x32xf32>
    %1129 = arith.divf %1128, %1127 : vector<2x32xf32>
    %1130 = arith.mulf %1119, %1055 : vector<2x32xf32>
    %1131 = arith.mulf %1111, %1121 : vector<2x32xf32>
    %1132 = arith.addf %1130, %1131 : vector<2x32xf32>
    %1133 = math.tanh %1132 : vector<2x32xf32>
    %1134 = arith.mulf %1129, %1133 : vector<2x32xf32>
    %cst_361 = arith.constant dense<0.000000e+00> : vector<2x128xf32>
    %1135 = tpu.matmul %1134, %2, %cst_361 {dimension_numbers = #tpu.dot_dimension_numbers<[1], [0], [0], [1], [0, 0, 1, 1], [], []>} : vector<2x32xf32>, vector<32x128xf32>, vector<2x128xf32> -> vector<2x128xf32>
    %cst_362 = arith.constant dense<0.000000e+00> : vector<2x128xf32>
    %1136 = tpu.matmul %1093, %6, %cst_362 {dimension_numbers = #tpu.dot_dimension_numbers<[1], [0], [0], [1], [0, 0, 1, 1], [], []>} : vector<2x32xf32>, vector<32x128xf32>, vector<2x128xf32> -> vector<2x128xf32>
    %1137 = arith.addf %1135, %1136 : vector<2x128xf32>
    %1138 = vector.broadcast %10 : vector<1x128xf32> to vector<2x128xf32>
    %1139 = arith.addf %1137, %1138 : vector<2x128xf32>
    %1140 = vector.extract_strided_slice %1139 {offsets = [0, 0], sizes = [2, 32], strides = [1, 1]} : vector<2x128xf32> to vector<2x32xf32>
    %cst_363 = arith.constant 0.000000e+00 : f32
    %1141 = vector.broadcast %cst_363 : f32 to vector<2x32xf32>
    %1142 = arith.subf %1141, %1140 : vector<2x32xf32>
    %1143 = math.exp %1142 : vector<2x32xf32>
    %cst_364 = arith.constant 1.000000e+00 : f32
    %1144 = vector.broadcast %cst_364 : f32 to vector<2x32xf32>
    %1145 = arith.addf %1144, %1143 : vector<2x32xf32>
    %cst_365 = arith.constant 1.000000e+00 : f32
    %1146 = vector.broadcast %cst_365 : f32 to vector<2x32xf32>
    %1147 = arith.divf %1146, %1145 : vector<2x32xf32>
    %1148 = vector.extract_strided_slice %1139 {offsets = [0, 32], sizes = [2, 32], strides = [1, 1]} : vector<2x128xf32> to vector<2x32xf32>
    %cst_366 = arith.constant 0.000000e+00 : f32
    %1149 = vector.broadcast %cst_366 : f32 to vector<2x32xf32>
    %1150 = arith.subf %1149, %1148 : vector<2x32xf32>
    %1151 = math.exp %1150 : vector<2x32xf32>
    %cst_367 = arith.constant 1.000000e+00 : f32
    %1152 = vector.broadcast %cst_367 : f32 to vector<2x32xf32>
    %1153 = arith.addf %1152, %1151 : vector<2x32xf32>
    %cst_368 = arith.constant 1.000000e+00 : f32
    %1154 = vector.broadcast %cst_368 : f32 to vector<2x32xf32>
    %1155 = arith.divf %1154, %1153 : vector<2x32xf32>
    %1156 = vector.extract_strided_slice %1139 {offsets = [0, 64], sizes = [2, 32], strides = [1, 1]} : vector<2x128xf32> to vector<2x32xf32>
    %1157 = math.tanh %1156 : vector<2x32xf32>
    %1158 = vector.extract_strided_slice %1139 {offsets = [0, 96], sizes = [2, 32], strides = [1, 1]} : vector<2x128xf32> to vector<2x32xf32>
    %cst_369 = arith.constant 0.000000e+00 : f32
    %1159 = vector.broadcast %cst_369 : f32 to vector<2x32xf32>
    %1160 = arith.subf %1159, %1158 : vector<2x32xf32>
    %1161 = math.exp %1160 : vector<2x32xf32>
    %cst_370 = arith.constant 1.000000e+00 : f32
    %1162 = vector.broadcast %cst_370 : f32 to vector<2x32xf32>
    %1163 = arith.addf %1162, %1161 : vector<2x32xf32>
    %cst_371 = arith.constant 1.000000e+00 : f32
    %1164 = vector.broadcast %cst_371 : f32 to vector<2x32xf32>
    %1165 = arith.divf %1164, %1163 : vector<2x32xf32>
    %1166 = arith.mulf %1155, %1091 : vector<2x32xf32>
    %1167 = arith.mulf %1147, %1157 : vector<2x32xf32>
    %1168 = arith.addf %1166, %1167 : vector<2x32xf32>
    %1169 = math.tanh %1168 : vector<2x32xf32>
    %1170 = arith.mulf %1165, %1169 : vector<2x32xf32>
    %1171 = arith.addf %1094, %1170 : vector<2x32xf32>
    %c15 = arith.constant 15 : index
    %c0_372 = arith.constant 0 : index
    %c0_373 = arith.constant 0 : index
    %1172 = vector.load %arg1[%c15, %c0_372, %c0_373] : memref<16x2x1xf32, #tpu.memory_space<vmem>>, vector<1x2x1xf32>
    %1173 = vector.shape_cast %1172 : vector<1x2x1xf32> to vector<2x1xf32>
    %1174 = vector.broadcast %1173 : vector<2x1xf32> to vector<2x128xf32>
    %1175 = vector.broadcast %0 : vector<1x128xf32> to vector<2x128xf32>
    %1176 = arith.mulf %1174, %1175 : vector<2x128xf32>
    %cst_374 = arith.constant dense<0.000000e+00> : vector<2x128xf32>
    %1177 = tpu.matmul %1134, %4, %cst_374 {dimension_numbers = #tpu.dot_dimension_numbers<[1], [0], [0], [1], [0, 0, 1, 1], [], []>} : vector<2x32xf32>, vector<32x128xf32>, vector<2x128xf32> -> vector<2x128xf32>
    %1178 = arith.addf %1176, %1177 : vector<2x128xf32>
    %1179 = vector.broadcast %8 : vector<1x128xf32> to vector<2x128xf32>
    %1180 = arith.addf %1178, %1179 : vector<2x128xf32>
    %1181 = vector.extract_strided_slice %1180 {offsets = [0, 0], sizes = [2, 32], strides = [1, 1]} : vector<2x128xf32> to vector<2x32xf32>
    %cst_375 = arith.constant 0.000000e+00 : f32
    %1182 = vector.broadcast %cst_375 : f32 to vector<2x32xf32>
    %1183 = arith.subf %1182, %1181 : vector<2x32xf32>
    %1184 = math.exp %1183 : vector<2x32xf32>
    %cst_376 = arith.constant 1.000000e+00 : f32
    %1185 = vector.broadcast %cst_376 : f32 to vector<2x32xf32>
    %1186 = arith.addf %1185, %1184 : vector<2x32xf32>
    %cst_377 = arith.constant 1.000000e+00 : f32
    %1187 = vector.broadcast %cst_377 : f32 to vector<2x32xf32>
    %1188 = arith.divf %1187, %1186 : vector<2x32xf32>
    %1189 = vector.extract_strided_slice %1180 {offsets = [0, 32], sizes = [2, 32], strides = [1, 1]} : vector<2x128xf32> to vector<2x32xf32>
    %cst_378 = arith.constant 0.000000e+00 : f32
    %1190 = vector.broadcast %cst_378 : f32 to vector<2x32xf32>
    %1191 = arith.subf %1190, %1189 : vector<2x32xf32>
    %1192 = math.exp %1191 : vector<2x32xf32>
    %cst_379 = arith.constant 1.000000e+00 : f32
    %1193 = vector.broadcast %cst_379 : f32 to vector<2x32xf32>
    %1194 = arith.addf %1193, %1192 : vector<2x32xf32>
    %cst_380 = arith.constant 1.000000e+00 : f32
    %1195 = vector.broadcast %cst_380 : f32 to vector<2x32xf32>
    %1196 = arith.divf %1195, %1194 : vector<2x32xf32>
    %1197 = vector.extract_strided_slice %1180 {offsets = [0, 64], sizes = [2, 32], strides = [1, 1]} : vector<2x128xf32> to vector<2x32xf32>
    %1198 = math.tanh %1197 : vector<2x32xf32>
    %1199 = vector.extract_strided_slice %1180 {offsets = [0, 96], sizes = [2, 32], strides = [1, 1]} : vector<2x128xf32> to vector<2x32xf32>
    %cst_381 = arith.constant 0.000000e+00 : f32
    %1200 = vector.broadcast %cst_381 : f32 to vector<2x32xf32>
    %1201 = arith.subf %1200, %1199 : vector<2x32xf32>
    %1202 = math.exp %1201 : vector<2x32xf32>
    %cst_382 = arith.constant 1.000000e+00 : f32
    %1203 = vector.broadcast %cst_382 : f32 to vector<2x32xf32>
    %1204 = arith.addf %1203, %1202 : vector<2x32xf32>
    %cst_383 = arith.constant 1.000000e+00 : f32
    %1205 = vector.broadcast %cst_383 : f32 to vector<2x32xf32>
    %1206 = arith.divf %1205, %1204 : vector<2x32xf32>
    %1207 = arith.mulf %1196, %1132 : vector<2x32xf32>
    %1208 = arith.mulf %1188, %1198 : vector<2x32xf32>
    %1209 = arith.addf %1207, %1208 : vector<2x32xf32>
    %1210 = math.tanh %1209 : vector<2x32xf32>
    %1211 = arith.mulf %1206, %1210 : vector<2x32xf32>
    %cst_384 = arith.constant dense<0.000000e+00> : vector<2x128xf32>
    %1212 = tpu.matmul %1211, %2, %cst_384 {dimension_numbers = #tpu.dot_dimension_numbers<[1], [0], [0], [1], [0, 0, 1, 1], [], []>} : vector<2x32xf32>, vector<32x128xf32>, vector<2x128xf32> -> vector<2x128xf32>
    %cst_385 = arith.constant dense<0.000000e+00> : vector<2x128xf32>
    %1213 = tpu.matmul %1170, %6, %cst_385 {dimension_numbers = #tpu.dot_dimension_numbers<[1], [0], [0], [1], [0, 0, 1, 1], [], []>} : vector<2x32xf32>, vector<32x128xf32>, vector<2x128xf32> -> vector<2x128xf32>
    %1214 = arith.addf %1212, %1213 : vector<2x128xf32>
    %1215 = vector.broadcast %10 : vector<1x128xf32> to vector<2x128xf32>
    %1216 = arith.addf %1214, %1215 : vector<2x128xf32>
    %1217 = vector.extract_strided_slice %1216 {offsets = [0, 0], sizes = [2, 32], strides = [1, 1]} : vector<2x128xf32> to vector<2x32xf32>
    %cst_386 = arith.constant 0.000000e+00 : f32
    %1218 = vector.broadcast %cst_386 : f32 to vector<2x32xf32>
    %1219 = arith.subf %1218, %1217 : vector<2x32xf32>
    %1220 = math.exp %1219 : vector<2x32xf32>
    %cst_387 = arith.constant 1.000000e+00 : f32
    %1221 = vector.broadcast %cst_387 : f32 to vector<2x32xf32>
    %1222 = arith.addf %1221, %1220 : vector<2x32xf32>
    %cst_388 = arith.constant 1.000000e+00 : f32
    %1223 = vector.broadcast %cst_388 : f32 to vector<2x32xf32>
    %1224 = arith.divf %1223, %1222 : vector<2x32xf32>
    %1225 = vector.extract_strided_slice %1216 {offsets = [0, 32], sizes = [2, 32], strides = [1, 1]} : vector<2x128xf32> to vector<2x32xf32>
    %cst_389 = arith.constant 0.000000e+00 : f32
    %1226 = vector.broadcast %cst_389 : f32 to vector<2x32xf32>
    %1227 = arith.subf %1226, %1225 : vector<2x32xf32>
    %1228 = math.exp %1227 : vector<2x32xf32>
    %cst_390 = arith.constant 1.000000e+00 : f32
    %1229 = vector.broadcast %cst_390 : f32 to vector<2x32xf32>
    %1230 = arith.addf %1229, %1228 : vector<2x32xf32>
    %cst_391 = arith.constant 1.000000e+00 : f32
    %1231 = vector.broadcast %cst_391 : f32 to vector<2x32xf32>
    %1232 = arith.divf %1231, %1230 : vector<2x32xf32>
    %1233 = vector.extract_strided_slice %1216 {offsets = [0, 64], sizes = [2, 32], strides = [1, 1]} : vector<2x128xf32> to vector<2x32xf32>
    %1234 = math.tanh %1233 : vector<2x32xf32>
    %1235 = vector.extract_strided_slice %1216 {offsets = [0, 96], sizes = [2, 32], strides = [1, 1]} : vector<2x128xf32> to vector<2x32xf32>
    %cst_392 = arith.constant 0.000000e+00 : f32
    %1236 = vector.broadcast %cst_392 : f32 to vector<2x32xf32>
    %1237 = arith.subf %1236, %1235 : vector<2x32xf32>
    %1238 = math.exp %1237 : vector<2x32xf32>
    %cst_393 = arith.constant 1.000000e+00 : f32
    %1239 = vector.broadcast %cst_393 : f32 to vector<2x32xf32>
    %1240 = arith.addf %1239, %1238 : vector<2x32xf32>
    %cst_394 = arith.constant 1.000000e+00 : f32
    %1241 = vector.broadcast %cst_394 : f32 to vector<2x32xf32>
    %1242 = arith.divf %1241, %1240 : vector<2x32xf32>
    %1243 = arith.mulf %1232, %1168 : vector<2x32xf32>
    %1244 = arith.mulf %1224, %1234 : vector<2x32xf32>
    %1245 = arith.addf %1243, %1244 : vector<2x32xf32>
    %1246 = math.tanh %1245 : vector<2x32xf32>
    %1247 = arith.mulf %1242, %1246 : vector<2x32xf32>
    %1248 = arith.addf %1171, %1247 : vector<2x32xf32>
    %c0_395 = arith.constant 0 : index
    %c0_396 = arith.constant 0 : index
    %1249 = vector.load %arg12[%c0_395, %c0_396] : memref<2x32xf32, #tpu.memory_space<vmem>>, vector<2x32xf32>
    tpu.vector_store %arg12[%c0_395, %c0_396], %1248 {strides = array<i32>} : memref<2x32xf32, #tpu.memory_space<vmem>>, vector<2x32xf32>,
    %cst_397 = arith.constant dense<0.000000e+00> : vector<2x128xf32>
    %1250 = tpu.matmul %1248, %11, %cst_397 {dimension_numbers = #tpu.dot_dimension_numbers<[1], [0], [0], [1], [0, 0, 1, 1], [], []>} : vector<2x32xf32>, vector<32x128xf32>, vector<2x128xf32> -> vector<2x128xf32>
    %cst_398 = arith.constant dense<0.000000e+00> : vector<2x128xf32>
    %1251 = tpu.matmul %16, %12, %cst_398 {dimension_numbers = #tpu.dot_dimension_numbers<[1], [0], [0], [1], [0, 0, 1, 1], [], []>} : vector<2x32xf32>, vector<32x128xf32>, vector<2x128xf32> -> vector<2x128xf32>
    %1252 = arith.addf %1250, %1251 : vector<2x128xf32>
    %1253 = vector.broadcast %13 : vector<1x128xf32> to vector<2x128xf32>
    %1254 = arith.addf %1252, %1253 : vector<2x128xf32>
    %1255 = vector.extract_strided_slice %1254 {offsets = [0, 0], sizes = [2, 32], strides = [1, 1]} : vector<2x128xf32> to vector<2x32xf32>
    %cst_399 = arith.constant 0.000000e+00 : f32
    %1256 = vector.broadcast %cst_399 : f32 to vector<2x32xf32>
    %1257 = arith.subf %1256, %1255 : vector<2x32xf32>
    %1258 = math.exp %1257 : vector<2x32xf32>
    %cst_400 = arith.constant 1.000000e+00 : f32
    %1259 = vector.broadcast %cst_400 : f32 to vector<2x32xf32>
    %1260 = arith.addf %1259, %1258 : vector<2x32xf32>
    %cst_401 = arith.constant 1.000000e+00 : f32
    %1261 = vector.broadcast %cst_401 : f32 to vector<2x32xf32>
    %1262 = arith.divf %1261, %1260 : vector<2x32xf32>
    %1263 = vector.extract_strided_slice %1254 {offsets = [0, 32], sizes = [2, 32], strides = [1, 1]} : vector<2x128xf32> to vector<2x32xf32>
    %cst_402 = arith.constant 0.000000e+00 : f32
    %1264 = vector.broadcast %cst_402 : f32 to vector<2x32xf32>
    %1265 = arith.subf %1264, %1263 : vector<2x32xf32>
    %1266 = math.exp %1265 : vector<2x32xf32>
    %cst_403 = arith.constant 1.000000e+00 : f32
    %1267 = vector.broadcast %cst_403 : f32 to vector<2x32xf32>
    %1268 = arith.addf %1267, %1266 : vector<2x32xf32>
    %cst_404 = arith.constant 1.000000e+00 : f32
    %1269 = vector.broadcast %cst_404 : f32 to vector<2x32xf32>
    %1270 = arith.divf %1269, %1268 : vector<2x32xf32>
    %1271 = vector.extract_strided_slice %1254 {offsets = [0, 64], sizes = [2, 32], strides = [1, 1]} : vector<2x128xf32> to vector<2x32xf32>
    %1272 = math.tanh %1271 : vector<2x32xf32>
    %1273 = vector.extract_strided_slice %1254 {offsets = [0, 96], sizes = [2, 32], strides = [1, 1]} : vector<2x128xf32> to vector<2x32xf32>
    %cst_405 = arith.constant 0.000000e+00 : f32
    %1274 = vector.broadcast %cst_405 : f32 to vector<2x32xf32>
    %1275 = arith.subf %1274, %1273 : vector<2x32xf32>
    %1276 = math.exp %1275 : vector<2x32xf32>
    %cst_406 = arith.constant 1.000000e+00 : f32
    %1277 = vector.broadcast %cst_406 : f32 to vector<2x32xf32>
    %1278 = arith.addf %1277, %1276 : vector<2x32xf32>
    %cst_407 = arith.constant 1.000000e+00 : f32
    %1279 = vector.broadcast %cst_407 : f32 to vector<2x32xf32>
    %1280 = arith.divf %1279, %1278 : vector<2x32xf32>
    %1281 = arith.mulf %1270, %16 : vector<2x32xf32>
    %1282 = arith.mulf %1262, %1272 : vector<2x32xf32>
    %1283 = arith.addf %1281, %1282 : vector<2x32xf32>
    %1284 = math.tanh %1283 : vector<2x32xf32>
    %1285 = arith.mulf %1280, %1284 : vector<2x32xf32>
    %cst_408 = arith.constant dense<0.000000e+00> : vector<2x1xf32>
    %1286 = tpu.matmul %1285, %14, %cst_408 {dimension_numbers = #tpu.dot_dimension_numbers<[1], [0], [0], [1], [0, 0, 1, 1], [], []>} : vector<2x32xf32>, vector<32x1xf32>, vector<2x1xf32> -> vector<2x1xf32>
    %1287 = vector.broadcast %15 : vector<1x1xf32> to vector<2x1xf32>
    %1288 = arith.addf %1286, %1287 : vector<2x1xf32>
    %c0_409 = arith.constant 0 : index
    %c0_410 = arith.constant 0 : index
    %c0_411 = arith.constant 0 : index
    %1289 = vector.load %arg11[%c0_409, %c0_410, %c0_411] : memref<16x2x1xf32, #tpu.memory_space<vmem>>, vector<1x2x1xf32>
    %1290 = vector.shape_cast %1289 : vector<1x2x1xf32> to vector<2x1xf32>
    %1291 = vector.shape_cast %1288 : vector<2x1xf32> to vector<1x2x1xf32>
    tpu.vector_store %arg11[%c0_409, %c0_410, %c0_411], %1291 {strides = array<i32>} : memref<16x2x1xf32, #tpu.memory_space<vmem>>, vector<1x2x1xf32>,
    %cst_412 = arith.constant dense<0.000000e+00> : vector<2x128xf32>
    %1292 = tpu.matmul %1285, %11, %cst_412 {dimension_numbers = #tpu.dot_dimension_numbers<[1], [0], [0], [1], [0, 0, 1, 1], [], []>} : vector<2x32xf32>, vector<32x128xf32>, vector<2x128xf32> -> vector<2x128xf32>
    %cst_413 = arith.constant dense<0.000000e+00> : vector<2x128xf32>
    %1293 = tpu.matmul %1285, %12, %cst_413 {dimension_numbers = #tpu.dot_dimension_numbers<[1], [0], [0], [1], [0, 0, 1, 1], [], []>} : vector<2x32xf32>, vector<32x128xf32>, vector<2x128xf32> -> vector<2x128xf32>
    %1294 = arith.addf %1292, %1293 : vector<2x128xf32>
    %1295 = vector.broadcast %13 : vector<1x128xf32> to vector<2x128xf32>
    %1296 = arith.addf %1294, %1295 : vector<2x128xf32>
    %1297 = vector.extract_strided_slice %1296 {offsets = [0, 0], sizes = [2, 32], strides = [1, 1]} : vector<2x128xf32> to vector<2x32xf32>
    %cst_414 = arith.constant 0.000000e+00 : f32
    %1298 = vector.broadcast %cst_414 : f32 to vector<2x32xf32>
    %1299 = arith.subf %1298, %1297 : vector<2x32xf32>
    %1300 = math.exp %1299 : vector<2x32xf32>
    %cst_415 = arith.constant 1.000000e+00 : f32
    %1301 = vector.broadcast %cst_415 : f32 to vector<2x32xf32>
    %1302 = arith.addf %1301, %1300 : vector<2x32xf32>
    %cst_416 = arith.constant 1.000000e+00 : f32
    %1303 = vector.broadcast %cst_416 : f32 to vector<2x32xf32>
    %1304 = arith.divf %1303, %1302 : vector<2x32xf32>
    %1305 = vector.extract_strided_slice %1296 {offsets = [0, 32], sizes = [2, 32], strides = [1, 1]} : vector<2x128xf32> to vector<2x32xf32>
    %cst_417 = arith.constant 0.000000e+00 : f32
    %1306 = vector.broadcast %cst_417 : f32 to vector<2x32xf32>
    %1307 = arith.subf %1306, %1305 : vector<2x32xf32>
    %1308 = math.exp %1307 : vector<2x32xf32>
    %cst_418 = arith.constant 1.000000e+00 : f32
    %1309 = vector.broadcast %cst_418 : f32 to vector<2x32xf32>
    %1310 = arith.addf %1309, %1308 : vector<2x32xf32>
    %cst_419 = arith.constant 1.000000e+00 : f32
    %1311 = vector.broadcast %cst_419 : f32 to vector<2x32xf32>
    %1312 = arith.divf %1311, %1310 : vector<2x32xf32>
    %1313 = vector.extract_strided_slice %1296 {offsets = [0, 64], sizes = [2, 32], strides = [1, 1]} : vector<2x128xf32> to vector<2x32xf32>
    %1314 = math.tanh %1313 : vector<2x32xf32>
    %1315 = vector.extract_strided_slice %1296 {offsets = [0, 96], sizes = [2, 32], strides = [1, 1]} : vector<2x128xf32> to vector<2x32xf32>
    %cst_420 = arith.constant 0.000000e+00 : f32
    %1316 = vector.broadcast %cst_420 : f32 to vector<2x32xf32>
    %1317 = arith.subf %1316, %1315 : vector<2x32xf32>
    %1318 = math.exp %1317 : vector<2x32xf32>
    %cst_421 = arith.constant 1.000000e+00 : f32
    %1319 = vector.broadcast %cst_421 : f32 to vector<2x32xf32>
    %1320 = arith.addf %1319, %1318 : vector<2x32xf32>
    %cst_422 = arith.constant 1.000000e+00 : f32
    %1321 = vector.broadcast %cst_422 : f32 to vector<2x32xf32>
    %1322 = arith.divf %1321, %1320 : vector<2x32xf32>
    %1323 = arith.mulf %1312, %1283 : vector<2x32xf32>
    %1324 = arith.mulf %1304, %1314 : vector<2x32xf32>
    %1325 = arith.addf %1323, %1324 : vector<2x32xf32>
    %1326 = math.tanh %1325 : vector<2x32xf32>
    %1327 = arith.mulf %1322, %1326 : vector<2x32xf32>
    %cst_423 = arith.constant dense<0.000000e+00> : vector<2x1xf32>
    %1328 = tpu.matmul %1327, %14, %cst_423 {dimension_numbers = #tpu.dot_dimension_numbers<[1], [0], [0], [1], [0, 0, 1, 1], [], []>} : vector<2x32xf32>, vector<32x1xf32>, vector<2x1xf32> -> vector<2x1xf32>
    %1329 = vector.broadcast %15 : vector<1x1xf32> to vector<2x1xf32>
    %1330 = arith.addf %1328, %1329 : vector<2x1xf32>
    %c1_424 = arith.constant 1 : index
    %c0_425 = arith.constant 0 : index
    %c0_426 = arith.constant 0 : index
    %1331 = vector.load %arg11[%c1_424, %c0_425, %c0_426] : memref<16x2x1xf32, #tpu.memory_space<vmem>>, vector<1x2x1xf32>
    %1332 = vector.shape_cast %1331 : vector<1x2x1xf32> to vector<2x1xf32>
    %1333 = vector.shape_cast %1330 : vector<2x1xf32> to vector<1x2x1xf32>
    tpu.vector_store %arg11[%c1_424, %c0_425, %c0_426], %1333 {strides = array<i32>} : memref<16x2x1xf32, #tpu.memory_space<vmem>>, vector<1x2x1xf32>,
    %cst_427 = arith.constant dense<0.000000e+00> : vector<2x128xf32>
    %1334 = tpu.matmul %1327, %11, %cst_427 {dimension_numbers = #tpu.dot_dimension_numbers<[1], [0], [0], [1], [0, 0, 1, 1], [], []>} : vector<2x32xf32>, vector<32x128xf32>, vector<2x128xf32> -> vector<2x128xf32>
    %cst_428 = arith.constant dense<0.000000e+00> : vector<2x128xf32>
    %1335 = tpu.matmul %1327, %12, %cst_428 {dimension_numbers = #tpu.dot_dimension_numbers<[1], [0], [0], [1], [0, 0, 1, 1], [], []>} : vector<2x32xf32>, vector<32x128xf32>, vector<2x128xf32> -> vector<2x128xf32>
    %1336 = arith.addf %1334, %1335 : vector<2x128xf32>
    %1337 = vector.broadcast %13 : vector<1x128xf32> to vector<2x128xf32>
    %1338 = arith.addf %1336, %1337 : vector<2x128xf32>
    %1339 = vector.extract_strided_slice %1338 {offsets = [0, 0], sizes = [2, 32], strides = [1, 1]} : vector<2x128xf32> to vector<2x32xf32>
    %cst_429 = arith.constant 0.000000e+00 : f32
    %1340 = vector.broadcast %cst_429 : f32 to vector<2x32xf32>
    %1341 = arith.subf %1340, %1339 : vector<2x32xf32>
    %1342 = math.exp %1341 : vector<2x32xf32>
    %cst_430 = arith.constant 1.000000e+00 : f32
    %1343 = vector.broadcast %cst_430 : f32 to vector<2x32xf32>
    %1344 = arith.addf %1343, %1342 : vector<2x32xf32>
    %cst_431 = arith.constant 1.000000e+00 : f32
    %1345 = vector.broadcast %cst_431 : f32 to vector<2x32xf32>
    %1346 = arith.divf %1345, %1344 : vector<2x32xf32>
    %1347 = vector.extract_strided_slice %1338 {offsets = [0, 32], sizes = [2, 32], strides = [1, 1]} : vector<2x128xf32> to vector<2x32xf32>
    %cst_432 = arith.constant 0.000000e+00 : f32
    %1348 = vector.broadcast %cst_432 : f32 to vector<2x32xf32>
    %1349 = arith.subf %1348, %1347 : vector<2x32xf32>
    %1350 = math.exp %1349 : vector<2x32xf32>
    %cst_433 = arith.constant 1.000000e+00 : f32
    %1351 = vector.broadcast %cst_433 : f32 to vector<2x32xf32>
    %1352 = arith.addf %1351, %1350 : vector<2x32xf32>
    %cst_434 = arith.constant 1.000000e+00 : f32
    %1353 = vector.broadcast %cst_434 : f32 to vector<2x32xf32>
    %1354 = arith.divf %1353, %1352 : vector<2x32xf32>
    %1355 = vector.extract_strided_slice %1338 {offsets = [0, 64], sizes = [2, 32], strides = [1, 1]} : vector<2x128xf32> to vector<2x32xf32>
    %1356 = math.tanh %1355 : vector<2x32xf32>
    %1357 = vector.extract_strided_slice %1338 {offsets = [0, 96], sizes = [2, 32], strides = [1, 1]} : vector<2x128xf32> to vector<2x32xf32>
    %cst_435 = arith.constant 0.000000e+00 : f32
    %1358 = vector.broadcast %cst_435 : f32 to vector<2x32xf32>
    %1359 = arith.subf %1358, %1357 : vector<2x32xf32>
    %1360 = math.exp %1359 : vector<2x32xf32>
    %cst_436 = arith.constant 1.000000e+00 : f32
    %1361 = vector.broadcast %cst_436 : f32 to vector<2x32xf32>
    %1362 = arith.addf %1361, %1360 : vector<2x32xf32>
    %cst_437 = arith.constant 1.000000e+00 : f32
    %1363 = vector.broadcast %cst_437 : f32 to vector<2x32xf32>
    %1364 = arith.divf %1363, %1362 : vector<2x32xf32>
    %1365 = arith.mulf %1354, %1325 : vector<2x32xf32>
    %1366 = arith.mulf %1346, %1356 : vector<2x32xf32>
    %1367 = arith.addf %1365, %1366 : vector<2x32xf32>
    %1368 = math.tanh %1367 : vector<2x32xf32>
    %1369 = arith.mulf %1364, %1368 : vector<2x32xf32>
    %cst_438 = arith.constant dense<0.000000e+00> : vector<2x1xf32>
    %1370 = tpu.matmul %1369, %14, %cst_438 {dimension_numbers = #tpu.dot_dimension_numbers<[1], [0], [0], [1], [0, 0, 1, 1], [], []>} : vector<2x32xf32>, vector<32x1xf32>, vector<2x1xf32> -> vector<2x1xf32>
    %1371 = vector.broadcast %15 : vector<1x1xf32> to vector<2x1xf32>
    %1372 = arith.addf %1370, %1371 : vector<2x1xf32>
    %c2_439 = arith.constant 2 : index
    %c0_440 = arith.constant 0 : index
    %c0_441 = arith.constant 0 : index
    %1373 = vector.load %arg11[%c2_439, %c0_440, %c0_441] : memref<16x2x1xf32, #tpu.memory_space<vmem>>, vector<1x2x1xf32>
    %1374 = vector.shape_cast %1373 : vector<1x2x1xf32> to vector<2x1xf32>
    %1375 = vector.shape_cast %1372 : vector<2x1xf32> to vector<1x2x1xf32>
    tpu.vector_store %arg11[%c2_439, %c0_440, %c0_441], %1375 {strides = array<i32>} : memref<16x2x1xf32, #tpu.memory_space<vmem>>, vector<1x2x1xf32>,
    %cst_442 = arith.constant dense<0.000000e+00> : vector<2x128xf32>
    %1376 = tpu.matmul %1369, %11, %cst_442 {dimension_numbers = #tpu.dot_dimension_numbers<[1], [0], [0], [1], [0, 0, 1, 1], [], []>} : vector<2x32xf32>, vector<32x128xf32>, vector<2x128xf32> -> vector<2x128xf32>
    %cst_443 = arith.constant dense<0.000000e+00> : vector<2x128xf32>
    %1377 = tpu.matmul %1369, %12, %cst_443 {dimension_numbers = #tpu.dot_dimension_numbers<[1], [0], [0], [1], [0, 0, 1, 1], [], []>} : vector<2x32xf32>, vector<32x128xf32>, vector<2x128xf32> -> vector<2x128xf32>
    %1378 = arith.addf %1376, %1377 : vector<2x128xf32>
    %1379 = vector.broadcast %13 : vector<1x128xf32> to vector<2x128xf32>
    %1380 = arith.addf %1378, %1379 : vector<2x128xf32>
    %1381 = vector.extract_strided_slice %1380 {offsets = [0, 0], sizes = [2, 32], strides = [1, 1]} : vector<2x128xf32> to vector<2x32xf32>
    %cst_444 = arith.constant 0.000000e+00 : f32
    %1382 = vector.broadcast %cst_444 : f32 to vector<2x32xf32>
    %1383 = arith.subf %1382, %1381 : vector<2x32xf32>
    %1384 = math.exp %1383 : vector<2x32xf32>
    %cst_445 = arith.constant 1.000000e+00 : f32
    %1385 = vector.broadcast %cst_445 : f32 to vector<2x32xf32>
    %1386 = arith.addf %1385, %1384 : vector<2x32xf32>
    %cst_446 = arith.constant 1.000000e+00 : f32
    %1387 = vector.broadcast %cst_446 : f32 to vector<2x32xf32>
    %1388 = arith.divf %1387, %1386 : vector<2x32xf32>
    %1389 = vector.extract_strided_slice %1380 {offsets = [0, 32], sizes = [2, 32], strides = [1, 1]} : vector<2x128xf32> to vector<2x32xf32>
    %cst_447 = arith.constant 0.000000e+00 : f32
    %1390 = vector.broadcast %cst_447 : f32 to vector<2x32xf32>
    %1391 = arith.subf %1390, %1389 : vector<2x32xf32>
    %1392 = math.exp %1391 : vector<2x32xf32>
    %cst_448 = arith.constant 1.000000e+00 : f32
    %1393 = vector.broadcast %cst_448 : f32 to vector<2x32xf32>
    %1394 = arith.addf %1393, %1392 : vector<2x32xf32>
    %cst_449 = arith.constant 1.000000e+00 : f32
    %1395 = vector.broadcast %cst_449 : f32 to vector<2x32xf32>
    %1396 = arith.divf %1395, %1394 : vector<2x32xf32>
    %1397 = vector.extract_strided_slice %1380 {offsets = [0, 64], sizes = [2, 32], strides = [1, 1]} : vector<2x128xf32> to vector<2x32xf32>
    %1398 = math.tanh %1397 : vector<2x32xf32>
    %1399 = vector.extract_strided_slice %1380 {offsets = [0, 96], sizes = [2, 32], strides = [1, 1]} : vector<2x128xf32> to vector<2x32xf32>
    %cst_450 = arith.constant 0.000000e+00 : f32
    %1400 = vector.broadcast %cst_450 : f32 to vector<2x32xf32>
    %1401 = arith.subf %1400, %1399 : vector<2x32xf32>
    %1402 = math.exp %1401 : vector<2x32xf32>
    %cst_451 = arith.constant 1.000000e+00 : f32
    %1403 = vector.broadcast %cst_451 : f32 to vector<2x32xf32>
    %1404 = arith.addf %1403, %1402 : vector<2x32xf32>
    %cst_452 = arith.constant 1.000000e+00 : f32
    %1405 = vector.broadcast %cst_452 : f32 to vector<2x32xf32>
    %1406 = arith.divf %1405, %1404 : vector<2x32xf32>
    %1407 = arith.mulf %1396, %1367 : vector<2x32xf32>
    %1408 = arith.mulf %1388, %1398 : vector<2x32xf32>
    %1409 = arith.addf %1407, %1408 : vector<2x32xf32>
    %1410 = math.tanh %1409 : vector<2x32xf32>
    %1411 = arith.mulf %1406, %1410 : vector<2x32xf32>
    %cst_453 = arith.constant dense<0.000000e+00> : vector<2x1xf32>
    %1412 = tpu.matmul %1411, %14, %cst_453 {dimension_numbers = #tpu.dot_dimension_numbers<[1], [0], [0], [1], [0, 0, 1, 1], [], []>} : vector<2x32xf32>, vector<32x1xf32>, vector<2x1xf32> -> vector<2x1xf32>
    %1413 = vector.broadcast %15 : vector<1x1xf32> to vector<2x1xf32>
    %1414 = arith.addf %1412, %1413 : vector<2x1xf32>
    %c3_454 = arith.constant 3 : index
    %c0_455 = arith.constant 0 : index
    %c0_456 = arith.constant 0 : index
    %1415 = vector.load %arg11[%c3_454, %c0_455, %c0_456] : memref<16x2x1xf32, #tpu.memory_space<vmem>>, vector<1x2x1xf32>
    %1416 = vector.shape_cast %1415 : vector<1x2x1xf32> to vector<2x1xf32>
    %1417 = vector.shape_cast %1414 : vector<2x1xf32> to vector<1x2x1xf32>
    tpu.vector_store %arg11[%c3_454, %c0_455, %c0_456], %1417 {strides = array<i32>} : memref<16x2x1xf32, #tpu.memory_space<vmem>>, vector<1x2x1xf32>,
    %cst_457 = arith.constant dense<0.000000e+00> : vector<2x128xf32>
    %1418 = tpu.matmul %1411, %11, %cst_457 {dimension_numbers = #tpu.dot_dimension_numbers<[1], [0], [0], [1], [0, 0, 1, 1], [], []>} : vector<2x32xf32>, vector<32x128xf32>, vector<2x128xf32> -> vector<2x128xf32>
    %cst_458 = arith.constant dense<0.000000e+00> : vector<2x128xf32>
    %1419 = tpu.matmul %1411, %12, %cst_458 {dimension_numbers = #tpu.dot_dimension_numbers<[1], [0], [0], [1], [0, 0, 1, 1], [], []>} : vector<2x32xf32>, vector<32x128xf32>, vector<2x128xf32> -> vector<2x128xf32>
    %1420 = arith.addf %1418, %1419 : vector<2x128xf32>
    %1421 = vector.broadcast %13 : vector<1x128xf32> to vector<2x128xf32>
    %1422 = arith.addf %1420, %1421 : vector<2x128xf32>
    %1423 = vector.extract_strided_slice %1422 {offsets = [0, 0], sizes = [2, 32], strides = [1, 1]} : vector<2x128xf32> to vector<2x32xf32>
    %cst_459 = arith.constant 0.000000e+00 : f32
    %1424 = vector.broadcast %cst_459 : f32 to vector<2x32xf32>
    %1425 = arith.subf %1424, %1423 : vector<2x32xf32>
    %1426 = math.exp %1425 : vector<2x32xf32>
    %cst_460 = arith.constant 1.000000e+00 : f32
    %1427 = vector.broadcast %cst_460 : f32 to vector<2x32xf32>
    %1428 = arith.addf %1427, %1426 : vector<2x32xf32>
    %cst_461 = arith.constant 1.000000e+00 : f32
    %1429 = vector.broadcast %cst_461 : f32 to vector<2x32xf32>
    %1430 = arith.divf %1429, %1428 : vector<2x32xf32>
    %1431 = vector.extract_strided_slice %1422 {offsets = [0, 32], sizes = [2, 32], strides = [1, 1]} : vector<2x128xf32> to vector<2x32xf32>
    %cst_462 = arith.constant 0.000000e+00 : f32
    %1432 = vector.broadcast %cst_462 : f32 to vector<2x32xf32>
    %1433 = arith.subf %1432, %1431 : vector<2x32xf32>
    %1434 = math.exp %1433 : vector<2x32xf32>
    %cst_463 = arith.constant 1.000000e+00 : f32
    %1435 = vector.broadcast %cst_463 : f32 to vector<2x32xf32>
    %1436 = arith.addf %1435, %1434 : vector<2x32xf32>
    %cst_464 = arith.constant 1.000000e+00 : f32
    %1437 = vector.broadcast %cst_464 : f32 to vector<2x32xf32>
    %1438 = arith.divf %1437, %1436 : vector<2x32xf32>
    %1439 = vector.extract_strided_slice %1422 {offsets = [0, 64], sizes = [2, 32], strides = [1, 1]} : vector<2x128xf32> to vector<2x32xf32>
    %1440 = math.tanh %1439 : vector<2x32xf32>
    %1441 = vector.extract_strided_slice %1422 {offsets = [0, 96], sizes = [2, 32], strides = [1, 1]} : vector<2x128xf32> to vector<2x32xf32>
    %cst_465 = arith.constant 0.000000e+00 : f32
    %1442 = vector.broadcast %cst_465 : f32 to vector<2x32xf32>
    %1443 = arith.subf %1442, %1441 : vector<2x32xf32>
    %1444 = math.exp %1443 : vector<2x32xf32>
    %cst_466 = arith.constant 1.000000e+00 : f32
    %1445 = vector.broadcast %cst_466 : f32 to vector<2x32xf32>
    %1446 = arith.addf %1445, %1444 : vector<2x32xf32>
    %cst_467 = arith.constant 1.000000e+00 : f32
    %1447 = vector.broadcast %cst_467 : f32 to vector<2x32xf32>
    %1448 = arith.divf %1447, %1446 : vector<2x32xf32>
    %1449 = arith.mulf %1438, %1409 : vector<2x32xf32>
    %1450 = arith.mulf %1430, %1440 : vector<2x32xf32>
    %1451 = arith.addf %1449, %1450 : vector<2x32xf32>
    %1452 = math.tanh %1451 : vector<2x32xf32>
    %1453 = arith.mulf %1448, %1452 : vector<2x32xf32>
    %cst_468 = arith.constant dense<0.000000e+00> : vector<2x1xf32>
    %1454 = tpu.matmul %1453, %14, %cst_468 {dimension_numbers = #tpu.dot_dimension_numbers<[1], [0], [0], [1], [0, 0, 1, 1], [], []>} : vector<2x32xf32>, vector<32x1xf32>, vector<2x1xf32> -> vector<2x1xf32>
    %1455 = vector.broadcast %15 : vector<1x1xf32> to vector<2x1xf32>
    %1456 = arith.addf %1454, %1455 : vector<2x1xf32>
    %c4_469 = arith.constant 4 : index
    %c0_470 = arith.constant 0 : index
    %c0_471 = arith.constant 0 : index
    %1457 = vector.load %arg11[%c4_469, %c0_470, %c0_471] : memref<16x2x1xf32, #tpu.memory_space<vmem>>, vector<1x2x1xf32>
    %1458 = vector.shape_cast %1457 : vector<1x2x1xf32> to vector<2x1xf32>
    %1459 = vector.shape_cast %1456 : vector<2x1xf32> to vector<1x2x1xf32>
    tpu.vector_store %arg11[%c4_469, %c0_470, %c0_471], %1459 {strides = array<i32>} : memref<16x2x1xf32, #tpu.memory_space<vmem>>, vector<1x2x1xf32>,
    %cst_472 = arith.constant dense<0.000000e+00> : vector<2x128xf32>
    %1460 = tpu.matmul %1453, %11, %cst_472 {dimension_numbers = #tpu.dot_dimension_numbers<[1], [0], [0], [1], [0, 0, 1, 1], [], []>} : vector<2x32xf32>, vector<32x128xf32>, vector<2x128xf32> -> vector<2x128xf32>
    %cst_473 = arith.constant dense<0.000000e+00> : vector<2x128xf32>
    %1461 = tpu.matmul %1453, %12, %cst_473 {dimension_numbers = #tpu.dot_dimension_numbers<[1], [0], [0], [1], [0, 0, 1, 1], [], []>} : vector<2x32xf32>, vector<32x128xf32>, vector<2x128xf32> -> vector<2x128xf32>
    %1462 = arith.addf %1460, %1461 : vector<2x128xf32>
    %1463 = vector.broadcast %13 : vector<1x128xf32> to vector<2x128xf32>
    %1464 = arith.addf %1462, %1463 : vector<2x128xf32>
    %1465 = vector.extract_strided_slice %1464 {offsets = [0, 0], sizes = [2, 32], strides = [1, 1]} : vector<2x128xf32> to vector<2x32xf32>
    %cst_474 = arith.constant 0.000000e+00 : f32
    %1466 = vector.broadcast %cst_474 : f32 to vector<2x32xf32>
    %1467 = arith.subf %1466, %1465 : vector<2x32xf32>
    %1468 = math.exp %1467 : vector<2x32xf32>
    %cst_475 = arith.constant 1.000000e+00 : f32
    %1469 = vector.broadcast %cst_475 : f32 to vector<2x32xf32>
    %1470 = arith.addf %1469, %1468 : vector<2x32xf32>
    %cst_476 = arith.constant 1.000000e+00 : f32
    %1471 = vector.broadcast %cst_476 : f32 to vector<2x32xf32>
    %1472 = arith.divf %1471, %1470 : vector<2x32xf32>
    %1473 = vector.extract_strided_slice %1464 {offsets = [0, 32], sizes = [2, 32], strides = [1, 1]} : vector<2x128xf32> to vector<2x32xf32>
    %cst_477 = arith.constant 0.000000e+00 : f32
    %1474 = vector.broadcast %cst_477 : f32 to vector<2x32xf32>
    %1475 = arith.subf %1474, %1473 : vector<2x32xf32>
    %1476 = math.exp %1475 : vector<2x32xf32>
    %cst_478 = arith.constant 1.000000e+00 : f32
    %1477 = vector.broadcast %cst_478 : f32 to vector<2x32xf32>
    %1478 = arith.addf %1477, %1476 : vector<2x32xf32>
    %cst_479 = arith.constant 1.000000e+00 : f32
    %1479 = vector.broadcast %cst_479 : f32 to vector<2x32xf32>
    %1480 = arith.divf %1479, %1478 : vector<2x32xf32>
    %1481 = vector.extract_strided_slice %1464 {offsets = [0, 64], sizes = [2, 32], strides = [1, 1]} : vector<2x128xf32> to vector<2x32xf32>
    %1482 = math.tanh %1481 : vector<2x32xf32>
    %1483 = vector.extract_strided_slice %1464 {offsets = [0, 96], sizes = [2, 32], strides = [1, 1]} : vector<2x128xf32> to vector<2x32xf32>
    %cst_480 = arith.constant 0.000000e+00 : f32
    %1484 = vector.broadcast %cst_480 : f32 to vector<2x32xf32>
    %1485 = arith.subf %1484, %1483 : vector<2x32xf32>
    %1486 = math.exp %1485 : vector<2x32xf32>
    %cst_481 = arith.constant 1.000000e+00 : f32
    %1487 = vector.broadcast %cst_481 : f32 to vector<2x32xf32>
    %1488 = arith.addf %1487, %1486 : vector<2x32xf32>
    %cst_482 = arith.constant 1.000000e+00 : f32
    %1489 = vector.broadcast %cst_482 : f32 to vector<2x32xf32>
    %1490 = arith.divf %1489, %1488 : vector<2x32xf32>
    %1491 = arith.mulf %1480, %1451 : vector<2x32xf32>
    %1492 = arith.mulf %1472, %1482 : vector<2x32xf32>
    %1493 = arith.addf %1491, %1492 : vector<2x32xf32>
    %1494 = math.tanh %1493 : vector<2x32xf32>
    %1495 = arith.mulf %1490, %1494 : vector<2x32xf32>
    %cst_483 = arith.constant dense<0.000000e+00> : vector<2x1xf32>
    %1496 = tpu.matmul %1495, %14, %cst_483 {dimension_numbers = #tpu.dot_dimension_numbers<[1], [0], [0], [1], [0, 0, 1, 1], [], []>} : vector<2x32xf32>, vector<32x1xf32>, vector<2x1xf32> -> vector<2x1xf32>
    %1497 = vector.broadcast %15 : vector<1x1xf32> to vector<2x1xf32>
    %1498 = arith.addf %1496, %1497 : vector<2x1xf32>
    %c5_484 = arith.constant 5 : index
    %c0_485 = arith.constant 0 : index
    %c0_486 = arith.constant 0 : index
    %1499 = vector.load %arg11[%c5_484, %c0_485, %c0_486] : memref<16x2x1xf32, #tpu.memory_space<vmem>>, vector<1x2x1xf32>
    %1500 = vector.shape_cast %1499 : vector<1x2x1xf32> to vector<2x1xf32>
    %1501 = vector.shape_cast %1498 : vector<2x1xf32> to vector<1x2x1xf32>
    tpu.vector_store %arg11[%c5_484, %c0_485, %c0_486], %1501 {strides = array<i32>} : memref<16x2x1xf32, #tpu.memory_space<vmem>>, vector<1x2x1xf32>,
    %cst_487 = arith.constant dense<0.000000e+00> : vector<2x128xf32>
    %1502 = tpu.matmul %1495, %11, %cst_487 {dimension_numbers = #tpu.dot_dimension_numbers<[1], [0], [0], [1], [0, 0, 1, 1], [], []>} : vector<2x32xf32>, vector<32x128xf32>, vector<2x128xf32> -> vector<2x128xf32>
    %cst_488 = arith.constant dense<0.000000e+00> : vector<2x128xf32>
    %1503 = tpu.matmul %1495, %12, %cst_488 {dimension_numbers = #tpu.dot_dimension_numbers<[1], [0], [0], [1], [0, 0, 1, 1], [], []>} : vector<2x32xf32>, vector<32x128xf32>, vector<2x128xf32> -> vector<2x128xf32>
    %1504 = arith.addf %1502, %1503 : vector<2x128xf32>
    %1505 = vector.broadcast %13 : vector<1x128xf32> to vector<2x128xf32>
    %1506 = arith.addf %1504, %1505 : vector<2x128xf32>
    %1507 = vector.extract_strided_slice %1506 {offsets = [0, 0], sizes = [2, 32], strides = [1, 1]} : vector<2x128xf32> to vector<2x32xf32>
    %cst_489 = arith.constant 0.000000e+00 : f32
    %1508 = vector.broadcast %cst_489 : f32 to vector<2x32xf32>
    %1509 = arith.subf %1508, %1507 : vector<2x32xf32>
    %1510 = math.exp %1509 : vector<2x32xf32>
    %cst_490 = arith.constant 1.000000e+00 : f32
    %1511 = vector.broadcast %cst_490 : f32 to vector<2x32xf32>
    %1512 = arith.addf %1511, %1510 : vector<2x32xf32>
    %cst_491 = arith.constant 1.000000e+00 : f32
    %1513 = vector.broadcast %cst_491 : f32 to vector<2x32xf32>
    %1514 = arith.divf %1513, %1512 : vector<2x32xf32>
    %1515 = vector.extract_strided_slice %1506 {offsets = [0, 32], sizes = [2, 32], strides = [1, 1]} : vector<2x128xf32> to vector<2x32xf32>
    %cst_492 = arith.constant 0.000000e+00 : f32
    %1516 = vector.broadcast %cst_492 : f32 to vector<2x32xf32>
    %1517 = arith.subf %1516, %1515 : vector<2x32xf32>
    %1518 = math.exp %1517 : vector<2x32xf32>
    %cst_493 = arith.constant 1.000000e+00 : f32
    %1519 = vector.broadcast %cst_493 : f32 to vector<2x32xf32>
    %1520 = arith.addf %1519, %1518 : vector<2x32xf32>
    %cst_494 = arith.constant 1.000000e+00 : f32
    %1521 = vector.broadcast %cst_494 : f32 to vector<2x32xf32>
    %1522 = arith.divf %1521, %1520 : vector<2x32xf32>
    %1523 = vector.extract_strided_slice %1506 {offsets = [0, 64], sizes = [2, 32], strides = [1, 1]} : vector<2x128xf32> to vector<2x32xf32>
    %1524 = math.tanh %1523 : vector<2x32xf32>
    %1525 = vector.extract_strided_slice %1506 {offsets = [0, 96], sizes = [2, 32], strides = [1, 1]} : vector<2x128xf32> to vector<2x32xf32>
    %cst_495 = arith.constant 0.000000e+00 : f32
    %1526 = vector.broadcast %cst_495 : f32 to vector<2x32xf32>
    %1527 = arith.subf %1526, %1525 : vector<2x32xf32>
    %1528 = math.exp %1527 : vector<2x32xf32>
    %cst_496 = arith.constant 1.000000e+00 : f32
    %1529 = vector.broadcast %cst_496 : f32 to vector<2x32xf32>
    %1530 = arith.addf %1529, %1528 : vector<2x32xf32>
    %cst_497 = arith.constant 1.000000e+00 : f32
    %1531 = vector.broadcast %cst_497 : f32 to vector<2x32xf32>
    %1532 = arith.divf %1531, %1530 : vector<2x32xf32>
    %1533 = arith.mulf %1522, %1493 : vector<2x32xf32>
    %1534 = arith.mulf %1514, %1524 : vector<2x32xf32>
    %1535 = arith.addf %1533, %1534 : vector<2x32xf32>
    %1536 = math.tanh %1535 : vector<2x32xf32>
    %1537 = arith.mulf %1532, %1536 : vector<2x32xf32>
    %cst_498 = arith.constant dense<0.000000e+00> : vector<2x1xf32>
    %1538 = tpu.matmul %1537, %14, %cst_498 {dimension_numbers = #tpu.dot_dimension_numbers<[1], [0], [0], [1], [0, 0, 1, 1], [], []>} : vector<2x32xf32>, vector<32x1xf32>, vector<2x1xf32> -> vector<2x1xf32>
    %1539 = vector.broadcast %15 : vector<1x1xf32> to vector<2x1xf32>
    %1540 = arith.addf %1538, %1539 : vector<2x1xf32>
    %c6_499 = arith.constant 6 : index
    %c0_500 = arith.constant 0 : index
    %c0_501 = arith.constant 0 : index
    %1541 = vector.load %arg11[%c6_499, %c0_500, %c0_501] : memref<16x2x1xf32, #tpu.memory_space<vmem>>, vector<1x2x1xf32>
    %1542 = vector.shape_cast %1541 : vector<1x2x1xf32> to vector<2x1xf32>
    %1543 = vector.shape_cast %1540 : vector<2x1xf32> to vector<1x2x1xf32>
    tpu.vector_store %arg11[%c6_499, %c0_500, %c0_501], %1543 {strides = array<i32>} : memref<16x2x1xf32, #tpu.memory_space<vmem>>, vector<1x2x1xf32>,
    %cst_502 = arith.constant dense<0.000000e+00> : vector<2x128xf32>
    %1544 = tpu.matmul %1537, %11, %cst_502 {dimension_numbers = #tpu.dot_dimension_numbers<[1], [0], [0], [1], [0, 0, 1, 1], [], []>} : vector<2x32xf32>, vector<32x128xf32>, vector<2x128xf32> -> vector<2x128xf32>
    %cst_503 = arith.constant dense<0.000000e+00> : vector<2x128xf32>
    %1545 = tpu.matmul %1537, %12, %cst_503 {dimension_numbers = #tpu.dot_dimension_numbers<[1], [0], [0], [1], [0, 0, 1, 1], [], []>} : vector<2x32xf32>, vector<32x128xf32>, vector<2x128xf32> -> vector<2x128xf32>
    %1546 = arith.addf %1544, %1545 : vector<2x128xf32>
    %1547 = vector.broadcast %13 : vector<1x128xf32> to vector<2x128xf32>
    %1548 = arith.addf %1546, %1547 : vector<2x128xf32>
    %1549 = vector.extract_strided_slice %1548 {offsets = [0, 0], sizes = [2, 32], strides = [1, 1]} : vector<2x128xf32> to vector<2x32xf32>
    %cst_504 = arith.constant 0.000000e+00 : f32
    %1550 = vector.broadcast %cst_504 : f32 to vector<2x32xf32>
    %1551 = arith.subf %1550, %1549 : vector<2x32xf32>
    %1552 = math.exp %1551 : vector<2x32xf32>
    %cst_505 = arith.constant 1.000000e+00 : f32
    %1553 = vector.broadcast %cst_505 : f32 to vector<2x32xf32>
    %1554 = arith.addf %1553, %1552 : vector<2x32xf32>
    %cst_506 = arith.constant 1.000000e+00 : f32
    %1555 = vector.broadcast %cst_506 : f32 to vector<2x32xf32>
    %1556 = arith.divf %1555, %1554 : vector<2x32xf32>
    %1557 = vector.extract_strided_slice %1548 {offsets = [0, 32], sizes = [2, 32], strides = [1, 1]} : vector<2x128xf32> to vector<2x32xf32>
    %cst_507 = arith.constant 0.000000e+00 : f32
    %1558 = vector.broadcast %cst_507 : f32 to vector<2x32xf32>
    %1559 = arith.subf %1558, %1557 : vector<2x32xf32>
    %1560 = math.exp %1559 : vector<2x32xf32>
    %cst_508 = arith.constant 1.000000e+00 : f32
    %1561 = vector.broadcast %cst_508 : f32 to vector<2x32xf32>
    %1562 = arith.addf %1561, %1560 : vector<2x32xf32>
    %cst_509 = arith.constant 1.000000e+00 : f32
    %1563 = vector.broadcast %cst_509 : f32 to vector<2x32xf32>
    %1564 = arith.divf %1563, %1562 : vector<2x32xf32>
    %1565 = vector.extract_strided_slice %1548 {offsets = [0, 64], sizes = [2, 32], strides = [1, 1]} : vector<2x128xf32> to vector<2x32xf32>
    %1566 = math.tanh %1565 : vector<2x32xf32>
    %1567 = vector.extract_strided_slice %1548 {offsets = [0, 96], sizes = [2, 32], strides = [1, 1]} : vector<2x128xf32> to vector<2x32xf32>
    %cst_510 = arith.constant 0.000000e+00 : f32
    %1568 = vector.broadcast %cst_510 : f32 to vector<2x32xf32>
    %1569 = arith.subf %1568, %1567 : vector<2x32xf32>
    %1570 = math.exp %1569 : vector<2x32xf32>
    %cst_511 = arith.constant 1.000000e+00 : f32
    %1571 = vector.broadcast %cst_511 : f32 to vector<2x32xf32>
    %1572 = arith.addf %1571, %1570 : vector<2x32xf32>
    %cst_512 = arith.constant 1.000000e+00 : f32
    %1573 = vector.broadcast %cst_512 : f32 to vector<2x32xf32>
    %1574 = arith.divf %1573, %1572 : vector<2x32xf32>
    %1575 = arith.mulf %1564, %1535 : vector<2x32xf32>
    %1576 = arith.mulf %1556, %1566 : vector<2x32xf32>
    %1577 = arith.addf %1575, %1576 : vector<2x32xf32>
    %1578 = math.tanh %1577 : vector<2x32xf32>
    %1579 = arith.mulf %1574, %1578 : vector<2x32xf32>
    %cst_513 = arith.constant dense<0.000000e+00> : vector<2x1xf32>
    %1580 = tpu.matmul %1579, %14, %cst_513 {dimension_numbers = #tpu.dot_dimension_numbers<[1], [0], [0], [1], [0, 0, 1, 1], [], []>} : vector<2x32xf32>, vector<32x1xf32>, vector<2x1xf32> -> vector<2x1xf32>
    %1581 = vector.broadcast %15 : vector<1x1xf32> to vector<2x1xf32>
    %1582 = arith.addf %1580, %1581 : vector<2x1xf32>
    %c7_514 = arith.constant 7 : index
    %c0_515 = arith.constant 0 : index
    %c0_516 = arith.constant 0 : index
    %1583 = vector.load %arg11[%c7_514, %c0_515, %c0_516] : memref<16x2x1xf32, #tpu.memory_space<vmem>>, vector<1x2x1xf32>
    %1584 = vector.shape_cast %1583 : vector<1x2x1xf32> to vector<2x1xf32>
    %1585 = vector.shape_cast %1582 : vector<2x1xf32> to vector<1x2x1xf32>
    tpu.vector_store %arg11[%c7_514, %c0_515, %c0_516], %1585 {strides = array<i32>} : memref<16x2x1xf32, #tpu.memory_space<vmem>>, vector<1x2x1xf32>,
    %cst_517 = arith.constant dense<0.000000e+00> : vector<2x128xf32>
    %1586 = tpu.matmul %1579, %11, %cst_517 {dimension_numbers = #tpu.dot_dimension_numbers<[1], [0], [0], [1], [0, 0, 1, 1], [], []>} : vector<2x32xf32>, vector<32x128xf32>, vector<2x128xf32> -> vector<2x128xf32>
    %cst_518 = arith.constant dense<0.000000e+00> : vector<2x128xf32>
    %1587 = tpu.matmul %1579, %12, %cst_518 {dimension_numbers = #tpu.dot_dimension_numbers<[1], [0], [0], [1], [0, 0, 1, 1], [], []>} : vector<2x32xf32>, vector<32x128xf32>, vector<2x128xf32> -> vector<2x128xf32>
    %1588 = arith.addf %1586, %1587 : vector<2x128xf32>
    %1589 = vector.broadcast %13 : vector<1x128xf32> to vector<2x128xf32>
    %1590 = arith.addf %1588, %1589 : vector<2x128xf32>
    %1591 = vector.extract_strided_slice %1590 {offsets = [0, 0], sizes = [2, 32], strides = [1, 1]} : vector<2x128xf32> to vector<2x32xf32>
    %cst_519 = arith.constant 0.000000e+00 : f32
    %1592 = vector.broadcast %cst_519 : f32 to vector<2x32xf32>
    %1593 = arith.subf %1592, %1591 : vector<2x32xf32>
    %1594 = math.exp %1593 : vector<2x32xf32>
    %cst_520 = arith.constant 1.000000e+00 : f32
    %1595 = vector.broadcast %cst_520 : f32 to vector<2x32xf32>
    %1596 = arith.addf %1595, %1594 : vector<2x32xf32>
    %cst_521 = arith.constant 1.000000e+00 : f32
    %1597 = vector.broadcast %cst_521 : f32 to vector<2x32xf32>
    %1598 = arith.divf %1597, %1596 : vector<2x32xf32>
    %1599 = vector.extract_strided_slice %1590 {offsets = [0, 32], sizes = [2, 32], strides = [1, 1]} : vector<2x128xf32> to vector<2x32xf32>
    %cst_522 = arith.constant 0.000000e+00 : f32
    %1600 = vector.broadcast %cst_522 : f32 to vector<2x32xf32>
    %1601 = arith.subf %1600, %1599 : vector<2x32xf32>
    %1602 = math.exp %1601 : vector<2x32xf32>
    %cst_523 = arith.constant 1.000000e+00 : f32
    %1603 = vector.broadcast %cst_523 : f32 to vector<2x32xf32>
    %1604 = arith.addf %1603, %1602 : vector<2x32xf32>
    %cst_524 = arith.constant 1.000000e+00 : f32
    %1605 = vector.broadcast %cst_524 : f32 to vector<2x32xf32>
    %1606 = arith.divf %1605, %1604 : vector<2x32xf32>
    %1607 = vector.extract_strided_slice %1590 {offsets = [0, 64], sizes = [2, 32], strides = [1, 1]} : vector<2x128xf32> to vector<2x32xf32>
    %1608 = math.tanh %1607 : vector<2x32xf32>
    %1609 = vector.extract_strided_slice %1590 {offsets = [0, 96], sizes = [2, 32], strides = [1, 1]} : vector<2x128xf32> to vector<2x32xf32>
    %cst_525 = arith.constant 0.000000e+00 : f32
    %1610 = vector.broadcast %cst_525 : f32 to vector<2x32xf32>
    %1611 = arith.subf %1610, %1609 : vector<2x32xf32>
    %1612 = math.exp %1611 : vector<2x32xf32>
    %cst_526 = arith.constant 1.000000e+00 : f32
    %1613 = vector.broadcast %cst_526 : f32 to vector<2x32xf32>
    %1614 = arith.addf %1613, %1612 : vector<2x32xf32>
    %cst_527 = arith.constant 1.000000e+00 : f32
    %1615 = vector.broadcast %cst_527 : f32 to vector<2x32xf32>
    %1616 = arith.divf %1615, %1614 : vector<2x32xf32>
    %1617 = arith.mulf %1606, %1577 : vector<2x32xf32>
    %1618 = arith.mulf %1598, %1608 : vector<2x32xf32>
    %1619 = arith.addf %1617, %1618 : vector<2x32xf32>
    %1620 = math.tanh %1619 : vector<2x32xf32>
    %1621 = arith.mulf %1616, %1620 : vector<2x32xf32>
    %cst_528 = arith.constant dense<0.000000e+00> : vector<2x1xf32>
    %1622 = tpu.matmul %1621, %14, %cst_528 {dimension_numbers = #tpu.dot_dimension_numbers<[1], [0], [0], [1], [0, 0, 1, 1], [], []>} : vector<2x32xf32>, vector<32x1xf32>, vector<2x1xf32> -> vector<2x1xf32>
    %1623 = vector.broadcast %15 : vector<1x1xf32> to vector<2x1xf32>
    %1624 = arith.addf %1622, %1623 : vector<2x1xf32>
    %c8_529 = arith.constant 8 : index
    %c0_530 = arith.constant 0 : index
    %c0_531 = arith.constant 0 : index
    %1625 = vector.load %arg11[%c8_529, %c0_530, %c0_531] : memref<16x2x1xf32, #tpu.memory_space<vmem>>, vector<1x2x1xf32>
    %1626 = vector.shape_cast %1625 : vector<1x2x1xf32> to vector<2x1xf32>
    %1627 = vector.shape_cast %1624 : vector<2x1xf32> to vector<1x2x1xf32>
    tpu.vector_store %arg11[%c8_529, %c0_530, %c0_531], %1627 {strides = array<i32>} : memref<16x2x1xf32, #tpu.memory_space<vmem>>, vector<1x2x1xf32>,
    %cst_532 = arith.constant dense<0.000000e+00> : vector<2x128xf32>
    %1628 = tpu.matmul %1621, %11, %cst_532 {dimension_numbers = #tpu.dot_dimension_numbers<[1], [0], [0], [1], [0, 0, 1, 1], [], []>} : vector<2x32xf32>, vector<32x128xf32>, vector<2x128xf32> -> vector<2x128xf32>
    %cst_533 = arith.constant dense<0.000000e+00> : vector<2x128xf32>
    %1629 = tpu.matmul %1621, %12, %cst_533 {dimension_numbers = #tpu.dot_dimension_numbers<[1], [0], [0], [1], [0, 0, 1, 1], [], []>} : vector<2x32xf32>, vector<32x128xf32>, vector<2x128xf32> -> vector<2x128xf32>
    %1630 = arith.addf %1628, %1629 : vector<2x128xf32>
    %1631 = vector.broadcast %13 : vector<1x128xf32> to vector<2x128xf32>
    %1632 = arith.addf %1630, %1631 : vector<2x128xf32>
    %1633 = vector.extract_strided_slice %1632 {offsets = [0, 0], sizes = [2, 32], strides = [1, 1]} : vector<2x128xf32> to vector<2x32xf32>
    %cst_534 = arith.constant 0.000000e+00 : f32
    %1634 = vector.broadcast %cst_534 : f32 to vector<2x32xf32>
    %1635 = arith.subf %1634, %1633 : vector<2x32xf32>
    %1636 = math.exp %1635 : vector<2x32xf32>
    %cst_535 = arith.constant 1.000000e+00 : f32
    %1637 = vector.broadcast %cst_535 : f32 to vector<2x32xf32>
    %1638 = arith.addf %1637, %1636 : vector<2x32xf32>
    %cst_536 = arith.constant 1.000000e+00 : f32
    %1639 = vector.broadcast %cst_536 : f32 to vector<2x32xf32>
    %1640 = arith.divf %1639, %1638 : vector<2x32xf32>
    %1641 = vector.extract_strided_slice %1632 {offsets = [0, 32], sizes = [2, 32], strides = [1, 1]} : vector<2x128xf32> to vector<2x32xf32>
    %cst_537 = arith.constant 0.000000e+00 : f32
    %1642 = vector.broadcast %cst_537 : f32 to vector<2x32xf32>
    %1643 = arith.subf %1642, %1641 : vector<2x32xf32>
    %1644 = math.exp %1643 : vector<2x32xf32>
    %cst_538 = arith.constant 1.000000e+00 : f32
    %1645 = vector.broadcast %cst_538 : f32 to vector<2x32xf32>
    %1646 = arith.addf %1645, %1644 : vector<2x32xf32>
    %cst_539 = arith.constant 1.000000e+00 : f32
    %1647 = vector.broadcast %cst_539 : f32 to vector<2x32xf32>
    %1648 = arith.divf %1647, %1646 : vector<2x32xf32>
    %1649 = vector.extract_strided_slice %1632 {offsets = [0, 64], sizes = [2, 32], strides = [1, 1]} : vector<2x128xf32> to vector<2x32xf32>
    %1650 = math.tanh %1649 : vector<2x32xf32>
    %1651 = vector.extract_strided_slice %1632 {offsets = [0, 96], sizes = [2, 32], strides = [1, 1]} : vector<2x128xf32> to vector<2x32xf32>
    %cst_540 = arith.constant 0.000000e+00 : f32
    %1652 = vector.broadcast %cst_540 : f32 to vector<2x32xf32>
    %1653 = arith.subf %1652, %1651 : vector<2x32xf32>
    %1654 = math.exp %1653 : vector<2x32xf32>
    %cst_541 = arith.constant 1.000000e+00 : f32
    %1655 = vector.broadcast %cst_541 : f32 to vector<2x32xf32>
    %1656 = arith.addf %1655, %1654 : vector<2x32xf32>
    %cst_542 = arith.constant 1.000000e+00 : f32
    %1657 = vector.broadcast %cst_542 : f32 to vector<2x32xf32>
    %1658 = arith.divf %1657, %1656 : vector<2x32xf32>
    %1659 = arith.mulf %1648, %1619 : vector<2x32xf32>
    %1660 = arith.mulf %1640, %1650 : vector<2x32xf32>
    %1661 = arith.addf %1659, %1660 : vector<2x32xf32>
    %1662 = math.tanh %1661 : vector<2x32xf32>
    %1663 = arith.mulf %1658, %1662 : vector<2x32xf32>
    %cst_543 = arith.constant dense<0.000000e+00> : vector<2x1xf32>
    %1664 = tpu.matmul %1663, %14, %cst_543 {dimension_numbers = #tpu.dot_dimension_numbers<[1], [0], [0], [1], [0, 0, 1, 1], [], []>} : vector<2x32xf32>, vector<32x1xf32>, vector<2x1xf32> -> vector<2x1xf32>
    %1665 = vector.broadcast %15 : vector<1x1xf32> to vector<2x1xf32>
    %1666 = arith.addf %1664, %1665 : vector<2x1xf32>
    %c9_544 = arith.constant 9 : index
    %c0_545 = arith.constant 0 : index
    %c0_546 = arith.constant 0 : index
    %1667 = vector.load %arg11[%c9_544, %c0_545, %c0_546] : memref<16x2x1xf32, #tpu.memory_space<vmem>>, vector<1x2x1xf32>
    %1668 = vector.shape_cast %1667 : vector<1x2x1xf32> to vector<2x1xf32>
    %1669 = vector.shape_cast %1666 : vector<2x1xf32> to vector<1x2x1xf32>
    tpu.vector_store %arg11[%c9_544, %c0_545, %c0_546], %1669 {strides = array<i32>} : memref<16x2x1xf32, #tpu.memory_space<vmem>>, vector<1x2x1xf32>,
    %cst_547 = arith.constant dense<0.000000e+00> : vector<2x128xf32>
    %1670 = tpu.matmul %1663, %11, %cst_547 {dimension_numbers = #tpu.dot_dimension_numbers<[1], [0], [0], [1], [0, 0, 1, 1], [], []>} : vector<2x32xf32>, vector<32x128xf32>, vector<2x128xf32> -> vector<2x128xf32>
    %cst_548 = arith.constant dense<0.000000e+00> : vector<2x128xf32>
    %1671 = tpu.matmul %1663, %12, %cst_548 {dimension_numbers = #tpu.dot_dimension_numbers<[1], [0], [0], [1], [0, 0, 1, 1], [], []>} : vector<2x32xf32>, vector<32x128xf32>, vector<2x128xf32> -> vector<2x128xf32>
    %1672 = arith.addf %1670, %1671 : vector<2x128xf32>
    %1673 = vector.broadcast %13 : vector<1x128xf32> to vector<2x128xf32>
    %1674 = arith.addf %1672, %1673 : vector<2x128xf32>
    %1675 = vector.extract_strided_slice %1674 {offsets = [0, 0], sizes = [2, 32], strides = [1, 1]} : vector<2x128xf32> to vector<2x32xf32>
    %cst_549 = arith.constant 0.000000e+00 : f32
    %1676 = vector.broadcast %cst_549 : f32 to vector<2x32xf32>
    %1677 = arith.subf %1676, %1675 : vector<2x32xf32>
    %1678 = math.exp %1677 : vector<2x32xf32>
    %cst_550 = arith.constant 1.000000e+00 : f32
    %1679 = vector.broadcast %cst_550 : f32 to vector<2x32xf32>
    %1680 = arith.addf %1679, %1678 : vector<2x32xf32>
    %cst_551 = arith.constant 1.000000e+00 : f32
    %1681 = vector.broadcast %cst_551 : f32 to vector<2x32xf32>
    %1682 = arith.divf %1681, %1680 : vector<2x32xf32>
    %1683 = vector.extract_strided_slice %1674 {offsets = [0, 32], sizes = [2, 32], strides = [1, 1]} : vector<2x128xf32> to vector<2x32xf32>
    %cst_552 = arith.constant 0.000000e+00 : f32
    %1684 = vector.broadcast %cst_552 : f32 to vector<2x32xf32>
    %1685 = arith.subf %1684, %1683 : vector<2x32xf32>
    %1686 = math.exp %1685 : vector<2x32xf32>
    %cst_553 = arith.constant 1.000000e+00 : f32
    %1687 = vector.broadcast %cst_553 : f32 to vector<2x32xf32>
    %1688 = arith.addf %1687, %1686 : vector<2x32xf32>
    %cst_554 = arith.constant 1.000000e+00 : f32
    %1689 = vector.broadcast %cst_554 : f32 to vector<2x32xf32>
    %1690 = arith.divf %1689, %1688 : vector<2x32xf32>
    %1691 = vector.extract_strided_slice %1674 {offsets = [0, 64], sizes = [2, 32], strides = [1, 1]} : vector<2x128xf32> to vector<2x32xf32>
    %1692 = math.tanh %1691 : vector<2x32xf32>
    %1693 = vector.extract_strided_slice %1674 {offsets = [0, 96], sizes = [2, 32], strides = [1, 1]} : vector<2x128xf32> to vector<2x32xf32>
    %cst_555 = arith.constant 0.000000e+00 : f32
    %1694 = vector.broadcast %cst_555 : f32 to vector<2x32xf32>
    %1695 = arith.subf %1694, %1693 : vector<2x32xf32>
    %1696 = math.exp %1695 : vector<2x32xf32>
    %cst_556 = arith.constant 1.000000e+00 : f32
    %1697 = vector.broadcast %cst_556 : f32 to vector<2x32xf32>
    %1698 = arith.addf %1697, %1696 : vector<2x32xf32>
    %cst_557 = arith.constant 1.000000e+00 : f32
    %1699 = vector.broadcast %cst_557 : f32 to vector<2x32xf32>
    %1700 = arith.divf %1699, %1698 : vector<2x32xf32>
    %1701 = arith.mulf %1690, %1661 : vector<2x32xf32>
    %1702 = arith.mulf %1682, %1692 : vector<2x32xf32>
    %1703 = arith.addf %1701, %1702 : vector<2x32xf32>
    %1704 = math.tanh %1703 : vector<2x32xf32>
    %1705 = arith.mulf %1700, %1704 : vector<2x32xf32>
    %cst_558 = arith.constant dense<0.000000e+00> : vector<2x1xf32>
    %1706 = tpu.matmul %1705, %14, %cst_558 {dimension_numbers = #tpu.dot_dimension_numbers<[1], [0], [0], [1], [0, 0, 1, 1], [], []>} : vector<2x32xf32>, vector<32x1xf32>, vector<2x1xf32> -> vector<2x1xf32>
    %1707 = vector.broadcast %15 : vector<1x1xf32> to vector<2x1xf32>
    %1708 = arith.addf %1706, %1707 : vector<2x1xf32>
    %c10_559 = arith.constant 10 : index
    %c0_560 = arith.constant 0 : index
    %c0_561 = arith.constant 0 : index
    %1709 = vector.load %arg11[%c10_559, %c0_560, %c0_561] : memref<16x2x1xf32, #tpu.memory_space<vmem>>, vector<1x2x1xf32>
    %1710 = vector.shape_cast %1709 : vector<1x2x1xf32> to vector<2x1xf32>
    %1711 = vector.shape_cast %1708 : vector<2x1xf32> to vector<1x2x1xf32>
    tpu.vector_store %arg11[%c10_559, %c0_560, %c0_561], %1711 {strides = array<i32>} : memref<16x2x1xf32, #tpu.memory_space<vmem>>, vector<1x2x1xf32>,
    %cst_562 = arith.constant dense<0.000000e+00> : vector<2x128xf32>
    %1712 = tpu.matmul %1705, %11, %cst_562 {dimension_numbers = #tpu.dot_dimension_numbers<[1], [0], [0], [1], [0, 0, 1, 1], [], []>} : vector<2x32xf32>, vector<32x128xf32>, vector<2x128xf32> -> vector<2x128xf32>
    %cst_563 = arith.constant dense<0.000000e+00> : vector<2x128xf32>
    %1713 = tpu.matmul %1705, %12, %cst_563 {dimension_numbers = #tpu.dot_dimension_numbers<[1], [0], [0], [1], [0, 0, 1, 1], [], []>} : vector<2x32xf32>, vector<32x128xf32>, vector<2x128xf32> -> vector<2x128xf32>
    %1714 = arith.addf %1712, %1713 : vector<2x128xf32>
    %1715 = vector.broadcast %13 : vector<1x128xf32> to vector<2x128xf32>
    %1716 = arith.addf %1714, %1715 : vector<2x128xf32>
    %1717 = vector.extract_strided_slice %1716 {offsets = [0, 0], sizes = [2, 32], strides = [1, 1]} : vector<2x128xf32> to vector<2x32xf32>
    %cst_564 = arith.constant 0.000000e+00 : f32
    %1718 = vector.broadcast %cst_564 : f32 to vector<2x32xf32>
    %1719 = arith.subf %1718, %1717 : vector<2x32xf32>
    %1720 = math.exp %1719 : vector<2x32xf32>
    %cst_565 = arith.constant 1.000000e+00 : f32
    %1721 = vector.broadcast %cst_565 : f32 to vector<2x32xf32>
    %1722 = arith.addf %1721, %1720 : vector<2x32xf32>
    %cst_566 = arith.constant 1.000000e+00 : f32
    %1723 = vector.broadcast %cst_566 : f32 to vector<2x32xf32>
    %1724 = arith.divf %1723, %1722 : vector<2x32xf32>
    %1725 = vector.extract_strided_slice %1716 {offsets = [0, 32], sizes = [2, 32], strides = [1, 1]} : vector<2x128xf32> to vector<2x32xf32>
    %cst_567 = arith.constant 0.000000e+00 : f32
    %1726 = vector.broadcast %cst_567 : f32 to vector<2x32xf32>
    %1727 = arith.subf %1726, %1725 : vector<2x32xf32>
    %1728 = math.exp %1727 : vector<2x32xf32>
    %cst_568 = arith.constant 1.000000e+00 : f32
    %1729 = vector.broadcast %cst_568 : f32 to vector<2x32xf32>
    %1730 = arith.addf %1729, %1728 : vector<2x32xf32>
    %cst_569 = arith.constant 1.000000e+00 : f32
    %1731 = vector.broadcast %cst_569 : f32 to vector<2x32xf32>
    %1732 = arith.divf %1731, %1730 : vector<2x32xf32>
    %1733 = vector.extract_strided_slice %1716 {offsets = [0, 64], sizes = [2, 32], strides = [1, 1]} : vector<2x128xf32> to vector<2x32xf32>
    %1734 = math.tanh %1733 : vector<2x32xf32>
    %1735 = vector.extract_strided_slice %1716 {offsets = [0, 96], sizes = [2, 32], strides = [1, 1]} : vector<2x128xf32> to vector<2x32xf32>
    %cst_570 = arith.constant 0.000000e+00 : f32
    %1736 = vector.broadcast %cst_570 : f32 to vector<2x32xf32>
    %1737 = arith.subf %1736, %1735 : vector<2x32xf32>
    %1738 = math.exp %1737 : vector<2x32xf32>
    %cst_571 = arith.constant 1.000000e+00 : f32
    %1739 = vector.broadcast %cst_571 : f32 to vector<2x32xf32>
    %1740 = arith.addf %1739, %1738 : vector<2x32xf32>
    %cst_572 = arith.constant 1.000000e+00 : f32
    %1741 = vector.broadcast %cst_572 : f32 to vector<2x32xf32>
    %1742 = arith.divf %1741, %1740 : vector<2x32xf32>
    %1743 = arith.mulf %1732, %1703 : vector<2x32xf32>
    %1744 = arith.mulf %1724, %1734 : vector<2x32xf32>
    %1745 = arith.addf %1743, %1744 : vector<2x32xf32>
    %1746 = math.tanh %1745 : vector<2x32xf32>
    %1747 = arith.mulf %1742, %1746 : vector<2x32xf32>
    %cst_573 = arith.constant dense<0.000000e+00> : vector<2x1xf32>
    %1748 = tpu.matmul %1747, %14, %cst_573 {dimension_numbers = #tpu.dot_dimension_numbers<[1], [0], [0], [1], [0, 0, 1, 1], [], []>} : vector<2x32xf32>, vector<32x1xf32>, vector<2x1xf32> -> vector<2x1xf32>
    %1749 = vector.broadcast %15 : vector<1x1xf32> to vector<2x1xf32>
    %1750 = arith.addf %1748, %1749 : vector<2x1xf32>
    %c11_574 = arith.constant 11 : index
    %c0_575 = arith.constant 0 : index
    %c0_576 = arith.constant 0 : index
    %1751 = vector.load %arg11[%c11_574, %c0_575, %c0_576] : memref<16x2x1xf32, #tpu.memory_space<vmem>>, vector<1x2x1xf32>
    %1752 = vector.shape_cast %1751 : vector<1x2x1xf32> to vector<2x1xf32>
    %1753 = vector.shape_cast %1750 : vector<2x1xf32> to vector<1x2x1xf32>
    tpu.vector_store %arg11[%c11_574, %c0_575, %c0_576], %1753 {strides = array<i32>} : memref<16x2x1xf32, #tpu.memory_space<vmem>>, vector<1x2x1xf32>,
    %cst_577 = arith.constant dense<0.000000e+00> : vector<2x128xf32>
    %1754 = tpu.matmul %1747, %11, %cst_577 {dimension_numbers = #tpu.dot_dimension_numbers<[1], [0], [0], [1], [0, 0, 1, 1], [], []>} : vector<2x32xf32>, vector<32x128xf32>, vector<2x128xf32> -> vector<2x128xf32>
    %cst_578 = arith.constant dense<0.000000e+00> : vector<2x128xf32>
    %1755 = tpu.matmul %1747, %12, %cst_578 {dimension_numbers = #tpu.dot_dimension_numbers<[1], [0], [0], [1], [0, 0, 1, 1], [], []>} : vector<2x32xf32>, vector<32x128xf32>, vector<2x128xf32> -> vector<2x128xf32>
    %1756 = arith.addf %1754, %1755 : vector<2x128xf32>
    %1757 = vector.broadcast %13 : vector<1x128xf32> to vector<2x128xf32>
    %1758 = arith.addf %1756, %1757 : vector<2x128xf32>
    %1759 = vector.extract_strided_slice %1758 {offsets = [0, 0], sizes = [2, 32], strides = [1, 1]} : vector<2x128xf32> to vector<2x32xf32>
    %cst_579 = arith.constant 0.000000e+00 : f32
    %1760 = vector.broadcast %cst_579 : f32 to vector<2x32xf32>
    %1761 = arith.subf %1760, %1759 : vector<2x32xf32>
    %1762 = math.exp %1761 : vector<2x32xf32>
    %cst_580 = arith.constant 1.000000e+00 : f32
    %1763 = vector.broadcast %cst_580 : f32 to vector<2x32xf32>
    %1764 = arith.addf %1763, %1762 : vector<2x32xf32>
    %cst_581 = arith.constant 1.000000e+00 : f32
    %1765 = vector.broadcast %cst_581 : f32 to vector<2x32xf32>
    %1766 = arith.divf %1765, %1764 : vector<2x32xf32>
    %1767 = vector.extract_strided_slice %1758 {offsets = [0, 32], sizes = [2, 32], strides = [1, 1]} : vector<2x128xf32> to vector<2x32xf32>
    %cst_582 = arith.constant 0.000000e+00 : f32
    %1768 = vector.broadcast %cst_582 : f32 to vector<2x32xf32>
    %1769 = arith.subf %1768, %1767 : vector<2x32xf32>
    %1770 = math.exp %1769 : vector<2x32xf32>
    %cst_583 = arith.constant 1.000000e+00 : f32
    %1771 = vector.broadcast %cst_583 : f32 to vector<2x32xf32>
    %1772 = arith.addf %1771, %1770 : vector<2x32xf32>
    %cst_584 = arith.constant 1.000000e+00 : f32
    %1773 = vector.broadcast %cst_584 : f32 to vector<2x32xf32>
    %1774 = arith.divf %1773, %1772 : vector<2x32xf32>
    %1775 = vector.extract_strided_slice %1758 {offsets = [0, 64], sizes = [2, 32], strides = [1, 1]} : vector<2x128xf32> to vector<2x32xf32>
    %1776 = math.tanh %1775 : vector<2x32xf32>
    %1777 = vector.extract_strided_slice %1758 {offsets = [0, 96], sizes = [2, 32], strides = [1, 1]} : vector<2x128xf32> to vector<2x32xf32>
    %cst_585 = arith.constant 0.000000e+00 : f32
    %1778 = vector.broadcast %cst_585 : f32 to vector<2x32xf32>
    %1779 = arith.subf %1778, %1777 : vector<2x32xf32>
    %1780 = math.exp %1779 : vector<2x32xf32>
    %cst_586 = arith.constant 1.000000e+00 : f32
    %1781 = vector.broadcast %cst_586 : f32 to vector<2x32xf32>
    %1782 = arith.addf %1781, %1780 : vector<2x32xf32>
    %cst_587 = arith.constant 1.000000e+00 : f32
    %1783 = vector.broadcast %cst_587 : f32 to vector<2x32xf32>
    %1784 = arith.divf %1783, %1782 : vector<2x32xf32>
    %1785 = arith.mulf %1774, %1745 : vector<2x32xf32>
    %1786 = arith.mulf %1766, %1776 : vector<2x32xf32>
    %1787 = arith.addf %1785, %1786 : vector<2x32xf32>
    %1788 = math.tanh %1787 : vector<2x32xf32>
    %1789 = arith.mulf %1784, %1788 : vector<2x32xf32>
    %cst_588 = arith.constant dense<0.000000e+00> : vector<2x1xf32>
    %1790 = tpu.matmul %1789, %14, %cst_588 {dimension_numbers = #tpu.dot_dimension_numbers<[1], [0], [0], [1], [0, 0, 1, 1], [], []>} : vector<2x32xf32>, vector<32x1xf32>, vector<2x1xf32> -> vector<2x1xf32>
    %1791 = vector.broadcast %15 : vector<1x1xf32> to vector<2x1xf32>
    %1792 = arith.addf %1790, %1791 : vector<2x1xf32>
    %c12_589 = arith.constant 12 : index
    %c0_590 = arith.constant 0 : index
    %c0_591 = arith.constant 0 : index
    %1793 = vector.load %arg11[%c12_589, %c0_590, %c0_591] : memref<16x2x1xf32, #tpu.memory_space<vmem>>, vector<1x2x1xf32>
    %1794 = vector.shape_cast %1793 : vector<1x2x1xf32> to vector<2x1xf32>
    %1795 = vector.shape_cast %1792 : vector<2x1xf32> to vector<1x2x1xf32>
    tpu.vector_store %arg11[%c12_589, %c0_590, %c0_591], %1795 {strides = array<i32>} : memref<16x2x1xf32, #tpu.memory_space<vmem>>, vector<1x2x1xf32>,
    %cst_592 = arith.constant dense<0.000000e+00> : vector<2x128xf32>
    %1796 = tpu.matmul %1789, %11, %cst_592 {dimension_numbers = #tpu.dot_dimension_numbers<[1], [0], [0], [1], [0, 0, 1, 1], [], []>} : vector<2x32xf32>, vector<32x128xf32>, vector<2x128xf32> -> vector<2x128xf32>
    %cst_593 = arith.constant dense<0.000000e+00> : vector<2x128xf32>
    %1797 = tpu.matmul %1789, %12, %cst_593 {dimension_numbers = #tpu.dot_dimension_numbers<[1], [0], [0], [1], [0, 0, 1, 1], [], []>} : vector<2x32xf32>, vector<32x128xf32>, vector<2x128xf32> -> vector<2x128xf32>
    %1798 = arith.addf %1796, %1797 : vector<2x128xf32>
    %1799 = vector.broadcast %13 : vector<1x128xf32> to vector<2x128xf32>
    %1800 = arith.addf %1798, %1799 : vector<2x128xf32>
    %1801 = vector.extract_strided_slice %1800 {offsets = [0, 0], sizes = [2, 32], strides = [1, 1]} : vector<2x128xf32> to vector<2x32xf32>
    %cst_594 = arith.constant 0.000000e+00 : f32
    %1802 = vector.broadcast %cst_594 : f32 to vector<2x32xf32>
    %1803 = arith.subf %1802, %1801 : vector<2x32xf32>
    %1804 = math.exp %1803 : vector<2x32xf32>
    %cst_595 = arith.constant 1.000000e+00 : f32
    %1805 = vector.broadcast %cst_595 : f32 to vector<2x32xf32>
    %1806 = arith.addf %1805, %1804 : vector<2x32xf32>
    %cst_596 = arith.constant 1.000000e+00 : f32
    %1807 = vector.broadcast %cst_596 : f32 to vector<2x32xf32>
    %1808 = arith.divf %1807, %1806 : vector<2x32xf32>
    %1809 = vector.extract_strided_slice %1800 {offsets = [0, 32], sizes = [2, 32], strides = [1, 1]} : vector<2x128xf32> to vector<2x32xf32>
    %cst_597 = arith.constant 0.000000e+00 : f32
    %1810 = vector.broadcast %cst_597 : f32 to vector<2x32xf32>
    %1811 = arith.subf %1810, %1809 : vector<2x32xf32>
    %1812 = math.exp %1811 : vector<2x32xf32>
    %cst_598 = arith.constant 1.000000e+00 : f32
    %1813 = vector.broadcast %cst_598 : f32 to vector<2x32xf32>
    %1814 = arith.addf %1813, %1812 : vector<2x32xf32>
    %cst_599 = arith.constant 1.000000e+00 : f32
    %1815 = vector.broadcast %cst_599 : f32 to vector<2x32xf32>
    %1816 = arith.divf %1815, %1814 : vector<2x32xf32>
    %1817 = vector.extract_strided_slice %1800 {offsets = [0, 64], sizes = [2, 32], strides = [1, 1]} : vector<2x128xf32> to vector<2x32xf32>
    %1818 = math.tanh %1817 : vector<2x32xf32>
    %1819 = vector.extract_strided_slice %1800 {offsets = [0, 96], sizes = [2, 32], strides = [1, 1]} : vector<2x128xf32> to vector<2x32xf32>
    %cst_600 = arith.constant 0.000000e+00 : f32
    %1820 = vector.broadcast %cst_600 : f32 to vector<2x32xf32>
    %1821 = arith.subf %1820, %1819 : vector<2x32xf32>
    %1822 = math.exp %1821 : vector<2x32xf32>
    %cst_601 = arith.constant 1.000000e+00 : f32
    %1823 = vector.broadcast %cst_601 : f32 to vector<2x32xf32>
    %1824 = arith.addf %1823, %1822 : vector<2x32xf32>
    %cst_602 = arith.constant 1.000000e+00 : f32
    %1825 = vector.broadcast %cst_602 : f32 to vector<2x32xf32>
    %1826 = arith.divf %1825, %1824 : vector<2x32xf32>
    %1827 = arith.mulf %1816, %1787 : vector<2x32xf32>
    %1828 = arith.mulf %1808, %1818 : vector<2x32xf32>
    %1829 = arith.addf %1827, %1828 : vector<2x32xf32>
    %1830 = math.tanh %1829 : vector<2x32xf32>
    %1831 = arith.mulf %1826, %1830 : vector<2x32xf32>
    %cst_603 = arith.constant dense<0.000000e+00> : vector<2x1xf32>
    %1832 = tpu.matmul %1831, %14, %cst_603 {dimension_numbers = #tpu.dot_dimension_numbers<[1], [0], [0], [1], [0, 0, 1, 1], [], []>} : vector<2x32xf32>, vector<32x1xf32>, vector<2x1xf32> -> vector<2x1xf32>
    %1833 = vector.broadcast %15 : vector<1x1xf32> to vector<2x1xf32>
    %1834 = arith.addf %1832, %1833 : vector<2x1xf32>
    %c13_604 = arith.constant 13 : index
    %c0_605 = arith.constant 0 : index
    %c0_606 = arith.constant 0 : index
    %1835 = vector.load %arg11[%c13_604, %c0_605, %c0_606] : memref<16x2x1xf32, #tpu.memory_space<vmem>>, vector<1x2x1xf32>
    %1836 = vector.shape_cast %1835 : vector<1x2x1xf32> to vector<2x1xf32>
    %1837 = vector.shape_cast %1834 : vector<2x1xf32> to vector<1x2x1xf32>
    tpu.vector_store %arg11[%c13_604, %c0_605, %c0_606], %1837 {strides = array<i32>} : memref<16x2x1xf32, #tpu.memory_space<vmem>>, vector<1x2x1xf32>,
    %cst_607 = arith.constant dense<0.000000e+00> : vector<2x128xf32>
    %1838 = tpu.matmul %1831, %11, %cst_607 {dimension_numbers = #tpu.dot_dimension_numbers<[1], [0], [0], [1], [0, 0, 1, 1], [], []>} : vector<2x32xf32>, vector<32x128xf32>, vector<2x128xf32> -> vector<2x128xf32>
    %cst_608 = arith.constant dense<0.000000e+00> : vector<2x128xf32>
    %1839 = tpu.matmul %1831, %12, %cst_608 {dimension_numbers = #tpu.dot_dimension_numbers<[1], [0], [0], [1], [0, 0, 1, 1], [], []>} : vector<2x32xf32>, vector<32x128xf32>, vector<2x128xf32> -> vector<2x128xf32>
    %1840 = arith.addf %1838, %1839 : vector<2x128xf32>
    %1841 = vector.broadcast %13 : vector<1x128xf32> to vector<2x128xf32>
    %1842 = arith.addf %1840, %1841 : vector<2x128xf32>
    %1843 = vector.extract_strided_slice %1842 {offsets = [0, 0], sizes = [2, 32], strides = [1, 1]} : vector<2x128xf32> to vector<2x32xf32>
    %cst_609 = arith.constant 0.000000e+00 : f32
    %1844 = vector.broadcast %cst_609 : f32 to vector<2x32xf32>
    %1845 = arith.subf %1844, %1843 : vector<2x32xf32>
    %1846 = math.exp %1845 : vector<2x32xf32>
    %cst_610 = arith.constant 1.000000e+00 : f32
    %1847 = vector.broadcast %cst_610 : f32 to vector<2x32xf32>
    %1848 = arith.addf %1847, %1846 : vector<2x32xf32>
    %cst_611 = arith.constant 1.000000e+00 : f32
    %1849 = vector.broadcast %cst_611 : f32 to vector<2x32xf32>
    %1850 = arith.divf %1849, %1848 : vector<2x32xf32>
    %1851 = vector.extract_strided_slice %1842 {offsets = [0, 32], sizes = [2, 32], strides = [1, 1]} : vector<2x128xf32> to vector<2x32xf32>
    %cst_612 = arith.constant 0.000000e+00 : f32
    %1852 = vector.broadcast %cst_612 : f32 to vector<2x32xf32>
    %1853 = arith.subf %1852, %1851 : vector<2x32xf32>
    %1854 = math.exp %1853 : vector<2x32xf32>
    %cst_613 = arith.constant 1.000000e+00 : f32
    %1855 = vector.broadcast %cst_613 : f32 to vector<2x32xf32>
    %1856 = arith.addf %1855, %1854 : vector<2x32xf32>
    %cst_614 = arith.constant 1.000000e+00 : f32
    %1857 = vector.broadcast %cst_614 : f32 to vector<2x32xf32>
    %1858 = arith.divf %1857, %1856 : vector<2x32xf32>
    %1859 = vector.extract_strided_slice %1842 {offsets = [0, 64], sizes = [2, 32], strides = [1, 1]} : vector<2x128xf32> to vector<2x32xf32>
    %1860 = math.tanh %1859 : vector<2x32xf32>
    %1861 = vector.extract_strided_slice %1842 {offsets = [0, 96], sizes = [2, 32], strides = [1, 1]} : vector<2x128xf32> to vector<2x32xf32>
    %cst_615 = arith.constant 0.000000e+00 : f32
    %1862 = vector.broadcast %cst_615 : f32 to vector<2x32xf32>
    %1863 = arith.subf %1862, %1861 : vector<2x32xf32>
    %1864 = math.exp %1863 : vector<2x32xf32>
    %cst_616 = arith.constant 1.000000e+00 : f32
    %1865 = vector.broadcast %cst_616 : f32 to vector<2x32xf32>
    %1866 = arith.addf %1865, %1864 : vector<2x32xf32>
    %cst_617 = arith.constant 1.000000e+00 : f32
    %1867 = vector.broadcast %cst_617 : f32 to vector<2x32xf32>
    %1868 = arith.divf %1867, %1866 : vector<2x32xf32>
    %1869 = arith.mulf %1858, %1829 : vector<2x32xf32>
    %1870 = arith.mulf %1850, %1860 : vector<2x32xf32>
    %1871 = arith.addf %1869, %1870 : vector<2x32xf32>
    %1872 = math.tanh %1871 : vector<2x32xf32>
    %1873 = arith.mulf %1868, %1872 : vector<2x32xf32>
    %cst_618 = arith.constant dense<0.000000e+00> : vector<2x1xf32>
    %1874 = tpu.matmul %1873, %14, %cst_618 {dimension_numbers = #tpu.dot_dimension_numbers<[1], [0], [0], [1], [0, 0, 1, 1], [], []>} : vector<2x32xf32>, vector<32x1xf32>, vector<2x1xf32> -> vector<2x1xf32>
    %1875 = vector.broadcast %15 : vector<1x1xf32> to vector<2x1xf32>
    %1876 = arith.addf %1874, %1875 : vector<2x1xf32>
    %c14_619 = arith.constant 14 : index
    %c0_620 = arith.constant 0 : index
    %c0_621 = arith.constant 0 : index
    %1877 = vector.load %arg11[%c14_619, %c0_620, %c0_621] : memref<16x2x1xf32, #tpu.memory_space<vmem>>, vector<1x2x1xf32>
    %1878 = vector.shape_cast %1877 : vector<1x2x1xf32> to vector<2x1xf32>
    %1879 = vector.shape_cast %1876 : vector<2x1xf32> to vector<1x2x1xf32>
    tpu.vector_store %arg11[%c14_619, %c0_620, %c0_621], %1879 {strides = array<i32>} : memref<16x2x1xf32, #tpu.memory_space<vmem>>, vector<1x2x1xf32>,
    %cst_622 = arith.constant dense<0.000000e+00> : vector<2x128xf32>
    %1880 = tpu.matmul %1873, %11, %cst_622 {dimension_numbers = #tpu.dot_dimension_numbers<[1], [0], [0], [1], [0, 0, 1, 1], [], []>} : vector<2x32xf32>, vector<32x128xf32>, vector<2x128xf32> -> vector<2x128xf32>
    %cst_623 = arith.constant dense<0.000000e+00> : vector<2x128xf32>
    %1881 = tpu.matmul %1873, %12, %cst_623 {dimension_numbers = #tpu.dot_dimension_numbers<[1], [0], [0], [1], [0, 0, 1, 1], [], []>} : vector<2x32xf32>, vector<32x128xf32>, vector<2x128xf32> -> vector<2x128xf32>
    %1882 = arith.addf %1880, %1881 : vector<2x128xf32>
    %1883 = vector.broadcast %13 : vector<1x128xf32> to vector<2x128xf32>
    %1884 = arith.addf %1882, %1883 : vector<2x128xf32>
    %1885 = vector.extract_strided_slice %1884 {offsets = [0, 0], sizes = [2, 32], strides = [1, 1]} : vector<2x128xf32> to vector<2x32xf32>
    %cst_624 = arith.constant 0.000000e+00 : f32
    %1886 = vector.broadcast %cst_624 : f32 to vector<2x32xf32>
    %1887 = arith.subf %1886, %1885 : vector<2x32xf32>
    %1888 = math.exp %1887 : vector<2x32xf32>
    %cst_625 = arith.constant 1.000000e+00 : f32
    %1889 = vector.broadcast %cst_625 : f32 to vector<2x32xf32>
    %1890 = arith.addf %1889, %1888 : vector<2x32xf32>
    %cst_626 = arith.constant 1.000000e+00 : f32
    %1891 = vector.broadcast %cst_626 : f32 to vector<2x32xf32>
    %1892 = arith.divf %1891, %1890 : vector<2x32xf32>
    %1893 = vector.extract_strided_slice %1884 {offsets = [0, 32], sizes = [2, 32], strides = [1, 1]} : vector<2x128xf32> to vector<2x32xf32>
    %cst_627 = arith.constant 0.000000e+00 : f32
    %1894 = vector.broadcast %cst_627 : f32 to vector<2x32xf32>
    %1895 = arith.subf %1894, %1893 : vector<2x32xf32>
    %1896 = math.exp %1895 : vector<2x32xf32>
    %cst_628 = arith.constant 1.000000e+00 : f32
    %1897 = vector.broadcast %cst_628 : f32 to vector<2x32xf32>
    %1898 = arith.addf %1897, %1896 : vector<2x32xf32>
    %cst_629 = arith.constant 1.000000e+00 : f32
    %1899 = vector.broadcast %cst_629 : f32 to vector<2x32xf32>
    %1900 = arith.divf %1899, %1898 : vector<2x32xf32>
    %1901 = vector.extract_strided_slice %1884 {offsets = [0, 64], sizes = [2, 32], strides = [1, 1]} : vector<2x128xf32> to vector<2x32xf32>
    %1902 = math.tanh %1901 : vector<2x32xf32>
    %1903 = vector.extract_strided_slice %1884 {offsets = [0, 96], sizes = [2, 32], strides = [1, 1]} : vector<2x128xf32> to vector<2x32xf32>
    %cst_630 = arith.constant 0.000000e+00 : f32
    %1904 = vector.broadcast %cst_630 : f32 to vector<2x32xf32>
    %1905 = arith.subf %1904, %1903 : vector<2x32xf32>
    %1906 = math.exp %1905 : vector<2x32xf32>
    %cst_631 = arith.constant 1.000000e+00 : f32
    %1907 = vector.broadcast %cst_631 : f32 to vector<2x32xf32>
    %1908 = arith.addf %1907, %1906 : vector<2x32xf32>
    %cst_632 = arith.constant 1.000000e+00 : f32
    %1909 = vector.broadcast %cst_632 : f32 to vector<2x32xf32>
    %1910 = arith.divf %1909, %1908 : vector<2x32xf32>
    %1911 = arith.mulf %1900, %1871 : vector<2x32xf32>
    %1912 = arith.mulf %1892, %1902 : vector<2x32xf32>
    %1913 = arith.addf %1911, %1912 : vector<2x32xf32>
    %1914 = math.tanh %1913 : vector<2x32xf32>
    %1915 = arith.mulf %1910, %1914 : vector<2x32xf32>
    %cst_633 = arith.constant dense<0.000000e+00> : vector<2x1xf32>
    %1916 = tpu.matmul %1915, %14, %cst_633 {dimension_numbers = #tpu.dot_dimension_numbers<[1], [0], [0], [1], [0, 0, 1, 1], [], []>} : vector<2x32xf32>, vector<32x1xf32>, vector<2x1xf32> -> vector<2x1xf32>
    %1917 = vector.broadcast %15 : vector<1x1xf32> to vector<2x1xf32>
    %1918 = arith.addf %1916, %1917 : vector<2x1xf32>
    %c15_634 = arith.constant 15 : index
    %c0_635 = arith.constant 0 : index
    %c0_636 = arith.constant 0 : index
    %1919 = vector.load %arg11[%c15_634, %c0_635, %c0_636] : memref<16x2x1xf32, #tpu.memory_space<vmem>>, vector<1x2x1xf32>
    %1920 = vector.shape_cast %1919 : vector<1x2x1xf32> to vector<2x1xf32>
    %1921 = vector.shape_cast %1918 : vector<2x1xf32> to vector<1x2x1xf32>
    tpu.vector_store %arg11[%c15_634, %c0_635, %c0_636], %1921 {strides = array<i32>} : memref<16x2x1xf32, #tpu.memory_space<vmem>>, vector<1x2x1xf32>,
    return
  }
  func.func @transform_0(%arg0: i32) -> (i32, i32, i32) {
    %c0_i32 = arith.constant 0 : i32
    %c0_i32_0 = arith.constant 0 : i32
    %c0_i32_1 = arith.constant 0 : i32
    %c0_i32_2 = arith.constant 0 : i32
    return %c0_i32, %c0_i32_0, %c0_i32_1 : i32, i32, i32
  }
  func.func @transform_1(%arg0: i32) -> (i32, i32) {
    %c0_i32 = arith.constant 0 : i32
    %c0_i32_0 = arith.constant 0 : i32
    %c0_i32_1 = arith.constant 0 : i32
    return %c0_i32, %c0_i32_0 : i32, i32
  }
  func.func @transform_2(%arg0: i32) -> (i32, i32, i32) {
    %c0_i32 = arith.constant 0 : i32
    %c0_i32_0 = arith.constant 0 : i32
    %c0_i32_1 = arith.constant 0 : i32
    %c0_i32_2 = arith.constant 0 : i32
    return %c0_i32, %c0_i32_0, %c0_i32_1 : i32, i32, i32
  }
  func.func @transform_3(%arg0: i32) -> (i32, i32, i32) {
    %c0_i32 = arith.constant 0 : i32
    %c0_i32_0 = arith.constant 0 : i32
    %c0_i32_1 = arith.constant 0 : i32
    %c0_i32_2 = arith.constant 0 : i32
    return %c0_i32, %c0_i32_0, %c0_i32_1 : i32, i32, i32
  }
  func.func @transform_4(%arg0: i32) -> (i32, i32, i32) {
    %c0_i32 = arith.constant 0 : i32
    %c0_i32_0 = arith.constant 0 : i32
    %c0_i32_1 = arith.constant 0 : i32
    %c0_i32_2 = arith.constant 0 : i32
    return %c0_i32, %c0_i32_0, %c0_i32_1 : i32, i32, i32
  }
  func.func @transform_5(%arg0: i32) -> (i32, i32) {
    %c0_i32 = arith.constant 0 : i32
    %c0_i32_0 = arith.constant 0 : i32
    %c0_i32_1 = arith.constant 0 : i32
    return %c0_i32, %c0_i32_0 : i32, i32
  }
  func.func @transform_6(%arg0: i32) -> (i32, i32) {
    %c0_i32 = arith.constant 0 : i32
    %c0_i32_0 = arith.constant 0 : i32
    %c0_i32_1 = arith.constant 0 : i32
    return %c0_i32, %c0_i32_0 : i32, i32
  }
  func.func @transform_7(%arg0: i32) -> (i32, i32) {
    %c0_i32 = arith.constant 0 : i32
    %c0_i32_0 = arith.constant 0 : i32
    %c0_i32_1 = arith.constant 0 : i32
    return %c0_i32, %c0_i32_0 : i32, i32
  }
  func.func @transform_8(%arg0: i32) -> (i32, i32) {
    %c0_i32 = arith.constant 0 : i32
    %c0_i32_0 = arith.constant 0 : i32
    %c0_i32_1 = arith.constant 0 : i32
    return %c0_i32, %c0_i32_0 : i32, i32
  }
  func.func @transform_9(%arg0: i32) -> (i32, i32) {
    %c0_i32 = arith.constant 0 : i32
    %c0_i32_0 = arith.constant 0 : i32
    %c0_i32_1 = arith.constant 0 : i32
    return %c0_i32, %c0_i32_0 : i32, i32
  }
  func.func @transform_10(%arg0: i32) -> (i32, i32, i32) {
    %c0_i32 = arith.constant 0 : i32
    %c0_i32_0 = arith.constant 0 : i32
    %c0_i32_1 = arith.constant 0 : i32
    %c0_i32_2 = arith.constant 0 : i32
    return %c0_i32, %c0_i32_0, %c0_i32_1 : i32, i32, i32
  }
  func.func @transform_11(%arg0: i32) -> (i32, i32) {
    %c0_i32 = arith.constant 0 : i32
    %c0_i32_0 = arith.constant 0 : i32
    %c0_i32_1 = arith.constant 0 : i32
    return %c0_i32, %c0_i32_0 : i32, i32
  }
}

</mosaic_0001>

<llo_original>
// kernel: tpu_custom_call.1
$region0: #{tpu_custom_call.1}
  #allocation0 [shape = 'u32[]', space=smem, size = 0x4, offset = 0x4, fixed_abs, tag = 'smem constant byte address 0x4 - core index']
  #allocation1 [shape = 'u32[144,128]{1,0:T(1,128)}', space=vmem, size = 0x12000, scoped, tag = 'internal scratch']
  #allocation2 [shape = 'f32[1,1]{1,0:T(1,128)S(1)}', space=vmem, size = 0x200, scoped, tag = 'scoped memory for tpu_custom_call.1']
  %s0 = inlined_call_operand.vmem [shape: f32[16,2,1], index: 0, kind: input, shape index: {}]
  %s1 = inlined_call_operand.vmem [shape: f32[1,128], index: 1, kind: input, shape index: {}]
  %s2 = inlined_call_operand.vmem [shape: f32[2,32,128], index: 2, kind: input, shape index: {}]
  %s3 = inlined_call_operand.hbm [shape: f32[2,32,128], index: 3, kind: input, shape index: {}]
  %s4 = inlined_call_operand.vmem [shape: f32[2,1,128], index: 4, kind: input, shape index: {}]
  %s5 = inlined_call_operand.hbm [shape: f32[32,128], index: 5, kind: input, shape index: {}]
  %s6 = inlined_call_operand.hbm [shape: f32[32,128], index: 6, kind: input, shape index: {}]
  %s7 = inlined_call_operand.vmem [shape: f32[1,128], index: 7, kind: input, shape index: {}]
  %s8 = inlined_call_operand.vmem [shape: f32[32,1], index: 8, kind: input, shape index: {}]
  %s9 = inlined_call_operand.<no memory space> [shape: f32[1,1], index: 9, kind: input, shape index: {}]
  %s10 = inlined_call_operand.vmem [shape: f32[16,2,1], index: 10, kind: output, shape index: {0}]
  %s11 = inlined_call_operand.hbm [shape: f32[2,32], index: 11, kind: output, shape index: {1}]
  %12 = xla_tuple %s10, %s11
  %s13 = sld [smem:[#allocation0]]
  $region70: #{tpu_custom_call.1} parent=0
    _
  %s15 = ssub.s32 1, %s13
  %s16 = scalar_select 0, %s15, %s13
  %v17 = vstv %s9
  %18 = vst [vmem:[#allocation2] sm:$0x1] %v17
  $region1: #{tpu_custom_call.1} parent=0
    #allocation3 [shape = 'u8[32768]{0}', space=vmem, size = 0x8000, scoped, tag = 'input window, operand 3, single buffered']
    #allocation4 [shape = 's32[1]{0}', space=sflag, size = 0x4, scoped, tag = 'scoped memory for tpu_custom_call.1']
    #allocation5 [shape = 's32[1]{0}', space=sflag, size = 0x4, scoped, tag = 'scoped memory for tpu_custom_call.1']
    #allocation6 [shape = 'u8[16384]{0}', space=vmem, size = 0x4000, scoped, tag = 'input window, operand 5, single buffered']
    #allocation7 [shape = 's32[1]{0}', space=sflag, size = 0x4, scoped, tag = 'scoped memory for tpu_custom_call.1']
    #allocation8 [shape = 'u8[16384]{0}', space=vmem, size = 0x4000, scoped, tag = 'input window, operand 6, single buffered']
    #allocation9 [shape = 'u8[1024]{0}', space=vmem, size = 0x400, scoped, tag = 'output window, operand 1, single buffered']
    %19 = vsyncpa [#allocation4], 0
    %20 = vsyncpa [#allocation7], 0
    %21 = vsyncpa [#allocation5], 0
    // Predicated region
    $region2: #{tpu_custom_call.1} parent=1 // pred_check
      _
    $region3: #{tpu_custom_call.1} parent=1 // pred_check_branch
      %23 = sbr.rel (0) target = $region5
    $region4: #{tpu_custom_call.1} parent=1 // pred_region
      _
    $region5: #{tpu_custom_call.1} parent=1 // pred_fallthru
      _
    // Predicated region
    $region6: #{tpu_custom_call.1} parent=1 // pred_check
      _
    $region7: #{tpu_custom_call.1} parent=1 // pred_check_branch
      %25 = sbr.rel (0) target = $region9
    $region8: #{tpu_custom_call.1} parent=1 // pred_region
      _
    $region9: #{tpu_custom_call.1} parent=1 // pred_fallthru
      _
    // Predicated region
    $region10: #{tpu_custom_call.1} parent=1 // pred_check
      _
    $region11: #{tpu_custom_call.1} parent=1 // pred_check_branch
      %27 = sbr.rel (0) target = $region13
    $region12: #{tpu_custom_call.1} parent=1 // pred_region
      _
    $region13: #{tpu_custom_call.1} parent=1 // pred_fallthru
      _
    // Predicated region
    $region14: #{tpu_custom_call.1} parent=1 // pred_check
      _
    $region15: #{tpu_custom_call.1} parent=1 // pred_check_branch
      %29 = sbr.rel (0) target = $region17
    $region16: #{tpu_custom_call.1} parent=1 // pred_region
      %s31 = ssub.s32 1024, 1024
      %32 = vsyncadd [#allocation4], %s31
      %s33 = sshll.u32 [#allocation3], 4
      %s34 = int_to_ptr.vmem [resolvable:$true] %s33
      %39 = dma.hbm_to_vmem [thread:$0]  %s3, 1024, %s34, [#allocation4], 128, 128, 8
    $region17: #{tpu_custom_call.1} parent=1 // pred_fallthru
      _
    // Predicated region
    $region18: #{tpu_custom_call.1} parent=1 // pred_check
      _
    $region19: #{tpu_custom_call.1} parent=1 // pred_check_branch
      %41 = sbr.rel (0) target = $region21
    $region20: #{tpu_custom_call.1} parent=1 // pred_region
      _
    $region21: #{tpu_custom_call.1} parent=1 // pred_fallthru
      _
    // Predicated region
    $region22: #{tpu_custom_call.1} parent=1 // pred_check
      _
    $region23: #{tpu_custom_call.1} parent=1 // pred_check_branch
      %43 = sbr.rel (0) target = $region25
    $region24: #{tpu_custom_call.1} parent=1 // pred_region
      %s45 = ssub.s32 512, 512
      %46 = vsyncadd [#allocation7], %s45
      %s47 = sshll.u32 [#allocation6], 4
      %s48 = int_to_ptr.vmem [resolvable:$true] %s47
      %53 = dma.hbm_to_vmem [thread:$0]  %s5, 512, %s48, [#allocation7], 128, 128, 8
    $region25: #{tpu_custom_call.1} parent=1 // pred_fallthru
      _
    // Predicated region
    $region26: #{tpu_custom_call.1} parent=1 // pred_check
      _
    $region27: #{tpu_custom_call.1} parent=1 // pred_check_branch
      %55 = sbr.rel (0) target = $region29
    $region28: #{tpu_custom_call.1} parent=1 // pred_region
      %s57 = ssub.s32 512, 512
      %58 = vsyncadd [#allocation7], %s57
      %s59 = sshll.u32 [#allocation8], 4
      %s60 = int_to_ptr.vmem [resolvable:$true] %s59
      %65 = dma.hbm_to_vmem [thread:$0]  %s6, 512, %s60, [#allocation7], 128, 128, 8
    $region29: #{tpu_custom_call.1} parent=1 // pred_fallthru
      _
    // Predicated region
    $region30: #{tpu_custom_call.1} parent=1 // pred_check
      _
    $region31: #{tpu_custom_call.1} parent=1 // pred_check_branch
      %67 = sbr.rel (0) target = $region33
    $region32: #{tpu_custom_call.1} parent=1 // pred_region
      _
    $region33: #{tpu_custom_call.1} parent=1 // pred_fallthru
      _
    // Predicated region
    $region34: #{tpu_custom_call.1} parent=1 // pred_check
      _
    $region35: #{tpu_custom_call.1} parent=1 // pred_check_branch
      %69 = sbr.rel (0) target = $region37
    $region36: #{tpu_custom_call.1} parent=1 // pred_region
      _
    $region37: #{tpu_custom_call.1} parent=1 // pred_fallthru
      _
    // Predicated region
    $region38: #{tpu_custom_call.1} parent=1 // pred_check
      _
    $region39: #{tpu_custom_call.1} parent=1 // pred_check_branch
      %71 = sbr.rel (0) target = $region41
    $region40: #{tpu_custom_call.1} parent=1 // pred_region
      _
    $region41: #{tpu_custom_call.1} parent=1 // pred_fallthru
      _
    // Predicated region
    $region42: #{tpu_custom_call.1} parent=1 // pred_check
      _
    $region43: #{tpu_custom_call.1} parent=1 // pred_check_branch
      %73 = sbr.rel (0) target = $region45
    $region44: #{tpu_custom_call.1} parent=1 // pred_region
      %74 = dma.done [#allocation4], 1024
    $region45: #{tpu_custom_call.1} parent=1 // pred_fallthru
      _
    // Predicated region
    $region46: #{tpu_custom_call.1} parent=1 // pred_check
      _
    $region47: #{tpu_custom_call.1} parent=1 // pred_check_branch
      %76 = sbr.rel (0) target = $region49
    $region48: #{tpu_custom_call.1} parent=1 // pred_region
      %77 = dma.done [#allocation7], 512
    $region49: #{tpu_custom_call.1} parent=1 // pred_fallthru
      _
    // Predicated region
    $region50: #{tpu_custom_call.1} parent=1 // pred_check
      _
    $region51: #{tpu_custom_call.1} parent=1 // pred_check_branch
      %79 = sbr.rel (0) target = $region53
    $region52: #{tpu_custom_call.1} parent=1 // pred_region
      %80 = dma.done [#allocation7], 512
    $region53: #{tpu_custom_call.1} parent=1 // pred_fallthru
      _
    %v81 = vld [vmem:[%s1] sm:$0x1]
    %s82 = scalar_lea.vmem %s2, 32
    %v83 = vld [vmem:[%s82] sm:$0xff]
    %v84 = vld [vmem:[%s82 + $0x8] sm:$0xff]
    %v85 = vld [vmem:[%s82 + $0x10] sm:$0xff]
    %v86 = vld [vmem:[%s82 + $0x18] sm:$0xff]
    %v87 = vld [vmem:[#allocation3] sm:$0xff]
    %v88 = vld [vmem:[#allocation3 + $0x8] sm:$0xff]
    %v89 = vld [vmem:[#allocation3 + $0x10] sm:$0xff]
    %v90 = vld [vmem:[#allocation3 + $0x18] sm:$0xff]
    %s91 = scalar_lea.vmem [#allocation3], 32
    %v92 = vld [vmem:[%s91] sm:$0xff]
    %v93 = vld [vmem:[%s91 + $0x8] sm:$0xff]
    %v94 = vld [vmem:[%s91 + $0x10] sm:$0xff]
    %v95 = vld [vmem:[%s91 + $0x18] sm:$0xff]
    %v96 = vld [vmem:[%s4] sm:$0x1]
    %s97 = scalar_lea.vmem %s4, 1
    %v98 = vld [vmem:[%s97] sm:$0x1]
    %v99 = vld [vmem:[#allocation6] sm:$0xff]
    %v100 = vld [vmem:[#allocation6 + $0x8] sm:$0xff]
    %v101 = vld [vmem:[#allocation6 + $0x10] sm:$0xff]
    %v102 = vld [vmem:[#allocation6 + $0x18] sm:$0xff]
    %v103 = vld [vmem:[#allocation8] sm:$0xff]
    %v104 = vld [vmem:[#allocation8 + $0x8] sm:$0xff]
    %v105 = vld [vmem:[#allocation8 + $0x10] sm:$0xff]
    %v106 = vld [vmem:[#allocation8 + $0x18] sm:$0xff]
    %v107 = vld [vmem:[%s7] sm:$0x1]
    %v108 = vld [vmem:[%s8] sm:$0xff]
    %v109 = vld [vmem:[%s8 + $0x8] sm:$0xff]
    %v110 = vld [vmem:[%s8 + $0x10] sm:$0xff]
    %v111 = vld [vmem:[%s8 + $0x18] sm:$0xff]
    %v112 = vld [vmem:[#allocation2] sm:$0x1]
    %v113 = vld [vmem:[%s0] sm:$0x3]
    %115 = vset.pattern.permute.xlu0 0
    %116 = vperm.xlu0 %115, %v113
    %v117 = vpop.permute.xlu0 %116
    %v120 = vlaneseq
    %v121 = vshrl.u32 %v120, 7
    %v122 = vsub.s32 0, %v121
    %v123 = vrot.slane %v81, %v122
    %v125 = vmul.f32 %v117, %v123
    %vm126 = vcmask 261120
    %v128 = vsel %vm126, 0.0, 0
    %130 = vmatprep.subr.mxu0 0.0
    %131 = vmatpush1.msra.mxu0 %v87
    %132 = vmatprep.subr.mxu0 0.0
    %133 = vmatpush1.msra.mxu0 %v88
    %134 = vmatprep.subr.mxu0 0.0
    %135 = vmatpush1.msra.mxu0 %v89
    %136 = vmatprep.subr.mxu0 0.0
    %137 = vmatpush1.msra.mxu0 %v90
    %138 = vmatprep.subr.mxu0 0.0
    %139 = vmatpush1.msra.mxu0 0.0
    %140 = vmatprep.subr.mxu0 0.0
    %141 = vmatpush1.msra.mxu0 0.0
    %142 = vmatprep.subr.mxu0 0.0
    %143 = vmatpush1.msra.mxu0 0.0
    %144 = vmatprep.subr.mxu0 0.0
    %145 = vmatpush1.msra.mxu0 0.0
    %146 = vmatprep.subr.mxu0 0.0
    %147 = vmatpush1.msra.mxu0 0.0
    %148 = vmatprep.subr.mxu0 0.0
    %149 = vmatpush1.msra.mxu0 0.0
    %150 = vmatprep.subr.mxu0 0.0
    %151 = vmatpush1.msra.mxu0 0.0
    %152 = vmatprep.subr.mxu0 0.0
    %153 = vmatpush1.msra.mxu0 0.0
    %154 = vmatprep.subr.mxu0 0.0
    %155 = vmatpush1.msra.mxu0 0.0
    %156 = vmatprep.subr.mxu0 0.0
    %157 = vmatpush1.msra.mxu0 0.0
    %158 = vmatprep.subr.mxu0 0.0
    %159 = vmatpush1.msra.mxu0 0.0
    %160 = vmatprep.subr.mxu0 0.0
    %161 = vmatpush1.msra.mxu0 0.0
    %162 = vmatprep.subr.mxu0 0.0
    %163 = vmatpush1.msra.mxu0 0.0
    %164 = vmatprep.subr.mxu0 0.0
    %165 = vmatpush1.msra.mxu0 0.0
    %166 = vmatprep.subr.mxu0 0.0
    %167 = vmatpush1.msra.mxu0 0.0
    %168 = vmatprep.subr.mxu0 0.0
    %169 = vmatpush1.msra.mxu0 0.0
    %170 = vmatprep.subr.mxu0 0.0
    %171 = vmatpush1.msra.mxu0 0.0
    %172 = vmatprep.subr.mxu0 0.0
    %173 = vmatpush1.msra.mxu0 0.0
    %174 = vmatprep.subr.mxu0 0.0
    %175 = vmatpush1.msra.mxu0 0.0
    %176 = vmatprep.subr.mxu0 0.0
    %177 = vmatpush1.msra.mxu0 0.0
    %178 = vmatprep.subr.mxu0 0.0
    %179 = vmatpush1.msra.mxu0 0.0
    %180 = vmatprep.subr.mxu0 0.0
    %181 = vmatpush1.msra.mxu0 0.0
    %182 = vmatprep.subr.mxu0 0.0
    %183 = vmatpush1.msra.mxu0 0.0
    %184 = vmatprep.subr.mxu0 0.0
    %185 = vmatpush1.msra.mxu0 0.0
    %186 = vmatprep.subr.mxu0 0.0
    %187 = vmatpush1.msra.mxu0 0.0
    %188 = vmatprep.subr.mxu0 0.0
    %189 = vmatpush1.msra.mxu0 0.0
    %190 = vmatprep.subr.mxu0 0.0
    %191 = vmatpush1.msra.mxu0 0.0
    %192 = vmatprep.subr.mxu0 0.0
    %193 = vmatpush1.msra.mxu0 0.0
    %194 = vmatprep.mubr.f32.mxu0 0.0
    %195 = vmatmul.mubr.f32.gmra.mrb[0].mxu0 %v128
    %v196 = vpop.f32.mrb[0].mxu0
    %v197 = vadd.f32 0.0, %v196
    %v198 = vpop.f32.mrb[0].mxu0
    %199 = vdwg.mxu0
    %v200 = vadd.f32 %v125, %v197
    %v202 = vlaneseq
    %v203 = vshrl.u32 %v202, 7
    %v204 = vsub.s32 0, %v203
    %v205 = vrot.slane %v96, %v204
    %v207 = vadd.f32 %v200, %v205
    %v208 = vsub.f32 0.0, %v207
    %v209 = vmul.f32 %v208, 1.442695
    %v210 = vpow.pop %v209
    %v211 = vadd.f32 %v210, 1.0
    %v212 = vrcp.pop %v211
    %v213 = vmul.f32 1.0, %v212
    %v214 = vtanh.pop %v207
    %v215 = vmul.f32 %v213, 0.0
    %217 = vrot.lane.b32.xlu0 %v214, 64
    %v218 = vpop.permute.xlu0 %217
    %v220 = vmul.f32 %v213, %v218
    %222 = vrot.lane.b32.xlu0 %v220, 32
    %v223 = vpop.permute.xlu0 %222
    %v225 = vadd.f32 %v215, %v223
    %v226 = vtanh.pop %v225
    %228 = vrot.lane.b32.xlu0 %v226, 64
    %v229 = vpop.permute.xlu0 %228
    %v231 = vmul.f32 %v213, %v229
    %232 = vmatprep.subr.mxu0 0.0
    %233 = vmatpush1.msra.mxu0 %v92
    %234 = vmatprep.subr.mxu0 0.0
    %235 = vmatpush1.msra.mxu0 %v93
    %236 = vmatprep.subr.mxu0 0.0
    %237 = vmatpush1.msra.mxu0 %v94
    %238 = vmatprep.subr.mxu0 0.0
    %239 = vmatpush1.msra.mxu0 %v95
    %240 = vmatprep.subr.mxu0 0.0
    %241 = vmatpush1.msra.mxu0 0.0
    %242 = vmatprep.subr.mxu0 0.0
    %243 = vmatpush1.msra.mxu0 0.0
    %244 = vmatprep.subr.mxu0 0.0
    %245 = vmatpush1.msra.mxu0 0.0
    %246 = vmatprep.subr.mxu0 0.0
    %247 = vmatpush1.msra.mxu0 0.0
    %248 = vmatprep.subr.mxu0 0.0
    %249 = vmatpush1.msra.mxu0 0.0
    %250 = vmatprep.subr.mxu0 0.0
    %251 = vmatpush1.msra.mxu0 0.0
    %252 = vmatprep.subr.mxu0 0.0
    %253 = vmatpush1.msra.mxu0 0.0
    %254 = vmatprep.subr.mxu0 0.0
    %255 = vmatpush1.msra.mxu0 0.0
    %256 = vmatprep.subr.mxu0 0.0
    %257 = vmatpush1.msra.mxu0 0.0
    %258 = vmatprep.subr.mxu0 0.0
    %259 = vmatpush1.msra.mxu0 0.0
    %260 = vmatprep.subr.mxu0 0.0
    %261 = vmatpush1.msra.mxu0 0.0
    %262 = vmatprep.subr.mxu0 0.0
    %263 = vmatpush1.msra.mxu0 0.0
    %264 = vmatprep.subr.mxu0 0.0
    %265 = vmatpush1.msra.mxu0 0.0
    %266 = vmatprep.subr.mxu0 0.0
    %267 = vmatpush1.msra.mxu0 0.0
    %268 = vmatprep.subr.mxu0 0.0
    %269 = vmatpush1.msra.mxu0 0.0
    %270 = vmatprep.subr.mxu0 0.0
    %271 = vmatpush1.msra.mxu0 0.0
    %272 = vmatprep.subr.mxu0 0.0
    %273 = vmatpush1.msra.mxu0 0.0
    %274 = vmatprep.subr.mxu0 0.0
    %275 = vmatpush1.msra.mxu0 0.0
    %276 = vmatprep.subr.mxu0 0.0
    %277 = vmatpush1.msra.mxu0 0.0
    %278 = vmatprep.subr.mxu0 0.0
    %279 = vmatpush1.msra.mxu0 0.0
    %280 = vmatprep.subr.mxu0 0.0
    %281 = vmatpush1.msra.mxu0 0.0
    %282 = vmatprep.subr.mxu0 0.0
    %283 = vmatpush1.msra.mxu0 0.0
    %284 = vmatprep.subr.mxu0 0.0
    %285 = vmatpush1.msra.mxu0 0.0
    %286 = vmatprep.subr.mxu0 0.0
    %287 = vmatpush1.msra.mxu0 0.0
    %288 = vmatprep.subr.mxu0 0.0
    %289 = vmatpush1.msra.mxu0 0.0
    %290 = vmatprep.subr.mxu0 0.0
    %291 = vmatpush1.msra.mxu0 0.0
    %292 = vmatprep.subr.mxu0 0.0
    %293 = vmatpush1.msra.mxu0 0.0
    %294 = vmatprep.subr.mxu0 0.0
    %295 = vmatpush1.msra.mxu0 0.0
    %296 = vmatprep.mubr.f32.mxu0 0.0
    %297 = vmatmul.mubr.f32.gmra.mrb[0].mxu0 %v128
    %v298 = vpop.f32.mrb[0].mxu0
    %v299 = vadd.f32 0.0, %v298
    %v300 = vpop.f32.mrb[0].mxu0
    %301 = vdwg.mxu0
    %303 = vrot.lane.b32.xlu0 %v231, 32
    %v304 = vpop.permute.xlu0 %303
    %v305 = vsel %vm126, %v304, 0
    %307 = vmatprep.subr.mxu0 0.0
    %308 = vmatpush1.msra.mxu0 %v83
    %309 = vmatprep.subr.mxu0 0.0
    %310 = vmatpush1.msra.mxu0 %v84
    %311 = vmatprep.subr.mxu0 0.0
    %312 = vmatpush1.msra.mxu0 %v85
    %313 = vmatprep.subr.mxu0 0.0
    %314 = vmatpush1.msra.mxu0 %v86
    %315 = vmatprep.subr.mxu0 0.0
    %316 = vmatpush1.msra.mxu0 0.0
    %317 = vmatprep.subr.mxu0 0.0
    %318 = vmatpush1.msra.mxu0 0.0
    %319 = vmatprep.subr.mxu0 0.0
    %320 = vmatpush1.msra.mxu0 0.0
    %321 = vmatprep.subr.mxu0 0.0
    %322 = vmatpush1.msra.mxu0 0.0
    %323 = vmatprep.subr.mxu0 0.0
    %324 = vmatpush1.msra.mxu0 0.0
    %325 = vmatprep.subr.mxu0 0.0
    %326 = vmatpush1.msra.mxu0 0.0
    %327 = vmatprep.subr.mxu0 0.0
    %328 = vmatpush1.msra.mxu0 0.0
    %329 = vmatprep.subr.mxu0 0.0
    %330 = vmatpush1.msra.mxu0 0.0
    %331 = vmatprep.subr.mxu0 0.0
    %332 = vmatpush1.msra.mxu0 0.0
    %333 = vmatprep.subr.mxu0 0.0
    %334 = vmatpush1.msra.mxu0 0.0
    %335 = vmatprep.subr.mxu0 0.0
    %336 = vmatpush1.msra.mxu0 0.0
    %337 = vmatprep.subr.mxu0 0.0
    %338 = vmatpush1.msra.mxu0 0.0
    %339 = vmatprep.subr.mxu0 0.0
    %340 = vmatpush1.msra.mxu0 0.0
    %341 = vmatprep.subr.mxu0 0.0
    %342 = vmatpush1.msra.mxu0 0.0
    %343 = vmatprep.subr.mxu0 0.0
    %344 = vmatpush1.msra.mxu0 0.0
    %345 = vmatprep.subr.mxu0 0.0
    %346 = vmatpush1.msra.mxu0 0.0
    %347 = vmatprep.subr.mxu0 0.0
    %348 = vmatpush1.msra.mxu0 0.0
    %349 = vmatprep.subr.mxu0 0.0
    %350 = vmatpush1.msra.mxu0 0.0
    %351 = vmatprep.subr.mxu0 0.0
    %352 = vmatpush1.msra.mxu0 0.0
    %353 = vmatprep.subr.mxu0 0.0
    %354 = vmatpush1.msra.mxu0 0.0
    %355 = vmatprep.subr.mxu0 0.0
    %356 = vmatpush1.msra.mxu0 0.0
    %357 = vmatprep.subr.mxu0 0.0
    %358 = vmatpush1.msra.mxu0 0.0
    %359 = vmatprep.subr.mxu0 0.0
    %360 = vmatpush1.msra.mxu0 0.0
    %361 = vmatprep.subr.mxu0 0.0
    %362 = vmatpush1.msra.mxu0 0.0
    %363 = vmatprep.subr.mxu0 0.0
    %364 = vmatpush1.msra.mxu0 0.0
    %365 = vmatprep.subr.mxu0 0.0
    %366 = vmatpush1.msra.mxu0 0.0
    %367 = vmatprep.subr.mxu0 0.0
    %368 = vmatpush1.msra.mxu0 0.0
    %369 = vmatprep.subr.mxu0 0.0
    %370 = vmatpush1.msra.mxu0 0.0
    %371 = vmatprep.mubr.f32.mxu0 0.0
    %372 = vmatmul.mubr.f32.gmra.mrb[0].mxu0 %v305
    %v373 = vpop.f32.mrb[0].mxu0
    %v374 = vadd.f32 %v299, %v373
    %v375 = vpop.f32.mrb[0].mxu0
    %376 = vdwg.mxu0
    %v378 = vlaneseq
    %v379 = vshrl.u32 %v378, 7
    %v380 = vsub.s32 0, %v379
    %v381 = vrot.slane %v98, %v380
    %v383 = vadd.f32 %v374, %v381
    %v384 = vsub.f32 0.0, %v383
    %v385 = vmul.f32 %v384, 1.442695
    %v386 = vpow.pop %v385
    %v387 = vadd.f32 %v386, 1.0
    %v388 = vrcp.pop %v387
    %v389 = vmul.f32 1.0, %v388
    %v390 = vtanh.pop %v383
    %v391 = vmul.f32 %v389, 0.0
    %393 = vrot.lane.b32.xlu0 %v390, 64
    %v394 = vpop.permute.xlu0 %393
    %v396 = vmul.f32 %v389, %v394
    %398 = vrot.lane.b32.xlu0 %v396, 32
    %v399 = vpop.permute.xlu0 %398
    %v401 = vadd.f32 %v391, %v399
    %v402 = vtanh.pop %v401
    %404 = vrot.lane.b32.xlu0 %v402, 64
    %v405 = vpop.permute.xlu0 %404
    %v407 = vmul.f32 %v389, %v405
    %v408 = vadd.f32 %v407, 0.0
    %s409 = scalar_lea.vmem %s0, 2
    %v410 = vld [vmem:[%s409] sm:$0x3]
    %412 = vset.pattern.permute.xlu0 0
    %413 = vperm.xlu0 %412, %v410
    %v414 = vpop.permute.xlu0 %413
    %v416 = vmul.f32 %v414, %v123
    %417 = vmatprep.subr.mxu0 0.0
    %418 = vmatpush1.msra.mxu0 %v87
    %419 = vmatprep.subr.mxu0 0.0
    %420 = vmatpush1.msra.mxu0 %v88
    %421 = vmatprep.subr.mxu0 0.0
    %422 = vmatpush1.msra.mxu0 %v89
    %423 = vmatprep.subr.mxu0 0.0
    %424 = vmatpush1.msra.mxu0 %v90
    %425 = vmatprep.subr.mxu0 0.0
    %426 = vmatpush1.msra.mxu0 0.0
    %427 = vmatprep.subr.mxu0 0.0
    %428 = vmatpush1.msra.mxu0 0.0
    %429 = vmatprep.subr.mxu0 0.0
    %430 = vmatpush1.msra.mxu0 0.0
    %431 = vmatprep.subr.mxu0 0.0
    %432 = vmatpush1.msra.mxu0 0.0
    %433 = vmatprep.subr.mxu0 0.0
    %434 = vmatpush1.msra.mxu0 0.0
    %435 = vmatprep.subr.mxu0 0.0
    %436 = vmatpush1.msra.mxu0 0.0
    %437 = vmatprep.subr.mxu0 0.0
    %438 = vmatpush1.msra.mxu0 0.0
    %439 = vmatprep.subr.mxu0 0.0
    %440 = vmatpush1.msra.mxu0 0.0
    %441 = vmatprep.subr.mxu0 0.0
    %442 = vmatpush1.msra.mxu0 0.0
    %443 = vmatprep.subr.mxu0 0.0
    %444 = vmatpush1.msra.mxu0 0.0
    %445 = vmatprep.subr.mxu0 0.0
    %446 = vmatpush1.msra.mxu0 0.0
    %447 = vmatprep.subr.mxu0 0.0
    %448 = vmatpush1.msra.mxu0 0.0
    %449 = vmatprep.subr.mxu0 0.0
    %450 = vmatpush1.msra.mxu0 0.0
    %451 = vmatprep.subr.mxu0 0.0
    %452 = vmatpush1.msra.mxu0 0.0
    %453 = vmatprep.subr.mxu0 0.0
    %454 = vmatpush1.msra.mxu0 0.0
    %455 = vmatprep.subr.mxu0 0.0
    %456 = vmatpush1.msra.mxu0 0.0
    %457 = vmatprep.subr.mxu0 0.0
    %458 = vmatpush1.msra.mxu0 0.0
    %459 = vmatprep.subr.mxu0 0.0
    %460 = vmatpush1.msra.mxu0 0.0
    %461 = vmatprep.subr.mxu0 0.0
    %462 = vmatpush1.msra.mxu0 0.0
    %463 = vmatprep.subr.mxu0 0.0
    %464 = vmatpush1.msra.mxu0 0.0
    %465 = vmatprep.subr.mxu0 0.0
    %466 = vmatpush1.msra.mxu0 0.0
    %467 = vmatprep.subr.mxu0 0.0
    %468 = vmatpush1.msra.mxu0 0.0
    %469 = vmatprep.subr.mxu0 0.0
    %470 = vmatpush1.msra.mxu0 0.0
    %471 = vmatprep.subr.mxu0 0.0
    %472 = vmatpush1.msra.mxu0 0.0
    %473 = vmatprep.subr.mxu0 0.0
    %474 = vmatpush1.msra.mxu0 0.0
    %475 = vmatprep.subr.mxu0 0.0
    %476 = vmatpush1.msra.mxu0 0.0
    %477 = vmatprep.subr.mxu0 0.0
    %478 = vmatpush1.msra.mxu0 0.0
    %479 = vmatprep.subr.mxu0 0.0
    %480 = vmatpush1.msra.mxu0 0.0
    %481 = vmatprep.mubr.f32.mxu0 0.0
    %482 = vmatmul.mubr.f32.gmra.mrb[0].mxu0 %v305
    %v483 = vpop.f32.mrb[0].mxu0
    %v484 = vadd.f32 0.0, %v483
    %v485 = vpop.f32.mrb[0].mxu0
    %486 = vdwg.mxu0
    %v487 = vadd.f32 %v416, %v484
    %v488 = vadd.f32 %v487, %v205
    %v489 = vsub.f32 0.0, %v488
    %v490 = vmul.f32 %v489, 1.442695
    %v491 = vpow.pop %v490
    %v492 = vadd.f32 %v491, 1.0
    %v493 = vrcp.pop %v492
    %v494 = vmul.f32 1.0, %v493
    %v495 = vtanh.pop %v488
    %v496 = vmul.f32 %v494, %v225
    %498 = vrot.lane.b32.xlu0 %v495, 64
    %v499 = vpop.permute.xlu0 %498
    %v501 = vmul.f32 %v494, %v499
    %503 = vrot.lane.b32.xlu0 %v501, 32
    %v504 = vpop.permute.xlu0 %503
    %v506 = vadd.f32 %v496, %v504
    %v507 = vtanh.pop %v506
    %509 = vrot.lane.b32.xlu0 %v507, 64
    %v510 = vpop.permute.xlu0 %509
    %v512 = vmul.f32 %v494, %v510
    %514 = vrot.lane.b32.xlu0 %v407, 32
    %v515 = vpop.permute.xlu0 %514
    %v516 = vsel %vm126, %v515, 0
    %518 = vmatprep.subr.mxu0 0.0
    %519 = vmatpush1.msra.mxu0 %v92
    %520 = vmatprep.subr.mxu0 0.0
    %521 = vmatpush1.msra.mxu0 %v93
    %522 = vmatprep.subr.mxu0 0.0
    %523 = vmatpush1.msra.mxu0 %v94
    %524 = vmatprep.subr.mxu0 0.0
    %525 = vmatpush1.msra.mxu0 %v95
    %526 = vmatprep.subr.mxu0 0.0
    %527 = vmatpush1.msra.mxu0 0.0
    %528 = vmatprep.subr.mxu0 0.0
    %529 = vmatpush1.msra.mxu0 0.0
    %530 = vmatprep.subr.mxu0 0.0
    %531 = vmatpush1.msra.mxu0 0.0
    %532 = vmatprep.subr.mxu0 0.0
    %533 = vmatpush1.msra.mxu0 0.0
    %534 = vmatprep.subr.mxu0 0.0
    %535 = vmatpush1.msra.mxu0 0.0
    %536 = vmatprep.subr.mxu0 0.0
    %537 = vmatpush1.msra.mxu0 0.0
    %538 = vmatprep.subr.mxu0 0.0
    %539 = vmatpush1.msra.mxu0 0.0
    %540 = vmatprep.subr.mxu0 0.0
    %541 = vmatpush1.msra.mxu0 0.0
    %542 = vmatprep.subr.mxu0 0.0
    %543 = vmatpush1.msra.mxu0 0.0
    %544 = vmatprep.subr.mxu0 0.0
    %545 = vmatpush1.msra.mxu0 0.0
    %546 = vmatprep.subr.mxu0 0.0
    %547 = vmatpush1.msra.mxu0 0.0
    %548 = vmatprep.subr.mxu0 0.0
    %549 = vmatpush1.msra.mxu0 0.0
    %550 = vmatprep.subr.mxu0 0.0
    %551 = vmatpush1.msra.mxu0 0.0
    %552 = vmatprep.subr.mxu0 0.0
    %553 = vmatpush1.msra.mxu0 0.0
    %554 = vmatprep.subr.mxu0 0.0
    %555 = vmatpush1.msra.mxu0 0.0
    %556 = vmatprep.subr.mxu0 0.0
    %557 = vmatpush1.msra.mxu0 0.0
    %558 = vmatprep.subr.mxu0 0.0
    %559 = vmatpush1.msra.mxu0 0.0
    %560 = vmatprep.subr.mxu0 0.0
    %561 = vmatpush1.msra.mxu0 0.0
    %562 = vmatprep.subr.mxu0 0.0
    %563 = vmatpush1.msra.mxu0 0.0
    %564 = vmatprep.subr.mxu0 0.0
    %565 = vmatpush1.msra.mxu0 0.0
    %566 = vmatprep.subr.mxu0 0.0
    %567 = vmatpush1.msra.mxu0 0.0
    %568 = vmatprep.subr.mxu0 0.0
    %569 = vmatpush1.msra.mxu0 0.0
    %570 = vmatprep.subr.mxu0 0.0
    %571 = vmatpush1.msra.mxu0 0.0
    %572 = vmatprep.subr.mxu0 0.0
    %573 = vmatpush1.msra.mxu0 0.0
    %574 = vmatprep.subr.mxu0 0.0
    %575 = vmatpush1.msra.mxu0 0.0
    %576 = vmatprep.subr.mxu0 0.0
    %577 = vmatpush1.msra.mxu0 0.0
    %578 = vmatprep.subr.mxu0 0.0
    %579 = vmatpush1.msra.mxu0 0.0
    %580 = vmatprep.subr.mxu0 0.0
    %581 = vmatpush1.msra.mxu0 0.0
    %582 = vmatprep.mubr.f32.mxu0 0.0
    %583 = vmatmul.mubr.f32.gmra.mrb[0].mxu0 %v516
    %v584 = vpop.f32.mrb[0].mxu0
    %v585 = vadd.f32 0.0, %v584
    %v586 = vpop.f32.mrb[0].mxu0
    %587 = vdwg.mxu0
    %589 = vrot.lane.b32.xlu0 %v512, 32
    %v590 = vpop.permute.xlu0 %589
    %v591 = vsel %vm126, %v590, 0
    %593 = vmatprep.subr.mxu0 0.0
    %594 = vmatpush1.msra.mxu0 %v83
    %595 = vmatprep.subr.mxu0 0.0
    %596 = vmatpush1.msra.mxu0 %v84
    %597 = vmatprep.subr.mxu0 0.0
    %598 = vmatpush1.msra.mxu0 %v85
    %599 = vmatprep.subr.mxu0 0.0
    %600 = vmatpush1.msra.mxu0 %v86
    %601 = vmatprep.subr.mxu0 0.0
    %602 = vmatpush1.msra.mxu0 0.0
    %603 = vmatprep.subr.mxu0 0.0
    %604 = vmatpush1.msra.mxu0 0.0
    %605 = vmatprep.subr.mxu0 0.0
    %606 = vmatpush1.msra.mxu0 0.0
    %607 = vmatprep.subr.mxu0 0.0
    %608 = vmatpush1.msra.mxu0 0.0
    %609 = vmatprep.subr.mxu0 0.0
    %610 = vmatpush1.msra.mxu0 0.0
    %611 = vmatprep.subr.mxu0 0.0
    %612 = vmatpush1.msra.mxu0 0.0
    %613 = vmatprep.subr.mxu0 0.0
    %614 = vmatpush1.msra.mxu0 0.0
    %615 = vmatprep.subr.mxu0 0.0
    %616 = vmatpush1.msra.mxu0 0.0
    %617 = vmatprep.subr.mxu0 0.0
    %618 = vmatpush1.msra.mxu0 0.0
    %619 = vmatprep.subr.mxu0 0.0
    %620 = vmatpush1.msra.mxu0 0.0
    %621 = vmatprep.subr.mxu0 0.0
    %622 = vmatpush1.msra.mxu0 0.0
    %623 = vmatprep.subr.mxu0 0.0
    %624 = vmatpush1.msra.mxu0 0.0
    %625 = vmatprep.subr.mxu0 0.0
    %626 = vmatpush1.msra.mxu0 0.0
    %627 = vmatprep.subr.mxu0 0.0
    %628 = vmatpush1.msra.mxu0 0.0
    %629 = vmatprep.subr.mxu0 0.0
    %630 = vmatpush1.msra.mxu0 0.0
    %631 = vmatprep.subr.mxu0 0.0
    %632 = vmatpush1.msra.mxu0 0.0
    %633 = vmatprep.subr.mxu0 0.0
    %634 = vmatpush1.msra.mxu0 0.0
    %635 = vmatprep.subr.mxu0 0.0
    %636 = vmatpush1.msra.mxu0 0.0
    %637 = vmatprep.subr.mxu0 0.0
    %638 = vmatpush1.msra.mxu0 0.0
    %639 = vmatprep.subr.mxu0 0.0
    %640 = vmatpush1.msra.mxu0 0.0
    %641 = vmatprep.subr.mxu0 0.0
    %642 = vmatpush1.msra.mxu0 0.0
    %643 = vmatprep.subr.mxu0 0.0
    %644 = vmatpush1.msra.mxu0 0.0
    %645 = vmatprep.subr.mxu0 0.0
    %646 = vmatpush1.msra.mxu0 0.0
    %647 = vmatprep.subr.mxu0 0.0
    %648 = vmatpush1.msra.mxu0 0.0
    %649 = vmatprep.subr.mxu0 0.0
    %650 = vmatpush1.msra.mxu0 0.0
    %651 = vmatprep.subr.mxu0 0.0
    %652 = vmatpush1.msra.mxu0 0.0
    %653 = vmatprep.subr.mxu0 0.0
    %654 = vmatpush1.msra.mxu0 0.0
    %655 = vmatprep.subr.mxu0 0.0
    %656 = vmatpush1.msra.mxu0 0.0
    %657 = vmatprep.mubr.f32.mxu0 0.0
    %658 = vmatmul.mubr.f32.gmra.mrb[0].mxu0 %v591
    %v659 = vpop.f32.mrb[0].mxu0
    %v660 = vadd.f32 %v585, %v659
    %v661 = vpop.f32.mrb[0].mxu0
    %662 = vdwg.mxu0
    %v663 = vadd.f32 %v660, %v381
    %v664 = vsub.f32 0.0, %v663
    %v665 = vmul.f32 %v664, 1.442695
    %v666 = vpow.pop %v665
    %v667 = vadd.f32 %v666, 1.0
    %v668 = vrcp.pop %v667
    %v669 = vmul.f32 1.0, %v668
    %v670 = vtanh.pop %v663
    %v671 = vmul.f32 %v669, %v401
    %673 = vrot.lane.b32.xlu0 %v670, 64
    %v674 = vpop.permute.xlu0 %673
    %v676 = vmul.f32 %v669, %v674
    %678 = vrot.lane.b32.xlu0 %v676, 32
    %v679 = vpop.permute.xlu0 %678
    %v681 = vadd.f32 %v671, %v679
    %v682 = vtanh.pop %v681
    %684 = vrot.lane.b32.xlu0 %v682, 64
    %v685 = vpop.permute.xlu0 %684
    %v687 = vmul.f32 %v669, %v685
    %v688 = vadd.f32 %v408, %v687
    %s689 = scalar_lea.vmem %s0, 4
    %v690 = vld [vmem:[%s689] sm:$0x3]
    %692 = vset.pattern.permute.xlu0 0
    %693 = vperm.xlu0 %692, %v690
    %v694 = vpop.permute.xlu0 %693
    %v696 = vmul.f32 %v694, %v123
    %697 = vmatprep.subr.mxu0 0.0
    %698 = vmatpush1.msra.mxu0 %v87
    %699 = vmatprep.subr.mxu0 0.0
    %700 = vmatpush1.msra.mxu0 %v88
    %701 = vmatprep.subr.mxu0 0.0
    %702 = vmatpush1.msra.mxu0 %v89
    %703 = vmatprep.subr.mxu0 0.0
    %704 = vmatpush1.msra.mxu0 %v90
    %705 = vmatprep.subr.mxu0 0.0
    %706 = vmatpush1.msra.mxu0 0.0
    %707 = vmatprep.subr.mxu0 0.0
    %708 = vmatpush1.msra.mxu0 0.0
    %709 = vmatprep.subr.mxu0 0.0
    %710 = vmatpush1.msra.mxu0 0.0
    %711 = vmatprep.subr.mxu0 0.0
    %712 = vmatpush1.msra.mxu0 0.0
    %713 = vmatprep.subr.mxu0 0.0
    %714 = vmatpush1.msra.mxu0 0.0
    %715 = vmatprep.subr.mxu0 0.0
    %716 = vmatpush1.msra.mxu0 0.0
    %717 = vmatprep.subr.mxu0 0.0
    %718 = vmatpush1.msra.mxu0 0.0
    %719 = vmatprep.subr.mxu0 0.0
    %720 = vmatpush1.msra.mxu0 0.0
    %721 = vmatprep.subr.mxu0 0.0
    %722 = vmatpush1.msra.mxu0 0.0
    %723 = vmatprep.subr.mxu0 0.0
    %724 = vmatpush1.msra.mxu0 0.0
    %725 = vmatprep.subr.mxu0 0.0
    %726 = vmatpush1.msra.mxu0 0.0
    %727 = vmatprep.subr.mxu0 0.0
    %728 = vmatpush1.msra.mxu0 0.0
    %729 = vmatprep.subr.mxu0 0.0
    %730 = vmatpush1.msra.mxu0 0.0
    %731 = vmatprep.subr.mxu0 0.0
    %732 = vmatpush1.msra.mxu0 0.0
    %733 = vmatprep.subr.mxu0 0.0
    %734 = vmatpush1.msra.mxu0 0.0
    %735 = vmatprep.subr.mxu0 0.0
    %736 = vmatpush1.msra.mxu0 0.0
    %737 = vmatprep.subr.mxu0 0.0
    %738 = vmatpush1.msra.mxu0 0.0
    %739 = vmatprep.subr.mxu0 0.0
    %740 = vmatpush1.msra.mxu0 0.0
    %741 = vmatprep.subr.mxu0 0.0
    %742 = vmatpush1.msra.mxu0 0.0
    %743 = vmatprep.subr.mxu0 0.0
    %744 = vmatpush1.msra.mxu0 0.0
    %745 = vmatprep.subr.mxu0 0.0
    %746 = vmatpush1.msra.mxu0 0.0
    %747 = vmatprep.subr.mxu0 0.0
    %748 = vmatpush1.msra.mxu0 0.0
    %749 = vmatprep.subr.mxu0 0.0
    %750 = vmatpush1.msra.mxu0 0.0
    %751 = vmatprep.subr.mxu0 0.0
    %752 = vmatpush1.msra.mxu0 0.0
    %753 = vmatprep.subr.mxu0 0.0
    %754 = vmatpush1.msra.mxu0 0.0
    %755 = vmatprep.subr.mxu0 0.0
    %756 = vmatpush1.msra.mxu0 0.0
    %757 = vmatprep.subr.mxu0 0.0
    %758 = vmatpush1.msra.mxu0 0.0
    %759 = vmatprep.subr.mxu0 0.0
    %760 = vmatpush1.msra.mxu0 0.0
    %761 = vmatprep.mubr.f32.mxu0 0.0
    %762 = vmatmul.mubr.f32.gmra.mrb[0].mxu0 %v591
    %v763 = vpop.f32.mrb[0].mxu0
    %v764 = vadd.f32 0.0, %v763
    %v765 = vpop.f32.mrb[0].mxu0
    %766 = vdwg.mxu0
    %v767 = vadd.f32 %v696, %v764
    %v768 = vadd.f32 %v767, %v205
    %v769 = vsub.f32 0.0, %v768
    %v770 = vmul.f32 %v769, 1.442695
    %v771 = vpow.pop %v770
    %v772 = vadd.f32 %v771, 1.0
    %v773 = vrcp.pop %v772
    %v774 = vmul.f32 1.0, %v773
    %v775 = vtanh.pop %v768
    %v776 = vmul.f32 %v774, %v506
    %778 = vrot.lane.b32.xlu0 %v775, 64
    %v779 = vpop.permute.xlu0 %778
    %v781 = vmul.f32 %v774, %v779
    %783 = vrot.lane.b32.xlu0 %v781, 32
    %v784 = vpop.permute.xlu0 %783
    %v786 = vadd.f32 %v776, %v784
    %v787 = vtanh.pop %v786
    %789 = vrot.lane.b32.xlu0 %v787, 64
    %v790 = vpop.permute.xlu0 %789
    %v792 = vmul.f32 %v774, %v790
    %794 = vrot.lane.b32.xlu0 %v687, 32
    %v795 = vpop.permute.xlu0 %794
    %v796 = vsel %vm126, %v795, 0
    %798 = vmatprep.subr.mxu0 0.0
    %799 = vmatpush1.msra.mxu0 %v92
    %800 = vmatprep.subr.mxu0 0.0
    %801 = vmatpush1.msra.mxu0 %v93
    %802 = vmatprep.subr.mxu0 0.0
    %803 = vmatpush1.msra.mxu0 %v94
    %804 = vmatprep.subr.mxu0 0.0
    %805 = vmatpush1.msra.mxu0 %v95
    %806 = vmatprep.subr.mxu0 0.0
    %807 = vmatpush1.msra.mxu0 0.0
    %808 = vmatprep.subr.mxu0 0.0
    %809 = vmatpush1.msra.mxu0 0.0
    %810 = vmatprep.subr.mxu0 0.0
    %811 = vmatpush1.msra.mxu0 0.0
    %812 = vmatprep.subr.mxu0 0.0
    %813 = vmatpush1.msra.mxu0 0.0
    %814 = vmatprep.subr.mxu0 0.0
    %815 = vmatpush1.msra.mxu0 0.0
    %816 = vmatprep.subr.mxu0 0.0
    %817 = vmatpush1.msra.mxu0 0.0
    %818 = vmatprep.subr.mxu0 0.0
    %819 = vmatpush1.msra.mxu0 0.0
    %820 = vmatprep.subr.mxu0 0.0
    %821 = vmatpush1.msra.mxu0 0.0
    %822 = vmatprep.subr.mxu0 0.0
    %823 = vmatpush1.msra.mxu0 0.0
    %824 = vmatprep.subr.mxu0 0.0
    %825 = vmatpush1.msra.mxu0 0.0
    %826 = vmatprep.subr.mxu0 0.0
    %827 = vmatpush1.msra.mxu0 0.0
    %828 = vmatprep.subr.mxu0 0.0
    %829 = vmatpush1.msra.mxu0 0.0
    %830 = vmatprep.subr.mxu0 0.0
    %831 = vmatpush1.msra.mxu0 0.0
    %832 = vmatprep.subr.mxu0 0.0
    %833 = vmatpush1.msra.mxu0 0.0
    %834 = vmatprep.subr.mxu0 0.0
    %835 = vmatpush1.msra.mxu0 0.0
    %836 = vmatprep.subr.mxu0 0.0
    %837 = vmatpush1.msra.mxu0 0.0
    %838 = vmatprep.subr.mxu0 0.0
    %839 = vmatpush1.msra.mxu0 0.0
    %840 = vmatprep.subr.mxu0 0.0
    %841 = vmatpush1.msra.mxu0 0.0
    %842 = vmatprep.subr.mxu0 0.0
    %843 = vmatpush1.msra.mxu0 0.0
    %844 = vmatprep.subr.mxu0 0.0
    %845 = vmatpush1.msra.mxu0 0.0
    %846 = vmatprep.subr.mxu0 0.0
    %847 = vmatpush1.msra.mxu0 0.0
    %848 = vmatprep.subr.mxu0 0.0
    %849 = vmatpush1.msra.mxu0 0.0
    %850 = vmatprep.subr.mxu0 0.0
    %851 = vmatpush1.msra.mxu0 0.0
    %852 = vmatprep.subr.mxu0 0.0
    %853 = vmatpush1.msra.mxu0 0.0
    %854 = vmatprep.subr.mxu0 0.0
    %855 = vmatpush1.msra.mxu0 0.0
    %856 = vmatprep.subr.mxu0 0.0
    %857 = vmatpush1.msra.mxu0 0.0
    %858 = vmatprep.subr.mxu0 0.0
    %859 = vmatpush1.msra.mxu0 0.0
    %860 = vmatprep.subr.mxu0 0.0
    %861 = vmatpush1.msra.mxu0 0.0
    %862 = vmatprep.mubr.f32.mxu0 0.0
    %863 = vmatmul.mubr.f32.gmra.mrb[0].mxu0 %v796
    %v864 = vpop.f32.mrb[0].mxu0
    %v865 = vadd.f32 0.0, %v864
    %v866 = vpop.f32.mrb[0].mxu0
    %867 = vdwg.mxu0
    %869 = vrot.lane.b32.xlu0 %v792, 32
    %v870 = vpop.permute.xlu0 %869
    %v871 = vsel %vm126, %v870, 0
    %873 = vmatprep.subr.mxu0 0.0
    %874 = vmatpush1.msra.mxu0 %v83
    %875 = vmatprep.subr.mxu0 0.0
    %876 = vmatpush1.msra.mxu0 %v84
    %877 = vmatprep.subr.mxu0 0.0
    %878 = vmatpush1.msra.mxu0 %v85
    %879 = vmatprep.subr.mxu0 0.0
    %880 = vmatpush1.msra.mxu0 %v86
    %881 = vmatprep.subr.mxu0 0.0
    %882 = vmatpush1.msra.mxu0 0.0
    %883 = vmatprep.subr.mxu0 0.0
    %884 = vmatpush1.msra.mxu0 0.0
    %885 = vmatprep.subr.mxu0 0.0
    %886 = vmatpush1.msra.mxu0 0.0
    %887 = vmatprep.subr.mxu0 0.0
    %888 = vmatpush1.msra.mxu0 0.0
    %889 = vmatprep.subr.mxu0 0.0
    %890 = vmatpush1.msra.mxu0 0.0
    %891 = vmatprep.subr.mxu0 0.0
    %892 = vmatpush1.msra.mxu0 0.0
    %893 = vmatprep.subr.mxu0 0.0
    %894 = vmatpush1.msra.mxu0 0.0
    %895 = vmatprep.subr.mxu0 0.0
    %896 = vmatpush1.msra.mxu0 0.0
    %897 = vmatprep.subr.mxu0 0.0
    %898 = vmatpush1.msra.mxu0 0.0
    %899 = vmatprep.subr.mxu0 0.0
    %900 = vmatpush1.msra.mxu0 0.0
    %901 = vmatprep.subr.mxu0 0.0
    %902 = vmatpush1.msra.mxu0 0.0
    %903 = vmatprep.subr.mxu0 0.0
    %904 = vmatpush1.msra.mxu0 0.0
    %905 = vmatprep.subr.mxu0 0.0
    %906 = vmatpush1.msra.mxu0 0.0
    %907 = vmatprep.subr.mxu0 0.0
    %908 = vmatpush1.msra.mxu0 0.0
    %909 = vmatprep.subr.mxu0 0.0
    %910 = vmatpush1.msra.mxu0 0.0
    %911 = vmatprep.subr.mxu0 0.0
    %912 = vmatpush1.msra.mxu0 0.0
    %913 = vmatprep.subr.mxu0 0.0
    %914 = vmatpush1.msra.mxu0 0.0
    %915 = vmatprep.subr.mxu0 0.0
    %916 = vmatpush1.msra.mxu0 0.0
    %917 = vmatprep.subr.mxu0 0.0
    %918 = vmatpush1.msra.mxu0 0.0
    %919 = vmatprep.subr.mxu0 0.0
    %920 = vmatpush1.msra.mxu0 0.0
    %921 = vmatprep.subr.mxu0 0.0
    %922 = vmatpush1.msra.mxu0 0.0
    %923 = vmatprep.subr.mxu0 0.0
    %924 = vmatpush1.msra.mxu0 0.0
    %925 = vmatprep.subr.mxu0 0.0
    %926 = vmatpush1.msra.mxu0 0.0
    %927 = vmatprep.subr.mxu0 0.0
    %928 = vmatpush1.msra.mxu0 0.0
    %929 = vmatprep.subr.mxu0 0.0
    %930 = vmatpush1.msra.mxu0 0.0
    %931 = vmatprep.subr.mxu0 0.0
    %932 = vmatpush1.msra.mxu0 0.0
    %933 = vmatprep.subr.mxu0 0.0
    %934 = vmatpush1.msra.mxu0 0.0
    %935 = vmatprep.subr.mxu0 0.0
    %936 = vmatpush1.msra.mxu0 0.0
    %937 = vmatprep.mubr.f32.mxu0 0.0
    %938 = vmatmul.mubr.f32.gmra.mrb[0].mxu0 %v871
    %v939 = vpop.f32.mrb[0].mxu0
    %v940 = vadd.f32 %v865, %v939
    %v941 = vpop.f32.mrb[0].mxu0
    %942 = vdwg.mxu0
    %v943 = vadd.f32 %v940, %v381
    %v944 = vsub.f32 0.0, %v943
    %v945 = vmul.f32 %v944, 1.442695
    %v946 = vpow.pop %v945
    %v947 = vadd.f32 %v946, 1.0
    %v948 = vrcp.pop %v947
    %v949 = vmul.f32 1.0, %v948
    %v950 = vtanh.pop %v943
    %v951 = vmul.f32 %v949, %v681
    %953 = vrot.lane.b32.xlu0 %v950, 64
    %v954 = vpop.permute.xlu0 %953
    %v956 = vmul.f32 %v949, %v954
    %958 = vrot.lane.b32.xlu0 %v956, 32
    %v959 = vpop.permute.xlu0 %958
    %v961 = vadd.f32 %v951, %v959
    %v962 = vtanh.pop %v961
    %964 = vrot.lane.b32.xlu0 %v962, 64
    %v965 = vpop.permute.xlu0 %964
    %v967 = vmul.f32 %v949, %v965
    %v968 = vadd.f32 %v688, %v967
    %s969 = scalar_lea.vmem %s0, 6
    %v970 = vld [vmem:[%s969] sm:$0x3]
    %972 = vset.pattern.permute.xlu0 0
    %973 = vperm.xlu0 %972, %v970
    %v974 = vpop.permute.xlu0 %973
    %v976 = vmul.f32 %v974, %v123
    %977 = vmatprep.subr.mxu0 0.0
    %978 = vmatpush1.msra.mxu0 %v87
    %979 = vmatprep.subr.mxu0 0.0
    %980 = vmatpush1.msra.mxu0 %v88
    %981 = vmatprep.subr.mxu0 0.0
    %982 = vmatpush1.msra.mxu0 %v89
    %983 = vmatprep.subr.mxu0 0.0
    %984 = vmatpush1.msra.mxu0 %v90
    %985 = vmatprep.subr.mxu0 0.0
    %986 = vmatpush1.msra.mxu0 0.0
    %987 = vmatprep.subr.mxu0 0.0
    %988 = vmatpush1.msra.mxu0 0.0
    %989 = vmatprep.subr.mxu0 0.0
    %990 = vmatpush1.msra.mxu0 0.0
    %991 = vmatprep.subr.mxu0 0.0
    %992 = vmatpush1.msra.mxu0 0.0
    %993 = vmatprep.subr.mxu0 0.0
    %994 = vmatpush1.msra.mxu0 0.0
    %995 = vmatprep.subr.mxu0 0.0
    %996 = vmatpush1.msra.mxu0 0.0
    %997 = vmatprep.subr.mxu0 0.0
    %998 = vmatpush1.msra.mxu0 0.0
    %999 = vmatprep.subr.mxu0 0.0
    %1000 = vmatpush1.msra.mxu0 0.0
    %1001 = vmatprep.subr.mxu0 0.0
    %1002 = vmatpush1.msra.mxu0 0.0
    %1003 = vmatprep.subr.mxu0 0.0
    %1004 = vmatpush1.msra.mxu0 0.0
    %1005 = vmatprep.subr.mxu0 0.0
    %1006 = vmatpush1.msra.mxu0 0.0
    %1007 = vmatprep.subr.mxu0 0.0
    %1008 = vmatpush1.msra.mxu0 0.0
    %1009 = vmatprep.subr.mxu0 0.0
    %1010 = vmatpush1.msra.mxu0 0.0
    %1011 = vmatprep.subr.mxu0 0.0
    %1012 = vmatpush1.msra.mxu0 0.0
    %1013 = vmatprep.subr.mxu0 0.0
    %1014 = vmatpush1.msra.mxu0 0.0
    %1015 = vmatprep.subr.mxu0 0.0
    %1016 = vmatpush1.msra.mxu0 0.0
    %1017 = vmatprep.subr.mxu0 0.0
    %1018 = vmatpush1.msra.mxu0 0.0
    %1019 = vmatprep.subr.mxu0 0.0
    %1020 = vmatpush1.msra.mxu0 0.0
    %1021 = vmatprep.subr.mxu0 0.0
    %1022 = vmatpush1.msra.mxu0 0.0
    %1023 = vmatprep.subr.mxu0 0.0
    %1024 = vmatpush1.msra.mxu0 0.0
    %1025 = vmatprep.subr.mxu0 0.0
    %1026 = vmatpush1.msra.mxu0 0.0
    %1027 = vmatprep.subr.mxu0 0.0
    %1028 = vmatpush1.msra.mxu0 0.0
    %1029 = vmatprep.subr.mxu0 0.0
    %1030 = vmatpush1.msra.mxu0 0.0
    %1031 = vmatprep.subr.mxu0 0.0
    %1032 = vmatpush1.msra.mxu0 0.0
    %1033 = vmatprep.subr.mxu0 0.0
    %1034 = vmatpush1.msra.mxu0 0.0
    %1035 = vmatprep.subr.mxu0 0.0
    %1036 = vmatpush1.msra.mxu0 0.0
    %1037 = vmatprep.subr.mxu0 0.0
    %1038 = vmatpush1.msra.mxu0 0.0
    %1039 = vmatprep.subr.mxu0 0.0
    %1040 = vmatpush1.msra.mxu0 0.0
    %1041 = vmatprep.mubr.f32.mxu0 0.0
    %1042 = vmatmul.mubr.f32.gmra.mrb[0].mxu0 %v871
    %v1043 = vpop.f32.mrb[0].mxu0
    %v1044 = vadd.f32 0.0, %v1043
    %v1045 = vpop.f32.mrb[0].mxu0
    %1046 = vdwg.mxu0
    %v1047 = vadd.f32 %v976, %v1044
    %v1048 = vadd.f32 %v1047, %v205
    %v1049 = vsub.f32 0.0, %v1048
    %v1050 = vmul.f32 %v1049, 1.442695
    %v1051 = vpow.pop %v1050
    %v1052 = vadd.f32 %v1051, 1.0
    %v1053 = vrcp.pop %v1052
    %v1054 = vmul.f32 1.0, %v1053
    %v1055 = vtanh.pop %v1048
    %v1056 = vmul.f32 %v1054, %v786
    %1058 = vrot.lane.b32.xlu0 %v1055, 64
    %v1059 = vpop.permute.xlu0 %1058
    %v1061 = vmul.f32 %v1054, %v1059
    %1063 = vrot.lane.b32.xlu0 %v1061, 32
    %v1064 = vpop.permute.xlu0 %1063
    %v1066 = vadd.f32 %v1056, %v1064
    %v1067 = vtanh.pop %v1066
    %1069 = vrot.lane.b32.xlu0 %v1067, 64
    %v1070 = vpop.permute.xlu0 %1069
    %v1072 = vmul.f32 %v1054, %v1070
    %1074 = vrot.lane.b32.xlu0 %v967, 32
    %v1075 = vpop.permute.xlu0 %1074
    %v1076 = vsel %vm126, %v1075, 0
    %1078 = vmatprep.subr.mxu0 0.0
    %1079 = vmatpush1.msra.mxu0 %v92
    %1080 = vmatprep.subr.mxu0 0.0
    %1081 = vmatpush1.msra.mxu0 %v93
    %1082 = vmatprep.subr.mxu0 0.0
    %1083 = vmatpush1.msra.mxu0 %v94
    %1084 = vmatprep.subr.mxu0 0.0
    %1085 = vmatpush1.msra.mxu0 %v95
    %1086 = vmatprep.subr.mxu0 0.0
    %1087 = vmatpush1.msra.mxu0 0.0
    %1088 = vmatprep.subr.mxu0 0.0
    %1089 = vmatpush1.msra.mxu0 0.0
    %1090 = vmatprep.subr.mxu0 0.0
    %1091 = vmatpush1.msra.mxu0 0.0
    %1092 = vmatprep.subr.mxu0 0.0
    %1093 = vmatpush1.msra.mxu0 0.0
    %1094 = vmatprep.subr.mxu0 0.0
    %1095 = vmatpush1.msra.mxu0 0.0
    %1096 = vmatprep.subr.mxu0 0.0
    %1097 = vmatpush1.msra.mxu0 0.0
    %1098 = vmatprep.subr.mxu0 0.0
    %1099 = vmatpush1.msra.mxu0 0.0
    %1100 = vmatprep.subr.mxu0 0.0
    %1101 = vmatpush1.msra.mxu0 0.0
    %1102 = vmatprep.subr.mxu0 0.0
    %1103 = vmatpush1.msra.mxu0 0.0
    %1104 = vmatprep.subr.mxu0 0.0
    %1105 = vmatpush1.msra.mxu0 0.0
    %1106 = vmatprep.subr.mxu0 0.0
    %1107 = vmatpush1.msra.mxu0 0.0
    %1108 = vmatprep.subr.mxu0 0.0
    %1109 = vmatpush1.msra.mxu0 0.0
    %1110 = vmatprep.subr.mxu0 0.0
    %1111 = vmatpush1.msra.mxu0 0.0
    %1112 = vmatprep.subr.mxu0 0.0
    %1113 = vmatpush1.msra.mxu0 0.0
    %1114 = vmatprep.subr.mxu0 0.0
    %1115 = vmatpush1.msra.mxu0 0.0
    %1116 = vmatprep.subr.mxu0 0.0
    %1117 = vmatpush1.msra.mxu0 0.0
    %1118 = vmatprep.subr.mxu0 0.0
    %1119 = vmatpush1.msra.mxu0 0.0
    %1120 = vmatprep.subr.mxu0 0.0
    %1121 = vmatpush1.msra.mxu0 0.0
    %1122 = vmatprep.subr.mxu0 0.0
    %1123 = vmatpush1.msra.mxu0 0.0
    %1124 = vmatprep.subr.mxu0 0.0
    %1125 = vmatpush1.msra.mxu0 0.0
    %1126 = vmatprep.subr.mxu0 0.0
    %1127 = vmatpush1.msra.mxu0 0.0
    %1128 = vmatprep.subr.mxu0 0.0
    %1129 = vmatpush1.msra.mxu0 0.0
    %1130 = vmatprep.subr.mxu0 0.0
    %1131 = vmatpush1.msra.mxu0 0.0
    %1132 = vmatprep.subr.mxu0 0.0
    %1133 = vmatpush1.msra.mxu0 0.0
    %1134 = vmatprep.subr.mxu0 0.0
    %1135 = vmatpush1.msra.mxu0 0.0
    %1136 = vmatprep.subr.mxu0 0.0
    %1137 = vmatpush1.msra.mxu0 0.0
    %1138 = vmatprep.subr.mxu0 0.0
    %1139 = vmatpush1.msra.mxu0 0.0
    %1140 = vmatprep.subr.mxu0 0.0
    %1141 = vmatpush1.msra.mxu0 0.0
    %1142 = vmatprep.mubr.f32.mxu0 0.0
    %1143 = vmatmul.mubr.f32.gmra.mrb[0].mxu0 %v1076
    %v1144 = vpop.f32.mrb[0].mxu0
    %v1145 = vadd.f32 0.0, %v1144
    %v1146 = vpop.f32.mrb[0].mxu0
    %1147 = vdwg.mxu0
    %1149 = vrot.lane.b32.xlu0 %v1072, 32
    %v1150 = vpop.permute.xlu0 %1149
    %v1151 = vsel %vm126, %v1150, 0
    %1153 = vmatprep.subr.mxu0 0.0
    %1154 = vmatpush1.msra.mxu0 %v83
    %1155 = vmatprep.subr.mxu0 0.0
    %1156 = vmatpush1.msra.mxu0 %v84
    %1157 = vmatprep.subr.mxu0 0.0
    %1158 = vmatpush1.msra.mxu0 %v85
    %1159 = vmatprep.subr.mxu0 0.0
    %1160 = vmatpush1.msra.mxu0 %v86
    %1161 = vmatprep.subr.mxu0 0.0
    %1162 = vmatpush1.msra.mxu0 0.0
    %1163 = vmatprep.subr.mxu0 0.0
    %1164 = vmatpush1.msra.mxu0 0.0
    %1165 = vmatprep.subr.mxu0 0.0
    %1166 = vmatpush1.msra.mxu0 0.0
    %1167 = vmatprep.subr.mxu0 0.0
    %1168 = vmatpush1.msra.mxu0 0.0
    %1169 = vmatprep.subr.mxu0 0.0
    %1170 = vmatpush1.msra.mxu0 0.0
    %1171 = vmatprep.subr.mxu0 0.0
    %1172 = vmatpush1.msra.mxu0 0.0
    %1173 = vmatprep.subr.mxu0 0.0
    %1174 = vmatpush1.msra.mxu0 0.0
    %1175 = vmatprep.subr.mxu0 0.0
    %1176 = vmatpush1.msra.mxu0 0.0
    %1177 = vmatprep.subr.mxu0 0.0
    %1178 = vmatpush1.msra.mxu0 0.0
    %1179 = vmatprep.subr.mxu0 0.0
    %1180 = vmatpush1.msra.mxu0 0.0
    %1181 = vmatprep.subr.mxu0 0.0
    %1182 = vmatpush1.msra.mxu0 0.0
    %1183 = vmatprep.subr.mxu0 0.0
    %1184 = vmatpush1.msra.mxu0 0.0
    %1185 = vmatprep.subr.mxu0 0.0
    %1186 = vmatpush1.msra.mxu0 0.0
    %1187 = vmatprep.subr.mxu0 0.0
    %1188 = vmatpush1.msra.mxu0 0.0
    %1189 = vmatprep.subr.mxu0 0.0
    %1190 = vmatpush1.msra.mxu0 0.0
    %1191 = vmatprep.subr.mxu0 0.0
    %1192 = vmatpush1.msra.mxu0 0.0
    %1193 = vmatprep.subr.mxu0 0.0
    %1194 = vmatpush1.msra.mxu0 0.0
    %1195 = vmatprep.subr.mxu0 0.0
    %1196 = vmatpush1.msra.mxu0 0.0
    %1197 = vmatprep.subr.mxu0 0.0
    %1198 = vmatpush1.msra.mxu0 0.0
    %1199 = vmatprep.subr.mxu0 0.0
    %1200 = vmatpush1.msra.mxu0 0.0
    %1201 = vmatprep.subr.mxu0 0.0
    %1202 = vmatpush1.msra.mxu0 0.0
    %1203 = vmatprep.subr.mxu0 0.0
    %1204 = vmatpush1.msra.mxu0 0.0
    %1205 = vmatprep.subr.mxu0 0.0
    %1206 = vmatpush1.msra.mxu0 0.0
    %1207 = vmatprep.subr.mxu0 0.0
    %1208 = vmatpush1.msra.mxu0 0.0
    %1209 = vmatprep.subr.mxu0 0.0
    %1210 = vmatpush1.msra.mxu0 0.0
    %1211 = vmatprep.subr.mxu0 0.0
    %1212 = vmatpush1.msra.mxu0 0.0
    %1213 = vmatprep.subr.mxu0 0.0
    %1214 = vmatpush1.msra.mxu0 0.0
    %1215 = vmatprep.subr.mxu0 0.0
    %1216 = vmatpush1.msra.mxu0 0.0
    %1217 = vmatprep.mubr.f32.mxu0 0.0
    %1218 = vmatmul.mubr.f32.gmra.mrb[0].mxu0 %v1151
    %v1219 = vpop.f32.mrb[0].mxu0
    %v1220 = vadd.f32 %v1145, %v1219
    %v1221 = vpop.f32.mrb[0].mxu0
    %1222 = vdwg.mxu0
    %v1223 = vadd.f32 %v1220, %v381
    %v1224 = vsub.f32 0.0, %v1223
    %v1225 = vmul.f32 %v1224, 1.442695
    %v1226 = vpow.pop %v1225
    %v1227 = vadd.f32 %v1226, 1.0
    %v1228 = vrcp.pop %v1227
    %v1229 = vmul.f32 1.0, %v1228
    %v1230 = vtanh.pop %v1223
    %v1231 = vmul.f32 %v1229, %v961
    %1233 = vrot.lane.b32.xlu0 %v1230, 64
    %v1234 = vpop.permute.xlu0 %1233
    %v1236 = vmul.f32 %v1229, %v1234
    %1238 = vrot.lane.b32.xlu0 %v1236, 32
    %v1239 = vpop.permute.xlu0 %1238
    %v1241 = vadd.f32 %v1231, %v1239
    %v1242 = vtanh.pop %v1241
    %1244 = vrot.lane.b32.xlu0 %v1242, 64
    %v1245 = vpop.permute.xlu0 %1244
    %v1247 = vmul.f32 %v1229, %v1245
    %v1248 = vadd.f32 %v968, %v1247
    %s1249 = scalar_lea.vmem %s0, 8
    %v1250 = vld [vmem:[%s1249] sm:$0x3]
    %1252 = vset.pattern.permute.xlu0 0
    %1253 = vperm.xlu0 %1252, %v1250
    %v1254 = vpop.permute.xlu0 %1253
    %v1256 = vmul.f32 %v1254, %v123
    %1257 = vmatprep.subr.mxu0 0.0
    %1258 = vmatpush1.msra.mxu0 %v87
    %1259 = vmatprep.subr.mxu0 0.0
    %1260 = vmatpush1.msra.mxu0 %v88
    %1261 = vmatprep.subr.mxu0 0.0
    %1262 = vmatpush1.msra.mxu0 %v89
    %1263 = vmatprep.subr.mxu0 0.0
    %1264 = vmatpush1.msra.mxu0 %v90
    %1265 = vmatprep.subr.mxu0 0.0
    %1266 = vmatpush1.msra.mxu0 0.0
    %1267 = vmatprep.subr.mxu0 0.0
    %1268 = vmatpush1.msra.mxu0 0.0
    %1269 = vmatprep.subr.mxu0 0.0
    %1270 = vmatpush1.msra.mxu0 0.0
    %1271 = vmatprep.subr.mxu0 0.0
    %1272 = vmatpush1.msra.mxu0 0.0
    %1273 = vmatprep.subr.mxu0 0.0
    %1274 = vmatpush1.msra.mxu0 0.0
    %1275 = vmatprep.subr.mxu0 0.0
    %1276 = vmatpush1.msra.mxu0 0.0
    %1277 = vmatprep.subr.mxu0 0.0
    %1278 = vmatpush1.msra.mxu0 0.0
    %1279 = vmatprep.subr.mxu0 0.0
    %1280 = vmatpush1.msra.mxu0 0.0
    %1281 = vmatprep.subr.mxu0 0.0
    %1282 = vmatpush1.msra.mxu0 0.0
    %1283 = vmatprep.subr.mxu0 0.0
    %1284 = vmatpush1.msra.mxu0 0.0
    %1285 = vmatprep.subr.mxu0 0.0
    %1286 = vmatpush1.msra.mxu0 0.0
    %1287 = vmatprep.subr.mxu0 0.0
    %1288 = vmatpush1.msra.mxu0 0.0
    %1289 = vmatprep.subr.mxu0 0.0
    %1290 = vmatpush1.msra.mxu0 0.0
    %1291 = vmatprep.subr.mxu0 0.0
    %1292 = vmatpush1.msra.mxu0 0.0
    %1293 = vmatprep.subr.mxu0 0.0
    %1294 = vmatpush1.msra.mxu0 0.0
    %1295 = vmatprep.subr.mxu0 0.0
    %1296 = vmatpush1.msra.mxu0 0.0
    %1297 = vmatprep.subr.mxu0 0.0
    %1298 = vmatpush1.msra.mxu0 0.0
    %1299 = vmatprep.subr.mxu0 0.0
    %1300 = vmatpush1.msra.mxu0 0.0
    %1301 = vmatprep.subr.mxu0 0.0
    %1302 = vmatpush1.msra.mxu0 0.0
    %1303 = vmatprep.subr.mxu0 0.0
    %1304 = vmatpush1.msra.mxu0 0.0
    %1305 = vmatprep.subr.mxu0 0.0
    %1306 = vmatpush1.msra.mxu0 0.0
    %1307 = vmatprep.subr.mxu0 0.0
    %1308 = vmatpush1.msra.mxu0 0.0
    %1309 = vmatprep.subr.mxu0 0.0
    %1310 = vmatpush1.msra.mxu0 0.0
    %1311 = vmatprep.subr.mxu0 0.0
    %1312 = vmatpush1.msra.mxu0 0.0
    %1313 = vmatprep.subr.mxu0 0.0
    %1314 = vmatpush1.msra.mxu0 0.0
    %1315 = vmatprep.subr.mxu0 0.0
    %1316 = vmatpush1.msra.mxu0 0.0
    %1317 = vmatprep.subr.mxu0 0.0
    %1318 = vmatpush1.msra.mxu0 0.0
    %1319 = vmatprep.subr.mxu0 0.0
    %1320 = vmatpush1.msra.mxu0 0.0
    %1321 = vmatprep.mubr.f32.mxu0 0.0
    %1322 = vmatmul.mubr.f32.gmra.mrb[0].mxu0 %v1151
    %v1323 = vpop.f32.mrb[0].mxu0
    %v1324 = vadd.f32 0.0, %v1323
    %v1325 = vpop.f32.mrb[0].mxu0
    %1326 = vdwg.mxu0
    %v1327 = vadd.f32 %v1256, %v1324
    %v1328 = vadd.f32 %v1327, %v205
    %v1329 = vsub.f32 0.0, %v1328
    %v1330 = vmul.f32 %v1329, 1.442695
    %v1331 = vpow.pop %v1330
    %v1332 = vadd.f32 %v1331, 1.0
    %v1333 = vrcp.pop %v1332
    %v1334 = vmul.f32 1.0, %v1333
    %v1335 = vtanh.pop %v1328
    %v1336 = vmul.f32 %v1334, %v1066
    %1338 = vrot.lane.b32.xlu0 %v1335, 64
    %v1339 = vpop.permute.xlu0 %1338
    %v1341 = vmul.f32 %v1334, %v1339
    %1343 = vrot.lane.b32.xlu0 %v1341, 32
    %v1344 = vpop.permute.xlu0 %1343
    %v1346 = vadd.f32 %v1336, %v1344
    %v1347 = vtanh.pop %v1346
    %1349 = vrot.lane.b32.xlu0 %v1347, 64
    %v1350 = vpop.permute.xlu0 %1349
    %v1352 = vmul.f32 %v1334, %v1350
    %1354 = vrot.lane.b32.xlu0 %v1247, 32
    %v1355 = vpop.permute.xlu0 %1354
    %v1356 = vsel %vm126, %v1355, 0
    %1358 = vmatprep.subr.mxu0 0.0
    %1359 = vmatpush1.msra.mxu0 %v92
    %1360 = vmatprep.subr.mxu0 0.0
    %1361 = vmatpush1.msra.mxu0 %v93
    %1362 = vmatprep.subr.mxu0 0.0
    %1363 = vmatpush1.msra.mxu0 %v94
    %1364 = vmatprep.subr.mxu0 0.0
    %1365 = vmatpush1.msra.mxu0 %v95
    %1366 = vmatprep.subr.mxu0 0.0
    %1367 = vmatpush1.msra.mxu0 0.0
    %1368 = vmatprep.subr.mxu0 0.0
    %1369 = vmatpush1.msra.mxu0 0.0
    %1370 = vmatprep.subr.mxu0 0.0
    %1371 = vmatpush1.msra.mxu0 0.0
    %1372 = vmatprep.subr.mxu0 0.0
    %1373 = vmatpush1.msra.mxu0 0.0
    %1374 = vmatprep.subr.mxu0 0.0
    %1375 = vmatpush1.msra.mxu0 0.0
    %1376 = vmatprep.subr.mxu0 0.0
    %1377 = vmatpush1.msra.mxu0 0.0
    %1378 = vmatprep.subr.mxu0 0.0
    %1379 = vmatpush1.msra.mxu0 0.0
    %1380 = vmatprep.subr.mxu0 0.0
    %1381 = vmatpush1.msra.mxu0 0.0
    %1382 = vmatprep.subr.mxu0 0.0
    %1383 = vmatpush1.msra.mxu0 0.0
    %1384 = vmatprep.subr.mxu0 0.0
    %1385 = vmatpush1.msra.mxu0 0.0
    %1386 = vmatprep.subr.mxu0 0.0
    %1387 = vmatpush1.msra.mxu0 0.0
    %1388 = vmatprep.subr.mxu0 0.0
    %1389 = vmatpush1.msra.mxu0 0.0
    %1390 = vmatprep.subr.mxu0 0.0
    %1391 = vmatpush1.msra.mxu0 0.0
    %1392 = vmatprep.subr.mxu0 0.0
    %1393 = vmatpush1.msra.mxu0 0.0
    %1394 = vmatprep.subr.mxu0 0.0
    %1395 = vmatpush1.msra.mxu0 0.0
    %1396 = vmatprep.subr.mxu0 0.0
    %1397 = vmatpush1.msra.mxu0 0.0
    %1398 = vmatprep.subr.mxu0 0.0
    %1399 = vmatpush1.msra.mxu0 0.0
    %1400 = vmatprep.subr.mxu0 0.0
    %1401 = vmatpush1.msra.mxu0 0.0
    %1402 = vmatprep.subr.mxu0 0.0
    %1403 = vmatpush1.msra.mxu0 0.0
    %1404 = vmatprep.subr.mxu0 0.0
    %1405 = vmatpush1.msra.mxu0 0.0
    %1406 = vmatprep.subr.mxu0 0.0
    %1407 = vmatpush1.msra.mxu0 0.0
    %1408 = vmatprep.subr.mxu0 0.0
    %1409 = vmatpush1.msra.mxu0 0.0
    %1410 = vmatprep.subr.mxu0 0.0
    %1411 = vmatpush1.msra.mxu0 0.0
    %1412 = vmatprep.subr.mxu0 0.0
    %1413 = vmatpush1.msra.mxu0 0.0
    %1414 = vmatprep.subr.mxu0 0.0
    %1415 = vmatpush1.msra.mxu0 0.0
    %1416 = vmatprep.subr.mxu0 0.0
    %1417 = vmatpush1.msra.mxu0 0.0
    %1418 = vmatprep.subr.mxu0 0.0
    %1419 = vmatpush1.msra.mxu0 0.0
    %1420 = vmatprep.subr.mxu0 0.0
    %1421 = vmatpush1.msra.mxu0 0.0
    %1422 = vmatprep.mubr.f32.mxu0 0.0
    %1423 = vmatmul.mubr.f32.gmra.mrb[0].mxu0 %v1356
    %v1424 = vpop.f32.mrb[0].mxu0
    %v1425 = vadd.f32 0.0, %v1424
    %v1426 = vpop.f32.mrb[0].mxu0
    %1427 = vdwg.mxu0
    %1429 = vrot.lane.b32.xlu0 %v1352, 32
    %v1430 = vpop.permute.xlu0 %1429
    %v1431 = vsel %vm126, %v1430, 0
    %1433 = vmatprep.subr.mxu0 0.0
    %1434 = vmatpush1.msra.mxu0 %v83
    %1435 = vmatprep.subr.mxu0 0.0
    %1436 = vmatpush1.msra.mxu0 %v84
    %1437 = vmatprep.subr.mxu0 0.0
    %1438 = vmatpush1.msra.mxu0 %v85
    %1439 = vmatprep.subr.mxu0 0.0
    %1440 = vmatpush1.msra.mxu0 %v86
    %1441 = vmatprep.subr.mxu0 0.0
    %1442 = vmatpush1.msra.mxu0 0.0
    %1443 = vmatprep.subr.mxu0 0.0
    %1444 = vmatpush1.msra.mxu0 0.0
    %1445 = vmatprep.subr.mxu0 0.0
    %1446 = vmatpush1.msra.mxu0 0.0
    %1447 = vmatprep.subr.mxu0 0.0
    %1448 = vmatpush1.msra.mxu0 0.0
    %1449 = vmatprep.subr.mxu0 0.0
    %1450 = vmatpush1.msra.mxu0 0.0
    %1451 = vmatprep.subr.mxu0 0.0
    %1452 = vmatpush1.msra.mxu0 0.0
    %1453 = vmatprep.subr.mxu0 0.0
    %1454 = vmatpush1.msra.mxu0 0.0
    %1455 = vmatprep.subr.mxu0 0.0
    %1456 = vmatpush1.msra.mxu0 0.0
    %1457 = vmatprep.subr.mxu0 0.0
    %1458 = vmatpush1.msra.mxu0 0.0
    %1459 = vmatprep.subr.mxu0 0.0
    %1460 = vmatpush1.msra.mxu0 0.0
    %1461 = vmatprep.subr.mxu0 0.0
    %1462 = vmatpush1.msra.mxu0 0.0
    %1463 = vmatprep.subr.mxu0 0.0
    %1464 = vmatpush1.msra.mxu0 0.0
    %1465 = vmatprep.subr.mxu0 0.0
    %1466 = vmatpush1.msra.mxu0 0.0
    %1467 = vmatprep.subr.mxu0 0.0
    %1468 = vmatpush1.msra.mxu0 0.0
    %1469 = vmatprep.subr.mxu0 0.0
    %1470 = vmatpush1.msra.mxu0 0.0
    %1471 = vmatprep.subr.mxu0 0.0
    %1472 = vmatpush1.msra.mxu0 0.0
    %1473 = vmatprep.subr.mxu0 0.0
    %1474 = vmatpush1.msra.mxu0 0.0
    %1475 = vmatprep.subr.mxu0 0.0
    %1476 = vmatpush1.msra.mxu0 0.0
    %1477 = vmatprep.subr.mxu0 0.0
    %1478 = vmatpush1.msra.mxu0 0.0
    %1479 = vmatprep.subr.mxu0 0.0
    %1480 = vmatpush1.msra.mxu0 0.0
    %1481 = vmatprep.subr.mxu0 0.0
    %1482 = vmatpush1.msra.mxu0 0.0
    %1483 = vmatprep.subr.mxu0 0.0
    %1484 = vmatpush1.msra.mxu0 0.0
    %1485 = vmatprep.subr.mxu0 0.0
    %1486 = vmatpush1.msra.mxu0 0.0
    %1487 = vmatprep.subr.mxu0 0.0
    %1488 = vmatpush1.msra.mxu0 0.0
    %1489 = vmatprep.subr.mxu0 0.0
    %1490 = vmatpush1.msra.mxu0 0.0
    %1491 = vmatprep.subr.mxu0 0.0
    %1492 = vmatpush1.msra.mxu0 0.0
    %1493 = vmatprep.subr.mxu0 0.0
    %1494 = vmatpush1.msra.mxu0 0.0
    %1495 = vmatprep.subr.mxu0 0.0
    %1496 = vmatpush1.msra.mxu0 0.0
    %1497 = vmatprep.mubr.f32.mxu0 0.0
    %1498 = vmatmul.mubr.f32.gmra.mrb[0].mxu0 %v1431
    %v1499 = vpop.f32.mrb[0].mxu0
    %v1500 = vadd.f32 %v1425, %v1499
    %v1501 = vpop.f32.mrb[0].mxu0
    %1502 = vdwg.mxu0
    %v1503 = vadd.f32 %v1500, %v381
    %v1504 = vsub.f32 0.0, %v1503
    %v1505 = vmul.f32 %v1504, 1.442695
    %v1506 = vpow.pop %v1505
    %v1507 = vadd.f32 %v1506, 1.0
    %v1508 = vrcp.pop %v1507
    %v1509 = vmul.f32 1.0, %v1508
    %v1510 = vtanh.pop %v1503
    %v1511 = vmul.f32 %v1509, %v1241
    %1513 = vrot.lane.b32.xlu0 %v1510, 64
    %v1514 = vpop.permute.xlu0 %1513
    %v1516 = vmul.f32 %v1509, %v1514
    %1518 = vrot.lane.b32.xlu0 %v1516, 32
    %v1519 = vpop.permute.xlu0 %1518
    %v1521 = vadd.f32 %v1511, %v1519
    %v1522 = vtanh.pop %v1521
    %1524 = vrot.lane.b32.xlu0 %v1522, 64
    %v1525 = vpop.permute.xlu0 %1524
    %v1527 = vmul.f32 %v1509, %v1525
    %v1528 = vadd.f32 %v1248, %v1527
    %s1529 = scalar_lea.vmem %s0, 10
    %v1530 = vld [vmem:[%s1529] sm:$0x3]
    %1532 = vset.pattern.permute.xlu0 0
    %1533 = vperm.xlu0 %1532, %v1530
    %v1534 = vpop.permute.xlu0 %1533
    %v1536 = vmul.f32 %v1534, %v123
    %1537 = vmatprep.subr.mxu0 0.0
    %1538 = vmatpush1.msra.mxu0 %v87
    %1539 = vmatprep.subr.mxu0 0.0
    %1540 = vmatpush1.msra.mxu0 %v88
    %1541 = vmatprep.subr.mxu0 0.0
    %1542 = vmatpush1.msra.mxu0 %v89
    %1543 = vmatprep.subr.mxu0 0.0
    %1544 = vmatpush1.msra.mxu0 %v90
    %1545 = vmatprep.subr.mxu0 0.0
    %1546 = vmatpush1.msra.mxu0 0.0
    %1547 = vmatprep.subr.mxu0 0.0
    %1548 = vmatpush1.msra.mxu0 0.0
    %1549 = vmatprep.subr.mxu0 0.0
    %1550 = vmatpush1.msra.mxu0 0.0
    %1551 = vmatprep.subr.mxu0 0.0
    %1552 = vmatpush1.msra.mxu0 0.0
    %1553 = vmatprep.subr.mxu0 0.0
    %1554 = vmatpush1.msra.mxu0 0.0
    %1555 = vmatprep.subr.mxu0 0.0
    %1556 = vmatpush1.msra.mxu0 0.0
    %1557 = vmatprep.subr.mxu0 0.0
    %1558 = vmatpush1.msra.mxu0 0.0
    %1559 = vmatprep.subr.mxu0 0.0
    %1560 = vmatpush1.msra.mxu0 0.0
    %1561 = vmatprep.subr.mxu0 0.0
    %1562 = vmatpush1.msra.mxu0 0.0
    %1563 = vmatprep.subr.mxu0 0.0
    %1564 = vmatpush1.msra.mxu0 0.0
    %1565 = vmatprep.subr.mxu0 0.0
    %1566 = vmatpush1.msra.mxu0 0.0
    %1567 = vmatprep.subr.mxu0 0.0
    %1568 = vmatpush1.msra.mxu0 0.0
    %1569 = vmatprep.subr.mxu0 0.0
    %1570 = vmatpush1.msra.mxu0 0.0
    %1571 = vmatprep.subr.mxu0 0.0
    %1572 = vmatpush1.msra.mxu0 0.0
    %1573 = vmatprep.subr.mxu0 0.0
    %1574 = vmatpush1.msra.mxu0 0.0
    %1575 = vmatprep.subr.mxu0 0.0
    %1576 = vmatpush1.msra.mxu0 0.0
    %1577 = vmatprep.subr.mxu0 0.0
    %1578 = vmatpush1.msra.mxu0 0.0
    %1579 = vmatprep.subr.mxu0 0.0
    %1580 = vmatpush1.msra.mxu0 0.0
    %1581 = vmatprep.subr.mxu0 0.0
    %1582 = vmatpush1.msra.mxu0 0.0
    %1583 = vmatprep.subr.mxu0 0.0
    %1584 = vmatpush1.msra.mxu0 0.0
    %1585 = vmatprep.subr.mxu0 0.0
    %1586 = vmatpush1.msra.mxu0 0.0
    %1587 = vmatprep.subr.mxu0 0.0
    %1588 = vmatpush1.msra.mxu0 0.0
    %1589 = vmatprep.subr.mxu0 0.0
    %1590 = vmatpush1.msra.mxu0 0.0
    %1591 = vmatprep.subr.mxu0 0.0
    %1592 = vmatpush1.msra.mxu0 0.0
    %1593 = vmatprep.subr.mxu0 0.0
    %1594 = vmatpush1.msra.mxu0 0.0
    %1595 = vmatprep.subr.mxu0 0.0
    %1596 = vmatpush1.msra.mxu0 0.0
    %1597 = vmatprep.subr.mxu0 0.0
    %1598 = vmatpush1.msra.mxu0 0.0
    %1599 = vmatprep.subr.mxu0 0.0
    %1600 = vmatpush1.msra.mxu0 0.0
    %1601 = vmatprep.mubr.f32.mxu0 0.0
    %1602 = vmatmul.mubr.f32.gmra.mrb[0].mxu0 %v1431
    %v1603 = vpop.f32.mrb[0].mxu0
    %v1604 = vadd.f32 0.0, %v1603
    %v1605 = vpop.f32.mrb[0].mxu0
    %1606 = vdwg.mxu0
    %v1607 = vadd.f32 %v1536, %v1604
    %v1608 = vadd.f32 %v1607, %v205
    %v1609 = vsub.f32 0.0, %v1608
    %v1610 = vmul.f32 %v1609, 1.442695
    %v1611 = vpow.pop %v1610
    %v1612 = vadd.f32 %v1611, 1.0
    %v1613 = vrcp.pop %v1612
    %v1614 = vmul.f32 1.0, %v1613
    %v1615 = vtanh.pop %v1608
    %v1616 = vmul.f32 %v1614, %v1346
    %1618 = vrot.lane.b32.xlu0 %v1615, 64
    %v1619 = vpop.permute.xlu0 %1618
    %v1621 = vmul.f32 %v1614, %v1619
    %1623 = vrot.lane.b32.xlu0 %v1621, 32
    %v1624 = vpop.permute.xlu0 %1623
    %v1626 = vadd.f32 %v1616, %v1624
    %v1627 = vtanh.pop %v1626
    %1629 = vrot.lane.b32.xlu0 %v1627, 64
    %v1630 = vpop.permute.xlu0 %1629
    %v1632 = vmul.f32 %v1614, %v1630
    %1634 = vrot.lane.b32.xlu0 %v1527, 32
    %v1635 = vpop.permute.xlu0 %1634
    %v1636 = vsel %vm126, %v1635, 0
    %1638 = vmatprep.subr.mxu0 0.0
    %1639 = vmatpush1.msra.mxu0 %v92
    %1640 = vmatprep.subr.mxu0 0.0
    %1641 = vmatpush1.msra.mxu0 %v93
    %1642 = vmatprep.subr.mxu0 0.0
    %1643 = vmatpush1.msra.mxu0 %v94
    %1644 = vmatprep.subr.mxu0 0.0
    %1645 = vmatpush1.msra.mxu0 %v95
    %1646 = vmatprep.subr.mxu0 0.0
    %1647 = vmatpush1.msra.mxu0 0.0
    %1648 = vmatprep.subr.mxu0 0.0
    %1649 = vmatpush1.msra.mxu0 0.0
    %1650 = vmatprep.subr.mxu0 0.0
    %1651 = vmatpush1.msra.mxu0 0.0
    %1652 = vmatprep.subr.mxu0 0.0
    %1653 = vmatpush1.msra.mxu0 0.0
    %1654 = vmatprep.subr.mxu0 0.0
    %1655 = vmatpush1.msra.mxu0 0.0
    %1656 = vmatprep.subr.mxu0 0.0
    %1657 = vmatpush1.msra.mxu0 0.0
    %1658 = vmatprep.subr.mxu0 0.0
    %1659 = vmatpush1.msra.mxu0 0.0
    %1660 = vmatprep.subr.mxu0 0.0
    %1661 = vmatpush1.msra.mxu0 0.0
    %1662 = vmatprep.subr.mxu0 0.0
    %1663 = vmatpush1.msra.mxu0 0.0
    %1664 = vmatprep.subr.mxu0 0.0
    %1665 = vmatpush1.msra.mxu0 0.0
    %1666 = vmatprep.subr.mxu0 0.0
    %1667 = vmatpush1.msra.mxu0 0.0
    %1668 = vmatprep.subr.mxu0 0.0
    %1669 = vmatpush1.msra.mxu0 0.0
    %1670 = vmatprep.subr.mxu0 0.0
    %1671 = vmatpush1.msra.mxu0 0.0
    %1672 = vmatprep.subr.mxu0 0.0
    %1673 = vmatpush1.msra.mxu0 0.0
    %1674 = vmatprep.subr.mxu0 0.0
    %1675 = vmatpush1.msra.mxu0 0.0
    %1676 = vmatprep.subr.mxu0 0.0
    %1677 = vmatpush1.msra.mxu0 0.0
    %1678 = vmatprep.subr.mxu0 0.0
    %1679 = vmatpush1.msra.mxu0 0.0
    %1680 = vmatprep.subr.mxu0 0.0
    %1681 = vmatpush1.msra.mxu0 0.0
    %1682 = vmatprep.subr.mxu0 0.0
    %1683 = vmatpush1.msra.mxu0 0.0
    %1684 = vmatprep.subr.mxu0 0.0
    %1685 = vmatpush1.msra.mxu0 0.0
    %1686 = vmatprep.subr.mxu0 0.0
    %1687 = vmatpush1.msra.mxu0 0.0
    %1688 = vmatprep.subr.mxu0 0.0
    %1689 = vmatpush1.msra.mxu0 0.0
    %1690 = vmatprep.subr.mxu0 0.0
    %1691 = vmatpush1.msra.mxu0 0.0
    %1692 = vmatprep.subr.mxu0 0.0
    %1693 = vmatpush1.msra.mxu0 0.0
    %1694 = vmatprep.subr.mxu0 0.0
    %1695 = vmatpush1.msra.mxu0 0.0
    %1696 = vmatprep.subr.mxu0 0.0
    %1697 = vmatpush1.msra.mxu0 0.0
    %1698 = vmatprep.subr.mxu0 0.0
    %1699 = vmatpush1.msra.mxu0 0.0
    %1700 = vmatprep.subr.mxu0 0.0
    %1701 = vmatpush1.msra.mxu0 0.0
    %1702 = vmatprep.mubr.f32.mxu0 0.0
    %1703 = vmatmul.mubr.f32.gmra.mrb[0].mxu0 %v1636
    %v1704 = vpop.f32.mrb[0].mxu0
    %v1705 = vadd.f32 0.0, %v1704
    %v1706 = vpop.f32.mrb[0].mxu0
    %1707 = vdwg.mxu0
    %1709 = vrot.lane.b32.xlu0 %v1632, 32
    %v1710 = vpop.permute.xlu0 %1709
    %v1711 = vsel %vm126, %v1710, 0
    %1713 = vmatprep.subr.mxu0 0.0
    %1714 = vmatpush1.msra.mxu0 %v83
    %1715 = vmatprep.subr.mxu0 0.0
    %1716 = vmatpush1.msra.mxu0 %v84
    %1717 = vmatprep.subr.mxu0 0.0
    %1718 = vmatpush1.msra.mxu0 %v85
    %1719 = vmatprep.subr.mxu0 0.0
    %1720 = vmatpush1.msra.mxu0 %v86
    %1721 = vmatprep.subr.mxu0 0.0
    %1722 = vmatpush1.msra.mxu0 0.0
    %1723 = vmatprep.subr.mxu0 0.0
    %1724 = vmatpush1.msra.mxu0 0.0
    %1725 = vmatprep.subr.mxu0 0.0
    %1726 = vmatpush1.msra.mxu0 0.0
    %1727 = vmatprep.subr.mxu0 0.0
    %1728 = vmatpush1.msra.mxu0 0.0
    %1729 = vmatprep.subr.mxu0 0.0
    %1730 = vmatpush1.msra.mxu0 0.0
    %1731 = vmatprep.subr.mxu0 0.0
    %1732 = vmatpush1.msra.mxu0 0.0
    %1733 = vmatprep.subr.mxu0 0.0
    %1734 = vmatpush1.msra.mxu0 0.0
    %1735 = vmatprep.subr.mxu0 0.0
    %1736 = vmatpush1.msra.mxu0 0.0
    %1737 = vmatprep.subr.mxu0 0.0
    %1738 = vmatpush1.msra.mxu0 0.0
    %1739 = vmatprep.subr.mxu0 0.0
    %1740 = vmatpush1.msra.mxu0 0.0
    %1741 = vmatprep.subr.mxu0 0.0
    %1742 = vmatpush1.msra.mxu0 0.0
    %1743 = vmatprep.subr.mxu0 0.0
    %1744 = vmatpush1.msra.mxu0 0.0
    %1745 = vmatprep.subr.mxu0 0.0
    %1746 = vmatpush1.msra.mxu0 0.0
    %1747 = vmatprep.subr.mxu0 0.0
    %1748 = vmatpush1.msra.mxu0 0.0
    %1749 = vmatprep.subr.mxu0 0.0
    %1750 = vmatpush1.msra.mxu0 0.0
    %1751 = vmatprep.subr.mxu0 0.0
    %1752 = vmatpush1.msra.mxu0 0.0
    %1753 = vmatprep.subr.mxu0 0.0
    %1754 = vmatpush1.msra.mxu0 0.0
    %1755 = vmatprep.subr.mxu0 0.0
    %1756 = vmatpush1.msra.mxu0 0.0
    %1757 = vmatprep.subr.mxu0 0.0
    %1758 = vmatpush1.msra.mxu0 0.0
    %1759 = vmatprep.subr.mxu0 0.0
    %1760 = vmatpush1.msra.mxu0 0.0
    %1761 = vmatprep.subr.mxu0 0.0
    %1762 = vmatpush1.msra.mxu0 0.0
    %1763 = vmatprep.subr.mxu0 0.0
    %1764 = vmatpush1.msra.mxu0 0.0
    %1765 = vmatprep.subr.mxu0 0.0
    %1766 = vmatpush1.msra.mxu0 0.0
    %1767 = vmatprep.subr.mxu0 0.0
    %1768 = vmatpush1.msra.mxu0 0.0
    %1769 = vmatprep.subr.mxu0 0.0
    %1770 = vmatpush1.msra.mxu0 0.0
    %1771 = vmatprep.subr.mxu0 0.0
    %1772 = vmatpush1.msra.mxu0 0.0
    %1773 = vmatprep.subr.mxu0 0.0
    %1774 = vmatpush1.msra.mxu0 0.0
    %1775 = vmatprep.subr.mxu0 0.0
    %1776 = vmatpush1.msra.mxu0 0.0
    %1777 = vmatprep.mubr.f32.mxu0 0.0
    %1778 = vmatmul.mubr.f32.gmra.mrb[0].mxu0 %v1711
    %v1779 = vpop.f32.mrb[0].mxu0
    %v1780 = vadd.f32 %v1705, %v1779
    %v1781 = vpop.f32.mrb[0].mxu0
    %1782 = vdwg.mxu0
    %v1783 = vadd.f32 %v1780, %v381
    %v1784 = vsub.f32 0.0, %v1783
    %v1785 = vmul.f32 %v1784, 1.442695
    %v1786 = vpow.pop %v1785
    %v1787 = vadd.f32 %v1786, 1.0
    %v1788 = vrcp.pop %v1787
    %v1789 = vmul.f32 1.0, %v1788
    %v1790 = vtanh.pop %v1783
    %v1791 = vmul.f32 %v1789, %v1521
    %1793 = vrot.lane.b32.xlu0 %v1790, 64
    %v1794 = vpop.permute.xlu0 %1793
    %v1796 = vmul.f32 %v1789, %v1794
    %1798 = vrot.lane.b32.xlu0 %v1796, 32
    %v1799 = vpop.permute.xlu0 %1798
    %v1801 = vadd.f32 %v1791, %v1799
    %v1802 = vtanh.pop %v1801
    %1804 = vrot.lane.b32.xlu0 %v1802, 64
    %v1805 = vpop.permute.xlu0 %1804
    %v1807 = vmul.f32 %v1789, %v1805
    %v1808 = vadd.f32 %v1528, %v1807
    %s1809 = scalar_lea.vmem %s0, 12
    %v1810 = vld [vmem:[%s1809] sm:$0x3]
    %1812 = vset.pattern.permute.xlu0 0
    %1813 = vperm.xlu0 %1812, %v1810
    %v1814 = vpop.permute.xlu0 %1813
    %v1816 = vmul.f32 %v1814, %v123
    %1817 = vmatprep.subr.mxu0 0.0
    %1818 = vmatpush1.msra.mxu0 %v87
    %1819 = vmatprep.subr.mxu0 0.0
    %1820 = vmatpush1.msra.mxu0 %v88
    %1821 = vmatprep.subr.mxu0 0.0
    %1822 = vmatpush1.msra.mxu0 %v89
    %1823 = vmatprep.subr.mxu0 0.0
    %1824 = vmatpush1.msra.mxu0 %v90
    %1825 = vmatprep.subr.mxu0 0.0
    %1826 = vmatpush1.msra.mxu0 0.0
    %1827 = vmatprep.subr.mxu0 0.0
    %1828 = vmatpush1.msra.mxu0 0.0
    %1829 = vmatprep.subr.mxu0 0.0
    %1830 = vmatpush1.msra.mxu0 0.0
    %1831 = vmatprep.subr.mxu0 0.0
    %1832 = vmatpush1.msra.mxu0 0.0
    %1833 = vmatprep.subr.mxu0 0.0
    %1834 = vmatpush1.msra.mxu0 0.0
    %1835 = vmatprep.subr.mxu0 0.0
    %1836 = vmatpush1.msra.mxu0 0.0
    %1837 = vmatprep.subr.mxu0 0.0
    %1838 = vmatpush1.msra.mxu0 0.0
    %1839 = vmatprep.subr.mxu0 0.0
    %1840 = vmatpush1.msra.mxu0 0.0
    %1841 = vmatprep.subr.mxu0 0.0
    %1842 = vmatpush1.msra.mxu0 0.0
    %1843 = vmatprep.subr.mxu0 0.0
    %1844 = vmatpush1.msra.mxu0 0.0
    %1845 = vmatprep.subr.mxu0 0.0
    %1846 = vmatpush1.msra.mxu0 0.0
    %1847 = vmatprep.subr.mxu0 0.0
    %1848 = vmatpush1.msra.mxu0 0.0
    %1849 = vmatprep.subr.mxu0 0.0
    %1850 = vmatpush1.msra.mxu0 0.0
    %1851 = vmatprep.subr.mxu0 0.0
    %1852 = vmatpush1.msra.mxu0 0.0
    %1853 = vmatprep.subr.mxu0 0.0
    %1854 = vmatpush1.msra.mxu0 0.0
    %1855 = vmatprep.subr.mxu0 0.0
    %1856 = vmatpush1.msra.mxu0 0.0
    %1857 = vmatprep.subr.mxu0 0.0
    %1858 = vmatpush1.msra.mxu0 0.0
    %1859 = vmatprep.subr.mxu0 0.0
    %1860 = vmatpush1.msra.mxu0 0.0
    %1861 = vmatprep.subr.mxu0 0.0
    %1862 = vmatpush1.msra.mxu0 0.0
    %1863 = vmatprep.subr.mxu0 0.0
    %1864 = vmatpush1.msra.mxu0 0.0
    %1865 = vmatprep.subr.mxu0 0.0
    %1866 = vmatpush1.msra.mxu0 0.0
    %1867 = vmatprep.subr.mxu0 0.0
    %1868 = vmatpush1.msra.mxu0 0.0
    %1869 = vmatprep.subr.mxu0 0.0
    %1870 = vmatpush1.msra.mxu0 0.0
    %1871 = vmatprep.subr.mxu0 0.0
    %1872 = vmatpush1.msra.mxu0 0.0
    %1873 = vmatprep.subr.mxu0 0.0
    %1874 = vmatpush1.msra.mxu0 0.0
    %1875 = vmatprep.subr.mxu0 0.0
    %1876 = vmatpush1.msra.mxu0 0.0
    %1877 = vmatprep.subr.mxu0 0.0
    %1878 = vmatpush1.msra.mxu0 0.0
    %1879 = vmatprep.subr.mxu0 0.0
    %1880 = vmatpush1.msra.mxu0 0.0
    %1881 = vmatprep.mubr.f32.mxu0 0.0
    %1882 = vmatmul.mubr.f32.gmra.mrb[0].mxu0 %v1711
    %v1883 = vpop.f32.mrb[0].mxu0
    %v1884 = vadd.f32 0.0, %v1883
    %v1885 = vpop.f32.mrb[0].mxu0
    %1886 = vdwg.mxu0
    %v1887 = vadd.f32 %v1816, %v1884
    %v1888 = vadd.f32 %v1887, %v205
    %v1889 = vsub.f32 0.0, %v1888
    %v1890 = vmul.f32 %v1889, 1.442695
    %v1891 = vpow.pop %v1890
    %v1892 = vadd.f32 %v1891, 1.0
    %v1893 = vrcp.pop %v1892
    %v1894 = vmul.f32 1.0, %v1893
    %v1895 = vtanh.pop %v1888
    %v1896 = vmul.f32 %v1894, %v1626
    %1898 = vrot.lane.b32.xlu0 %v1895, 64
    %v1899 = vpop.permute.xlu0 %1898
    %v1901 = vmul.f32 %v1894, %v1899
    %1903 = vrot.lane.b32.xlu0 %v1901, 32
    %v1904 = vpop.permute.xlu0 %1903
    %v1906 = vadd.f32 %v1896, %v1904
    %v1907 = vtanh.pop %v1906
    %1909 = vrot.lane.b32.xlu0 %v1907, 64
    %v1910 = vpop.permute.xlu0 %1909
    %v1912 = vmul.f32 %v1894, %v1910
    %1914 = vrot.lane.b32.xlu0 %v1807, 32
    %v1915 = vpop.permute.xlu0 %1914
    %v1916 = vsel %vm126, %v1915, 0
    %1918 = vmatprep.subr.mxu0 0.0
    %1919 = vmatpush1.msra.mxu0 %v92
    %1920 = vmatprep.subr.mxu0 0.0
    %1921 = vmatpush1.msra.mxu0 %v93
    %1922 = vmatprep.subr.mxu0 0.0
    %1923 = vmatpush1.msra.mxu0 %v94
    %1924 = vmatprep.subr.mxu0 0.0
    %1925 = vmatpush1.msra.mxu0 %v95
    %1926 = vmatprep.subr.mxu0 0.0
    %1927 = vmatpush1.msra.mxu0 0.0
    %1928 = vmatprep.subr.mxu0 0.0
    %1929 = vmatpush1.msra.mxu0 0.0
    %1930 = vmatprep.subr.mxu0 0.0
    %1931 = vmatpush1.msra.mxu0 0.0
    %1932 = vmatprep.subr.mxu0 0.0
    %1933 = vmatpush1.msra.mxu0 0.0
    %1934 = vmatprep.subr.mxu0 0.0
    %1935 = vmatpush1.msra.mxu0 0.0
    %1936 = vmatprep.subr.mxu0 0.0
    %1937 = vmatpush1.msra.mxu0 0.0
    %1938 = vmatprep.subr.mxu0 0.0
    %1939 = vmatpush1.msra.mxu0 0.0
    %1940 = vmatprep.subr.mxu0 0.0
    %1941 = vmatpush1.msra.mxu0 0.0
    %1942 = vmatprep.subr.mxu0 0.0
    %1943 = vmatpush1.msra.mxu0 0.0
    %1944 = vmatprep.subr.mxu0 0.0
    %1945 = vmatpush1.msra.mxu0 0.0
    %1946 = vmatprep.subr.mxu0 0.0
    %1947 = vmatpush1.msra.mxu0 0.0
    %1948 = vmatprep.subr.mxu0 0.0
    %1949 = vmatpush1.msra.mxu0 0.0
    %1950 = vmatprep.subr.mxu0 0.0
    %1951 = vmatpush1.msra.mxu0 0.0
    %1952 = vmatprep.subr.mxu0 0.0
    %1953 = vmatpush1.msra.mxu0 0.0
    %1954 = vmatprep.subr.mxu0 0.0
    %1955 = vmatpush1.msra.mxu0 0.0
    %1956 = vmatprep.subr.mxu0 0.0
    %1957 = vmatpush1.msra.mxu0 0.0
    %1958 = vmatprep.subr.mxu0 0.0
    %1959 = vmatpush1.msra.mxu0 0.0
    %1960 = vmatprep.subr.mxu0 0.0
    %1961 = vmatpush1.msra.mxu0 0.0
    %1962 = vmatprep.subr.mxu0 0.0
    %1963 = vmatpush1.msra.mxu0 0.0
    %1964 = vmatprep.subr.mxu0 0.0
    %1965 = vmatpush1.msra.mxu0 0.0
    %1966 = vmatprep.subr.mxu0 0.0
    %1967 = vmatpush1.msra.mxu0 0.0
    %1968 = vmatprep.subr.mxu0 0.0
    %1969 = vmatpush1.msra.mxu0 0.0
    %1970 = vmatprep.subr.mxu0 0.0
    %1971 = vmatpush1.msra.mxu0 0.0
    %1972 = vmatprep.subr.mxu0 0.0
    %1973 = vmatpush1.msra.mxu0 0.0
    %1974 = vmatprep.subr.mxu0 0.0
    %1975 = vmatpush1.msra.mxu0 0.0
    %1976 = vmatprep.subr.mxu0 0.0
    %1977 = vmatpush1.msra.mxu0 0.0
    %1978 = vmatprep.subr.mxu0 0.0
    %1979 = vmatpush1.msra.mxu0 0.0
    %1980 = vmatprep.subr.mxu0 0.0
    %1981 = vmatpush1.msra.mxu0 0.0
    %1982 = vmatprep.mubr.f32.mxu0 0.0
    %1983 = vmatmul.mubr.f32.gmra.mrb[0].mxu0 %v1916
    %v1984 = vpop.f32.mrb[0].mxu0
    %v1985 = vadd.f32 0.0, %v1984
    %v1986 = vpop.f32.mrb[0].mxu0
    %1987 = vdwg.mxu0
    %1989 = vrot.lane.b32.xlu0 %v1912, 32
    %v1990 = vpop.permute.xlu0 %1989
    %v1991 = vsel %vm126, %v1990, 0
    %1993 = vmatprep.subr.mxu0 0.0
    %1994 = vmatpush1.msra.mxu0 %v83
    %1995 = vmatprep.subr.mxu0 0.0
    %1996 = vmatpush1.msra.mxu0 %v84
    %1997 = vmatprep.subr.mxu0 0.0
    %1998 = vmatpush1.msra.mxu0 %v85
    %1999 = vmatprep.subr.mxu0 0.0
    %2000 = vmatpush1.msra.mxu0 %v86
    %2001 = vmatprep.subr.mxu0 0.0
    %2002 = vmatpush1.msra.mxu0 0.0
    %2003 = vmatprep.subr.mxu0 0.0
    %2004 = vmatpush1.msra.mxu0 0.0
    %2005 = vmatprep.subr.mxu0 0.0
    %2006 = vmatpush1.msra.mxu0 0.0
    %2007 = vmatprep.subr.mxu0 0.0
    %2008 = vmatpush1.msra.mxu0 0.0
    %2009 = vmatprep.subr.mxu0 0.0
    %2010 = vmatpush1.msra.mxu0 0.0
    %2011 = vmatprep.subr.mxu0 0.0
    %2012 = vmatpush1.msra.mxu0 0.0
    %2013 = vmatprep.subr.mxu0 0.0
    %2014 = vmatpush1.msra.mxu0 0.0
    %2015 = vmatprep.subr.mxu0 0.0
    %2016 = vmatpush1.msra.mxu0 0.0
    %2017 = vmatprep.subr.mxu0 0.0
    %2018 = vmatpush1.msra.mxu0 0.0
    %2019 = vmatprep.subr.mxu0 0.0
    %2020 = vmatpush1.msra.mxu0 0.0
    %2021 = vmatprep.subr.mxu0 0.0
    %2022 = vmatpush1.msra.mxu0 0.0
    %2023 = vmatprep.subr.mxu0 0.0
    %2024 = vmatpush1.msra.mxu0 0.0
    %2025 = vmatprep.subr.mxu0 0.0
    %2026 = vmatpush1.msra.mxu0 0.0
    %2027 = vmatprep.subr.mxu0 0.0
    %2028 = vmatpush1.msra.mxu0 0.0
    %2029 = vmatprep.subr.mxu0 0.0
    %2030 = vmatpush1.msra.mxu0 0.0
    %2031 = vmatprep.subr.mxu0 0.0
    %2032 = vmatpush1.msra.mxu0 0.0
    %2033 = vmatprep.subr.mxu0 0.0
    %2034 = vmatpush1.msra.mxu0 0.0
    %2035 = vmatprep.subr.mxu0 0.0
    %2036 = vmatpush1.msra.mxu0 0.0
    %2037 = vmatprep.subr.mxu0 0.0
    %2038 = vmatpush1.msra.mxu0 0.0
    %2039 = vmatprep.subr.mxu0 0.0
    %2040 = vmatpush1.msra.mxu0 0.0
    %2041 = vmatprep.subr.mxu0 0.0
    %2042 = vmatpush1.msra.mxu0 0.0
    %2043 = vmatprep.subr.mxu0 0.0
    %2044 = vmatpush1.msra.mxu0 0.0
    %2045 = vmatprep.subr.mxu0 0.0
    %2046 = vmatpush1.msra.mxu0 0.0
    %2047 = vmatprep.subr.mxu0 0.0
    %2048 = vmatpush1.msra.mxu0 0.0
    %2049 = vmatprep.subr.mxu0 0.0
    %2050 = vmatpush1.msra.mxu0 0.0
    %2051 = vmatprep.subr.mxu0 0.0
    %2052 = vmatpush1.msra.mxu0 0.0
    %2053 = vmatprep.subr.mxu0 0.0
    %2054 = vmatpush1.msra.mxu0 0.0
    %2055 = vmatprep.subr.mxu0 0.0
    %2056 = vmatpush1.msra.mxu0 0.0
    %2057 = vmatprep.mubr.f32.mxu0 0.0
    %2058 = vmatmul.mubr.f32.gmra.mrb[0].mxu0 %v1991
    %v2059 = vpop.f32.mrb[0].mxu0
    %v2060 = vadd.f32 %v1985, %v2059
    %v2061 = vpop.f32.mrb[0].mxu0
    %2062 = vdwg.mxu0
    %v2063 = vadd.f32 %v2060, %v381
    %v2064 = vsub.f32 0.0, %v2063
    %v2065 = vmul.f32 %v2064, 1.442695
    %v2066 = vpow.pop %v2065
    %v2067 = vadd.f32 %v2066, 1.0
    %v2068 = vrcp.pop %v2067
    %v2069 = vmul.f32 1.0, %v2068
    %v2070 = vtanh.pop %v2063
    %v2071 = vmul.f32 %v2069, %v1801
    %2073 = vrot.lane.b32.xlu0 %v2070, 64
    %v2074 = vpop.permute.xlu0 %2073
    %v2076 = vmul.f32 %v2069, %v2074
    %2078 = vrot.lane.b32.xlu0 %v2076, 32
    %v2079 = vpop.permute.xlu0 %2078
    %v2081 = vadd.f32 %v2071, %v2079
    %v2082 = vtanh.pop %v2081
    %2084 = vrot.lane.b32.xlu0 %v2082, 64
    %v2085 = vpop.permute.xlu0 %2084
    %v2087 = vmul.f32 %v2069, %v2085
    %v2088 = vadd.f32 %v1808, %v2087
    %s2089 = scalar_lea.vmem %s0, 14
    %v2090 = vld [vmem:[%s2089] sm:$0x3]
    %2092 = vset.pattern.permute.xlu0 0
    %2093 = vperm.xlu0 %2092, %v2090
    %v2094 = vpop.permute.xlu0 %2093
    %v2096 = vmul.f32 %v2094, %v123
    %2097 = vmatprep.subr.mxu0 0.0
    %2098 = vmatpush1.msra.mxu0 %v87
    %2099 = vmatprep.subr.mxu0 0.0
    %2100 = vmatpush1.msra.mxu0 %v88
    %2101 = vmatprep.subr.mxu0 0.0
    %2102 = vmatpush1.msra.mxu0 %v89
    %2103 = vmatprep.subr.mxu0 0.0
    %2104 = vmatpush1.msra.mxu0 %v90
    %2105 = vmatprep.subr.mxu0 0.0
    %2106 = vmatpush1.msra.mxu0 0.0
    %2107 = vmatprep.subr.mxu0 0.0
    %2108 = vmatpush1.msra.mxu0 0.0
    %2109 = vmatprep.subr.mxu0 0.0
    %2110 = vmatpush1.msra.mxu0 0.0
    %2111 = vmatprep.subr.mxu0 0.0
    %2112 = vmatpush1.msra.mxu0 0.0
    %2113 = vmatprep.subr.mxu0 0.0
    %2114 = vmatpush1.msra.mxu0 0.0
    %2115 = vmatprep.subr.mxu0 0.0
    %2116 = vmatpush1.msra.mxu0 0.0
    %2117 = vmatprep.subr.mxu0 0.0
    %2118 = vmatpush1.msra.mxu0 0.0
    %2119 = vmatprep.subr.mxu0 0.0
    %2120 = vmatpush1.msra.mxu0 0.0
    %2121 = vmatprep.subr.mxu0 0.0
    %2122 = vmatpush1.msra.mxu0 0.0
    %2123 = vmatprep.subr.mxu0 0.0
    %2124 = vmatpush1.msra.mxu0 0.0
    %2125 = vmatprep.subr.mxu0 0.0
    %2126 = vmatpush1.msra.mxu0 0.0
    %2127 = vmatprep.subr.mxu0 0.0
    %2128 = vmatpush1.msra.mxu0 0.0
    %2129 = vmatprep.subr.mxu0 0.0
    %2130 = vmatpush1.msra.mxu0 0.0
    %2131 = vmatprep.subr.mxu0 0.0
    %2132 = vmatpush1.msra.mxu0 0.0
    %2133 = vmatprep.subr.mxu0 0.0
    %2134 = vmatpush1.msra.mxu0 0.0
    %2135 = vmatprep.subr.mxu0 0.0
    %2136 = vmatpush1.msra.mxu0 0.0
    %2137 = vmatprep.subr.mxu0 0.0
    %2138 = vmatpush1.msra.mxu0 0.0
    %2139 = vmatprep.subr.mxu0 0.0
    %2140 = vmatpush1.msra.mxu0 0.0
    %2141 = vmatprep.subr.mxu0 0.0
    %2142 = vmatpush1.msra.mxu0 0.0
    %2143 = vmatprep.subr.mxu0 0.0
    %2144 = vmatpush1.msra.mxu0 0.0
    %2145 = vmatprep.subr.mxu0 0.0
    %2146 = vmatpush1.msra.mxu0 0.0
    %2147 = vmatprep.subr.mxu0 0.0
    %2148 = vmatpush1.msra.mxu0 0.0
    %2149 = vmatprep.subr.mxu0 0.0
    %2150 = vmatpush1.msra.mxu0 0.0
    %2151 = vmatprep.subr.mxu0 0.0
    %2152 = vmatpush1.msra.mxu0 0.0
    %2153 = vmatprep.subr.mxu0 0.0
    %2154 = vmatpush1.msra.mxu0 0.0
    %2155 = vmatprep.subr.mxu0 0.0
    %2156 = vmatpush1.msra.mxu0 0.0
    %2157 = vmatprep.subr.mxu0 0.0
    %2158 = vmatpush1.msra.mxu0 0.0
    %2159 = vmatprep.subr.mxu0 0.0
    %2160 = vmatpush1.msra.mxu0 0.0
    %2161 = vmatprep.mubr.f32.mxu0 0.0
    %2162 = vmatmul.mubr.f32.gmra.mrb[0].mxu0 %v1991
    %v2163 = vpop.f32.mrb[0].mxu0
    %v2164 = vadd.f32 0.0, %v2163
    %v2165 = vpop.f32.mrb[0].mxu0
    %2166 = vdwg.mxu0
    %v2167 = vadd.f32 %v2096, %v2164
    %v2168 = vadd.f32 %v2167, %v205
    %v2169 = vsub.f32 0.0, %v2168
    %v2170 = vmul.f32 %v2169, 1.442695
    %v2171 = vpow.pop %v2170
    %v2172 = vadd.f32 %v2171, 1.0
    %v2173 = vrcp.pop %v2172
    %v2174 = vmul.f32 1.0, %v2173
    %v2175 = vtanh.pop %v2168
    %v2176 = vmul.f32 %v2174, %v1906
    %2178 = vrot.lane.b32.xlu0 %v2175, 64
    %v2179 = vpop.permute.xlu0 %2178
    %v2181 = vmul.f32 %v2174, %v2179
    %2183 = vrot.lane.b32.xlu0 %v2181, 32
    %v2184 = vpop.permute.xlu0 %2183
    %v2186 = vadd.f32 %v2176, %v2184
    %v2187 = vtanh.pop %v2186
    %2189 = vrot.lane.b32.xlu0 %v2187, 64
    %v2190 = vpop.permute.xlu0 %2189
    %v2192 = vmul.f32 %v2174, %v2190
    %2194 = vrot.lane.b32.xlu0 %v2087, 32
    %v2195 = vpop.permute.xlu0 %2194
    %v2196 = vsel %vm126, %v2195, 0
    %2198 = vmatprep.subr.mxu0 0.0
    %2199 = vmatpush1.msra.mxu0 %v92
    %2200 = vmatprep.subr.mxu0 0.0
    %2201 = vmatpush1.msra.mxu0 %v93
    %2202 = vmatprep.subr.mxu0 0.0
    %2203 = vmatpush1.msra.mxu0 %v94
    %2204 = vmatprep.subr.mxu0 0.0
    %2205 = vmatpush1.msra.mxu0 %v95
    %2206 = vmatprep.subr.mxu0 0.0
    %2207 = vmatpush1.msra.mxu0 0.0
    %2208 = vmatprep.subr.mxu0 0.0
    %2209 = vmatpush1.msra.mxu0 0.0
    %2210 = vmatprep.subr.mxu0 0.0
    %2211 = vmatpush1.msra.mxu0 0.0
    %2212 = vmatprep.subr.mxu0 0.0
    %2213 = vmatpush1.msra.mxu0 0.0
    %2214 = vmatprep.subr.mxu0 0.0
    %2215 = vmatpush1.msra.mxu0 0.0
    %2216 = vmatprep.subr.mxu0 0.0
    %2217 = vmatpush1.msra.mxu0 0.0
    %2218 = vmatprep.subr.mxu0 0.0
    %2219 = vmatpush1.msra.mxu0 0.0
    %2220 = vmatprep.subr.mxu0 0.0
    %2221 = vmatpush1.msra.mxu0 0.0
    %2222 = vmatprep.subr.mxu0 0.0
    %2223 = vmatpush1.msra.mxu0 0.0
    %2224 = vmatprep.subr.mxu0 0.0
    %2225 = vmatpush1.msra.mxu0 0.0
    %2226 = vmatprep.subr.mxu0 0.0
    %2227 = vmatpush1.msra.mxu0 0.0
    %2228 = vmatprep.subr.mxu0 0.0
    %2229 = vmatpush1.msra.mxu0 0.0
    %2230 = vmatprep.subr.mxu0 0.0
    %2231 = vmatpush1.msra.mxu0 0.0
    %2232 = vmatprep.subr.mxu0 0.0
    %2233 = vmatpush1.msra.mxu0 0.0
    %2234 = vmatprep.subr.mxu0 0.0
    %2235 = vmatpush1.msra.mxu0 0.0
    %2236 = vmatprep.subr.mxu0 0.0
    %2237 = vmatpush1.msra.mxu0 0.0
    %2238 = vmatprep.subr.mxu0 0.0
    %2239 = vmatpush1.msra.mxu0 0.0
    %2240 = vmatprep.subr.mxu0 0.0
    %2241 = vmatpush1.msra.mxu0 0.0
    %2242 = vmatprep.subr.mxu0 0.0
    %2243 = vmatpush1.msra.mxu0 0.0
    %2244 = vmatprep.subr.mxu0 0.0
    %2245 = vmatpush1.msra.mxu0 0.0
    %2246 = vmatprep.subr.mxu0 0.0
    %2247 = vmatpush1.msra.mxu0 0.0
    %2248 = vmatprep.subr.mxu0 0.0
    %2249 = vmatpush1.msra.mxu0 0.0
    %2250 = vmatprep.subr.mxu0 0.0
    %2251 = vmatpush1.msra.mxu0 0.0
    %2252 = vmatprep.subr.mxu0 0.0
    %2253 = vmatpush1.msra.mxu0 0.0
    %2254 = vmatprep.subr.mxu0 0.0
    %2255 = vmatpush1.msra.mxu0 0.0
    %2256 = vmatprep.subr.mxu0 0.0
    %2257 = vmatpush1.msra.mxu0 0.0
    %2258 = vmatprep.subr.mxu0 0.0
    %2259 = vmatpush1.msra.mxu0 0.0
    %2260 = vmatprep.subr.mxu0 0.0
    %2261 = vmatpush1.msra.mxu0 0.0
    %2262 = vmatprep.mubr.f32.mxu0 0.0
    %2263 = vmatmul.mubr.f32.gmra.mrb[0].mxu0 %v2196
    %v2264 = vpop.f32.mrb[0].mxu0
    %v2265 = vadd.f32 0.0, %v2264
    %v2266 = vpop.f32.mrb[0].mxu0
    %2267 = vdwg.mxu0
    %2269 = vrot.lane.b32.xlu0 %v2192, 32
    %v2270 = vpop.permute.xlu0 %2269
    %v2271 = vsel %vm126, %v2270, 0
    %2273 = vmatprep.subr.mxu0 0.0
    %2274 = vmatpush1.msra.mxu0 %v83
    %2275 = vmatprep.subr.mxu0 0.0
    %2276 = vmatpush1.msra.mxu0 %v84
    %2277 = vmatprep.subr.mxu0 0.0
    %2278 = vmatpush1.msra.mxu0 %v85
    %2279 = vmatprep.subr.mxu0 0.0
    %2280 = vmatpush1.msra.mxu0 %v86
    %2281 = vmatprep.subr.mxu0 0.0
    %2282 = vmatpush1.msra.mxu0 0.0
    %2283 = vmatprep.subr.mxu0 0.0
    %2284 = vmatpush1.msra.mxu0 0.0
    %2285 = vmatprep.subr.mxu0 0.0
    %2286 = vmatpush1.msra.mxu0 0.0
    %2287 = vmatprep.subr.mxu0 0.0
    %2288 = vmatpush1.msra.mxu0 0.0
    %2289 = vmatprep.subr.mxu0 0.0
    %2290 = vmatpush1.msra.mxu0 0.0
    %2291 = vmatprep.subr.mxu0 0.0
    %2292 = vmatpush1.msra.mxu0 0.0
    %2293 = vmatprep.subr.mxu0 0.0
    %2294 = vmatpush1.msra.mxu0 0.0
    %2295 = vmatprep.subr.mxu0 0.0
    %2296 = vmatpush1.msra.mxu0 0.0
    %2297 = vmatprep.subr.mxu0 0.0
    %2298 = vmatpush1.msra.mxu0 0.0
    %2299 = vmatprep.subr.mxu0 0.0
    %2300 = vmatpush1.msra.mxu0 0.0
    %2301 = vmatprep.subr.mxu0 0.0
    %2302 = vmatpush1.msra.mxu0 0.0
    %2303 = vmatprep.subr.mxu0 0.0
    %2304 = vmatpush1.msra.mxu0 0.0
    %2305 = vmatprep.subr.mxu0 0.0
    %2306 = vmatpush1.msra.mxu0 0.0
    %2307 = vmatprep.subr.mxu0 0.0
    %2308 = vmatpush1.msra.mxu0 0.0
    %2309 = vmatprep.subr.mxu0 0.0
    %2310 = vmatpush1.msra.mxu0 0.0
    %2311 = vmatprep.subr.mxu0 0.0
    %2312 = vmatpush1.msra.mxu0 0.0
    %2313 = vmatprep.subr.mxu0 0.0
    %2314 = vmatpush1.msra.mxu0 0.0
    %2315 = vmatprep.subr.mxu0 0.0
    %2316 = vmatpush1.msra.mxu0 0.0
    %2317 = vmatprep.subr.mxu0 0.0
    %2318 = vmatpush1.msra.mxu0 0.0
    %2319 = vmatprep.subr.mxu0 0.0
    %2320 = vmatpush1.msra.mxu0 0.0
    %2321 = vmatprep.subr.mxu0 0.0
    %2322 = vmatpush1.msra.mxu0 0.0
    %2323 = vmatprep.subr.mxu0 0.0
    %2324 = vmatpush1.msra.mxu0 0.0
    %2325 = vmatprep.subr.mxu0 0.0
    %2326 = vmatpush1.msra.mxu0 0.0
    %2327 = vmatprep.subr.mxu0 0.0
    %2328 = vmatpush1.msra.mxu0 0.0
    %2329 = vmatprep.subr.mxu0 0.0
    %2330 = vmatpush1.msra.mxu0 0.0
    %2331 = vmatprep.subr.mxu0 0.0
    %2332 = vmatpush1.msra.mxu0 0.0
    %2333 = vmatprep.subr.mxu0 0.0
    %2334 = vmatpush1.msra.mxu0 0.0
    %2335 = vmatprep.subr.mxu0 0.0
    %2336 = vmatpush1.msra.mxu0 0.0
    %2337 = vmatprep.mubr.f32.mxu0 0.0
    %2338 = vmatmul.mubr.f32.gmra.mrb[0].mxu0 %v2271
    %v2339 = vpop.f32.mrb[0].mxu0
    %v2340 = vadd.f32 %v2265, %v2339
    %v2341 = vpop.f32.mrb[0].mxu0
    %2342 = vdwg.mxu0
    %v2343 = vadd.f32 %v2340, %v381
    %v2344 = vsub.f32 0.0, %v2343
    %v2345 = vmul.f32 %v2344, 1.442695
    %v2346 = vpow.pop %v2345
    %v2347 = vadd.f32 %v2346, 1.0
    %v2348 = vrcp.pop %v2347
    %v2349 = vmul.f32 1.0, %v2348
    %v2350 = vtanh.pop %v2343
    %v2351 = vmul.f32 %v2349, %v2081
    %2353 = vrot.lane.b32.xlu0 %v2350, 64
    %v2354 = vpop.permute.xlu0 %2353
    %v2356 = vmul.f32 %v2349, %v2354
    %2358 = vrot.lane.b32.xlu0 %v2356, 32
    %v2359 = vpop.permute.xlu0 %2358
    %v2361 = vadd.f32 %v2351, %v2359
    %v2362 = vtanh.pop %v2361
    %2364 = vrot.lane.b32.xlu0 %v2362, 64
    %v2365 = vpop.permute.xlu0 %2364
    %v2367 = vmul.f32 %v2349, %v2365
    %v2368 = vadd.f32 %v2088, %v2367
    %s2369 = scalar_lea.vmem %s0, 16
    %v2370 = vld [vmem:[%s2369] sm:$0x3]
    %2372 = vset.pattern.permute.xlu0 0
    %2373 = vperm.xlu0 %2372, %v2370
    %v2374 = vpop.permute.xlu0 %2373
    %v2376 = vmul.f32 %v2374, %v123
    %2377 = vmatprep.subr.mxu0 0.0
    %2378 = vmatpush1.msra.mxu0 %v87
    %2379 = vmatprep.subr.mxu0 0.0
    %2380 = vmatpush1.msra.mxu0 %v88
    %2381 = vmatprep.subr.mxu0 0.0
    %2382 = vmatpush1.msra.mxu0 %v89
    %2383 = vmatprep.subr.mxu0 0.0
    %2384 = vmatpush1.msra.mxu0 %v90
    %2385 = vmatprep.subr.mxu0 0.0
    %2386 = vmatpush1.msra.mxu0 0.0
    %2387 = vmatprep.subr.mxu0 0.0
    %2388 = vmatpush1.msra.mxu0 0.0
    %2389 = vmatprep.subr.mxu0 0.0
    %2390 = vmatpush1.msra.mxu0 0.0
    %2391 = vmatprep.subr.mxu0 0.0
    %2392 = vmatpush1.msra.mxu0 0.0
    %2393 = vmatprep.subr.mxu0 0.0
    %2394 = vmatpush1.msra.mxu0 0.0
    %2395 = vmatprep.subr.mxu0 0.0
    %2396 = vmatpush1.msra.mxu0 0.0
    %2397 = vmatprep.subr.mxu0 0.0
    %2398 = vmatpush1.msra.mxu0 0.0
    %2399 = vmatprep.subr.mxu0 0.0
    %2400 = vmatpush1.msra.mxu0 0.0
    %2401 = vmatprep.subr.mxu0 0.0
    %2402 = vmatpush1.msra.mxu0 0.0
    %2403 = vmatprep.subr.mxu0 0.0
    %2404 = vmatpush1.msra.mxu0 0.0
    %2405 = vmatprep.subr.mxu0 0.0
    %2406 = vmatpush1.msra.mxu0 0.0
    %2407 = vmatprep.subr.mxu0 0.0
    %2408 = vmatpush1.msra.mxu0 0.0
    %2409 = vmatprep.subr.mxu0 0.0
    %2410 = vmatpush1.msra.mxu0 0.0
    %2411 = vmatprep.subr.mxu0 0.0
    %2412 = vmatpush1.msra.mxu0 0.0
    %2413 = vmatprep.subr.mxu0 0.0
    %2414 = vmatpush1.msra.mxu0 0.0
    %2415 = vmatprep.subr.mxu0 0.0
    %2416 = vmatpush1.msra.mxu0 0.0
    %2417 = vmatprep.subr.mxu0 0.0
    %2418 = vmatpush1.msra.mxu0 0.0
    %2419 = vmatprep.subr.mxu0 0.0
    %2420 = vmatpush1.msra.mxu0 0.0
    %2421 = vmatprep.subr.mxu0 0.0
    %2422 = vmatpush1.msra.mxu0 0.0
    %2423 = vmatprep.subr.mxu0 0.0
    %2424 = vmatpush1.msra.mxu0 0.0
    %2425 = vmatprep.subr.mxu0 0.0
    %2426 = vmatpush1.msra.mxu0 0.0
    %2427 = vmatprep.subr.mxu0 0.0
    %2428 = vmatpush1.msra.mxu0 0.0
    %2429 = vmatprep.subr.mxu0 0.0
    %2430 = vmatpush1.msra.mxu0 0.0
    %2431 = vmatprep.subr.mxu0 0.0
    %2432 = vmatpush1.msra.mxu0 0.0
    %2433 = vmatprep.subr.mxu0 0.0
    %2434 = vmatpush1.msra.mxu0 0.0
    %2435 = vmatprep.subr.mxu0 0.0
    %2436 = vmatpush1.msra.mxu0 0.0
    %2437 = vmatprep.subr.mxu0 0.0
    %2438 = vmatpush1.msra.mxu0 0.0
    %2439 = vmatprep.subr.mxu0 0.0
    %2440 = vmatpush1.msra.mxu0 0.0
    %2441 = vmatprep.mubr.f32.mxu0 0.0
    %2442 = vmatmul.mubr.f32.gmra.mrb[0].mxu0 %v2271
    %v2443 = vpop.f32.mrb[0].mxu0
    %v2444 = vadd.f32 0.0, %v2443
    %v2445 = vpop.f32.mrb[0].mxu0
    %2446 = vdwg.mxu0
    %v2447 = vadd.f32 %v2376, %v2444
    %v2448 = vadd.f32 %v2447, %v205
    %v2449 = vsub.f32 0.0, %v2448
    %v2450 = vmul.f32 %v2449, 1.442695
    %v2451 = vpow.pop %v2450
    %v2452 = vadd.f32 %v2451, 1.0
    %v2453 = vrcp.pop %v2452
    %v2454 = vmul.f32 1.0, %v2453
    %v2455 = vtanh.pop %v2448
    %v2456 = vmul.f32 %v2454, %v2186
    %2458 = vrot.lane.b32.xlu0 %v2455, 64
    %v2459 = vpop.permute.xlu0 %2458
    %v2461 = vmul.f32 %v2454, %v2459
    %2463 = vrot.lane.b32.xlu0 %v2461, 32
    %v2464 = vpop.permute.xlu0 %2463
    %v2466 = vadd.f32 %v2456, %v2464
    %v2467 = vtanh.pop %v2466
    %2469 = vrot.lane.b32.xlu0 %v2467, 64
    %v2470 = vpop.permute.xlu0 %2469
    %v2472 = vmul.f32 %v2454, %v2470
    %2474 = vrot.lane.b32.xlu0 %v2367, 32
    %v2475 = vpop.permute.xlu0 %2474
    %v2476 = vsel %vm126, %v2475, 0
    %2478 = vmatprep.subr.mxu0 0.0
    %2479 = vmatpush1.msra.mxu0 %v92
    %2480 = vmatprep.subr.mxu0 0.0
    %2481 = vmatpush1.msra.mxu0 %v93
    %2482 = vmatprep.subr.mxu0 0.0
    %2483 = vmatpush1.msra.mxu0 %v94
    %2484 = vmatprep.subr.mxu0 0.0
    %2485 = vmatpush1.msra.mxu0 %v95
    %2486 = vmatprep.subr.mxu0 0.0
    %2487 = vmatpush1.msra.mxu0 0.0
    %2488 = vmatprep.subr.mxu0 0.0
    %2489 = vmatpush1.msra.mxu0 0.0
    %2490 = vmatprep.subr.mxu0 0.0
    %2491 = vmatpush1.msra.mxu0 0.0
    %2492 = vmatprep.subr.mxu0 0.0
    %2493 = vmatpush1.msra.mxu0 0.0
    %2494 = vmatprep.subr.mxu0 0.0
    %2495 = vmatpush1.msra.mxu0 0.0
    %2496 = vmatprep.subr.mxu0 0.0
    %2497 = vmatpush1.msra.mxu0 0.0
    %2498 = vmatprep.subr.mxu0 0.0
    %2499 = vmatpush1.msra.mxu0 0.0
    %2500 = vmatprep.subr.mxu0 0.0
    %2501 = vmatpush1.msra.mxu0 0.0
    %2502 = vmatprep.subr.mxu0 0.0
    %2503 = vmatpush1.msra.mxu0 0.0
    %2504 = vmatprep.subr.mxu0 0.0
    %2505 = vmatpush1.msra.mxu0 0.0
    %2506 = vmatprep.subr.mxu0 0.0
    %2507 = vmatpush1.msra.mxu0 0.0
    %2508 = vmatprep.subr.mxu0 0.0
    %2509 = vmatpush1.msra.mxu0 0.0
    %2510 = vmatprep.subr.mxu0 0.0
    %2511 = vmatpush1.msra.mxu0 0.0
    %2512 = vmatprep.subr.mxu0 0.0
    %2513 = vmatpush1.msra.mxu0 0.0
    %2514 = vmatprep.subr.mxu0 0.0
    %2515 = vmatpush1.msra.mxu0 0.0
    %2516 = vmatprep.subr.mxu0 0.0
    %2517 = vmatpush1.msra.mxu0 0.0
    %2518 = vmatprep.subr.mxu0 0.0
    %2519 = vmatpush1.msra.mxu0 0.0
    %2520 = vmatprep.subr.mxu0 0.0
    %2521 = vmatpush1.msra.mxu0 0.0
    %2522 = vmatprep.subr.mxu0 0.0
    %2523 = vmatpush1.msra.mxu0 0.0
    %2524 = vmatprep.subr.mxu0 0.0
    %2525 = vmatpush1.msra.mxu0 0.0
    %2526 = vmatprep.subr.mxu0 0.0
    %2527 = vmatpush1.msra.mxu0 0.0
    %2528 = vmatprep.subr.mxu0 0.0
    %2529 = vmatpush1.msra.mxu0 0.0
    %2530 = vmatprep.subr.mxu0 0.0
    %2531 = vmatpush1.msra.mxu0 0.0
    %2532 = vmatprep.subr.mxu0 0.0
    %2533 = vmatpush1.msra.mxu0 0.0
    %2534 = vmatprep.subr.mxu0 0.0
    %2535 = vmatpush1.msra.mxu0 0.0
    %2536 = vmatprep.subr.mxu0 0.0
    %2537 = vmatpush1.msra.mxu0 0.0
    %2538 = vmatprep.subr.mxu0 0.0
    %2539 = vmatpush1.msra.mxu0 0.0
    %2540 = vmatprep.subr.mxu0 0.0
    %2541 = vmatpush1.msra.mxu0 0.0
    %2542 = vmatprep.mubr.f32.mxu0 0.0
    %2543 = vmatmul.mubr.f32.gmra.mrb[0].mxu0 %v2476
    %v2544 = vpop.f32.mrb[0].mxu0
    %v2545 = vadd.f32 0.0, %v2544
    %v2546 = vpop.f32.mrb[0].mxu0
    %2547 = vdwg.mxu0
    %2549 = vrot.lane.b32.xlu0 %v2472, 32
    %v2550 = vpop.permute.xlu0 %2549
    %v2551 = vsel %vm126, %v2550, 0
    %2553 = vmatprep.subr.mxu0 0.0
    %2554 = vmatpush1.msra.mxu0 %v83
    %2555 = vmatprep.subr.mxu0 0.0
    %2556 = vmatpush1.msra.mxu0 %v84
    %2557 = vmatprep.subr.mxu0 0.0
    %2558 = vmatpush1.msra.mxu0 %v85
    %2559 = vmatprep.subr.mxu0 0.0
    %2560 = vmatpush1.msra.mxu0 %v86
    %2561 = vmatprep.subr.mxu0 0.0
    %2562 = vmatpush1.msra.mxu0 0.0
    %2563 = vmatprep.subr.mxu0 0.0
    %2564 = vmatpush1.msra.mxu0 0.0
    %2565 = vmatprep.subr.mxu0 0.0
    %2566 = vmatpush1.msra.mxu0 0.0
    %2567 = vmatprep.subr.mxu0 0.0
    %2568 = vmatpush1.msra.mxu0 0.0
    %2569 = vmatprep.subr.mxu0 0.0
    %2570 = vmatpush1.msra.mxu0 0.0
    %2571 = vmatprep.subr.mxu0 0.0
    %2572 = vmatpush1.msra.mxu0 0.0
    %2573 = vmatprep.subr.mxu0 0.0
    %2574 = vmatpush1.msra.mxu0 0.0
    %2575 = vmatprep.subr.mxu0 0.0
    %2576 = vmatpush1.msra.mxu0 0.0
    %2577 = vmatprep.subr.mxu0 0.0
    %2578 = vmatpush1.msra.mxu0 0.0
    %2579 = vmatprep.subr.mxu0 0.0
    %2580 = vmatpush1.msra.mxu0 0.0
    %2581 = vmatprep.subr.mxu0 0.0
    %2582 = vmatpush1.msra.mxu0 0.0
    %2583 = vmatprep.subr.mxu0 0.0
    %2584 = vmatpush1.msra.mxu0 0.0
    %2585 = vmatprep.subr.mxu0 0.0
    %2586 = vmatpush1.msra.mxu0 0.0
    %2587 = vmatprep.subr.mxu0 0.0
    %2588 = vmatpush1.msra.mxu0 0.0
    %2589 = vmatprep.subr.mxu0 0.0
    %2590 = vmatpush1.msra.mxu0 0.0
    %2591 = vmatprep.subr.mxu0 0.0
    %2592 = vmatpush1.msra.mxu0 0.0
    %2593 = vmatprep.subr.mxu0 0.0
    %2594 = vmatpush1.msra.mxu0 0.0
    %2595 = vmatprep.subr.mxu0 0.0
    %2596 = vmatpush1.msra.mxu0 0.0
    %2597 = vmatprep.subr.mxu0 0.0
    %2598 = vmatpush1.msra.mxu0 0.0
    %2599 = vmatprep.subr.mxu0 0.0
    %2600 = vmatpush1.msra.mxu0 0.0
    %2601 = vmatprep.subr.mxu0 0.0
    %2602 = vmatpush1.msra.mxu0 0.0
    %2603 = vmatprep.subr.mxu0 0.0
    %2604 = vmatpush1.msra.mxu0 0.0
    %2605 = vmatprep.subr.mxu0 0.0
    %2606 = vmatpush1.msra.mxu0 0.0
    %2607 = vmatprep.subr.mxu0 0.0
    %2608 = vmatpush1.msra.mxu0 0.0
    %2609 = vmatprep.subr.mxu0 0.0
    %2610 = vmatpush1.msra.mxu0 0.0
    %2611 = vmatprep.subr.mxu0 0.0
    %2612 = vmatpush1.msra.mxu0 0.0
    %2613 = vmatprep.subr.mxu0 0.0
    %2614 = vmatpush1.msra.mxu0 0.0
    %2615 = vmatprep.subr.mxu0 0.0
    %2616 = vmatpush1.msra.mxu0 0.0
    %2617 = vmatprep.mubr.f32.mxu0 0.0
    %2618 = vmatmul.mubr.f32.gmra.mrb[0].mxu0 %v2551
    %v2619 = vpop.f32.mrb[0].mxu0
    %v2620 = vadd.f32 %v2545, %v2619
    %v2621 = vpop.f32.mrb[0].mxu0
    %2622 = vdwg.mxu0
    %v2623 = vadd.f32 %v2620, %v381
    %v2624 = vsub.f32 0.0, %v2623
    %v2625 = vmul.f32 %v2624, 1.442695
    %v2626 = vpow.pop %v2625
    %v2627 = vadd.f32 %v2626, 1.0
    %v2628 = vrcp.pop %v2627
    %v2629 = vmul.f32 1.0, %v2628
    %v2630 = vtanh.pop %v2623
    %v2631 = vmul.f32 %v2629, %v2361
    %2633 = vrot.lane.b32.xlu0 %v2630, 64
    %v2634 = vpop.permute.xlu0 %2633
    %v2636 = vmul.f32 %v2629, %v2634
    %2638 = vrot.lane.b32.xlu0 %v2636, 32
    %v2639 = vpop.permute.xlu0 %2638
    %v2641 = vadd.f32 %v2631, %v2639
    %v2642 = vtanh.pop %v2641
    %2644 = vrot.lane.b32.xlu0 %v2642, 64
    %v2645 = vpop.permute.xlu0 %2644
    %v2647 = vmul.f32 %v2629, %v2645
    %v2648 = vadd.f32 %v2368, %v2647
    %s2649 = scalar_lea.vmem %s0, 18
    %v2650 = vld [vmem:[%s2649] sm:$0x3]
    %2652 = vset.pattern.permute.xlu0 0
    %2653 = vperm.xlu0 %2652, %v2650
    %v2654 = vpop.permute.xlu0 %2653
    %v2656 = vmul.f32 %v2654, %v123
    %2657 = vmatprep.subr.mxu0 0.0
    %2658 = vmatpush1.msra.mxu0 %v87
    %2659 = vmatprep.subr.mxu0 0.0
    %2660 = vmatpush1.msra.mxu0 %v88
    %2661 = vmatprep.subr.mxu0 0.0
    %2662 = vmatpush1.msra.mxu0 %v89
    %2663 = vmatprep.subr.mxu0 0.0
    %2664 = vmatpush1.msra.mxu0 %v90
    %2665 = vmatprep.subr.mxu0 0.0
    %2666 = vmatpush1.msra.mxu0 0.0
    %2667 = vmatprep.subr.mxu0 0.0
    %2668 = vmatpush1.msra.mxu0 0.0
    %2669 = vmatprep.subr.mxu0 0.0
    %2670 = vmatpush1.msra.mxu0 0.0
    %2671 = vmatprep.subr.mxu0 0.0
    %2672 = vmatpush1.msra.mxu0 0.0
    %2673 = vmatprep.subr.mxu0 0.0
    %2674 = vmatpush1.msra.mxu0 0.0
    %2675 = vmatprep.subr.mxu0 0.0
    %2676 = vmatpush1.msra.mxu0 0.0
    %2677 = vmatprep.subr.mxu0 0.0
    %2678 = vmatpush1.msra.mxu0 0.0
    %2679 = vmatprep.subr.mxu0 0.0
    %2680 = vmatpush1.msra.mxu0 0.0
    %2681 = vmatprep.subr.mxu0 0.0
    %2682 = vmatpush1.msra.mxu0 0.0
    %2683 = vmatprep.subr.mxu0 0.0
    %2684 = vmatpush1.msra.mxu0 0.0
    %2685 = vmatprep.subr.mxu0 0.0
    %2686 = vmatpush1.msra.mxu0 0.0
    %2687 = vmatprep.subr.mxu0 0.0
    %2688 = vmatpush1.msra.mxu0 0.0
    %2689 = vmatprep.subr.mxu0 0.0
    %2690 = vmatpush1.msra.mxu0 0.0
    %2691 = vmatprep.subr.mxu0 0.0
    %2692 = vmatpush1.msra.mxu0 0.0
    %2693 = vmatprep.subr.mxu0 0.0
    %2694 = vmatpush1.msra.mxu0 0.0
    %2695 = vmatprep.subr.mxu0 0.0
    %2696 = vmatpush1.msra.mxu0 0.0
    %2697 = vmatprep.subr.mxu0 0.0
    %2698 = vmatpush1.msra.mxu0 0.0
    %2699 = vmatprep.subr.mxu0 0.0
    %2700 = vmatpush1.msra.mxu0 0.0
    %2701 = vmatprep.subr.mxu0 0.0
    %2702 = vmatpush1.msra.mxu0 0.0
    %2703 = vmatprep.subr.mxu0 0.0
    %2704 = vmatpush1.msra.mxu0 0.0
    %2705 = vmatprep.subr.mxu0 0.0
    %2706 = vmatpush1.msra.mxu0 0.0
    %2707 = vmatprep.subr.mxu0 0.0
    %2708 = vmatpush1.msra.mxu0 0.0
    %2709 = vmatprep.subr.mxu0 0.0
    %2710 = vmatpush1.msra.mxu0 0.0
    %2711 = vmatprep.subr.mxu0 0.0
    %2712 = vmatpush1.msra.mxu0 0.0
    %2713 = vmatprep.subr.mxu0 0.0
    %2714 = vmatpush1.msra.mxu0 0.0
    %2715 = vmatprep.subr.mxu0 0.0
    %2716 = vmatpush1.msra.mxu0 0.0
    %2717 = vmatprep.subr.mxu0 0.0
    %2718 = vmatpush1.msra.mxu0 0.0
    %2719 = vmatprep.subr.mxu0 0.0
    %2720 = vmatpush1.msra.mxu0 0.0
    %2721 = vmatprep.mubr.f32.mxu0 0.0
    %2722 = vmatmul.mubr.f32.gmra.mrb[0].mxu0 %v2551
    %v2723 = vpop.f32.mrb[0].mxu0
    %v2724 = vadd.f32 0.0, %v2723
    %v2725 = vpop.f32.mrb[0].mxu0
    %2726 = vdwg.mxu0
    %v2727 = vadd.f32 %v2656, %v2724
    %v2728 = vadd.f32 %v2727, %v205
    %v2729 = vsub.f32 0.0, %v2728
    %v2730 = vmul.f32 %v2729, 1.442695
    %v2731 = vpow.pop %v2730
    %v2732 = vadd.f32 %v2731, 1.0
    %v2733 = vrcp.pop %v2732
    %v2734 = vmul.f32 1.0, %v2733
    %v2735 = vtanh.pop %v2728
    %v2736 = vmul.f32 %v2734, %v2466
    %2738 = vrot.lane.b32.xlu0 %v2735, 64
    %v2739 = vpop.permute.xlu0 %2738
    %v2741 = vmul.f32 %v2734, %v2739
    %2743 = vrot.lane.b32.xlu0 %v2741, 32
    %v2744 = vpop.permute.xlu0 %2743
    %v2746 = vadd.f32 %v2736, %v2744
    %v2747 = vtanh.pop %v2746
    %2749 = vrot.lane.b32.xlu0 %v2747, 64
    %v2750 = vpop.permute.xlu0 %2749
    %v2752 = vmul.f32 %v2734, %v2750
    %2754 = vrot.lane.b32.xlu0 %v2647, 32
    %v2755 = vpop.permute.xlu0 %2754
    %v2756 = vsel %vm126, %v2755, 0
    %2758 = vmatprep.subr.mxu0 0.0
    %2759 = vmatpush1.msra.mxu0 %v92
    %2760 = vmatprep.subr.mxu0 0.0
    %2761 = vmatpush1.msra.mxu0 %v93
    %2762 = vmatprep.subr.mxu0 0.0
    %2763 = vmatpush1.msra.mxu0 %v94
    %2764 = vmatprep.subr.mxu0 0.0
    %2765 = vmatpush1.msra.mxu0 %v95
    %2766 = vmatprep.subr.mxu0 0.0
    %2767 = vmatpush1.msra.mxu0 0.0
    %2768 = vmatprep.subr.mxu0 0.0
    %2769 = vmatpush1.msra.mxu0 0.0
    %2770 = vmatprep.subr.mxu0 0.0
    %2771 = vmatpush1.msra.mxu0 0.0
    %2772 = vmatprep.subr.mxu0 0.0
    %2773 = vmatpush1.msra.mxu0 0.0
    %2774 = vmatprep.subr.mxu0 0.0
    %2775 = vmatpush1.msra.mxu0 0.0
    %2776 = vmatprep.subr.mxu0 0.0
    %2777 = vmatpush1.msra.mxu0 0.0
    %2778 = vmatprep.subr.mxu0 0.0
    %2779 = vmatpush1.msra.mxu0 0.0
    %2780 = vmatprep.subr.mxu0 0.0
    %2781 = vmatpush1.msra.mxu0 0.0
    %2782 = vmatprep.subr.mxu0 0.0
    %2783 = vmatpush1.msra.mxu0 0.0
    %2784 = vmatprep.subr.mxu0 0.0
    %2785 = vmatpush1.msra.mxu0 0.0
    %2786 = vmatprep.subr.mxu0 0.0
    %2787 = vmatpush1.msra.mxu0 0.0
    %2788 = vmatprep.subr.mxu0 0.0
    %2789 = vmatpush1.msra.mxu0 0.0
    %2790 = vmatprep.subr.mxu0 0.0
    %2791 = vmatpush1.msra.mxu0 0.0
    %2792 = vmatprep.subr.mxu0 0.0
    %2793 = vmatpush1.msra.mxu0 0.0
    %2794 = vmatprep.subr.mxu0 0.0
    %2795 = vmatpush1.msra.mxu0 0.0
    %2796 = vmatprep.subr.mxu0 0.0
    %2797 = vmatpush1.msra.mxu0 0.0
    %2798 = vmatprep.subr.mxu0 0.0
    %2799 = vmatpush1.msra.mxu0 0.0
    %2800 = vmatprep.subr.mxu0 0.0
    %2801 = vmatpush1.msra.mxu0 0.0
    %2802 = vmatprep.subr.mxu0 0.0
    %2803 = vmatpush1.msra.mxu0 0.0
    %2804 = vmatprep.subr.mxu0 0.0
    %2805 = vmatpush1.msra.mxu0 0.0
    %2806 = vmatprep.subr.mxu0 0.0
    %2807 = vmatpush1.msra.mxu0 0.0
    %2808 = vmatprep.subr.mxu0 0.0
    %2809 = vmatpush1.msra.mxu0 0.0
    %2810 = vmatprep.subr.mxu0 0.0
    %2811 = vmatpush1.msra.mxu0 0.0
    %2812 = vmatprep.subr.mxu0 0.0
    %2813 = vmatpush1.msra.mxu0 0.0
    %2814 = vmatprep.subr.mxu0 0.0
    %2815 = vmatpush1.msra.mxu0 0.0
    %2816 = vmatprep.subr.mxu0 0.0
    %2817 = vmatpush1.msra.mxu0 0.0
    %2818 = vmatprep.subr.mxu0 0.0
    %2819 = vmatpush1.msra.mxu0 0.0
    %2820 = vmatprep.subr.mxu0 0.0
    %2821 = vmatpush1.msra.mxu0 0.0
    %2822 = vmatprep.mubr.f32.mxu0 0.0
    %2823 = vmatmul.mubr.f32.gmra.mrb[0].mxu0 %v2756
    %v2824 = vpop.f32.mrb[0].mxu0
    %v2825 = vadd.f32 0.0, %v2824
    %v2826 = vpop.f32.mrb[0].mxu0
    %2827 = vdwg.mxu0
    %2829 = vrot.lane.b32.xlu0 %v2752, 32
    %v2830 = vpop.permute.xlu0 %2829
    %v2831 = vsel %vm126, %v2830, 0
    %2833 = vmatprep.subr.mxu0 0.0
    %2834 = vmatpush1.msra.mxu0 %v83
    %2835 = vmatprep.subr.mxu0 0.0
    %2836 = vmatpush1.msra.mxu0 %v84
    %2837 = vmatprep.subr.mxu0 0.0
    %2838 = vmatpush1.msra.mxu0 %v85
    %2839 = vmatprep.subr.mxu0 0.0
    %2840 = vmatpush1.msra.mxu0 %v86
    %2841 = vmatprep.subr.mxu0 0.0
    %2842 = vmatpush1.msra.mxu0 0.0
    %2843 = vmatprep.subr.mxu0 0.0
    %2844 = vmatpush1.msra.mxu0 0.0
    %2845 = vmatprep.subr.mxu0 0.0
    %2846 = vmatpush1.msra.mxu0 0.0
    %2847 = vmatprep.subr.mxu0 0.0
    %2848 = vmatpush1.msra.mxu0 0.0
    %2849 = vmatprep.subr.mxu0 0.0
    %2850 = vmatpush1.msra.mxu0 0.0
    %2851 = vmatprep.subr.mxu0 0.0
    %2852 = vmatpush1.msra.mxu0 0.0
    %2853 = vmatprep.subr.mxu0 0.0
    %2854 = vmatpush1.msra.mxu0 0.0
    %2855 = vmatprep.subr.mxu0 0.0
    %2856 = vmatpush1.msra.mxu0 0.0
    %2857 = vmatprep.subr.mxu0 0.0
    %2858 = vmatpush1.msra.mxu0 0.0
    %2859 = vmatprep.subr.mxu0 0.0
    %2860 = vmatpush1.msra.mxu0 0.0
    %2861 = vmatprep.subr.mxu0 0.0
    %2862 = vmatpush1.msra.mxu0 0.0
    %2863 = vmatprep.subr.mxu0 0.0
    %2864 = vmatpush1.msra.mxu0 0.0
    %2865 = vmatprep.subr.mxu0 0.0
    %2866 = vmatpush1.msra.mxu0 0.0
    %2867 = vmatprep.subr.mxu0 0.0
    %2868 = vmatpush1.msra.mxu0 0.0
    %2869 = vmatprep.subr.mxu0 0.0
    %2870 = vmatpush1.msra.mxu0 0.0
    %2871 = vmatprep.subr.mxu0 0.0
    %2872 = vmatpush1.msra.mxu0 0.0
    %2873 = vmatprep.subr.mxu0 0.0
    %2874 = vmatpush1.msra.mxu0 0.0
    %2875 = vmatprep.subr.mxu0 0.0
    %2876 = vmatpush1.msra.mxu0 0.0
    %2877 = vmatprep.subr.mxu0 0.0
    %2878 = vmatpush1.msra.mxu0 0.0
    %2879 = vmatprep.subr.mxu0 0.0
    %2880 = vmatpush1.msra.mxu0 0.0
    %2881 = vmatprep.subr.mxu0 0.0
    %2882 = vmatpush1.msra.mxu0 0.0
    %2883 = vmatprep.subr.mxu0 0.0
    %2884 = vmatpush1.msra.mxu0 0.0
    %2885 = vmatprep.subr.mxu0 0.0
    %2886 = vmatpush1.msra.mxu0 0.0
    %2887 = vmatprep.subr.mxu0 0.0
    %2888 = vmatpush1.msra.mxu0 0.0
    %2889 = vmatprep.subr.mxu0 0.0
    %2890 = vmatpush1.msra.mxu0 0.0
    %2891 = vmatprep.subr.mxu0 0.0
    %2892 = vmatpush1.msra.mxu0 0.0
    %2893 = vmatprep.subr.mxu0 0.0
    %2894 = vmatpush1.msra.mxu0 0.0
    %2895 = vmatprep.subr.mxu0 0.0
    %2896 = vmatpush1.msra.mxu0 0.0
    %2897 = vmatprep.mubr.f32.mxu0 0.0
    %2898 = vmatmul.mubr.f32.gmra.mrb[0].mxu0 %v2831
    %v2899 = vpop.f32.mrb[0].mxu0
    %v2900 = vadd.f32 %v2825, %v2899
    %v2901 = vpop.f32.mrb[0].mxu0
    %2902 = vdwg.mxu0
    %v2903 = vadd.f32 %v2900, %v381
    %v2904 = vsub.f32 0.0, %v2903
    %v2905 = vmul.f32 %v2904, 1.442695
    %v2906 = vpow.pop %v2905
    %v2907 = vadd.f32 %v2906, 1.0
    %v2908 = vrcp.pop %v2907
    %v2909 = vmul.f32 1.0, %v2908
    %v2910 = vtanh.pop %v2903
    %v2911 = vmul.f32 %v2909, %v2641
    %2913 = vrot.lane.b32.xlu0 %v2910, 64
    %v2914 = vpop.permute.xlu0 %2913
    %v2916 = vmul.f32 %v2909, %v2914
    %2918 = vrot.lane.b32.xlu0 %v2916, 32
    %v2919 = vpop.permute.xlu0 %2918
    %v2921 = vadd.f32 %v2911, %v2919
    %v2922 = vtanh.pop %v2921
    %2924 = vrot.lane.b32.xlu0 %v2922, 64
    %v2925 = vpop.permute.xlu0 %2924
    %v2927 = vmul.f32 %v2909, %v2925
    %v2928 = vadd.f32 %v2648, %v2927
    %s2929 = scalar_lea.vmem %s0, 20
    %v2930 = vld [vmem:[%s2929] sm:$0x3]
    %2932 = vset.pattern.permute.xlu0 0
    %2933 = vperm.xlu0 %2932, %v2930
    %v2934 = vpop.permute.xlu0 %2933
    %v2936 = vmul.f32 %v2934, %v123
    %2937 = vmatprep.subr.mxu0 0.0
    %2938 = vmatpush1.msra.mxu0 %v87
    %2939 = vmatprep.subr.mxu0 0.0
    %2940 = vmatpush1.msra.mxu0 %v88
    %2941 = vmatprep.subr.mxu0 0.0
    %2942 = vmatpush1.msra.mxu0 %v89
    %2943 = vmatprep.subr.mxu0 0.0
    %2944 = vmatpush1.msra.mxu0 %v90
    %2945 = vmatprep.subr.mxu0 0.0
    %2946 = vmatpush1.msra.mxu0 0.0
    %2947 = vmatprep.subr.mxu0 0.0
    %2948 = vmatpush1.msra.mxu0 0.0
    %2949 = vmatprep.subr.mxu0 0.0
    %2950 = vmatpush1.msra.mxu0 0.0
    %2951 = vmatprep.subr.mxu0 0.0
    %2952 = vmatpush1.msra.mxu0 0.0
    %2953 = vmatprep.subr.mxu0 0.0
    %2954 = vmatpush1.msra.mxu0 0.0
    %2955 = vmatprep.subr.mxu0 0.0
    %2956 = vmatpush1.msra.mxu0 0.0
    %2957 = vmatprep.subr.mxu0 0.0
    %2958 = vmatpush1.msra.mxu0 0.0
    %2959 = vmatprep.subr.mxu0 0.0
    %2960 = vmatpush1.msra.mxu0 0.0
    %2961 = vmatprep.subr.mxu0 0.0
    %2962 = vmatpush1.msra.mxu0 0.0
    %2963 = vmatprep.subr.mxu0 0.0
    %2964 = vmatpush1.msra.mxu0 0.0
    %2965 = vmatprep.subr.mxu0 0.0
    %2966 = vmatpush1.msra.mxu0 0.0
    %2967 = vmatprep.subr.mxu0 0.0
    %2968 = vmatpush1.msra.mxu0 0.0
    %2969 = vmatprep.subr.mxu0 0.0
    %2970 = vmatpush1.msra.mxu0 0.0
    %2971 = vmatprep.subr.mxu0 0.0
    %2972 = vmatpush1.msra.mxu0 0.0
    %2973 = vmatprep.subr.mxu0 0.0
    %2974 = vmatpush1.msra.mxu0 0.0
    %2975 = vmatprep.subr.mxu0 0.0
    %2976 = vmatpush1.msra.mxu0 0.0
    %2977 = vmatprep.subr.mxu0 0.0
    %2978 = vmatpush1.msra.mxu0 0.0
    %2979 = vmatprep.subr.mxu0 0.0
    %2980 = vmatpush1.msra.mxu0 0.0
    %2981 = vmatprep.subr.mxu0 0.0
    %2982 = vmatpush1.msra.mxu0 0.0
    %2983 = vmatprep.subr.mxu0 0.0
    %2984 = vmatpush1.msra.mxu0 0.0
    %2985 = vmatprep.subr.mxu0 0.0
    %2986 = vmatpush1.msra.mxu0 0.0
    %2987 = vmatprep.subr.mxu0 0.0
    %2988 = vmatpush1.msra.mxu0 0.0
    %2989 = vmatprep.subr.mxu0 0.0
    %2990 = vmatpush1.msra.mxu0 0.0
    %2991 = vmatprep.subr.mxu0 0.0
    %2992 = vmatpush1.msra.mxu0 0.0
    %2993 = vmatprep.subr.mxu0 0.0
    %2994 = vmatpush1.msra.mxu0 0.0
    %2995 = vmatprep.subr.mxu0 0.0
    %2996 = vmatpush1.msra.mxu0 0.0
    %2997 = vmatprep.subr.mxu0 0.0
    %2998 = vmatpush1.msra.mxu0 0.0
    %2999 = vmatprep.subr.mxu0 0.0
    %3000 = vmatpush1.msra.mxu0 0.0
    %3001 = vmatprep.mubr.f32.mxu0 0.0
    %3002 = vmatmul.mubr.f32.gmra.mrb[0].mxu0 %v2831
    %v3003 = vpop.f32.mrb[0].mxu0
    %v3004 = vadd.f32 0.0, %v3003
    %v3005 = vpop.f32.mrb[0].mxu0
    %3006 = vdwg.mxu0
    %v3007 = vadd.f32 %v2936, %v3004
    %v3008 = vadd.f32 %v3007, %v205
    %v3009 = vsub.f32 0.0, %v3008
    %v3010 = vmul.f32 %v3009, 1.442695
    %v3011 = vpow.pop %v3010
    %v3012 = vadd.f32 %v3011, 1.0
    %v3013 = vrcp.pop %v3012
    %v3014 = vmul.f32 1.0, %v3013
    %v3015 = vtanh.pop %v3008
    %v3016 = vmul.f32 %v3014, %v2746
    %3018 = vrot.lane.b32.xlu0 %v3015, 64
    %v3019 = vpop.permute.xlu0 %3018
    %v3021 = vmul.f32 %v3014, %v3019
    %3023 = vrot.lane.b32.xlu0 %v3021, 32
    %v3024 = vpop.permute.xlu0 %3023
    %v3026 = vadd.f32 %v3016, %v3024
    %v3027 = vtanh.pop %v3026
    %3029 = vrot.lane.b32.xlu0 %v3027, 64
    %v3030 = vpop.permute.xlu0 %3029
    %v3032 = vmul.f32 %v3014, %v3030
    %3034 = vrot.lane.b32.xlu0 %v2927, 32
    %v3035 = vpop.permute.xlu0 %3034
    %v3036 = vsel %vm126, %v3035, 0
    %3038 = vmatprep.subr.mxu0 0.0
    %3039 = vmatpush1.msra.mxu0 %v92
    %3040 = vmatprep.subr.mxu0 0.0
    %3041 = vmatpush1.msra.mxu0 %v93
    %3042 = vmatprep.subr.mxu0 0.0
    %3043 = vmatpush1.msra.mxu0 %v94
    %3044 = vmatprep.subr.mxu0 0.0
    %3045 = vmatpush1.msra.mxu0 %v95
    %3046 = vmatprep.subr.mxu0 0.0
    %3047 = vmatpush1.msra.mxu0 0.0
    %3048 = vmatprep.subr.mxu0 0.0
    %3049 = vmatpush1.msra.mxu0 0.0
    %3050 = vmatprep.subr.mxu0 0.0
    %3051 = vmatpush1.msra.mxu0 0.0
    %3052 = vmatprep.subr.mxu0 0.0
    %3053 = vmatpush1.msra.mxu0 0.0
    %3054 = vmatprep.subr.mxu0 0.0
    %3055 = vmatpush1.msra.mxu0 0.0
    %3056 = vmatprep.subr.mxu0 0.0
    %3057 = vmatpush1.msra.mxu0 0.0
    %3058 = vmatprep.subr.mxu0 0.0
    %3059 = vmatpush1.msra.mxu0 0.0
    %3060 = vmatprep.subr.mxu0 0.0
    %3061 = vmatpush1.msra.mxu0 0.0
    %3062 = vmatprep.subr.mxu0 0.0
    %3063 = vmatpush1.msra.mxu0 0.0
    %3064 = vmatprep.subr.mxu0 0.0
    %3065 = vmatpush1.msra.mxu0 0.0
    %3066 = vmatprep.subr.mxu0 0.0
    %3067 = vmatpush1.msra.mxu0 0.0
    %3068 = vmatprep.subr.mxu0 0.0
    %3069 = vmatpush1.msra.mxu0 0.0
    %3070 = vmatprep.subr.mxu0 0.0
    %3071 = vmatpush1.msra.mxu0 0.0
    %3072 = vmatprep.subr.mxu0 0.0
    %3073 = vmatpush1.msra.mxu0 0.0
    %3074 = vmatprep.subr.mxu0 0.0
    %3075 = vmatpush1.msra.mxu0 0.0
    %3076 = vmatprep.subr.mxu0 0.0
    %3077 = vmatpush1.msra.mxu0 0.0
    %3078 = vmatprep.subr.mxu0 0.0
    %3079 = vmatpush1.msra.mxu0 0.0
    %3080 = vmatprep.subr.mxu0 0.0
    %3081 = vmatpush1.msra.mxu0 0.0
    %3082 = vmatprep.subr.mxu0 0.0
    %3083 = vmatpush1.msra.mxu0 0.0
    %3084 = vmatprep.subr.mxu0 0.0
    %3085 = vmatpush1.msra.mxu0 0.0
    %3086 = vmatprep.subr.mxu0 0.0
    %3087 = vmatpush1.msra.mxu0 0.0
    %3088 = vmatprep.subr.mxu0 0.0
    %3089 = vmatpush1.msra.mxu0 0.0
    %3090 = vmatprep.subr.mxu0 0.0
    %3091 = vmatpush1.msra.mxu0 0.0
    %3092 = vmatprep.subr.mxu0 0.0
    %3093 = vmatpush1.msra.mxu0 0.0
    %3094 = vmatprep.subr.mxu0 0.0
    %3095 = vmatpush1.msra.mxu0 0.0
    %3096 = vmatprep.subr.mxu0 0.0
    %3097 = vmatpush1.msra.mxu0 0.0
    %3098 = vmatprep.subr.mxu0 0.0
    %3099 = vmatpush1.msra.mxu0 0.0
    %3100 = vmatprep.subr.mxu0 0.0
    %3101 = vmatpush1.msra.mxu0 0.0
    %3102 = vmatprep.mubr.f32.mxu0 0.0
    %3103 = vmatmul.mubr.f32.gmra.mrb[0].mxu0 %v3036
    %v3104 = vpop.f32.mrb[0].mxu0
    %v3105 = vadd.f32 0.0, %v3104
    %v3106 = vpop.f32.mrb[0].mxu0
    %3107 = vdwg.mxu0
    %3109 = vrot.lane.b32.xlu0 %v3032, 32
    %v3110 = vpop.permute.xlu0 %3109
    %v3111 = vsel %vm126, %v3110, 0
    %3113 = vmatprep.subr.mxu0 0.0
    %3114 = vmatpush1.msra.mxu0 %v83
    %3115 = vmatprep.subr.mxu0 0.0
    %3116 = vmatpush1.msra.mxu0 %v84
    %3117 = vmatprep.subr.mxu0 0.0
    %3118 = vmatpush1.msra.mxu0 %v85
    %3119 = vmatprep.subr.mxu0 0.0
    %3120 = vmatpush1.msra.mxu0 %v86
    %3121 = vmatprep.subr.mxu0 0.0
    %3122 = vmatpush1.msra.mxu0 0.0
    %3123 = vmatprep.subr.mxu0 0.0
    %3124 = vmatpush1.msra.mxu0 0.0
    %3125 = vmatprep.subr.mxu0 0.0
    %3126 = vmatpush1.msra.mxu0 0.0
    %3127 = vmatprep.subr.mxu0 0.0
    %3128 = vmatpush1.msra.mxu0 0.0
    %3129 = vmatprep.subr.mxu0 0.0
    %3130 = vmatpush1.msra.mxu0 0.0
    %3131 = vmatprep.subr.mxu0 0.0
    %3132 = vmatpush1.msra.mxu0 0.0
    %3133 = vmatprep.subr.mxu0 0.0
    %3134 = vmatpush1.msra.mxu0 0.0
    %3135 = vmatprep.subr.mxu0 0.0
    %3136 = vmatpush1.msra.mxu0 0.0
    %3137 = vmatprep.subr.mxu0 0.0
    %3138 = vmatpush1.msra.mxu0 0.0
    %3139 = vmatprep.subr.mxu0 0.0
    %3140 = vmatpush1.msra.mxu0 0.0
    %3141 = vmatprep.subr.mxu0 0.0
    %3142 = vmatpush1.msra.mxu0 0.0
    %3143 = vmatprep.subr.mxu0 0.0
    %3144 = vmatpush1.msra.mxu0 0.0
    %3145 = vmatprep.subr.mxu0 0.0
    %3146 = vmatpush1.msra.mxu0 0.0
    %3147 = vmatprep.subr.mxu0 0.0
    %3148 = vmatpush1.msra.mxu0 0.0
    %3149 = vmatprep.subr.mxu0 0.0
    %3150 = vmatpush1.msra.mxu0 0.0
    %3151 = vmatprep.subr.mxu0 0.0
    %3152 = vmatpush1.msra.mxu0 0.0
    %3153 = vmatprep.subr.mxu0 0.0
    %3154 = vmatpush1.msra.mxu0 0.0
    %3155 = vmatprep.subr.mxu0 0.0
    %3156 = vmatpush1.msra.mxu0 0.0
    %3157 = vmatprep.subr.mxu0 0.0
    %3158 = vmatpush1.msra.mxu0 0.0
    %3159 = vmatprep.subr.mxu0 0.0
    %3160 = vmatpush1.msra.mxu0 0.0
    %3161 = vmatprep.subr.mxu0 0.0
    %3162 = vmatpush1.msra.mxu0 0.0
    %3163 = vmatprep.subr.mxu0 0.0
    %3164 = vmatpush1.msra.mxu0 0.0
    %3165 = vmatprep.subr.mxu0 0.0
    %3166 = vmatpush1.msra.mxu0 0.0
    %3167 = vmatprep.subr.mxu0 0.0
    %3168 = vmatpush1.msra.mxu0 0.0
    %3169 = vmatprep.subr.mxu0 0.0
    %3170 = vmatpush1.msra.mxu0 0.0
    %3171 = vmatprep.subr.mxu0 0.0
    %3172 = vmatpush1.msra.mxu0 0.0
    %3173 = vmatprep.subr.mxu0 0.0
    %3174 = vmatpush1.msra.mxu0 0.0
    %3175 = vmatprep.subr.mxu0 0.0
    %3176 = vmatpush1.msra.mxu0 0.0
    %3177 = vmatprep.mubr.f32.mxu0 0.0
    %3178 = vmatmul.mubr.f32.gmra.mrb[0].mxu0 %v3111
    %v3179 = vpop.f32.mrb[0].mxu0
    %v3180 = vadd.f32 %v3105, %v3179
    %v3181 = vpop.f32.mrb[0].mxu0
    %3182 = vdwg.mxu0
    %v3183 = vadd.f32 %v3180, %v381
    %v3184 = vsub.f32 0.0, %v3183
    %v3185 = vmul.f32 %v3184, 1.442695
    %v3186 = vpow.pop %v3185
    %v3187 = vadd.f32 %v3186, 1.0
    %v3188 = vrcp.pop %v3187
    %v3189 = vmul.f32 1.0, %v3188
    %v3190 = vtanh.pop %v3183
    %v3191 = vmul.f32 %v3189, %v2921
    %3193 = vrot.lane.b32.xlu0 %v3190, 64
    %v3194 = vpop.permute.xlu0 %3193
    %v3196 = vmul.f32 %v3189, %v3194
    %3198 = vrot.lane.b32.xlu0 %v3196, 32
    %v3199 = vpop.permute.xlu0 %3198
    %v3201 = vadd.f32 %v3191, %v3199
    %v3202 = vtanh.pop %v3201
    %3204 = vrot.lane.b32.xlu0 %v3202, 64
    %v3205 = vpop.permute.xlu0 %3204
    %v3207 = vmul.f32 %v3189, %v3205
    %v3208 = vadd.f32 %v2928, %v3207
    %s3209 = scalar_lea.vmem %s0, 22
    %v3210 = vld [vmem:[%s3209] sm:$0x3]
    %3212 = vset.pattern.permute.xlu0 0
    %3213 = vperm.xlu0 %3212, %v3210
    %v3214 = vpop.permute.xlu0 %3213
    %v3216 = vmul.f32 %v3214, %v123
    %3217 = vmatprep.subr.mxu0 0.0
    %3218 = vmatpush1.msra.mxu0 %v87
    %3219 = vmatprep.subr.mxu0 0.0
    %3220 = vmatpush1.msra.mxu0 %v88
    %3221 = vmatprep.subr.mxu0 0.0
    %3222 = vmatpush1.msra.mxu0 %v89
    %3223 = vmatprep.subr.mxu0 0.0
    %3224 = vmatpush1.msra.mxu0 %v90
    %3225 = vmatprep.subr.mxu0 0.0
    %3226 = vmatpush1.msra.mxu0 0.0
    %3227 = vmatprep.subr.mxu0 0.0
    %3228 = vmatpush1.msra.mxu0 0.0
    %3229 = vmatprep.subr.mxu0 0.0
    %3230 = vmatpush1.msra.mxu0 0.0
    %3231 = vmatprep.subr.mxu0 0.0
    %3232 = vmatpush1.msra.mxu0 0.0
    %3233 = vmatprep.subr.mxu0 0.0
    %3234 = vmatpush1.msra.mxu0 0.0
    %3235 = vmatprep.subr.mxu0 0.0
    %3236 = vmatpush1.msra.mxu0 0.0
    %3237 = vmatprep.subr.mxu0 0.0
    %3238 = vmatpush1.msra.mxu0 0.0
    %3239 = vmatprep.subr.mxu0 0.0
    %3240 = vmatpush1.msra.mxu0 0.0
    %3241 = vmatprep.subr.mxu0 0.0
    %3242 = vmatpush1.msra.mxu0 0.0
    %3243 = vmatprep.subr.mxu0 0.0
    %3244 = vmatpush1.msra.mxu0 0.0
    %3245 = vmatprep.subr.mxu0 0.0
    %3246 = vmatpush1.msra.mxu0 0.0
    %3247 = vmatprep.subr.mxu0 0.0
    %3248 = vmatpush1.msra.mxu0 0.0
    %3249 = vmatprep.subr.mxu0 0.0
    %3250 = vmatpush1.msra.mxu0 0.0
    %3251 = vmatprep.subr.mxu0 0.0
    %3252 = vmatpush1.msra.mxu0 0.0
    %3253 = vmatprep.subr.mxu0 0.0
    %3254 = vmatpush1.msra.mxu0 0.0
    %3255 = vmatprep.subr.mxu0 0.0
    %3256 = vmatpush1.msra.mxu0 0.0
    %3257 = vmatprep.subr.mxu0 0.0
    %3258 = vmatpush1.msra.mxu0 0.0
    %3259 = vmatprep.subr.mxu0 0.0
    %3260 = vmatpush1.msra.mxu0 0.0
    %3261 = vmatprep.subr.mxu0 0.0
    %3262 = vmatpush1.msra.mxu0 0.0
    %3263 = vmatprep.subr.mxu0 0.0
    %3264 = vmatpush1.msra.mxu0 0.0
    %3265 = vmatprep.subr.mxu0 0.0
    %3266 = vmatpush1.msra.mxu0 0.0
    %3267 = vmatprep.subr.mxu0 0.0
    %3268 = vmatpush1.msra.mxu0 0.0
    %3269 = vmatprep.subr.mxu0 0.0
    %3270 = vmatpush1.msra.mxu0 0.0
    %3271 = vmatprep.subr.mxu0 0.0
    %3272 = vmatpush1.msra.mxu0 0.0
    %3273 = vmatprep.subr.mxu0 0.0
    %3274 = vmatpush1.msra.mxu0 0.0
    %3275 = vmatprep.subr.mxu0 0.0
    %3276 = vmatpush1.msra.mxu0 0.0
    %3277 = vmatprep.subr.mxu0 0.0
    %3278 = vmatpush1.msra.mxu0 0.0
    %3279 = vmatprep.subr.mxu0 0.0
    %3280 = vmatpush1.msra.mxu0 0.0
    %3281 = vmatprep.mubr.f32.mxu0 0.0
    %3282 = vmatmul.mubr.f32.gmra.mrb[0].mxu0 %v3111
    %v3283 = vpop.f32.mrb[0].mxu0
    %v3284 = vadd.f32 0.0, %v3283
    %v3285 = vpop.f32.mrb[0].mxu0
    %3286 = vdwg.mxu0
    %v3287 = vadd.f32 %v3216, %v3284
    %v3288 = vadd.f32 %v3287, %v205
    %v3289 = vsub.f32 0.0, %v3288
    %v3290 = vmul.f32 %v3289, 1.442695
    %v3291 = vpow.pop %v3290
    %v3292 = vadd.f32 %v3291, 1.0
    %v3293 = vrcp.pop %v3292
    %v3294 = vmul.f32 1.0, %v3293
    %v3295 = vtanh.pop %v3288
    %v3296 = vmul.f32 %v3294, %v3026
    %3298 = vrot.lane.b32.xlu0 %v3295, 64
    %v3299 = vpop.permute.xlu0 %3298
    %v3301 = vmul.f32 %v3294, %v3299
    %3303 = vrot.lane.b32.xlu0 %v3301, 32
    %v3304 = vpop.permute.xlu0 %3303
    %v3306 = vadd.f32 %v3296, %v3304
    %v3307 = vtanh.pop %v3306
    %3309 = vrot.lane.b32.xlu0 %v3307, 64
    %v3310 = vpop.permute.xlu0 %3309
    %v3312 = vmul.f32 %v3294, %v3310
    %3314 = vrot.lane.b32.xlu0 %v3207, 32
    %v3315 = vpop.permute.xlu0 %3314
    %v3316 = vsel %vm126, %v3315, 0
    %3318 = vmatprep.subr.mxu0 0.0
    %3319 = vmatpush1.msra.mxu0 %v92
    %3320 = vmatprep.subr.mxu0 0.0
    %3321 = vmatpush1.msra.mxu0 %v93
    %3322 = vmatprep.subr.mxu0 0.0
    %3323 = vmatpush1.msra.mxu0 %v94
    %3324 = vmatprep.subr.mxu0 0.0
    %3325 = vmatpush1.msra.mxu0 %v95
    %3326 = vmatprep.subr.mxu0 0.0
    %3327 = vmatpush1.msra.mxu0 0.0
    %3328 = vmatprep.subr.mxu0 0.0
    %3329 = vmatpush1.msra.mxu0 0.0
    %3330 = vmatprep.subr.mxu0 0.0
    %3331 = vmatpush1.msra.mxu0 0.0
    %3332 = vmatprep.subr.mxu0 0.0
    %3333 = vmatpush1.msra.mxu0 0.0
    %3334 = vmatprep.subr.mxu0 0.0
    %3335 = vmatpush1.msra.mxu0 0.0
    %3336 = vmatprep.subr.mxu0 0.0
    %3337 = vmatpush1.msra.mxu0 0.0
    %3338 = vmatprep.subr.mxu0 0.0
    %3339 = vmatpush1.msra.mxu0 0.0
    %3340 = vmatprep.subr.mxu0 0.0
    %3341 = vmatpush1.msra.mxu0 0.0
    %3342 = vmatprep.subr.mxu0 0.0
    %3343 = vmatpush1.msra.mxu0 0.0
    %3344 = vmatprep.subr.mxu0 0.0
    %3345 = vmatpush1.msra.mxu0 0.0
    %3346 = vmatprep.subr.mxu0 0.0
    %3347 = vmatpush1.msra.mxu0 0.0
    %3348 = vmatprep.subr.mxu0 0.0
    %3349 = vmatpush1.msra.mxu0 0.0
    %3350 = vmatprep.subr.mxu0 0.0
    %3351 = vmatpush1.msra.mxu0 0.0
    %3352 = vmatprep.subr.mxu0 0.0
    %3353 = vmatpush1.msra.mxu0 0.0
    %3354 = vmatprep.subr.mxu0 0.0
    %3355 = vmatpush1.msra.mxu0 0.0
    %3356 = vmatprep.subr.mxu0 0.0
    %3357 = vmatpush1.msra.mxu0 0.0
    %3358 = vmatprep.subr.mxu0 0.0
    %3359 = vmatpush1.msra.mxu0 0.0
    %3360 = vmatprep.subr.mxu0 0.0
    %3361 = vmatpush1.msra.mxu0 0.0
    %3362 = vmatprep.subr.mxu0 0.0
    %3363 = vmatpush1.msra.mxu0 0.0
    %3364 = vmatprep.subr.mxu0 0.0
    %3365 = vmatpush1.msra.mxu0 0.0
    %3366 = vmatprep.subr.mxu0 0.0
    %3367 = vmatpush1.msra.mxu0 0.0
    %3368 = vmatprep.subr.mxu0 0.0
    %3369 = vmatpush1.msra.mxu0 0.0
    %3370 = vmatprep.subr.mxu0 0.0
    %3371 = vmatpush1.msra.mxu0 0.0
    %3372 = vmatprep.subr.mxu0 0.0
    %3373 = vmatpush1.msra.mxu0 0.0
    %3374 = vmatprep.subr.mxu0 0.0
    %3375 = vmatpush1.msra.mxu0 0.0
    %3376 = vmatprep.subr.mxu0 0.0
    %3377 = vmatpush1.msra.mxu0 0.0
    %3378 = vmatprep.subr.mxu0 0.0
    %3379 = vmatpush1.msra.mxu0 0.0
    %3380 = vmatprep.subr.mxu0 0.0
    %3381 = vmatpush1.msra.mxu0 0.0
    %3382 = vmatprep.mubr.f32.mxu0 0.0
    %3383 = vmatmul.mubr.f32.gmra.mrb[0].mxu0 %v3316
    %v3384 = vpop.f32.mrb[0].mxu0
    %v3385 = vadd.f32 0.0, %v3384
    %v3386 = vpop.f32.mrb[0].mxu0
    %3387 = vdwg.mxu0
    %3389 = vrot.lane.b32.xlu0 %v3312, 32
    %v3390 = vpop.permute.xlu0 %3389
    %v3391 = vsel %vm126, %v3390, 0
    %3393 = vmatprep.subr.mxu0 0.0
    %3394 = vmatpush1.msra.mxu0 %v83
    %3395 = vmatprep.subr.mxu0 0.0
    %3396 = vmatpush1.msra.mxu0 %v84
    %3397 = vmatprep.subr.mxu0 0.0
    %3398 = vmatpush1.msra.mxu0 %v85
    %3399 = vmatprep.subr.mxu0 0.0
    %3400 = vmatpush1.msra.mxu0 %v86
    %3401 = vmatprep.subr.mxu0 0.0
    %3402 = vmatpush1.msra.mxu0 0.0
    %3403 = vmatprep.subr.mxu0 0.0
    %3404 = vmatpush1.msra.mxu0 0.0
    %3405 = vmatprep.subr.mxu0 0.0
    %3406 = vmatpush1.msra.mxu0 0.0
    %3407 = vmatprep.subr.mxu0 0.0
    %3408 = vmatpush1.msra.mxu0 0.0
    %3409 = vmatprep.subr.mxu0 0.0
    %3410 = vmatpush1.msra.mxu0 0.0
    %3411 = vmatprep.subr.mxu0 0.0
    %3412 = vmatpush1.msra.mxu0 0.0
    %3413 = vmatprep.subr.mxu0 0.0
    %3414 = vmatpush1.msra.mxu0 0.0
    %3415 = vmatprep.subr.mxu0 0.0
    %3416 = vmatpush1.msra.mxu0 0.0
    %3417 = vmatprep.subr.mxu0 0.0
    %3418 = vmatpush1.msra.mxu0 0.0
    %3419 = vmatprep.subr.mxu0 0.0
    %3420 = vmatpush1.msra.mxu0 0.0
    %3421 = vmatprep.subr.mxu0 0.0
    %3422 = vmatpush1.msra.mxu0 0.0
    %3423 = vmatprep.subr.mxu0 0.0
    %3424 = vmatpush1.msra.mxu0 0.0
    %3425 = vmatprep.subr.mxu0 0.0
    %3426 = vmatpush1.msra.mxu0 0.0
    %3427 = vmatprep.subr.mxu0 0.0
    %3428 = vmatpush1.msra.mxu0 0.0
    %3429 = vmatprep.subr.mxu0 0.0
    %3430 = vmatpush1.msra.mxu0 0.0
    %3431 = vmatprep.subr.mxu0 0.0
    %3432 = vmatpush1.msra.mxu0 0.0
    %3433 = vmatprep.subr.mxu0 0.0
    %3434 = vmatpush1.msra.mxu0 0.0
    %3435 = vmatprep.subr.mxu0 0.0
    %3436 = vmatpush1.msra.mxu0 0.0
    %3437 = vmatprep.subr.mxu0 0.0
    %3438 = vmatpush1.msra.mxu0 0.0
    %3439 = vmatprep.subr.mxu0 0.0
    %3440 = vmatpush1.msra.mxu0 0.0
    %3441 = vmatprep.subr.mxu0 0.0
    %3442 = vmatpush1.msra.mxu0 0.0
    %3443 = vmatprep.subr.mxu0 0.0
    %3444 = vmatpush1.msra.mxu0 0.0
    %3445 = vmatprep.subr.mxu0 0.0
    %3446 = vmatpush1.msra.mxu0 0.0
    %3447 = vmatprep.subr.mxu0 0.0
    %3448 = vmatpush1.msra.mxu0 0.0
    %3449 = vmatprep.subr.mxu0 0.0
    %3450 = vmatpush1.msra.mxu0 0.0
    %3451 = vmatprep.subr.mxu0 0.0
    %3452 = vmatpush1.msra.mxu0 0.0
    %3453 = vmatprep.subr.mxu0 0.0
    %3454 = vmatpush1.msra.mxu0 0.0
    %3455 = vmatprep.subr.mxu0 0.0
    %3456 = vmatpush1.msra.mxu0 0.0
    %3457 = vmatprep.mubr.f32.mxu0 0.0
    %3458 = vmatmul.mubr.f32.gmra.mrb[0].mxu0 %v3391
    %v3459 = vpop.f32.mrb[0].mxu0
    %v3460 = vadd.f32 %v3385, %v3459
    %v3461 = vpop.f32.mrb[0].mxu0
    %3462 = vdwg.mxu0
    %v3463 = vadd.f32 %v3460, %v381
    %v3464 = vsub.f32 0.0, %v3463
    %v3465 = vmul.f32 %v3464, 1.442695
    %v3466 = vpow.pop %v3465
    %v3467 = vadd.f32 %v3466, 1.0
    %v3468 = vrcp.pop %v3467
    %v3469 = vmul.f32 1.0, %v3468
    %v3470 = vtanh.pop %v3463
    %v3471 = vmul.f32 %v3469, %v3201
    %3473 = vrot.lane.b32.xlu0 %v3470, 64
    %v3474 = vpop.permute.xlu0 %3473
    %v3476 = vmul.f32 %v3469, %v3474
    %3478 = vrot.lane.b32.xlu0 %v3476, 32
    %v3479 = vpop.permute.xlu0 %3478
    %v3481 = vadd.f32 %v3471, %v3479
    %v3482 = vtanh.pop %v3481
    %3484 = vrot.lane.b32.xlu0 %v3482, 64
    %v3485 = vpop.permute.xlu0 %3484
    %v3487 = vmul.f32 %v3469, %v3485
    %v3488 = vadd.f32 %v3208, %v3487
    %s3489 = scalar_lea.vmem %s0, 24
    %v3490 = vld [vmem:[%s3489] sm:$0x3]
    %3492 = vset.pattern.permute.xlu0 0
    %3493 = vperm.xlu0 %3492, %v3490
    %v3494 = vpop.permute.xlu0 %3493
    %v3496 = vmul.f32 %v3494, %v123
    %3497 = vmatprep.subr.mxu0 0.0
    %3498 = vmatpush1.msra.mxu0 %v87
    %3499 = vmatprep.subr.mxu0 0.0
    %3500 = vmatpush1.msra.mxu0 %v88
    %3501 = vmatprep.subr.mxu0 0.0
    %3502 = vmatpush1.msra.mxu0 %v89
    %3503 = vmatprep.subr.mxu0 0.0
    %3504 = vmatpush1.msra.mxu0 %v90
    %3505 = vmatprep.subr.mxu0 0.0
    %3506 = vmatpush1.msra.mxu0 0.0
    %3507 = vmatprep.subr.mxu0 0.0
    %3508 = vmatpush1.msra.mxu0 0.0
    %3509 = vmatprep.subr.mxu0 0.0
    %3510 = vmatpush1.msra.mxu0 0.0
    %3511 = vmatprep.subr.mxu0 0.0
    %3512 = vmatpush1.msra.mxu0 0.0
    %3513 = vmatprep.subr.mxu0 0.0
    %3514 = vmatpush1.msra.mxu0 0.0
    %3515 = vmatprep.subr.mxu0 0.0
    %3516 = vmatpush1.msra.mxu0 0.0
    %3517 = vmatprep.subr.mxu0 0.0
    %3518 = vmatpush1.msra.mxu0 0.0
    %3519 = vmatprep.subr.mxu0 0.0
    %3520 = vmatpush1.msra.mxu0 0.0
    %3521 = vmatprep.subr.mxu0 0.0
    %3522 = vmatpush1.msra.mxu0 0.0
    %3523 = vmatprep.subr.mxu0 0.0
    %3524 = vmatpush1.msra.mxu0 0.0
    %3525 = vmatprep.subr.mxu0 0.0
    %3526 = vmatpush1.msra.mxu0 0.0
    %3527 = vmatprep.subr.mxu0 0.0
    %3528 = vmatpush1.msra.mxu0 0.0
    %3529 = vmatprep.subr.mxu0 0.0
    %3530 = vmatpush1.msra.mxu0 0.0
    %3531 = vmatprep.subr.mxu0 0.0
    %3532 = vmatpush1.msra.mxu0 0.0
    %3533 = vmatprep.subr.mxu0 0.0
    %3534 = vmatpush1.msra.mxu0 0.0
    %3535 = vmatprep.subr.mxu0 0.0
    %3536 = vmatpush1.msra.mxu0 0.0
    %3537 = vmatprep.subr.mxu0 0.0
    %3538 = vmatpush1.msra.mxu0 0.0
    %3539 = vmatprep.subr.mxu0 0.0
    %3540 = vmatpush1.msra.mxu0 0.0
    %3541 = vmatprep.subr.mxu0 0.0
    %3542 = vmatpush1.msra.mxu0 0.0
    %3543 = vmatprep.subr.mxu0 0.0
    %3544 = vmatpush1.msra.mxu0 0.0
    %3545 = vmatprep.subr.mxu0 0.0
    %3546 = vmatpush1.msra.mxu0 0.0
    %3547 = vmatprep.subr.mxu0 0.0
    %3548 = vmatpush1.msra.mxu0 0.0
    %3549 = vmatprep.subr.mxu0 0.0
    %3550 = vmatpush1.msra.mxu0 0.0
    %3551 = vmatprep.subr.mxu0 0.0
    %3552 = vmatpush1.msra.mxu0 0.0
    %3553 = vmatprep.subr.mxu0 0.0
    %3554 = vmatpush1.msra.mxu0 0.0
    %3555 = vmatprep.subr.mxu0 0.0
    %3556 = vmatpush1.msra.mxu0 0.0
    %3557 = vmatprep.subr.mxu0 0.0
    %3558 = vmatpush1.msra.mxu0 0.0
    %3559 = vmatprep.subr.mxu0 0.0
    %3560 = vmatpush1.msra.mxu0 0.0
    %3561 = vmatprep.mubr.f32.mxu0 0.0
    %3562 = vmatmul.mubr.f32.gmra.mrb[0].mxu0 %v3391
    %v3563 = vpop.f32.mrb[0].mxu0
    %v3564 = vadd.f32 0.0, %v3563
    %v3565 = vpop.f32.mrb[0].mxu0
    %3566 = vdwg.mxu0
    %v3567 = vadd.f32 %v3496, %v3564
    %v3568 = vadd.f32 %v3567, %v205
    %v3569 = vsub.f32 0.0, %v3568
    %v3570 = vmul.f32 %v3569, 1.442695
    %v3571 = vpow.pop %v3570
    %v3572 = vadd.f32 %v3571, 1.0
    %v3573 = vrcp.pop %v3572
    %v3574 = vmul.f32 1.0, %v3573
    %v3575 = vtanh.pop %v3568
    %v3576 = vmul.f32 %v3574, %v3306
    %3578 = vrot.lane.b32.xlu0 %v3575, 64
    %v3579 = vpop.permute.xlu0 %3578
    %v3581 = vmul.f32 %v3574, %v3579
    %3583 = vrot.lane.b32.xlu0 %v3581, 32
    %v3584 = vpop.permute.xlu0 %3583
    %v3586 = vadd.f32 %v3576, %v3584
    %v3587 = vtanh.pop %v3586
    %3589 = vrot.lane.b32.xlu0 %v3587, 64
    %v3590 = vpop.permute.xlu0 %3589
    %v3592 = vmul.f32 %v3574, %v3590
    %3594 = vrot.lane.b32.xlu0 %v3487, 32
    %v3595 = vpop.permute.xlu0 %3594
    %v3596 = vsel %vm126, %v3595, 0
    %3598 = vmatprep.subr.mxu0 0.0
    %3599 = vmatpush1.msra.mxu0 %v92
    %3600 = vmatprep.subr.mxu0 0.0
    %3601 = vmatpush1.msra.mxu0 %v93
    %3602 = vmatprep.subr.mxu0 0.0
    %3603 = vmatpush1.msra.mxu0 %v94
    %3604 = vmatprep.subr.mxu0 0.0
    %3605 = vmatpush1.msra.mxu0 %v95
    %3606 = vmatprep.subr.mxu0 0.0
    %3607 = vmatpush1.msra.mxu0 0.0
    %3608 = vmatprep.subr.mxu0 0.0
    %3609 = vmatpush1.msra.mxu0 0.0
    %3610 = vmatprep.subr.mxu0 0.0
    %3611 = vmatpush1.msra.mxu0 0.0
    %3612 = vmatprep.subr.mxu0 0.0
    %3613 = vmatpush1.msra.mxu0 0.0
    %3614 = vmatprep.subr.mxu0 0.0
    %3615 = vmatpush1.msra.mxu0 0.0
    %3616 = vmatprep.subr.mxu0 0.0
    %3617 = vmatpush1.msra.mxu0 0.0
    %3618 = vmatprep.subr.mxu0 0.0
    %3619 = vmatpush1.msra.mxu0 0.0
    %3620 = vmatprep.subr.mxu0 0.0
    %3621 = vmatpush1.msra.mxu0 0.0
    %3622 = vmatprep.subr.mxu0 0.0
    %3623 = vmatpush1.msra.mxu0 0.0
    %3624 = vmatprep.subr.mxu0 0.0
    %3625 = vmatpush1.msra.mxu0 0.0
    %3626 = vmatprep.subr.mxu0 0.0
    %3627 = vmatpush1.msra.mxu0 0.0
    %3628 = vmatprep.subr.mxu0 0.0
    %3629 = vmatpush1.msra.mxu0 0.0
    %3630 = vmatprep.subr.mxu0 0.0
    %3631 = vmatpush1.msra.mxu0 0.0
    %3632 = vmatprep.subr.mxu0 0.0
    %3633 = vmatpush1.msra.mxu0 0.0
    %3634 = vmatprep.subr.mxu0 0.0
    %3635 = vmatpush1.msra.mxu0 0.0
    %3636 = vmatprep.subr.mxu0 0.0
    %3637 = vmatpush1.msra.mxu0 0.0
    %3638 = vmatprep.subr.mxu0 0.0
    %3639 = vmatpush1.msra.mxu0 0.0
    %3640 = vmatprep.subr.mxu0 0.0
    %3641 = vmatpush1.msra.mxu0 0.0
    %3642 = vmatprep.subr.mxu0 0.0
    %3643 = vmatpush1.msra.mxu0 0.0
    %3644 = vmatprep.subr.mxu0 0.0
    %3645 = vmatpush1.msra.mxu0 0.0
    %3646 = vmatprep.subr.mxu0 0.0
    %3647 = vmatpush1.msra.mxu0 0.0
    %3648 = vmatprep.subr.mxu0 0.0
    %3649 = vmatpush1.msra.mxu0 0.0
    %3650 = vmatprep.subr.mxu0 0.0
    %3651 = vmatpush1.msra.mxu0 0.0
    %3652 = vmatprep.subr.mxu0 0.0
    %3653 = vmatpush1.msra.mxu0 0.0
    %3654 = vmatprep.subr.mxu0 0.0
    %3655 = vmatpush1.msra.mxu0 0.0
    %3656 = vmatprep.subr.mxu0 0.0
    %3657 = vmatpush1.msra.mxu0 0.0
    %3658 = vmatprep.subr.mxu0 0.0
    %3659 = vmatpush1.msra.mxu0 0.0
    %3660 = vmatprep.subr.mxu0 0.0
    %3661 = vmatpush1.msra.mxu0 0.0
    %3662 = vmatprep.mubr.f32.mxu0 0.0
    %3663 = vmatmul.mubr.f32.gmra.mrb[0].mxu0 %v3596
    %v3664 = vpop.f32.mrb[0].mxu0
    %v3665 = vadd.f32 0.0, %v3664
    %v3666 = vpop.f32.mrb[0].mxu0
    %3667 = vdwg.mxu0
    %3669 = vrot.lane.b32.xlu0 %v3592, 32
    %v3670 = vpop.permute.xlu0 %3669
    %v3671 = vsel %vm126, %v3670, 0
    %3673 = vmatprep.subr.mxu0 0.0
    %3674 = vmatpush1.msra.mxu0 %v83
    %3675 = vmatprep.subr.mxu0 0.0
    %3676 = vmatpush1.msra.mxu0 %v84
    %3677 = vmatprep.subr.mxu0 0.0
    %3678 = vmatpush1.msra.mxu0 %v85
    %3679 = vmatprep.subr.mxu0 0.0
    %3680 = vmatpush1.msra.mxu0 %v86
    %3681 = vmatprep.subr.mxu0 0.0
    %3682 = vmatpush1.msra.mxu0 0.0
    %3683 = vmatprep.subr.mxu0 0.0
    %3684 = vmatpush1.msra.mxu0 0.0
    %3685 = vmatprep.subr.mxu0 0.0
    %3686 = vmatpush1.msra.mxu0 0.0
    %3687 = vmatprep.subr.mxu0 0.0
    %3688 = vmatpush1.msra.mxu0 0.0
    %3689 = vmatprep.subr.mxu0 0.0
    %3690 = vmatpush1.msra.mxu0 0.0
    %3691 = vmatprep.subr.mxu0 0.0
    %3692 = vmatpush1.msra.mxu0 0.0
    %3693 = vmatprep.subr.mxu0 0.0
    %3694 = vmatpush1.msra.mxu0 0.0
    %3695 = vmatprep.subr.mxu0 0.0
    %3696 = vmatpush1.msra.mxu0 0.0
    %3697 = vmatprep.subr.mxu0 0.0
    %3698 = vmatpush1.msra.mxu0 0.0
    %3699 = vmatprep.subr.mxu0 0.0
    %3700 = vmatpush1.msra.mxu0 0.0
    %3701 = vmatprep.subr.mxu0 0.0
    %3702 = vmatpush1.msra.mxu0 0.0
    %3703 = vmatprep.subr.mxu0 0.0
    %3704 = vmatpush1.msra.mxu0 0.0
    %3705 = vmatprep.subr.mxu0 0.0
    %3706 = vmatpush1.msra.mxu0 0.0
    %3707 = vmatprep.subr.mxu0 0.0
    %3708 = vmatpush1.msra.mxu0 0.0
    %3709 = vmatprep.subr.mxu0 0.0
    %3710 = vmatpush1.msra.mxu0 0.0
    %3711 = vmatprep.subr.mxu0 0.0
    %3712 = vmatpush1.msra.mxu0 0.0
    %3713 = vmatprep.subr.mxu0 0.0
    %3714 = vmatpush1.msra.mxu0 0.0
    %3715 = vmatprep.subr.mxu0 0.0
    %3716 = vmatpush1.msra.mxu0 0.0
    %3717 = vmatprep.subr.mxu0 0.0
    %3718 = vmatpush1.msra.mxu0 0.0
    %3719 = vmatprep.subr.mxu0 0.0
    %3720 = vmatpush1.msra.mxu0 0.0
    %3721 = vmatprep.subr.mxu0 0.0
    %3722 = vmatpush1.msra.mxu0 0.0
    %3723 = vmatprep.subr.mxu0 0.0
    %3724 = vmatpush1.msra.mxu0 0.0
    %3725 = vmatprep.subr.mxu0 0.0
    %3726 = vmatpush1.msra.mxu0 0.0
    %3727 = vmatprep.subr.mxu0 0.0
    %3728 = vmatpush1.msra.mxu0 0.0
    %3729 = vmatprep.subr.mxu0 0.0
    %3730 = vmatpush1.msra.mxu0 0.0
    %3731 = vmatprep.subr.mxu0 0.0
    %3732 = vmatpush1.msra.mxu0 0.0
    %3733 = vmatprep.subr.mxu0 0.0
    %3734 = vmatpush1.msra.mxu0 0.0
    %3735 = vmatprep.subr.mxu0 0.0
    %3736 = vmatpush1.msra.mxu0 0.0
    %3737 = vmatprep.mubr.f32.mxu0 0.0
    %3738 = vmatmul.mubr.f32.gmra.mrb[0].mxu0 %v3671
    %v3739 = vpop.f32.mrb[0].mxu0
    %v3740 = vadd.f32 %v3665, %v3739
    %v3741 = vpop.f32.mrb[0].mxu0
    %3742 = vdwg.mxu0
    %v3743 = vadd.f32 %v3740, %v381
    %v3744 = vsub.f32 0.0, %v3743
    %v3745 = vmul.f32 %v3744, 1.442695
    %v3746 = vpow.pop %v3745
    %v3747 = vadd.f32 %v3746, 1.0
    %v3748 = vrcp.pop %v3747
    %v3749 = vmul.f32 1.0, %v3748
    %v3750 = vtanh.pop %v3743
    %v3751 = vmul.f32 %v3749, %v3481
    %3753 = vrot.lane.b32.xlu0 %v3750, 64
    %v3754 = vpop.permute.xlu0 %3753
    %v3756 = vmul.f32 %v3749, %v3754
    %3758 = vrot.lane.b32.xlu0 %v3756, 32
    %v3759 = vpop.permute.xlu0 %3758
    %v3761 = vadd.f32 %v3751, %v3759
    %v3762 = vtanh.pop %v3761
    %3764 = vrot.lane.b32.xlu0 %v3762, 64
    %v3765 = vpop.permute.xlu0 %3764
    %v3767 = vmul.f32 %v3749, %v3765
    %v3768 = vadd.f32 %v3488, %v3767
    %s3769 = scalar_lea.vmem %s0, 26
    %v3770 = vld [vmem:[%s3769] sm:$0x3]
    %3772 = vset.pattern.permute.xlu0 0
    %3773 = vperm.xlu0 %3772, %v3770
    %v3774 = vpop.permute.xlu0 %3773
    %v3776 = vmul.f32 %v3774, %v123
    %3777 = vmatprep.subr.mxu0 0.0
    %3778 = vmatpush1.msra.mxu0 %v87
    %3779 = vmatprep.subr.mxu0 0.0
    %3780 = vmatpush1.msra.mxu0 %v88
    %3781 = vmatprep.subr.mxu0 0.0
    %3782 = vmatpush1.msra.mxu0 %v89
    %3783 = vmatprep.subr.mxu0 0.0
    %3784 = vmatpush1.msra.mxu0 %v90
    %3785 = vmatprep.subr.mxu0 0.0
    %3786 = vmatpush1.msra.mxu0 0.0
    %3787 = vmatprep.subr.mxu0 0.0
    %3788 = vmatpush1.msra.mxu0 0.0
    %3789 = vmatprep.subr.mxu0 0.0
    %3790 = vmatpush1.msra.mxu0 0.0
    %3791 = vmatprep.subr.mxu0 0.0
    %3792 = vmatpush1.msra.mxu0 0.0
    %3793 = vmatprep.subr.mxu0 0.0
    %3794 = vmatpush1.msra.mxu0 0.0
    %3795 = vmatprep.subr.mxu0 0.0
    %3796 = vmatpush1.msra.mxu0 0.0
    %3797 = vmatprep.subr.mxu0 0.0
    %3798 = vmatpush1.msra.mxu0 0.0
    %3799 = vmatprep.subr.mxu0 0.0
    %3800 = vmatpush1.msra.mxu0 0.0
    %3801 = vmatprep.subr.mxu0 0.0
    %3802 = vmatpush1.msra.mxu0 0.0
    %3803 = vmatprep.subr.mxu0 0.0
    %3804 = vmatpush1.msra.mxu0 0.0
    %3805 = vmatprep.subr.mxu0 0.0
    %3806 = vmatpush1.msra.mxu0 0.0
    %3807 = vmatprep.subr.mxu0 0.0
    %3808 = vmatpush1.msra.mxu0 0.0
    %3809 = vmatprep.subr.mxu0 0.0
    %3810 = vmatpush1.msra.mxu0 0.0
    %3811 = vmatprep.subr.mxu0 0.0
    %3812 = vmatpush1.msra.mxu0 0.0
    %3813 = vmatprep.subr.mxu0 0.0
    %3814 = vmatpush1.msra.mxu0 0.0
    %3815 = vmatprep.subr.mxu0 0.0
    %3816 = vmatpush1.msra.mxu0 0.0
    %3817 = vmatprep.subr.mxu0 0.0
    %3818 = vmatpush1.msra.mxu0 0.0
    %3819 = vmatprep.subr.mxu0 0.0
    %3820 = vmatpush1.msra.mxu0 0.0
    %3821 = vmatprep.subr.mxu0 0.0
    %3822 = vmatpush1.msra.mxu0 0.0
    %3823 = vmatprep.subr.mxu0 0.0
    %3824 = vmatpush1.msra.mxu0 0.0
    %3825 = vmatprep.subr.mxu0 0.0
    %3826 = vmatpush1.msra.mxu0 0.0
    %3827 = vmatprep.subr.mxu0 0.0
    %3828 = vmatpush1.msra.mxu0 0.0
    %3829 = vmatprep.subr.mxu0 0.0
    %3830 = vmatpush1.msra.mxu0 0.0
    %3831 = vmatprep.subr.mxu0 0.0
    %3832 = vmatpush1.msra.mxu0 0.0
    %3833 = vmatprep.subr.mxu0 0.0
    %3834 = vmatpush1.msra.mxu0 0.0
    %3835 = vmatprep.subr.mxu0 0.0
    %3836 = vmatpush1.msra.mxu0 0.0
    %3837 = vmatprep.subr.mxu0 0.0
    %3838 = vmatpush1.msra.mxu0 0.0
    %3839 = vmatprep.subr.mxu0 0.0
    %3840 = vmatpush1.msra.mxu0 0.0
    %3841 = vmatprep.mubr.f32.mxu0 0.0
    %3842 = vmatmul.mubr.f32.gmra.mrb[0].mxu0 %v3671
    %v3843 = vpop.f32.mrb[0].mxu0
    %v3844 = vadd.f32 0.0, %v3843
    %v3845 = vpop.f32.mrb[0].mxu0
    %3846 = vdwg.mxu0
    %v3847 = vadd.f32 %v3776, %v3844
    %v3848 = vadd.f32 %v3847, %v205
    %v3849 = vsub.f32 0.0, %v3848
    %v3850 = vmul.f32 %v3849, 1.442695
    %v3851 = vpow.pop %v3850
    %v3852 = vadd.f32 %v3851, 1.0
    %v3853 = vrcp.pop %v3852
    %v3854 = vmul.f32 1.0, %v3853
    %v3855 = vtanh.pop %v3848
    %v3856 = vmul.f32 %v3854, %v3586
    %3858 = vrot.lane.b32.xlu0 %v3855, 64
    %v3859 = vpop.permute.xlu0 %3858
    %v3861 = vmul.f32 %v3854, %v3859
    %3863 = vrot.lane.b32.xlu0 %v3861, 32
    %v3864 = vpop.permute.xlu0 %3863
    %v3866 = vadd.f32 %v3856, %v3864
    %v3867 = vtanh.pop %v3866
    %3869 = vrot.lane.b32.xlu0 %v3867, 64
    %v3870 = vpop.permute.xlu0 %3869
    %v3872 = vmul.f32 %v3854, %v3870
    %3874 = vrot.lane.b32.xlu0 %v3767, 32
    %v3875 = vpop.permute.xlu0 %3874
    %v3876 = vsel %vm126, %v3875, 0
    %3878 = vmatprep.subr.mxu0 0.0
    %3879 = vmatpush1.msra.mxu0 %v92
    %3880 = vmatprep.subr.mxu0 0.0
    %3881 = vmatpush1.msra.mxu0 %v93
    %3882 = vmatprep.subr.mxu0 0.0
    %3883 = vmatpush1.msra.mxu0 %v94
    %3884 = vmatprep.subr.mxu0 0.0
    %3885 = vmatpush1.msra.mxu0 %v95
    %3886 = vmatprep.subr.mxu0 0.0
    %3887 = vmatpush1.msra.mxu0 0.0
    %3888 = vmatprep.subr.mxu0 0.0
    %3889 = vmatpush1.msra.mxu0 0.0
    %3890 = vmatprep.subr.mxu0 0.0
    %3891 = vmatpush1.msra.mxu0 0.0
    %3892 = vmatprep.subr.mxu0 0.0
    %3893 = vmatpush1.msra.mxu0 0.0
    %3894 = vmatprep.subr.mxu0 0.0
    %3895 = vmatpush1.msra.mxu0 0.0
    %3896 = vmatprep.subr.mxu0 0.0
    %3897 = vmatpush1.msra.mxu0 0.0
    %3898 = vmatprep.subr.mxu0 0.0
    %3899 = vmatpush1.msra.mxu0 0.0
    %3900 = vmatprep.subr.mxu0 0.0
    %3901 = vmatpush1.msra.mxu0 0.0
    %3902 = vmatprep.subr.mxu0 0.0
    %3903 = vmatpush1.msra.mxu0 0.0
    %3904 = vmatprep.subr.mxu0 0.0
    %3905 = vmatpush1.msra.mxu0 0.0
    %3906 = vmatprep.subr.mxu0 0.0
    %3907 = vmatpush1.msra.mxu0 0.0
    %3908 = vmatprep.subr.mxu0 0.0
    %3909 = vmatpush1.msra.mxu0 0.0
    %3910 = vmatprep.subr.mxu0 0.0
    %3911 = vmatpush1.msra.mxu0 0.0
    %3912 = vmatprep.subr.mxu0 0.0
    %3913 = vmatpush1.msra.mxu0 0.0
    %3914 = vmatprep.subr.mxu0 0.0
    %3915 = vmatpush1.msra.mxu0 0.0
    %3916 = vmatprep.subr.mxu0 0.0
    %3917 = vmatpush1.msra.mxu0 0.0
    %3918 = vmatprep.subr.mxu0 0.0
    %3919 = vmatpush1.msra.mxu0 0.0
    %3920 = vmatprep.subr.mxu0 0.0
    %3921 = vmatpush1.msra.mxu0 0.0
    %3922 = vmatprep.subr.mxu0 0.0
    %3923 = vmatpush1.msra.mxu0 0.0
    %3924 = vmatprep.subr.mxu0 0.0
    %3925 = vmatpush1.msra.mxu0 0.0
    %3926 = vmatprep.subr.mxu0 0.0
    %3927 = vmatpush1.msra.mxu0 0.0
    %3928 = vmatprep.subr.mxu0 0.0
    %3929 = vmatpush1.msra.mxu0 0.0
    %3930 = vmatprep.subr.mxu0 0.0
    %3931 = vmatpush1.msra.mxu0 0.0
    %3932 = vmatprep.subr.mxu0 0.0
    %3933 = vmatpush1.msra.mxu0 0.0
    %3934 = vmatprep.subr.mxu0 0.0
    %3935 = vmatpush1.msra.mxu0 0.0
    %3936 = vmatprep.subr.mxu0 0.0
    %3937 = vmatpush1.msra.mxu0 0.0
    %3938 = vmatprep.subr.mxu0 0.0
    %3939 = vmatpush1.msra.mxu0 0.0
    %3940 = vmatprep.subr.mxu0 0.0
    %3941 = vmatpush1.msra.mxu0 0.0
    %3942 = vmatprep.mubr.f32.mxu0 0.0
    %3943 = vmatmul.mubr.f32.gmra.mrb[0].mxu0 %v3876
    %v3944 = vpop.f32.mrb[0].mxu0
    %v3945 = vadd.f32 0.0, %v3944
    %v3946 = vpop.f32.mrb[0].mxu0
    %3947 = vdwg.mxu0
    %3949 = vrot.lane.b32.xlu0 %v3872, 32
    %v3950 = vpop.permute.xlu0 %3949
    %v3951 = vsel %vm126, %v3950, 0
    %3953 = vmatprep.subr.mxu0 0.0
    %3954 = vmatpush1.msra.mxu0 %v83
    %3955 = vmatprep.subr.mxu0 0.0
    %3956 = vmatpush1.msra.mxu0 %v84
    %3957 = vmatprep.subr.mxu0 0.0
    %3958 = vmatpush1.msra.mxu0 %v85
    %3959 = vmatprep.subr.mxu0 0.0
    %3960 = vmatpush1.msra.mxu0 %v86
    %3961 = vmatprep.subr.mxu0 0.0
    %3962 = vmatpush1.msra.mxu0 0.0
    %3963 = vmatprep.subr.mxu0 0.0
    %3964 = vmatpush1.msra.mxu0 0.0
    %3965 = vmatprep.subr.mxu0 0.0
    %3966 = vmatpush1.msra.mxu0 0.0
    %3967 = vmatprep.subr.mxu0 0.0
    %3968 = vmatpush1.msra.mxu0 0.0
    %3969 = vmatprep.subr.mxu0 0.0
    %3970 = vmatpush1.msra.mxu0 0.0
    %3971 = vmatprep.subr.mxu0 0.0
    %3972 = vmatpush1.msra.mxu0 0.0
    %3973 = vmatprep.subr.mxu0 0.0
    %3974 = vmatpush1.msra.mxu0 0.0
    %3975 = vmatprep.subr.mxu0 0.0
    %3976 = vmatpush1.msra.mxu0 0.0
    %3977 = vmatprep.subr.mxu0 0.0
    %3978 = vmatpush1.msra.mxu0 0.0
    %3979 = vmatprep.subr.mxu0 0.0
    %3980 = vmatpush1.msra.mxu0 0.0
    %3981 = vmatprep.subr.mxu0 0.0
    %3982 = vmatpush1.msra.mxu0 0.0
    %3983 = vmatprep.subr.mxu0 0.0
    %3984 = vmatpush1.msra.mxu0 0.0
    %3985 = vmatprep.subr.mxu0 0.0
    %3986 = vmatpush1.msra.mxu0 0.0
    %3987 = vmatprep.subr.mxu0 0.0
    %3988 = vmatpush1.msra.mxu0 0.0
    %3989 = vmatprep.subr.mxu0 0.0
    %3990 = vmatpush1.msra.mxu0 0.0
    %3991 = vmatprep.subr.mxu0 0.0
    %3992 = vmatpush1.msra.mxu0 0.0
    %3993 = vmatprep.subr.mxu0 0.0
    %3994 = vmatpush1.msra.mxu0 0.0
    %3995 = vmatprep.subr.mxu0 0.0
    %3996 = vmatpush1.msra.mxu0 0.0
    %3997 = vmatprep.subr.mxu0 0.0
    %3998 = vmatpush1.msra.mxu0 0.0
    %3999 = vmatprep.subr.mxu0 0.0
    %4000 = vmatpush1.msra.mxu0 0.0
    %4001 = vmatprep.subr.mxu0 0.0
    %4002 = vmatpush1.msra.mxu0 0.0
    %4003 = vmatprep.subr.mxu0 0.0
    %4004 = vmatpush1.msra.mxu0 0.0
    %4005 = vmatprep.subr.mxu0 0.0
    %4006 = vmatpush1.msra.mxu0 0.0
    %4007 = vmatprep.subr.mxu0 0.0
    %4008 = vmatpush1.msra.mxu0 0.0
    %4009 = vmatprep.subr.mxu0 0.0
    %4010 = vmatpush1.msra.mxu0 0.0
    %4011 = vmatprep.subr.mxu0 0.0
    %4012 = vmatpush1.msra.mxu0 0.0
    %4013 = vmatprep.subr.mxu0 0.0
    %4014 = vmatpush1.msra.mxu0 0.0
    %4015 = vmatprep.subr.mxu0 0.0
    %4016 = vmatpush1.msra.mxu0 0.0
    %4017 = vmatprep.mubr.f32.mxu0 0.0
    %4018 = vmatmul.mubr.f32.gmra.mrb[0].mxu0 %v3951
    %v4019 = vpop.f32.mrb[0].mxu0
    %v4020 = vadd.f32 %v3945, %v4019
    %v4021 = vpop.f32.mrb[0].mxu0
    %4022 = vdwg.mxu0
    %v4023 = vadd.f32 %v4020, %v381
    %v4024 = vsub.f32 0.0, %v4023
    %v4025 = vmul.f32 %v4024, 1.442695
    %v4026 = vpow.pop %v4025
    %v4027 = vadd.f32 %v4026, 1.0
    %v4028 = vrcp.pop %v4027
    %v4029 = vmul.f32 1.0, %v4028
    %v4030 = vtanh.pop %v4023
    %v4031 = vmul.f32 %v4029, %v3761
    %4033 = vrot.lane.b32.xlu0 %v4030, 64
    %v4034 = vpop.permute.xlu0 %4033
    %v4036 = vmul.f32 %v4029, %v4034
    %4038 = vrot.lane.b32.xlu0 %v4036, 32
    %v4039 = vpop.permute.xlu0 %4038
    %v4041 = vadd.f32 %v4031, %v4039
    %v4042 = vtanh.pop %v4041
    %4044 = vrot.lane.b32.xlu0 %v4042, 64
    %v4045 = vpop.permute.xlu0 %4044
    %v4047 = vmul.f32 %v4029, %v4045
    %v4048 = vadd.f32 %v3768, %v4047
    %s4049 = scalar_lea.vmem %s0, 28
    %v4050 = vld [vmem:[%s4049] sm:$0x3]
    %4052 = vset.pattern.permute.xlu0 0
    %4053 = vperm.xlu0 %4052, %v4050
    %v4054 = vpop.permute.xlu0 %4053
    %v4056 = vmul.f32 %v4054, %v123
    %4057 = vmatprep.subr.mxu0 0.0
    %4058 = vmatpush1.msra.mxu0 %v87
    %4059 = vmatprep.subr.mxu0 0.0
    %4060 = vmatpush1.msra.mxu0 %v88
    %4061 = vmatprep.subr.mxu0 0.0
    %4062 = vmatpush1.msra.mxu0 %v89
    %4063 = vmatprep.subr.mxu0 0.0
    %4064 = vmatpush1.msra.mxu0 %v90
    %4065 = vmatprep.subr.mxu0 0.0
    %4066 = vmatpush1.msra.mxu0 0.0
    %4067 = vmatprep.subr.mxu0 0.0
    %4068 = vmatpush1.msra.mxu0 0.0
    %4069 = vmatprep.subr.mxu0 0.0
    %4070 = vmatpush1.msra.mxu0 0.0
    %4071 = vmatprep.subr.mxu0 0.0
    %4072 = vmatpush1.msra.mxu0 0.0
    %4073 = vmatprep.subr.mxu0 0.0
    %4074 = vmatpush1.msra.mxu0 0.0
    %4075 = vmatprep.subr.mxu0 0.0
    %4076 = vmatpush1.msra.mxu0 0.0
    %4077 = vmatprep.subr.mxu0 0.0
    %4078 = vmatpush1.msra.mxu0 0.0
    %4079 = vmatprep.subr.mxu0 0.0
    %4080 = vmatpush1.msra.mxu0 0.0
    %4081 = vmatprep.subr.mxu0 0.0
    %4082 = vmatpush1.msra.mxu0 0.0
    %4083 = vmatprep.subr.mxu0 0.0
    %4084 = vmatpush1.msra.mxu0 0.0
    %4085 = vmatprep.subr.mxu0 0.0
    %4086 = vmatpush1.msra.mxu0 0.0
    %4087 = vmatprep.subr.mxu0 0.0
    %4088 = vmatpush1.msra.mxu0 0.0
    %4089 = vmatprep.subr.mxu0 0.0
    %4090 = vmatpush1.msra.mxu0 0.0
    %4091 = vmatprep.subr.mxu0 0.0
    %4092 = vmatpush1.msra.mxu0 0.0
    %4093 = vmatprep.subr.mxu0 0.0
    %4094 = vmatpush1.msra.mxu0 0.0
    %4095 = vmatprep.subr.mxu0 0.0
    %4096 = vmatpush1.msra.mxu0 0.0
    %4097 = vmatprep.subr.mxu0 0.0
    %4098 = vmatpush1.msra.mxu0 0.0
    %4099 = vmatprep.subr.mxu0 0.0
    %4100 = vmatpush1.msra.mxu0 0.0
    %4101 = vmatprep.subr.mxu0 0.0
    %4102 = vmatpush1.msra.mxu0 0.0
    %4103 = vmatprep.subr.mxu0 0.0
    %4104 = vmatpush1.msra.mxu0 0.0
    %4105 = vmatprep.subr.mxu0 0.0
    %4106 = vmatpush1.msra.mxu0 0.0
    %4107 = vmatprep.subr.mxu0 0.0
    %4108 = vmatpush1.msra.mxu0 0.0
    %4109 = vmatprep.subr.mxu0 0.0
    %4110 = vmatpush1.msra.mxu0 0.0
    %4111 = vmatprep.subr.mxu0 0.0
    %4112 = vmatpush1.msra.mxu0 0.0
    %4113 = vmatprep.subr.mxu0 0.0
    %4114 = vmatpush1.msra.mxu0 0.0
    %4115 = vmatprep.subr.mxu0 0.0
    %4116 = vmatpush1.msra.mxu0 0.0
    %4117 = vmatprep.subr.mxu0 0.0
    %4118 = vmatpush1.msra.mxu0 0.0
    %4119 = vmatprep.subr.mxu0 0.0
    %4120 = vmatpush1.msra.mxu0 0.0
    %4121 = vmatprep.mubr.f32.mxu0 0.0
    %4122 = vmatmul.mubr.f32.gmra.mrb[0].mxu0 %v3951
    %v4123 = vpop.f32.mrb[0].mxu0
    %v4124 = vadd.f32 0.0, %v4123
    %v4125 = vpop.f32.mrb[0].mxu0
    %4126 = vdwg.mxu0
    %v4127 = vadd.f32 %v4056, %v4124
    %v4128 = vadd.f32 %v4127, %v205
    %v4129 = vsub.f32 0.0, %v4128
    %v4130 = vmul.f32 %v4129, 1.442695
    %v4131 = vpow.pop %v4130
    %v4132 = vadd.f32 %v4131, 1.0
    %v4133 = vrcp.pop %v4132
    %v4134 = vmul.f32 1.0, %v4133
    %v4135 = vtanh.pop %v4128
    %v4136 = vmul.f32 %v4134, %v3866
    %4138 = vrot.lane.b32.xlu0 %v4135, 64
    %v4139 = vpop.permute.xlu0 %4138
    %v4141 = vmul.f32 %v4134, %v4139
    %4143 = vrot.lane.b32.xlu0 %v4141, 32
    %v4144 = vpop.permute.xlu0 %4143
    %v4146 = vadd.f32 %v4136, %v4144
    %v4147 = vtanh.pop %v4146
    %4149 = vrot.lane.b32.xlu0 %v4147, 64
    %v4150 = vpop.permute.xlu0 %4149
    %v4152 = vmul.f32 %v4134, %v4150
    %4154 = vrot.lane.b32.xlu0 %v4047, 32
    %v4155 = vpop.permute.xlu0 %4154
    %v4156 = vsel %vm126, %v4155, 0
    %4158 = vmatprep.subr.mxu0 0.0
    %4159 = vmatpush1.msra.mxu0 %v92
    %4160 = vmatprep.subr.mxu0 0.0
    %4161 = vmatpush1.msra.mxu0 %v93
    %4162 = vmatprep.subr.mxu0 0.0
    %4163 = vmatpush1.msra.mxu0 %v94
    %4164 = vmatprep.subr.mxu0 0.0
    %4165 = vmatpush1.msra.mxu0 %v95
    %4166 = vmatprep.subr.mxu0 0.0
    %4167 = vmatpush1.msra.mxu0 0.0
    %4168 = vmatprep.subr.mxu0 0.0
    %4169 = vmatpush1.msra.mxu0 0.0
    %4170 = vmatprep.subr.mxu0 0.0
    %4171 = vmatpush1.msra.mxu0 0.0
    %4172 = vmatprep.subr.mxu0 0.0
    %4173 = vmatpush1.msra.mxu0 0.0
    %4174 = vmatprep.subr.mxu0 0.0
    %4175 = vmatpush1.msra.mxu0 0.0
    %4176 = vmatprep.subr.mxu0 0.0
    %4177 = vmatpush1.msra.mxu0 0.0
    %4178 = vmatprep.subr.mxu0 0.0
    %4179 = vmatpush1.msra.mxu0 0.0
    %4180 = vmatprep.subr.mxu0 0.0
    %4181 = vmatpush1.msra.mxu0 0.0
    %4182 = vmatprep.subr.mxu0 0.0
    %4183 = vmatpush1.msra.mxu0 0.0
    %4184 = vmatprep.subr.mxu0 0.0
    %4185 = vmatpush1.msra.mxu0 0.0
    %4186 = vmatprep.subr.mxu0 0.0
    %4187 = vmatpush1.msra.mxu0 0.0
    %4188 = vmatprep.subr.mxu0 0.0
    %4189 = vmatpush1.msra.mxu0 0.0
    %4190 = vmatprep.subr.mxu0 0.0
    %4191 = vmatpush1.msra.mxu0 0.0
    %4192 = vmatprep.subr.mxu0 0.0
    %4193 = vmatpush1.msra.mxu0 0.0
    %4194 = vmatprep.subr.mxu0 0.0
    %4195 = vmatpush1.msra.mxu0 0.0
    %4196 = vmatprep.subr.mxu0 0.0
    %4197 = vmatpush1.msra.mxu0 0.0
    %4198 = vmatprep.subr.mxu0 0.0
    %4199 = vmatpush1.msra.mxu0 0.0
    %4200 = vmatprep.subr.mxu0 0.0
    %4201 = vmatpush1.msra.mxu0 0.0
    %4202 = vmatprep.subr.mxu0 0.0
    %4203 = vmatpush1.msra.mxu0 0.0
    %4204 = vmatprep.subr.mxu0 0.0
    %4205 = vmatpush1.msra.mxu0 0.0
    %4206 = vmatprep.subr.mxu0 0.0
    %4207 = vmatpush1.msra.mxu0 0.0
    %4208 = vmatprep.subr.mxu0 0.0
    %4209 = vmatpush1.msra.mxu0 0.0
    %4210 = vmatprep.subr.mxu0 0.0
    %4211 = vmatpush1.msra.mxu0 0.0
    %4212 = vmatprep.subr.mxu0 0.0
    %4213 = vmatpush1.msra.mxu0 0.0
    %4214 = vmatprep.subr.mxu0 0.0
    %4215 = vmatpush1.msra.mxu0 0.0
    %4216 = vmatprep.subr.mxu0 0.0
    %4217 = vmatpush1.msra.mxu0 0.0
    %4218 = vmatprep.subr.mxu0 0.0
    %4219 = vmatpush1.msra.mxu0 0.0
    %4220 = vmatprep.subr.mxu0 0.0
    %4221 = vmatpush1.msra.mxu0 0.0
    %4222 = vmatprep.mubr.f32.mxu0 0.0
    %4223 = vmatmul.mubr.f32.gmra.mrb[0].mxu0 %v4156
    %v4224 = vpop.f32.mrb[0].mxu0
    %v4225 = vadd.f32 0.0, %v4224
    %v4226 = vpop.f32.mrb[0].mxu0
    %4227 = vdwg.mxu0
    %4229 = vrot.lane.b32.xlu0 %v4152, 32
    %v4230 = vpop.permute.xlu0 %4229
    %v4231 = vsel %vm126, %v4230, 0
    %4233 = vmatprep.subr.mxu0 0.0
    %4234 = vmatpush1.msra.mxu0 %v83
    %4235 = vmatprep.subr.mxu0 0.0
    %4236 = vmatpush1.msra.mxu0 %v84
    %4237 = vmatprep.subr.mxu0 0.0
    %4238 = vmatpush1.msra.mxu0 %v85
    %4239 = vmatprep.subr.mxu0 0.0
    %4240 = vmatpush1.msra.mxu0 %v86
    %4241 = vmatprep.subr.mxu0 0.0
    %4242 = vmatpush1.msra.mxu0 0.0
    %4243 = vmatprep.subr.mxu0 0.0
    %4244 = vmatpush1.msra.mxu0 0.0
    %4245 = vmatprep.subr.mxu0 0.0
    %4246 = vmatpush1.msra.mxu0 0.0
    %4247 = vmatprep.subr.mxu0 0.0
    %4248 = vmatpush1.msra.mxu0 0.0
    %4249 = vmatprep.subr.mxu0 0.0
    %4250 = vmatpush1.msra.mxu0 0.0
    %4251 = vmatprep.subr.mxu0 0.0
    %4252 = vmatpush1.msra.mxu0 0.0
    %4253 = vmatprep.subr.mxu0 0.0
    %4254 = vmatpush1.msra.mxu0 0.0
    %4255 = vmatprep.subr.mxu0 0.0
    %4256 = vmatpush1.msra.mxu0 0.0
    %4257 = vmatprep.subr.mxu0 0.0
    %4258 = vmatpush1.msra.mxu0 0.0
    %4259 = vmatprep.subr.mxu0 0.0
    %4260 = vmatpush1.msra.mxu0 0.0
    %4261 = vmatprep.subr.mxu0 0.0
    %4262 = vmatpush1.msra.mxu0 0.0
    %4263 = vmatprep.subr.mxu0 0.0
    %4264 = vmatpush1.msra.mxu0 0.0
    %4265 = vmatprep.subr.mxu0 0.0
    %4266 = vmatpush1.msra.mxu0 0.0
    %4267 = vmatprep.subr.mxu0 0.0
    %4268 = vmatpush1.msra.mxu0 0.0
    %4269 = vmatprep.subr.mxu0 0.0
    %4270 = vmatpush1.msra.mxu0 0.0
    %4271 = vmatprep.subr.mxu0 0.0
    %4272 = vmatpush1.msra.mxu0 0.0
    %4273 = vmatprep.subr.mxu0 0.0
    %4274 = vmatpush1.msra.mxu0 0.0
    %4275 = vmatprep.subr.mxu0 0.0
    %4276 = vmatpush1.msra.mxu0 0.0
    %4277 = vmatprep.subr.mxu0 0.0
    %4278 = vmatpush1.msra.mxu0 0.0
    %4279 = vmatprep.subr.mxu0 0.0
    %4280 = vmatpush1.msra.mxu0 0.0
    %4281 = vmatprep.subr.mxu0 0.0
    %4282 = vmatpush1.msra.mxu0 0.0
    %4283 = vmatprep.subr.mxu0 0.0
    %4284 = vmatpush1.msra.mxu0 0.0
    %4285 = vmatprep.subr.mxu0 0.0
    %4286 = vmatpush1.msra.mxu0 0.0
    %4287 = vmatprep.subr.mxu0 0.0
    %4288 = vmatpush1.msra.mxu0 0.0
    %4289 = vmatprep.subr.mxu0 0.0
    %4290 = vmatpush1.msra.mxu0 0.0
    %4291 = vmatprep.subr.mxu0 0.0
    %4292 = vmatpush1.msra.mxu0 0.0
    %4293 = vmatprep.subr.mxu0 0.0
    %4294 = vmatpush1.msra.mxu0 0.0
    %4295 = vmatprep.subr.mxu0 0.0
    %4296 = vmatpush1.msra.mxu0 0.0
    %4297 = vmatprep.mubr.f32.mxu0 0.0
    %4298 = vmatmul.mubr.f32.gmra.mrb[0].mxu0 %v4231
    %v4299 = vpop.f32.mrb[0].mxu0
    %v4300 = vadd.f32 %v4225, %v4299
    %v4301 = vpop.f32.mrb[0].mxu0
    %4302 = vdwg.mxu0
    %v4303 = vadd.f32 %v4300, %v381
    %v4304 = vsub.f32 0.0, %v4303
    %v4305 = vmul.f32 %v4304, 1.442695
    %v4306 = vpow.pop %v4305
    %v4307 = vadd.f32 %v4306, 1.0
    %v4308 = vrcp.pop %v4307
    %v4309 = vmul.f32 1.0, %v4308
    %v4310 = vtanh.pop %v4303
    %v4311 = vmul.f32 %v4309, %v4041
    %4313 = vrot.lane.b32.xlu0 %v4310, 64
    %v4314 = vpop.permute.xlu0 %4313
    %v4316 = vmul.f32 %v4309, %v4314
    %4318 = vrot.lane.b32.xlu0 %v4316, 32
    %v4319 = vpop.permute.xlu0 %4318
    %v4321 = vadd.f32 %v4311, %v4319
    %v4322 = vtanh.pop %v4321
    %4324 = vrot.lane.b32.xlu0 %v4322, 64
    %v4325 = vpop.permute.xlu0 %4324
    %v4327 = vmul.f32 %v4309, %v4325
    %v4328 = vadd.f32 %v4048, %v4327
    %s4329 = scalar_lea.vmem %s0, 30
    %v4330 = vld [vmem:[%s4329] sm:$0x3]
    %4332 = vset.pattern.permute.xlu0 0
    %4333 = vperm.xlu0 %4332, %v4330
    %v4334 = vpop.permute.xlu0 %4333
    %v4336 = vmul.f32 %v4334, %v123
    %4337 = vmatprep.subr.mxu0 0.0
    %4338 = vmatpush1.msra.mxu0 %v87
    %4339 = vmatprep.subr.mxu0 0.0
    %4340 = vmatpush1.msra.mxu0 %v88
    %4341 = vmatprep.subr.mxu0 0.0
    %4342 = vmatpush1.msra.mxu0 %v89
    %4343 = vmatprep.subr.mxu0 0.0
    %4344 = vmatpush1.msra.mxu0 %v90
    %4345 = vmatprep.subr.mxu0 0.0
    %4346 = vmatpush1.msra.mxu0 0.0
    %4347 = vmatprep.subr.mxu0 0.0
    %4348 = vmatpush1.msra.mxu0 0.0
    %4349 = vmatprep.subr.mxu0 0.0
    %4350 = vmatpush1.msra.mxu0 0.0
    %4351 = vmatprep.subr.mxu0 0.0
    %4352 = vmatpush1.msra.mxu0 0.0
    %4353 = vmatprep.subr.mxu0 0.0
    %4354 = vmatpush1.msra.mxu0 0.0
    %4355 = vmatprep.subr.mxu0 0.0
    %4356 = vmatpush1.msra.mxu0 0.0
    %4357 = vmatprep.subr.mxu0 0.0
    %4358 = vmatpush1.msra.mxu0 0.0
    %4359 = vmatprep.subr.mxu0 0.0
    %4360 = vmatpush1.msra.mxu0 0.0
    %4361 = vmatprep.subr.mxu0 0.0
    %4362 = vmatpush1.msra.mxu0 0.0
    %4363 = vmatprep.subr.mxu0 0.0
    %4364 = vmatpush1.msra.mxu0 0.0
    %4365 = vmatprep.subr.mxu0 0.0
    %4366 = vmatpush1.msra.mxu0 0.0
    %4367 = vmatprep.subr.mxu0 0.0
    %4368 = vmatpush1.msra.mxu0 0.0
    %4369 = vmatprep.subr.mxu0 0.0
    %4370 = vmatpush1.msra.mxu0 0.0
    %4371 = vmatprep.subr.mxu0 0.0
    %4372 = vmatpush1.msra.mxu0 0.0
    %4373 = vmatprep.subr.mxu0 0.0
    %4374 = vmatpush1.msra.mxu0 0.0
    %4375 = vmatprep.subr.mxu0 0.0
    %4376 = vmatpush1.msra.mxu0 0.0
    %4377 = vmatprep.subr.mxu0 0.0
    %4378 = vmatpush1.msra.mxu0 0.0
    %4379 = vmatprep.subr.mxu0 0.0
    %4380 = vmatpush1.msra.mxu0 0.0
    %4381 = vmatprep.subr.mxu0 0.0
    %4382 = vmatpush1.msra.mxu0 0.0
    %4383 = vmatprep.subr.mxu0 0.0
    %4384 = vmatpush1.msra.mxu0 0.0
    %4385 = vmatprep.subr.mxu0 0.0
    %4386 = vmatpush1.msra.mxu0 0.0
    %4387 = vmatprep.subr.mxu0 0.0
    %4388 = vmatpush1.msra.mxu0 0.0
    %4389 = vmatprep.subr.mxu0 0.0
    %4390 = vmatpush1.msra.mxu0 0.0
    %4391 = vmatprep.subr.mxu0 0.0
    %4392 = vmatpush1.msra.mxu0 0.0
    %4393 = vmatprep.subr.mxu0 0.0
    %4394 = vmatpush1.msra.mxu0 0.0
    %4395 = vmatprep.subr.mxu0 0.0
    %4396 = vmatpush1.msra.mxu0 0.0
    %4397 = vmatprep.subr.mxu0 0.0
    %4398 = vmatpush1.msra.mxu0 0.0
    %4399 = vmatprep.subr.mxu0 0.0
    %4400 = vmatpush1.msra.mxu0 0.0
    %4401 = vmatprep.mubr.f32.mxu0 0.0
    %4402 = vmatmul.mubr.f32.gmra.mrb[0].mxu0 %v4231
    %v4403 = vpop.f32.mrb[0].mxu0
    %v4404 = vadd.f32 0.0, %v4403
    %v4405 = vpop.f32.mrb[0].mxu0
    %4406 = vdwg.mxu0
    %v4407 = vadd.f32 %v4336, %v4404
    %v4408 = vadd.f32 %v4407, %v205
    %v4409 = vsub.f32 0.0, %v4408
    %v4410 = vmul.f32 %v4409, 1.442695
    %v4411 = vpow.pop %v4410
    %v4412 = vadd.f32 %v4411, 1.0
    %v4413 = vrcp.pop %v4412
    %v4414 = vmul.f32 1.0, %v4413
    %v4415 = vtanh.pop %v4408
    %v4416 = vmul.f32 %v4414, %v4146
    %4418 = vrot.lane.b32.xlu0 %v4415, 64
    %v4419 = vpop.permute.xlu0 %4418
    %v4421 = vmul.f32 %v4414, %v4419
    %4423 = vrot.lane.b32.xlu0 %v4421, 32
    %v4424 = vpop.permute.xlu0 %4423
    %v4426 = vadd.f32 %v4416, %v4424
    %v4427 = vtanh.pop %v4426
    %4429 = vrot.lane.b32.xlu0 %v4427, 64
    %v4430 = vpop.permute.xlu0 %4429
    %v4432 = vmul.f32 %v4414, %v4430
    %4434 = vrot.lane.b32.xlu0 %v4327, 32
    %v4435 = vpop.permute.xlu0 %4434
    %v4436 = vsel %vm126, %v4435, 0
    %4438 = vmatprep.subr.mxu0 0.0
    %4439 = vmatpush1.msra.mxu0 %v92
    %4440 = vmatprep.subr.mxu0 0.0
    %4441 = vmatpush1.msra.mxu0 %v93
    %4442 = vmatprep.subr.mxu0 0.0
    %4443 = vmatpush1.msra.mxu0 %v94
    %4444 = vmatprep.subr.mxu0 0.0
    %4445 = vmatpush1.msra.mxu0 %v95
    %4446 = vmatprep.subr.mxu0 0.0
    %4447 = vmatpush1.msra.mxu0 0.0
    %4448 = vmatprep.subr.mxu0 0.0
    %4449 = vmatpush1.msra.mxu0 0.0
    %4450 = vmatprep.subr.mxu0 0.0
    %4451 = vmatpush1.msra.mxu0 0.0
    %4452 = vmatprep.subr.mxu0 0.0
    %4453 = vmatpush1.msra.mxu0 0.0
    %4454 = vmatprep.subr.mxu0 0.0
    %4455 = vmatpush1.msra.mxu0 0.0
    %4456 = vmatprep.subr.mxu0 0.0
    %4457 = vmatpush1.msra.mxu0 0.0
    %4458 = vmatprep.subr.mxu0 0.0
    %4459 = vmatpush1.msra.mxu0 0.0
    %4460 = vmatprep.subr.mxu0 0.0
    %4461 = vmatpush1.msra.mxu0 0.0
    %4462 = vmatprep.subr.mxu0 0.0
    %4463 = vmatpush1.msra.mxu0 0.0
    %4464 = vmatprep.subr.mxu0 0.0
    %4465 = vmatpush1.msra.mxu0 0.0
    %4466 = vmatprep.subr.mxu0 0.0
    %4467 = vmatpush1.msra.mxu0 0.0
    %4468 = vmatprep.subr.mxu0 0.0
    %4469 = vmatpush1.msra.mxu0 0.0
    %4470 = vmatprep.subr.mxu0 0.0
    %4471 = vmatpush1.msra.mxu0 0.0
    %4472 = vmatprep.subr.mxu0 0.0
    %4473 = vmatpush1.msra.mxu0 0.0
    %4474 = vmatprep.subr.mxu0 0.0
    %4475 = vmatpush1.msra.mxu0 0.0
    %4476 = vmatprep.subr.mxu0 0.0
    %4477 = vmatpush1.msra.mxu0 0.0
    %4478 = vmatprep.subr.mxu0 0.0
    %4479 = vmatpush1.msra.mxu0 0.0
    %4480 = vmatprep.subr.mxu0 0.0
    %4481 = vmatpush1.msra.mxu0 0.0
    %4482 = vmatprep.subr.mxu0 0.0
    %4483 = vmatpush1.msra.mxu0 0.0
    %4484 = vmatprep.subr.mxu0 0.0
    %4485 = vmatpush1.msra.mxu0 0.0
    %4486 = vmatprep.subr.mxu0 0.0
    %4487 = vmatpush1.msra.mxu0 0.0
    %4488 = vmatprep.subr.mxu0 0.0
    %4489 = vmatpush1.msra.mxu0 0.0
    %4490 = vmatprep.subr.mxu0 0.0
    %4491 = vmatpush1.msra.mxu0 0.0
    %4492 = vmatprep.subr.mxu0 0.0
    %4493 = vmatpush1.msra.mxu0 0.0
    %4494 = vmatprep.subr.mxu0 0.0
    %4495 = vmatpush1.msra.mxu0 0.0
    %4496 = vmatprep.subr.mxu0 0.0
    %4497 = vmatpush1.msra.mxu0 0.0
    %4498 = vmatprep.subr.mxu0 0.0
    %4499 = vmatpush1.msra.mxu0 0.0
    %4500 = vmatprep.subr.mxu0 0.0
    %4501 = vmatpush1.msra.mxu0 0.0
    %4502 = vmatprep.mubr.f32.mxu0 0.0
    %4503 = vmatmul.mubr.f32.gmra.mrb[0].mxu0 %v4436
    %v4504 = vpop.f32.mrb[0].mxu0
    %v4505 = vadd.f32 0.0, %v4504
    %v4506 = vpop.f32.mrb[0].mxu0
    %4507 = vdwg.mxu0
    %4509 = vrot.lane.b32.xlu0 %v4432, 32
    %v4510 = vpop.permute.xlu0 %4509
    %v4511 = vsel %vm126, %v4510, 0
    %4513 = vmatprep.subr.mxu0 0.0
    %4514 = vmatpush1.msra.mxu0 %v83
    %4515 = vmatprep.subr.mxu0 0.0
    %4516 = vmatpush1.msra.mxu0 %v84
    %4517 = vmatprep.subr.mxu0 0.0
    %4518 = vmatpush1.msra.mxu0 %v85
    %4519 = vmatprep.subr.mxu0 0.0
    %4520 = vmatpush1.msra.mxu0 %v86
    %4521 = vmatprep.subr.mxu0 0.0
    %4522 = vmatpush1.msra.mxu0 0.0
    %4523 = vmatprep.subr.mxu0 0.0
    %4524 = vmatpush1.msra.mxu0 0.0
    %4525 = vmatprep.subr.mxu0 0.0
    %4526 = vmatpush1.msra.mxu0 0.0
    %4527 = vmatprep.subr.mxu0 0.0
    %4528 = vmatpush1.msra.mxu0 0.0
    %4529 = vmatprep.subr.mxu0 0.0
    %4530 = vmatpush1.msra.mxu0 0.0
    %4531 = vmatprep.subr.mxu0 0.0
    %4532 = vmatpush1.msra.mxu0 0.0
    %4533 = vmatprep.subr.mxu0 0.0
    %4534 = vmatpush1.msra.mxu0 0.0
    %4535 = vmatprep.subr.mxu0 0.0
    %4536 = vmatpush1.msra.mxu0 0.0
    %4537 = vmatprep.subr.mxu0 0.0
    %4538 = vmatpush1.msra.mxu0 0.0
    %4539 = vmatprep.subr.mxu0 0.0
    %4540 = vmatpush1.msra.mxu0 0.0
    %4541 = vmatprep.subr.mxu0 0.0
    %4542 = vmatpush1.msra.mxu0 0.0
    %4543 = vmatprep.subr.mxu0 0.0
    %4544 = vmatpush1.msra.mxu0 0.0
    %4545 = vmatprep.subr.mxu0 0.0
    %4546 = vmatpush1.msra.mxu0 0.0
    %4547 = vmatprep.subr.mxu0 0.0
    %4548 = vmatpush1.msra.mxu0 0.0
    %4549 = vmatprep.subr.mxu0 0.0
    %4550 = vmatpush1.msra.mxu0 0.0
    %4551 = vmatprep.subr.mxu0 0.0
    %4552 = vmatpush1.msra.mxu0 0.0
    %4553 = vmatprep.subr.mxu0 0.0
    %4554 = vmatpush1.msra.mxu0 0.0
    %4555 = vmatprep.subr.mxu0 0.0
    %4556 = vmatpush1.msra.mxu0 0.0
    %4557 = vmatprep.subr.mxu0 0.0
    %4558 = vmatpush1.msra.mxu0 0.0
    %4559 = vmatprep.subr.mxu0 0.0
    %4560 = vmatpush1.msra.mxu0 0.0
    %4561 = vmatprep.subr.mxu0 0.0
    %4562 = vmatpush1.msra.mxu0 0.0
    %4563 = vmatprep.subr.mxu0 0.0
    %4564 = vmatpush1.msra.mxu0 0.0
    %4565 = vmatprep.subr.mxu0 0.0
    %4566 = vmatpush1.msra.mxu0 0.0
    %4567 = vmatprep.subr.mxu0 0.0
    %4568 = vmatpush1.msra.mxu0 0.0
    %4569 = vmatprep.subr.mxu0 0.0
    %4570 = vmatpush1.msra.mxu0 0.0
    %4571 = vmatprep.subr.mxu0 0.0
    %4572 = vmatpush1.msra.mxu0 0.0
    %4573 = vmatprep.subr.mxu0 0.0
    %4574 = vmatpush1.msra.mxu0 0.0
    %4575 = vmatprep.subr.mxu0 0.0
    %4576 = vmatpush1.msra.mxu0 0.0
    %4577 = vmatprep.mubr.f32.mxu0 0.0
    %4578 = vmatmul.mubr.f32.gmra.mrb[0].mxu0 %v4511
    %v4579 = vpop.f32.mrb[0].mxu0
    %v4580 = vadd.f32 %v4505, %v4579
    %v4581 = vpop.f32.mrb[0].mxu0
    %4582 = vdwg.mxu0
    %v4583 = vadd.f32 %v4580, %v381
    %v4584 = vsub.f32 0.0, %v4583
    %v4585 = vmul.f32 %v4584, 1.442695
    %v4586 = vpow.pop %v4585
    %v4587 = vadd.f32 %v4586, 1.0
    %v4588 = vrcp.pop %v4587
    %v4589 = vmul.f32 1.0, %v4588
    %v4590 = vtanh.pop %v4583
    %v4591 = vmul.f32 %v4589, %v4321
    %4593 = vrot.lane.b32.xlu0 %v4590, 64
    %v4594 = vpop.permute.xlu0 %4593
    %v4596 = vmul.f32 %v4589, %v4594
    %4598 = vrot.lane.b32.xlu0 %v4596, 32
    %v4599 = vpop.permute.xlu0 %4598
    %v4601 = vadd.f32 %v4591, %v4599
    %v4602 = vtanh.pop %v4601
    %4604 = vrot.lane.b32.xlu0 %v4602, 64
    %v4605 = vpop.permute.xlu0 %4604
    %v4607 = vmul.f32 %v4589, %v4605
    %v4608 = vadd.f32 %v4328, %v4607
    %4610 = vrot.lane.b32.xlu0 %v4608, 32
    %v4611 = vpop.permute.xlu0 %4610
    %vm4613 = vcmask 254976
    %4614 = vst.msk [vmem:[#allocation9] sm:$0x3] %vm4613, %v4611
    %4615 = vmatprep.subr.mxu0 0.0
    %4616 = vmatpush1.msra.mxu0 %v103
    %4617 = vmatprep.subr.mxu0 0.0
    %4618 = vmatpush1.msra.mxu0 %v104
    %4619 = vmatprep.subr.mxu0 0.0
    %4620 = vmatpush1.msra.mxu0 %v105
    %4621 = vmatprep.subr.mxu0 0.0
    %4622 = vmatpush1.msra.mxu0 %v106
    %4623 = vmatprep.subr.mxu0 0.0
    %4624 = vmatpush1.msra.mxu0 0.0
    %4625 = vmatprep.subr.mxu0 0.0
    %4626 = vmatpush1.msra.mxu0 0.0
    %4627 = vmatprep.subr.mxu0 0.0
    %4628 = vmatpush1.msra.mxu0 0.0
    %4629 = vmatprep.subr.mxu0 0.0
    %4630 = vmatpush1.msra.mxu0 0.0
    %4631 = vmatprep.subr.mxu0 0.0
    %4632 = vmatpush1.msra.mxu0 0.0
    %4633 = vmatprep.subr.mxu0 0.0
    %4634 = vmatpush1.msra.mxu0 0.0
    %4635 = vmatprep.subr.mxu0 0.0
    %4636 = vmatpush1.msra.mxu0 0.0
    %4637 = vmatprep.subr.mxu0 0.0
    %4638 = vmatpush1.msra.mxu0 0.0
    %4639 = vmatprep.subr.mxu0 0.0
    %4640 = vmatpush1.msra.mxu0 0.0
    %4641 = vmatprep.subr.mxu0 0.0
    %4642 = vmatpush1.msra.mxu0 0.0
    %4643 = vmatprep.subr.mxu0 0.0
    %4644 = vmatpush1.msra.mxu0 0.0
    %4645 = vmatprep.subr.mxu0 0.0
    %4646 = vmatpush1.msra.mxu0 0.0
    %4647 = vmatprep.subr.mxu0 0.0
    %4648 = vmatpush1.msra.mxu0 0.0
    %4649 = vmatprep.subr.mxu0 0.0
    %4650 = vmatpush1.msra.mxu0 0.0
    %4651 = vmatprep.subr.mxu0 0.0
    %4652 = vmatpush1.msra.mxu0 0.0
    %4653 = vmatprep.subr.mxu0 0.0
    %4654 = vmatpush1.msra.mxu0 0.0
    %4655 = vmatprep.subr.mxu0 0.0
    %4656 = vmatpush1.msra.mxu0 0.0
    %4657 = vmatprep.subr.mxu0 0.0
    %4658 = vmatpush1.msra.mxu0 0.0
    %4659 = vmatprep.subr.mxu0 0.0
    %4660 = vmatpush1.msra.mxu0 0.0
    %4661 = vmatprep.subr.mxu0 0.0
    %4662 = vmatpush1.msra.mxu0 0.0
    %4663 = vmatprep.subr.mxu0 0.0
    %4664 = vmatpush1.msra.mxu0 0.0
    %4665 = vmatprep.subr.mxu0 0.0
    %4666 = vmatpush1.msra.mxu0 0.0
    %4667 = vmatprep.subr.mxu0 0.0
    %4668 = vmatpush1.msra.mxu0 0.0
    %4669 = vmatprep.subr.mxu0 0.0
    %4670 = vmatpush1.msra.mxu0 0.0
    %4671 = vmatprep.subr.mxu0 0.0
    %4672 = vmatpush1.msra.mxu0 0.0
    %4673 = vmatprep.subr.mxu0 0.0
    %4674 = vmatpush1.msra.mxu0 0.0
    %4675 = vmatprep.subr.mxu0 0.0
    %4676 = vmatpush1.msra.mxu0 0.0
    %4677 = vmatprep.subr.mxu0 0.0
    %4678 = vmatpush1.msra.mxu0 0.0
    %4679 = vmatprep.mubr.f32.mxu0 0.0
    %4680 = vmatmul.mubr.f32.gmra.mrb[0].mxu0 %v128
    %v4681 = vpop.f32.mrb[0].mxu0
    %v4682 = vadd.f32 0.0, %v4681
    %v4683 = vpop.f32.mrb[0].mxu0
    %4684 = vdwg.mxu0
    %v4685 = vsel %vm126, %v4611, 0
    %4687 = vmatprep.subr.mxu0 0.0
    %4688 = vmatpush1.msra.mxu0 %v99
    %4689 = vmatprep.subr.mxu0 0.0
    %4690 = vmatpush1.msra.mxu0 %v100
    %4691 = vmatprep.subr.mxu0 0.0
    %4692 = vmatpush1.msra.mxu0 %v101
    %4693 = vmatprep.subr.mxu0 0.0
    %4694 = vmatpush1.msra.mxu0 %v102
    %4695 = vmatprep.subr.mxu0 0.0
    %4696 = vmatpush1.msra.mxu0 0.0
    %4697 = vmatprep.subr.mxu0 0.0
    %4698 = vmatpush1.msra.mxu0 0.0
    %4699 = vmatprep.subr.mxu0 0.0
    %4700 = vmatpush1.msra.mxu0 0.0
    %4701 = vmatprep.subr.mxu0 0.0
    %4702 = vmatpush1.msra.mxu0 0.0
    %4703 = vmatprep.subr.mxu0 0.0
    %4704 = vmatpush1.msra.mxu0 0.0
    %4705 = vmatprep.subr.mxu0 0.0
    %4706 = vmatpush1.msra.mxu0 0.0
    %4707 = vmatprep.subr.mxu0 0.0
    %4708 = vmatpush1.msra.mxu0 0.0
    %4709 = vmatprep.subr.mxu0 0.0
    %4710 = vmatpush1.msra.mxu0 0.0
    %4711 = vmatprep.subr.mxu0 0.0
    %4712 = vmatpush1.msra.mxu0 0.0
    %4713 = vmatprep.subr.mxu0 0.0
    %4714 = vmatpush1.msra.mxu0 0.0
    %4715 = vmatprep.subr.mxu0 0.0
    %4716 = vmatpush1.msra.mxu0 0.0
    %4717 = vmatprep.subr.mxu0 0.0
    %4718 = vmatpush1.msra.mxu0 0.0
    %4719 = vmatprep.subr.mxu0 0.0
    %4720 = vmatpush1.msra.mxu0 0.0
    %4721 = vmatprep.subr.mxu0 0.0
    %4722 = vmatpush1.msra.mxu0 0.0
    %4723 = vmatprep.subr.mxu0 0.0
    %4724 = vmatpush1.msra.mxu0 0.0
    %4725 = vmatprep.subr.mxu0 0.0
    %4726 = vmatpush1.msra.mxu0 0.0
    %4727 = vmatprep.subr.mxu0 0.0
    %4728 = vmatpush1.msra.mxu0 0.0
    %4729 = vmatprep.subr.mxu0 0.0
    %4730 = vmatpush1.msra.mxu0 0.0
    %4731 = vmatprep.subr.mxu0 0.0
    %4732 = vmatpush1.msra.mxu0 0.0
    %4733 = vmatprep.subr.mxu0 0.0
    %4734 = vmatpush1.msra.mxu0 0.0
    %4735 = vmatprep.subr.mxu0 0.0
    %4736 = vmatpush1.msra.mxu0 0.0
    %4737 = vmatprep.subr.mxu0 0.0
    %4738 = vmatpush1.msra.mxu0 0.0
    %4739 = vmatprep.subr.mxu0 0.0
    %4740 = vmatpush1.msra.mxu0 0.0
    %4741 = vmatprep.subr.mxu0 0.0
    %4742 = vmatpush1.msra.mxu0 0.0
    %4743 = vmatprep.subr.mxu0 0.0
    %4744 = vmatpush1.msra.mxu0 0.0
    %4745 = vmatprep.subr.mxu0 0.0
    %4746 = vmatpush1.msra.mxu0 0.0
    %4747 = vmatprep.subr.mxu0 0.0
    %4748 = vmatpush1.msra.mxu0 0.0
    %4749 = vmatprep.subr.mxu0 0.0
    %4750 = vmatpush1.msra.mxu0 0.0
    %4751 = vmatprep.mubr.f32.mxu0 0.0
    %4752 = vmatmul.mubr.f32.gmra.mrb[0].mxu0 %v4685
    %v4753 = vpop.f32.mrb[0].mxu0
    %v4754 = vadd.f32 %v4682, %v4753
    %v4755 = vpop.f32.mrb[0].mxu0
    %4756 = vdwg.mxu0
    %v4758 = vlaneseq
    %v4759 = vshrl.u32 %v4758, 7
    %v4760 = vsub.s32 0, %v4759
    %v4761 = vrot.slane %v107, %v4760
    %v4763 = vadd.f32 %v4754, %v4761
    %v4764 = vsub.f32 0.0, %v4763
    %v4765 = vmul.f32 %v4764, 1.442695
    %v4766 = vpow.pop %v4765
    %v4767 = vadd.f32 %v4766, 1.0
    %v4768 = vrcp.pop %v4767
    %v4769 = vmul.f32 1.0, %v4768
    %v4770 = vtanh.pop %v4763
    %v4771 = vmul.f32 %v4769, 0.0
    %4773 = vrot.lane.b32.xlu0 %v4770, 64
    %v4774 = vpop.permute.xlu0 %4773
    %v4776 = vmul.f32 %v4769, %v4774
    %4778 = vrot.lane.b32.xlu0 %v4776, 32
    %v4779 = vpop.permute.xlu0 %4778
    %v4781 = vadd.f32 %v4771, %v4779
    %v4782 = vtanh.pop %v4781
    %4784 = vrot.lane.b32.xlu0 %v4782, 64
    %v4785 = vpop.permute.xlu0 %4784
    %v4787 = vmul.f32 %v4769, %v4785
    %v4789 = vlaneseq
    %v4790 = vshrl.u32 %v4789, 7
    %v4791 = vsub.s32 0, %v4790
    %v4792 = vrot.slane %v112, %v4791
    %4795 = vrot.lane.b32.xlu0 %v4787, 32
    %v4796 = vpop.permute.xlu0 %4795
    %v4797 = vsel %vm126, %v4796, 0
    %4799 = vmatprep.subr.mxu0 0.0
    %4800 = vmatpush1.msra.mxu0 %v108
    %4801 = vmatprep.subr.mxu0 0.0
    %4802 = vmatpush1.msra.mxu0 %v109
    %4803 = vmatprep.subr.mxu0 0.0
    %4804 = vmatpush1.msra.mxu0 %v110
    %4805 = vmatprep.subr.mxu0 0.0
    %4806 = vmatpush1.msra.mxu0 %v111
    %4807 = vmatprep.subr.mxu0 0.0
    %4808 = vmatpush1.msra.mxu0 0.0
    %4809 = vmatprep.subr.mxu0 0.0
    %4810 = vmatpush1.msra.mxu0 0.0
    %4811 = vmatprep.subr.mxu0 0.0
    %4812 = vmatpush1.msra.mxu0 0.0
    %4813 = vmatprep.subr.mxu0 0.0
    %4814 = vmatpush1.msra.mxu0 0.0
    %4815 = vmatprep.subr.mxu0 0.0
    %4816 = vmatpush1.msra.mxu0 0.0
    %4817 = vmatprep.subr.mxu0 0.0
    %4818 = vmatpush1.msra.mxu0 0.0
    %4819 = vmatprep.subr.mxu0 0.0
    %4820 = vmatpush1.msra.mxu0 0.0
    %4821 = vmatprep.subr.mxu0 0.0
    %4822 = vmatpush1.msra.mxu0 0.0
    %4823 = vmatprep.subr.mxu0 0.0
    %4824 = vmatpush1.msra.mxu0 0.0
    %4825 = vmatprep.subr.mxu0 0.0
    %4826 = vmatpush1.msra.mxu0 0.0
    %4827 = vmatprep.subr.mxu0 0.0
    %4828 = vmatpush1.msra.mxu0 0.0
    %4829 = vmatprep.subr.mxu0 0.0
    %4830 = vmatpush1.msra.mxu0 0.0
    %4831 = vmatprep.subr.mxu0 0.0
    %4832 = vmatpush1.msra.mxu0 0.0
    %4833 = vmatprep.subr.mxu0 0.0
    %4834 = vmatpush1.msra.mxu0 0.0
    %4835 = vmatprep.subr.mxu0 0.0
    %4836 = vmatpush1.msra.mxu0 0.0
    %4837 = vmatprep.subr.mxu0 0.0
    %4838 = vmatpush1.msra.mxu0 0.0
    %4839 = vmatprep.subr.mxu0 0.0
    %4840 = vmatpush1.msra.mxu0 0.0
    %4841 = vmatprep.subr.mxu0 0.0
    %4842 = vmatpush1.msra.mxu0 0.0
    %4843 = vmatprep.subr.mxu0 0.0
    %4844 = vmatpush1.msra.mxu0 0.0
    %4845 = vmatprep.subr.mxu0 0.0
    %4846 = vmatpush1.msra.mxu0 0.0
    %4847 = vmatprep.subr.mxu0 0.0
    %4848 = vmatpush1.msra.mxu0 0.0
    %4849 = vmatprep.subr.mxu0 0.0
    %4850 = vmatpush1.msra.mxu0 0.0
    %4851 = vmatprep.subr.mxu0 0.0
    %4852 = vmatpush1.msra.mxu0 0.0
    %4853 = vmatprep.subr.mxu0 0.0
    %4854 = vmatpush1.msra.mxu0 0.0
    %4855 = vmatprep.subr.mxu0 0.0
    %4856 = vmatpush1.msra.mxu0 0.0
    %4857 = vmatprep.subr.mxu0 0.0
    %4858 = vmatpush1.msra.mxu0 0.0
    %4859 = vmatprep.subr.mxu0 0.0
    %4860 = vmatpush1.msra.mxu0 0.0
    %4861 = vmatprep.subr.mxu0 0.0
    %4862 = vmatpush1.msra.mxu0 0.0
    %4863 = vmatprep.mubr.f32.mxu0 0.0
    %4864 = vmatmul.mubr.f32.gmra.mrb[0].mxu0 %v4797
    %v4865 = vpop.f32.mrb[0].mxu0
    %v4866 = vadd.f32 %v4792, %v4865
    %v4867 = vpop.f32.mrb[0].mxu0
    %4868 = vdwg.mxu0
    %vm4869 = vcmask 1024
    %4870 = vst.msk [vmem:[%s10] sm:$0x3] %vm4869, %v4866
    %4871 = vmatprep.subr.mxu0 0.0
    %4872 = vmatpush1.msra.mxu0 %v103
    %4873 = vmatprep.subr.mxu0 0.0
    %4874 = vmatpush1.msra.mxu0 %v104
    %4875 = vmatprep.subr.mxu0 0.0
    %4876 = vmatpush1.msra.mxu0 %v105
    %4877 = vmatprep.subr.mxu0 0.0
    %4878 = vmatpush1.msra.mxu0 %v106
    %4879 = vmatprep.subr.mxu0 0.0
    %4880 = vmatpush1.msra.mxu0 0.0
    %4881 = vmatprep.subr.mxu0 0.0
    %4882 = vmatpush1.msra.mxu0 0.0
    %4883 = vmatprep.subr.mxu0 0.0
    %4884 = vmatpush1.msra.mxu0 0.0
    %4885 = vmatprep.subr.mxu0 0.0
    %4886 = vmatpush1.msra.mxu0 0.0
    %4887 = vmatprep.subr.mxu0 0.0
    %4888 = vmatpush1.msra.mxu0 0.0
    %4889 = vmatprep.subr.mxu0 0.0
    %4890 = vmatpush1.msra.mxu0 0.0
    %4891 = vmatprep.subr.mxu0 0.0
    %4892 = vmatpush1.msra.mxu0 0.0
    %4893 = vmatprep.subr.mxu0 0.0
    %4894 = vmatpush1.msra.mxu0 0.0
    %4895 = vmatprep.subr.mxu0 0.0
    %4896 = vmatpush1.msra.mxu0 0.0
    %4897 = vmatprep.subr.mxu0 0.0
    %4898 = vmatpush1.msra.mxu0 0.0
    %4899 = vmatprep.subr.mxu0 0.0
    %4900 = vmatpush1.msra.mxu0 0.0
    %4901 = vmatprep.subr.mxu0 0.0
    %4902 = vmatpush1.msra.mxu0 0.0
    %4903 = vmatprep.subr.mxu0 0.0
    %4904 = vmatpush1.msra.mxu0 0.0
    %4905 = vmatprep.subr.mxu0 0.0
    %4906 = vmatpush1.msra.mxu0 0.0
    %4907 = vmatprep.subr.mxu0 0.0
    %4908 = vmatpush1.msra.mxu0 0.0
    %4909 = vmatprep.subr.mxu0 0.0
    %4910 = vmatpush1.msra.mxu0 0.0
    %4911 = vmatprep.subr.mxu0 0.0
    %4912 = vmatpush1.msra.mxu0 0.0
    %4913 = vmatprep.subr.mxu0 0.0
    %4914 = vmatpush1.msra.mxu0 0.0
    %4915 = vmatprep.subr.mxu0 0.0
    %4916 = vmatpush1.msra.mxu0 0.0
    %4917 = vmatprep.subr.mxu0 0.0
    %4918 = vmatpush1.msra.mxu0 0.0
    %4919 = vmatprep.subr.mxu0 0.0
    %4920 = vmatpush1.msra.mxu0 0.0
    %4921 = vmatprep.subr.mxu0 0.0
    %4922 = vmatpush1.msra.mxu0 0.0
    %4923 = vmatprep.subr.mxu0 0.0
    %4924 = vmatpush1.msra.mxu0 0.0
    %4925 = vmatprep.subr.mxu0 0.0
    %4926 = vmatpush1.msra.mxu0 0.0
    %4927 = vmatprep.subr.mxu0 0.0
    %4928 = vmatpush1.msra.mxu0 0.0
    %4929 = vmatprep.subr.mxu0 0.0
    %4930 = vmatpush1.msra.mxu0 0.0
    %4931 = vmatprep.subr.mxu0 0.0
    %4932 = vmatpush1.msra.mxu0 0.0
    %4933 = vmatprep.subr.mxu0 0.0
    %4934 = vmatpush1.msra.mxu0 0.0
    %4935 = vmatprep.mubr.f32.mxu0 0.0
    %4936 = vmatmul.mubr.f32.gmra.mrb[0].mxu0 %v4797
    %v4937 = vpop.f32.mrb[0].mxu0
    %v4938 = vadd.f32 0.0, %v4937
    %v4939 = vpop.f32.mrb[0].mxu0
    %4940 = vdwg.mxu0
    %4941 = vmatprep.subr.mxu0 0.0
    %4942 = vmatpush1.msra.mxu0 %v99
    %4943 = vmatprep.subr.mxu0 0.0
    %4944 = vmatpush1.msra.mxu0 %v100
    %4945 = vmatprep.subr.mxu0 0.0
    %4946 = vmatpush1.msra.mxu0 %v101
    %4947 = vmatprep.subr.mxu0 0.0
    %4948 = vmatpush1.msra.mxu0 %v102
    %4949 = vmatprep.subr.mxu0 0.0
    %4950 = vmatpush1.msra.mxu0 0.0
    %4951 = vmatprep.subr.mxu0 0.0
    %4952 = vmatpush1.msra.mxu0 0.0
    %4953 = vmatprep.subr.mxu0 0.0
    %4954 = vmatpush1.msra.mxu0 0.0
    %4955 = vmatprep.subr.mxu0 0.0
    %4956 = vmatpush1.msra.mxu0 0.0
    %4957 = vmatprep.subr.mxu0 0.0
    %4958 = vmatpush1.msra.mxu0 0.0
    %4959 = vmatprep.subr.mxu0 0.0
    %4960 = vmatpush1.msra.mxu0 0.0
    %4961 = vmatprep.subr.mxu0 0.0
    %4962 = vmatpush1.msra.mxu0 0.0
    %4963 = vmatprep.subr.mxu0 0.0
    %4964 = vmatpush1.msra.mxu0 0.0
    %4965 = vmatprep.subr.mxu0 0.0
    %4966 = vmatpush1.msra.mxu0 0.0
    %4967 = vmatprep.subr.mxu0 0.0
    %4968 = vmatpush1.msra.mxu0 0.0
    %4969 = vmatprep.subr.mxu0 0.0
    %4970 = vmatpush1.msra.mxu0 0.0
    %4971 = vmatprep.subr.mxu0 0.0
    %4972 = vmatpush1.msra.mxu0 0.0
    %4973 = vmatprep.subr.mxu0 0.0
    %4974 = vmatpush1.msra.mxu0 0.0
    %4975 = vmatprep.subr.mxu0 0.0
    %4976 = vmatpush1.msra.mxu0 0.0
    %4977 = vmatprep.subr.mxu0 0.0
    %4978 = vmatpush1.msra.mxu0 0.0
    %4979 = vmatprep.subr.mxu0 0.0
    %4980 = vmatpush1.msra.mxu0 0.0
    %4981 = vmatprep.subr.mxu0 0.0
    %4982 = vmatpush1.msra.mxu0 0.0
    %4983 = vmatprep.subr.mxu0 0.0
    %4984 = vmatpush1.msra.mxu0 0.0
    %4985 = vmatprep.subr.mxu0 0.0
    %4986 = vmatpush1.msra.mxu0 0.0
    %4987 = vmatprep.subr.mxu0 0.0
    %4988 = vmatpush1.msra.mxu0 0.0
    %4989 = vmatprep.subr.mxu0 0.0
    %4990 = vmatpush1.msra.mxu0 0.0
    %4991 = vmatprep.subr.mxu0 0.0
    %4992 = vmatpush1.msra.mxu0 0.0
    %4993 = vmatprep.subr.mxu0 0.0
    %4994 = vmatpush1.msra.mxu0 0.0
    %4995 = vmatprep.subr.mxu0 0.0
    %4996 = vmatpush1.msra.mxu0 0.0
    %4997 = vmatprep.subr.mxu0 0.0
    %4998 = vmatpush1.msra.mxu0 0.0
    %4999 = vmatprep.subr.mxu0 0.0
    %5000 = vmatpush1.msra.mxu0 0.0
    %5001 = vmatprep.subr.mxu0 0.0
    %5002 = vmatpush1.msra.mxu0 0.0
    %5003 = vmatprep.subr.mxu0 0.0
    %5004 = vmatpush1.msra.mxu0 0.0
    %5005 = vmatprep.mubr.f32.mxu0 0.0
    %5006 = vmatmul.mubr.f32.gmra.mrb[0].mxu0 %v4797
    %v5007 = vpop.f32.mrb[0].mxu0
    %v5008 = vadd.f32 %v4938, %v5007
    %v5009 = vpop.f32.mrb[0].mxu0
    %5010 = vdwg.mxu0
    %v5011 = vadd.f32 %v5008, %v4761
    %v5012 = vsub.f32 0.0, %v5011
    %v5013 = vmul.f32 %v5012, 1.442695
    %v5014 = vpow.pop %v5013
    %v5015 = vadd.f32 %v5014, 1.0
    %v5016 = vrcp.pop %v5015
    %v5017 = vmul.f32 1.0, %v5016
    %v5018 = vtanh.pop %v5011
    %v5019 = vmul.f32 %v5017, %v4781
    %5021 = vrot.lane.b32.xlu0 %v5018, 64
    %v5022 = vpop.permute.xlu0 %5021
    %v5024 = vmul.f32 %v5017, %v5022
    %5026 = vrot.lane.b32.xlu0 %v5024, 32
    %v5027 = vpop.permute.xlu0 %5026
    %v5029 = vadd.f32 %v5019, %v5027
    %v5030 = vtanh.pop %v5029
    %5032 = vrot.lane.b32.xlu0 %v5030, 64
    %v5033 = vpop.permute.xlu0 %5032
    %v5035 = vmul.f32 %v5017, %v5033
    %5037 = vrot.lane.b32.xlu0 %v5035, 32
    %v5038 = vpop.permute.xlu0 %5037
    %v5039 = vsel %vm126, %v5038, 0
    %5041 = vmatprep.subr.mxu0 0.0
    %5042 = vmatpush1.msra.mxu0 %v108
    %5043 = vmatprep.subr.mxu0 0.0
    %5044 = vmatpush1.msra.mxu0 %v109
    %5045 = vmatprep.subr.mxu0 0.0
    %5046 = vmatpush1.msra.mxu0 %v110
    %5047 = vmatprep.subr.mxu0 0.0
    %5048 = vmatpush1.msra.mxu0 %v111
    %5049 = vmatprep.subr.mxu0 0.0
    %5050 = vmatpush1.msra.mxu0 0.0
    %5051 = vmatprep.subr.mxu0 0.0
    %5052 = vmatpush1.msra.mxu0 0.0
    %5053 = vmatprep.subr.mxu0 0.0
    %5054 = vmatpush1.msra.mxu0 0.0
    %5055 = vmatprep.subr.mxu0 0.0
    %5056 = vmatpush1.msra.mxu0 0.0
    %5057 = vmatprep.subr.mxu0 0.0
    %5058 = vmatpush1.msra.mxu0 0.0
    %5059 = vmatprep.subr.mxu0 0.0
    %5060 = vmatpush1.msra.mxu0 0.0
    %5061 = vmatprep.subr.mxu0 0.0
    %5062 = vmatpush1.msra.mxu0 0.0
    %5063 = vmatprep.subr.mxu0 0.0
    %5064 = vmatpush1.msra.mxu0 0.0
    %5065 = vmatprep.subr.mxu0 0.0
    %5066 = vmatpush1.msra.mxu0 0.0
    %5067 = vmatprep.subr.mxu0 0.0
    %5068 = vmatpush1.msra.mxu0 0.0
    %5069 = vmatprep.subr.mxu0 0.0
    %5070 = vmatpush1.msra.mxu0 0.0
    %5071 = vmatprep.subr.mxu0 0.0
    %5072 = vmatpush1.msra.mxu0 0.0
    %5073 = vmatprep.subr.mxu0 0.0
    %5074 = vmatpush1.msra.mxu0 0.0
    %5075 = vmatprep.subr.mxu0 0.0
    %5076 = vmatpush1.msra.mxu0 0.0
    %5077 = vmatprep.subr.mxu0 0.0
    %5078 = vmatpush1.msra.mxu0 0.0
    %5079 = vmatprep.subr.mxu0 0.0
    %5080 = vmatpush1.msra.mxu0 0.0
    %5081 = vmatprep.subr.mxu0 0.0
    %5082 = vmatpush1.msra.mxu0 0.0
    %5083 = vmatprep.subr.mxu0 0.0
    %5084 = vmatpush1.msra.mxu0 0.0
    %5085 = vmatprep.subr.mxu0 0.0
    %5086 = vmatpush1.msra.mxu0 0.0
    %5087 = vmatprep.subr.mxu0 0.0
    %5088 = vmatpush1.msra.mxu0 0.0
    %5089 = vmatprep.subr.mxu0 0.0
    %5090 = vmatpush1.msra.mxu0 0.0
    %5091 = vmatprep.subr.mxu0 0.0
    %5092 = vmatpush1.msra.mxu0 0.0
    %5093 = vmatprep.subr.mxu0 0.0
    %5094 = vmatpush1.msra.mxu0 0.0
    %5095 = vmatprep.subr.mxu0 0.0
    %5096 = vmatpush1.msra.mxu0 0.0
    %5097 = vmatprep.subr.mxu0 0.0
    %5098 = vmatpush1.msra.mxu0 0.0
    %5099 = vmatprep.subr.mxu0 0.0
    %5100 = vmatpush1.msra.mxu0 0.0
    %5101 = vmatprep.subr.mxu0 0.0
    %5102 = vmatpush1.msra.mxu0 0.0
    %5103 = vmatprep.subr.mxu0 0.0
    %5104 = vmatpush1.msra.mxu0 0.0
    %5105 = vmatprep.mubr.f32.mxu0 0.0
    %5106 = vmatmul.mubr.f32.gmra.mrb[0].mxu0 %v5039
    %v5107 = vpop.f32.mrb[0].mxu0
    %v5108 = vadd.f32 %v4792, %v5107
    %v5109 = vpop.f32.mrb[0].mxu0
    %5110 = vdwg.mxu0
    %s5111 = scalar_lea.vmem %s10, 2
    %5112 = vst.msk [vmem:[%s5111] sm:$0x3] %vm4869, %v5108
    %5113 = vmatprep.subr.mxu0 0.0
    %5114 = vmatpush1.msra.mxu0 %v103
    %5115 = vmatprep.subr.mxu0 0.0
    %5116 = vmatpush1.msra.mxu0 %v104
    %5117 = vmatprep.subr.mxu0 0.0
    %5118 = vmatpush1.msra.mxu0 %v105
    %5119 = vmatprep.subr.mxu0 0.0
    %5120 = vmatpush1.msra.mxu0 %v106
    %5121 = vmatprep.subr.mxu0 0.0
    %5122 = vmatpush1.msra.mxu0 0.0
    %5123 = vmatprep.subr.mxu0 0.0
    %5124 = vmatpush1.msra.mxu0 0.0
    %5125 = vmatprep.subr.mxu0 0.0
    %5126 = vmatpush1.msra.mxu0 0.0
    %5127 = vmatprep.subr.mxu0 0.0
    %5128 = vmatpush1.msra.mxu0 0.0
    %5129 = vmatprep.subr.mxu0 0.0
    %5130 = vmatpush1.msra.mxu0 0.0
    %5131 = vmatprep.subr.mxu0 0.0
    %5132 = vmatpush1.msra.mxu0 0.0
    %5133 = vmatprep.subr.mxu0 0.0
    %5134 = vmatpush1.msra.mxu0 0.0
    %5135 = vmatprep.subr.mxu0 0.0
    %5136 = vmatpush1.msra.mxu0 0.0
    %5137 = vmatprep.subr.mxu0 0.0
    %5138 = vmatpush1.msra.mxu0 0.0
    %5139 = vmatprep.subr.mxu0 0.0
    %5140 = vmatpush1.msra.mxu0 0.0
    %5141 = vmatprep.subr.mxu0 0.0
    %5142 = vmatpush1.msra.mxu0 0.0
    %5143 = vmatprep.subr.mxu0 0.0
    %5144 = vmatpush1.msra.mxu0 0.0
    %5145 = vmatprep.subr.mxu0 0.0
    %5146 = vmatpush1.msra.mxu0 0.0
    %5147 = vmatprep.subr.mxu0 0.0
    %5148 = vmatpush1.msra.mxu0 0.0
    %5149 = vmatprep.subr.mxu0 0.0
    %5150 = vmatpush1.msra.mxu0 0.0
    %5151 = vmatprep.subr.mxu0 0.0
    %5152 = vmatpush1.msra.mxu0 0.0
    %5153 = vmatprep.subr.mxu0 0.0
    %5154 = vmatpush1.msra.mxu0 0.0
    %5155 = vmatprep.subr.mxu0 0.0
    %5156 = vmatpush1.msra.mxu0 0.0
    %5157 = vmatprep.subr.mxu0 0.0
    %5158 = vmatpush1.msra.mxu0 0.0
    %5159 = vmatprep.subr.mxu0 0.0
    %5160 = vmatpush1.msra.mxu0 0.0
    %5161 = vmatprep.subr.mxu0 0.0
    %5162 = vmatpush1.msra.mxu0 0.0
    %5163 = vmatprep.subr.mxu0 0.0
    %5164 = vmatpush1.msra.mxu0 0.0
    %5165 = vmatprep.subr.mxu0 0.0
    %5166 = vmatpush1.msra.mxu0 0.0
    %5167 = vmatprep.subr.mxu0 0.0
    %5168 = vmatpush1.msra.mxu0 0.0
    %5169 = vmatprep.subr.mxu0 0.0
    %5170 = vmatpush1.msra.mxu0 0.0
    %5171 = vmatprep.subr.mxu0 0.0
    %5172 = vmatpush1.msra.mxu0 0.0
    %5173 = vmatprep.subr.mxu0 0.0
    %5174 = vmatpush1.msra.mxu0 0.0
    %5175 = vmatprep.subr.mxu0 0.0
    %5176 = vmatpush1.msra.mxu0 0.0
    %5177 = vmatprep.mubr.f32.mxu0 0.0
    %5178 = vmatmul.mubr.f32.gmra.mrb[0].mxu0 %v5039
    %v5179 = vpop.f32.mrb[0].mxu0
    %v5180 = vadd.f32 0.0, %v5179
    %v5181 = vpop.f32.mrb[0].mxu0
    %5182 = vdwg.mxu0
    %5183 = vmatprep.subr.mxu0 0.0
    %5184 = vmatpush1.msra.mxu0 %v99
    %5185 = vmatprep.subr.mxu0 0.0
    %5186 = vmatpush1.msra.mxu0 %v100
    %5187 = vmatprep.subr.mxu0 0.0
    %5188 = vmatpush1.msra.mxu0 %v101
    %5189 = vmatprep.subr.mxu0 0.0
    %5190 = vmatpush1.msra.mxu0 %v102
    %5191 = vmatprep.subr.mxu0 0.0
    %5192 = vmatpush1.msra.mxu0 0.0
    %5193 = vmatprep.subr.mxu0 0.0
    %5194 = vmatpush1.msra.mxu0 0.0
    %5195 = vmatprep.subr.mxu0 0.0
    %5196 = vmatpush1.msra.mxu0 0.0
    %5197 = vmatprep.subr.mxu0 0.0
    %5198 = vmatpush1.msra.mxu0 0.0
    %5199 = vmatprep.subr.mxu0 0.0
    %5200 = vmatpush1.msra.mxu0 0.0
    %5201 = vmatprep.subr.mxu0 0.0
    %5202 = vmatpush1.msra.mxu0 0.0
    %5203 = vmatprep.subr.mxu0 0.0
    %5204 = vmatpush1.msra.mxu0 0.0
    %5205 = vmatprep.subr.mxu0 0.0
    %5206 = vmatpush1.msra.mxu0 0.0
    %5207 = vmatprep.subr.mxu0 0.0
    %5208 = vmatpush1.msra.mxu0 0.0
    %5209 = vmatprep.subr.mxu0 0.0
    %5210 = vmatpush1.msra.mxu0 0.0
    %5211 = vmatprep.subr.mxu0 0.0
    %5212 = vmatpush1.msra.mxu0 0.0
    %5213 = vmatprep.subr.mxu0 0.0
    %5214 = vmatpush1.msra.mxu0 0.0
    %5215 = vmatprep.subr.mxu0 0.0
    %5216 = vmatpush1.msra.mxu0 0.0
    %5217 = vmatprep.subr.mxu0 0.0
    %5218 = vmatpush1.msra.mxu0 0.0
    %5219 = vmatprep.subr.mxu0 0.0
    %5220 = vmatpush1.msra.mxu0 0.0
    %5221 = vmatprep.subr.mxu0 0.0
    %5222 = vmatpush1.msra.mxu0 0.0
    %5223 = vmatprep.subr.mxu0 0.0
    %5224 = vmatpush1.msra.mxu0 0.0
    %5225 = vmatprep.subr.mxu0 0.0
    %5226 = vmatpush1.msra.mxu0 0.0
    %5227 = vmatprep.subr.mxu0 0.0
    %5228 = vmatpush1.msra.mxu0 0.0
    %5229 = vmatprep.subr.mxu0 0.0
    %5230 = vmatpush1.msra.mxu0 0.0
    %5231 = vmatprep.subr.mxu0 0.0
    %5232 = vmatpush1.msra.mxu0 0.0
    %5233 = vmatprep.subr.mxu0 0.0
    %5234 = vmatpush1.msra.mxu0 0.0
    %5235 = vmatprep.subr.mxu0 0.0
    %5236 = vmatpush1.msra.mxu0 0.0
    %5237 = vmatprep.subr.mxu0 0.0
    %5238 = vmatpush1.msra.mxu0 0.0
    %5239 = vmatprep.subr.mxu0 0.0
    %5240 = vmatpush1.msra.mxu0 0.0
    %5241 = vmatprep.subr.mxu0 0.0
    %5242 = vmatpush1.msra.mxu0 0.0
    %5243 = vmatprep.subr.mxu0 0.0
    %5244 = vmatpush1.msra.mxu0 0.0
    %5245 = vmatprep.subr.mxu0 0.0
    %5246 = vmatpush1.msra.mxu0 0.0
    %5247 = vmatprep.mubr.f32.mxu0 0.0
    %5248 = vmatmul.mubr.f32.gmra.mrb[0].mxu0 %v5039
    %v5249 = vpop.f32.mrb[0].mxu0
    %v5250 = vadd.f32 %v5180, %v5249
    %v5251 = vpop.f32.mrb[0].mxu0
    %5252 = vdwg.mxu0
    %v5253 = vadd.f32 %v5250, %v4761
    %v5254 = vsub.f32 0.0, %v5253
    %v5255 = vmul.f32 %v5254, 1.442695
    %v5256 = vpow.pop %v5255
    %v5257 = vadd.f32 %v5256, 1.0
    %v5258 = vrcp.pop %v5257
    %v5259 = vmul.f32 1.0, %v5258
    %v5260 = vtanh.pop %v5253
    %v5261 = vmul.f32 %v5259, %v5029
    %5263 = vrot.lane.b32.xlu0 %v5260, 64
    %v5264 = vpop.permute.xlu0 %5263
    %v5266 = vmul.f32 %v5259, %v5264
    %5268 = vrot.lane.b32.xlu0 %v5266, 32
    %v5269 = vpop.permute.xlu0 %5268
    %v5271 = vadd.f32 %v5261, %v5269
    %v5272 = vtanh.pop %v5271
    %5274 = vrot.lane.b32.xlu0 %v5272, 64
    %v5275 = vpop.permute.xlu0 %5274
    %v5277 = vmul.f32 %v5259, %v5275
    %5279 = vrot.lane.b32.xlu0 %v5277, 32
    %v5280 = vpop.permute.xlu0 %5279
    %v5281 = vsel %vm126, %v5280, 0
    %5283 = vmatprep.subr.mxu0 0.0
    %5284 = vmatpush1.msra.mxu0 %v108
    %5285 = vmatprep.subr.mxu0 0.0
    %5286 = vmatpush1.msra.mxu0 %v109
    %5287 = vmatprep.subr.mxu0 0.0
    %5288 = vmatpush1.msra.mxu0 %v110
    %5289 = vmatprep.subr.mxu0 0.0
    %5290 = vmatpush1.msra.mxu0 %v111
    %5291 = vmatprep.subr.mxu0 0.0
    %5292 = vmatpush1.msra.mxu0 0.0
    %5293 = vmatprep.subr.mxu0 0.0
    %5294 = vmatpush1.msra.mxu0 0.0
    %5295 = vmatprep.subr.mxu0 0.0
    %5296 = vmatpush1.msra.mxu0 0.0
    %5297 = vmatprep.subr.mxu0 0.0
    %5298 = vmatpush1.msra.mxu0 0.0
    %5299 = vmatprep.subr.mxu0 0.0
    %5300 = vmatpush1.msra.mxu0 0.0
    %5301 = vmatprep.subr.mxu0 0.0
    %5302 = vmatpush1.msra.mxu0 0.0
    %5303 = vmatprep.subr.mxu0 0.0
    %5304 = vmatpush1.msra.mxu0 0.0
    %5305 = vmatprep.subr.mxu0 0.0
    %5306 = vmatpush1.msra.mxu0 0.0
    %5307 = vmatprep.subr.mxu0 0.0
    %5308 = vmatpush1.msra.mxu0 0.0
    %5309 = vmatprep.subr.mxu0 0.0
    %5310 = vmatpush1.msra.mxu0 0.0
    %5311 = vmatprep.subr.mxu0 0.0
    %5312 = vmatpush1.msra.mxu0 0.0
    %5313 = vmatprep.subr.mxu0 0.0
    %5314 = vmatpush1.msra.mxu0 0.0
    %5315 = vmatprep.subr.mxu0 0.0
    %5316 = vmatpush1.msra.mxu0 0.0
    %5317 = vmatprep.subr.mxu0 0.0
    %5318 = vmatpush1.msra.mxu0 0.0
    %5319 = vmatprep.subr.mxu0 0.0
    %5320 = vmatpush1.msra.mxu0 0.0
    %5321 = vmatprep.subr.mxu0 0.0
    %5322 = vmatpush1.msra.mxu0 0.0
    %5323 = vmatprep.subr.mxu0 0.0
    %5324 = vmatpush1.msra.mxu0 0.0
    %5325 = vmatprep.subr.mxu0 0.0
    %5326 = vmatpush1.msra.mxu0 0.0
    %5327 = vmatprep.subr.mxu0 0.0
    %5328 = vmatpush1.msra.mxu0 0.0
    %5329 = vmatprep.subr.mxu0 0.0
    %5330 = vmatpush1.msra.mxu0 0.0
    %5331 = vmatprep.subr.mxu0 0.0
    %5332 = vmatpush1.msra.mxu0 0.0
    %5333 = vmatprep.subr.mxu0 0.0
    %5334 = vmatpush1.msra.mxu0 0.0
    %5335 = vmatprep.subr.mxu0 0.0
    %5336 = vmatpush1.msra.mxu0 0.0
    %5337 = vmatprep.subr.mxu0 0.0
    %5338 = vmatpush1.msra.mxu0 0.0
    %5339 = vmatprep.subr.mxu0 0.0
    %5340 = vmatpush1.msra.mxu0 0.0
    %5341 = vmatprep.subr.mxu0 0.0
    %5342 = vmatpush1.msra.mxu0 0.0
    %5343 = vmatprep.subr.mxu0 0.0
    %5344 = vmatpush1.msra.mxu0 0.0
    %5345 = vmatprep.subr.mxu0 0.0
    %5346 = vmatpush1.msra.mxu0 0.0
    %5347 = vmatprep.mubr.f32.mxu0 0.0
    %5348 = vmatmul.mubr.f32.gmra.mrb[0].mxu0 %v5281
    %v5349 = vpop.f32.mrb[0].mxu0
    %v5350 = vadd.f32 %v4792, %v5349
    %v5351 = vpop.f32.mrb[0].mxu0
    %5352 = vdwg.mxu0
    %s5353 = scalar_lea.vmem %s10, 4
    %5354 = vst.msk [vmem:[%s5353] sm:$0x3] %vm4869, %v5350
    %5355 = vmatprep.subr.mxu0 0.0
    %5356 = vmatpush1.msra.mxu0 %v103
    %5357 = vmatprep.subr.mxu0 0.0
    %5358 = vmatpush1.msra.mxu0 %v104
    %5359 = vmatprep.subr.mxu0 0.0
    %5360 = vmatpush1.msra.mxu0 %v105
    %5361 = vmatprep.subr.mxu0 0.0
    %5362 = vmatpush1.msra.mxu0 %v106
    %5363 = vmatprep.subr.mxu0 0.0
    %5364 = vmatpush1.msra.mxu0 0.0
    %5365 = vmatprep.subr.mxu0 0.0
    %5366 = vmatpush1.msra.mxu0 0.0
    %5367 = vmatprep.subr.mxu0 0.0
    %5368 = vmatpush1.msra.mxu0 0.0
    %5369 = vmatprep.subr.mxu0 0.0
    %5370 = vmatpush1.msra.mxu0 0.0
    %5371 = vmatprep.subr.mxu0 0.0
    %5372 = vmatpush1.msra.mxu0 0.0
    %5373 = vmatprep.subr.mxu0 0.0
    %5374 = vmatpush1.msra.mxu0 0.0
    %5375 = vmatprep.subr.mxu0 0.0
    %5376 = vmatpush1.msra.mxu0 0.0
    %5377 = vmatprep.subr.mxu0 0.0
    %5378 = vmatpush1.msra.mxu0 0.0
    %5379 = vmatprep.subr.mxu0 0.0
    %5380 = vmatpush1.msra.mxu0 0.0
    %5381 = vmatprep.subr.mxu0 0.0
    %5382 = vmatpush1.msra.mxu0 0.0
    %5383 = vmatprep.subr.mxu0 0.0
    %5384 = vmatpush1.msra.mxu0 0.0
    %5385 = vmatprep.subr.mxu0 0.0
    %5386 = vmatpush1.msra.mxu0 0.0
    %5387 = vmatprep.subr.mxu0 0.0
    %5388 = vmatpush1.msra.mxu0 0.0
    %5389 = vmatprep.subr.mxu0 0.0
    %5390 = vmatpush1.msra.mxu0 0.0
    %5391 = vmatprep.subr.mxu0 0.0
    %5392 = vmatpush1.msra.mxu0 0.0
    %5393 = vmatprep.subr.mxu0 0.0
    %5394 = vmatpush1.msra.mxu0 0.0
    %5395 = vmatprep.subr.mxu0 0.0
    %5396 = vmatpush1.msra.mxu0 0.0
    %5397 = vmatprep.subr.mxu0 0.0
    %5398 = vmatpush1.msra.mxu0 0.0
    %5399 = vmatprep.subr.mxu0 0.0
    %5400 = vmatpush1.msra.mxu0 0.0
    %5401 = vmatprep.subr.mxu0 0.0
    %5402 = vmatpush1.msra.mxu0 0.0
    %5403 = vmatprep.subr.mxu0 0.0
    %5404 = vmatpush1.msra.mxu0 0.0
    %5405 = vmatprep.subr.mxu0 0.0
    %5406 = vmatpush1.msra.mxu0 0.0
    %5407 = vmatprep.subr.mxu0 0.0
    %5408 = vmatpush1.msra.mxu0 0.0
    %5409 = vmatprep.subr.mxu0 0.0
    %5410 = vmatpush1.msra.mxu0 0.0
    %5411 = vmatprep.subr.mxu0 0.0
    %5412 = vmatpush1.msra.mxu0 0.0
    %5413 = vmatprep.subr.mxu0 0.0
    %5414 = vmatpush1.msra.mxu0 0.0
    %5415 = vmatprep.subr.mxu0 0.0
    %5416 = vmatpush1.msra.mxu0 0.0
    %5417 = vmatprep.subr.mxu0 0.0
    %5418 = vmatpush1.msra.mxu0 0.0
    %5419 = vmatprep.mubr.f32.mxu0 0.0
    %5420 = vmatmul.mubr.f32.gmra.mrb[0].mxu0 %v5281
    %v5421 = vpop.f32.mrb[0].mxu0
    %v5422 = vadd.f32 0.0, %v5421
    %v5423 = vpop.f32.mrb[0].mxu0
    %5424 = vdwg.mxu0
    %5425 = vmatprep.subr.mxu0 0.0
    %5426 = vmatpush1.msra.mxu0 %v99
    %5427 = vmatprep.subr.mxu0 0.0
    %5428 = vmatpush1.msra.mxu0 %v100
    %5429 = vmatprep.subr.mxu0 0.0
    %5430 = vmatpush1.msra.mxu0 %v101
    %5431 = vmatprep.subr.mxu0 0.0
    %5432 = vmatpush1.msra.mxu0 %v102
    %5433 = vmatprep.subr.mxu0 0.0
    %5434 = vmatpush1.msra.mxu0 0.0
    %5435 = vmatprep.subr.mxu0 0.0
    %5436 = vmatpush1.msra.mxu0 0.0
    %5437 = vmatprep.subr.mxu0 0.0
    %5438 = vmatpush1.msra.mxu0 0.0
    %5439 = vmatprep.subr.mxu0 0.0
    %5440 = vmatpush1.msra.mxu0 0.0
    %5441 = vmatprep.subr.mxu0 0.0
    %5442 = vmatpush1.msra.mxu0 0.0
    %5443 = vmatprep.subr.mxu0 0.0
    %5444 = vmatpush1.msra.mxu0 0.0
    %5445 = vmatprep.subr.mxu0 0.0
    %5446 = vmatpush1.msra.mxu0 0.0
    %5447 = vmatprep.subr.mxu0 0.0
    %5448 = vmatpush1.msra.mxu0 0.0
    %5449 = vmatprep.subr.mxu0 0.0
    %5450 = vmatpush1.msra.mxu0 0.0
    %5451 = vmatprep.subr.mxu0 0.0
    %5452 = vmatpush1.msra.mxu0 0.0
    %5453 = vmatprep.subr.mxu0 0.0
    %5454 = vmatpush1.msra.mxu0 0.0
    %5455 = vmatprep.subr.mxu0 0.0
    %5456 = vmatpush1.msra.mxu0 0.0
    %5457 = vmatprep.subr.mxu0 0.0
    %5458 = vmatpush1.msra.mxu0 0.0
    %5459 = vmatprep.subr.mxu0 0.0
    %5460 = vmatpush1.msra.mxu0 0.0
    %5461 = vmatprep.subr.mxu0 0.0
    %5462 = vmatpush1.msra.mxu0 0.0
    %5463 = vmatprep.subr.mxu0 0.0
    %5464 = vmatpush1.msra.mxu0 0.0
    %5465 = vmatprep.subr.mxu0 0.0
    %5466 = vmatpush1.msra.mxu0 0.0
    %5467 = vmatprep.subr.mxu0 0.0
    %5468 = vmatpush1.msra.mxu0 0.0
    %5469 = vmatprep.subr.mxu0 0.0
    %5470 = vmatpush1.msra.mxu0 0.0
    %5471 = vmatprep.subr.mxu0 0.0
    %5472 = vmatpush1.msra.mxu0 0.0
    %5473 = vmatprep.subr.mxu0 0.0
    %5474 = vmatpush1.msra.mxu0 0.0
    %5475 = vmatprep.subr.mxu0 0.0
    %5476 = vmatpush1.msra.mxu0 0.0
    %5477 = vmatprep.subr.mxu0 0.0
    %5478 = vmatpush1.msra.mxu0 0.0
    %5479 = vmatprep.subr.mxu0 0.0
    %5480 = vmatpush1.msra.mxu0 0.0
    %5481 = vmatprep.subr.mxu0 0.0
    %5482 = vmatpush1.msra.mxu0 0.0
    %5483 = vmatprep.subr.mxu0 0.0
    %5484 = vmatpush1.msra.mxu0 0.0
    %5485 = vmatprep.subr.mxu0 0.0
    %5486 = vmatpush1.msra.mxu0 0.0
    %5487 = vmatprep.subr.mxu0 0.0
    %5488 = vmatpush1.msra.mxu0 0.0
    %5489 = vmatprep.mubr.f32.mxu0 0.0
    %5490 = vmatmul.mubr.f32.gmra.mrb[0].mxu0 %v5281
    %v5491 = vpop.f32.mrb[0].mxu0
    %v5492 = vadd.f32 %v5422, %v5491
    %v5493 = vpop.f32.mrb[0].mxu0
    %5494 = vdwg.mxu0
    %v5495 = vadd.f32 %v5492, %v4761
    %v5496 = vsub.f32 0.0, %v5495
    %v5497 = vmul.f32 %v5496, 1.442695
    %v5498 = vpow.pop %v5497
    %v5499 = vadd.f32 %v5498, 1.0
    %v5500 = vrcp.pop %v5499
    %v5501 = vmul.f32 1.0, %v5500
    %v5502 = vtanh.pop %v5495
    %v5503 = vmul.f32 %v5501, %v5271
    %5505 = vrot.lane.b32.xlu0 %v5502, 64
    %v5506 = vpop.permute.xlu0 %5505
    %v5508 = vmul.f32 %v5501, %v5506
    %5510 = vrot.lane.b32.xlu0 %v5508, 32
    %v5511 = vpop.permute.xlu0 %5510
    %v5513 = vadd.f32 %v5503, %v5511
    %v5514 = vtanh.pop %v5513
    %5516 = vrot.lane.b32.xlu0 %v5514, 64
    %v5517 = vpop.permute.xlu0 %5516
    %v5519 = vmul.f32 %v5501, %v5517
    %5521 = vrot.lane.b32.xlu0 %v5519, 32
    %v5522 = vpop.permute.xlu0 %5521
    %v5523 = vsel %vm126, %v5522, 0
    %5525 = vmatprep.subr.mxu0 0.0
    %5526 = vmatpush1.msra.mxu0 %v108
    %5527 = vmatprep.subr.mxu0 0.0
    %5528 = vmatpush1.msra.mxu0 %v109
    %5529 = vmatprep.subr.mxu0 0.0
    %5530 = vmatpush1.msra.mxu0 %v110
    %5531 = vmatprep.subr.mxu0 0.0
    %5532 = vmatpush1.msra.mxu0 %v111
    %5533 = vmatprep.subr.mxu0 0.0
    %5534 = vmatpush1.msra.mxu0 0.0
    %5535 = vmatprep.subr.mxu0 0.0
    %5536 = vmatpush1.msra.mxu0 0.0
    %5537 = vmatprep.subr.mxu0 0.0
    %5538 = vmatpush1.msra.mxu0 0.0
    %5539 = vmatprep.subr.mxu0 0.0
    %5540 = vmatpush1.msra.mxu0 0.0
    %5541 = vmatprep.subr.mxu0 0.0
    %5542 = vmatpush1.msra.mxu0 0.0
    %5543 = vmatprep.subr.mxu0 0.0
    %5544 = vmatpush1.msra.mxu0 0.0
    %5545 = vmatprep.subr.mxu0 0.0
    %5546 = vmatpush1.msra.mxu0 0.0
    %5547 = vmatprep.subr.mxu0 0.0
    %5548 = vmatpush1.msra.mxu0 0.0
    %5549 = vmatprep.subr.mxu0 0.0
    %5550 = vmatpush1.msra.mxu0 0.0
    %5551 = vmatprep.subr.mxu0 0.0
    %5552 = vmatpush1.msra.mxu0 0.0
    %5553 = vmatprep.subr.mxu0 0.0
    %5554 = vmatpush1.msra.mxu0 0.0
    %5555 = vmatprep.subr.mxu0 0.0
    %5556 = vmatpush1.msra.mxu0 0.0
    %5557 = vmatprep.subr.mxu0 0.0
    %5558 = vmatpush1.msra.mxu0 0.0
    %5559 = vmatprep.subr.mxu0 0.0
    %5560 = vmatpush1.msra.mxu0 0.0
    %5561 = vmatprep.subr.mxu0 0.0
    %5562 = vmatpush1.msra.mxu0 0.0
    %5563 = vmatprep.subr.mxu0 0.0
    %5564 = vmatpush1.msra.mxu0 0.0
    %5565 = vmatprep.subr.mxu0 0.0
    %5566 = vmatpush1.msra.mxu0 0.0
    %5567 = vmatprep.subr.mxu0 0.0
    %5568 = vmatpush1.msra.mxu0 0.0
    %5569 = vmatprep.subr.mxu0 0.0
    %5570 = vmatpush1.msra.mxu0 0.0
    %5571 = vmatprep.subr.mxu0 0.0
    %5572 = vmatpush1.msra.mxu0 0.0
    %5573 = vmatprep.subr.mxu0 0.0
    %5574 = vmatpush1.msra.mxu0 0.0
    %5575 = vmatprep.subr.mxu0 0.0
    %5576 = vmatpush1.msra.mxu0 0.0
    %5577 = vmatprep.subr.mxu0 0.0
    %5578 = vmatpush1.msra.mxu0 0.0
    %5579 = vmatprep.subr.mxu0 0.0
    %5580 = vmatpush1.msra.mxu0 0.0
    %5581 = vmatprep.subr.mxu0 0.0
    %5582 = vmatpush1.msra.mxu0 0.0
    %5583 = vmatprep.subr.mxu0 0.0
    %5584 = vmatpush1.msra.mxu0 0.0
    %5585 = vmatprep.subr.mxu0 0.0
    %5586 = vmatpush1.msra.mxu0 0.0
    %5587 = vmatprep.subr.mxu0 0.0
    %5588 = vmatpush1.msra.mxu0 0.0
    %5589 = vmatprep.mubr.f32.mxu0 0.0
    %5590 = vmatmul.mubr.f32.gmra.mrb[0].mxu0 %v5523
    %v5591 = vpop.f32.mrb[0].mxu0
    %v5592 = vadd.f32 %v4792, %v5591
    %v5593 = vpop.f32.mrb[0].mxu0
    %5594 = vdwg.mxu0
    %s5595 = scalar_lea.vmem %s10, 6
    %5596 = vst.msk [vmem:[%s5595] sm:$0x3] %vm4869, %v5592
    %5597 = vmatprep.subr.mxu0 0.0
    %5598 = vmatpush1.msra.mxu0 %v103
    %5599 = vmatprep.subr.mxu0 0.0
    %5600 = vmatpush1.msra.mxu0 %v104
    %5601 = vmatprep.subr.mxu0 0.0
    %5602 = vmatpush1.msra.mxu0 %v105
    %5603 = vmatprep.subr.mxu0 0.0
    %5604 = vmatpush1.msra.mxu0 %v106
    %5605 = vmatprep.subr.mxu0 0.0
    %5606 = vmatpush1.msra.mxu0 0.0
    %5607 = vmatprep.subr.mxu0 0.0
    %5608 = vmatpush1.msra.mxu0 0.0
    %5609 = vmatprep.subr.mxu0 0.0
    %5610 = vmatpush1.msra.mxu0 0.0
    %5611 = vmatprep.subr.mxu0 0.0
    %5612 = vmatpush1.msra.mxu0 0.0
    %5613 = vmatprep.subr.mxu0 0.0
    %5614 = vmatpush1.msra.mxu0 0.0
    %5615 = vmatprep.subr.mxu0 0.0
    %5616 = vmatpush1.msra.mxu0 0.0
    %5617 = vmatprep.subr.mxu0 0.0
    %5618 = vmatpush1.msra.mxu0 0.0
    %5619 = vmatprep.subr.mxu0 0.0
    %5620 = vmatpush1.msra.mxu0 0.0
    %5621 = vmatprep.subr.mxu0 0.0
    %5622 = vmatpush1.msra.mxu0 0.0
    %5623 = vmatprep.subr.mxu0 0.0
    %5624 = vmatpush1.msra.mxu0 0.0
    %5625 = vmatprep.subr.mxu0 0.0
    %5626 = vmatpush1.msra.mxu0 0.0
    %5627 = vmatprep.subr.mxu0 0.0
    %5628 = vmatpush1.msra.mxu0 0.0
    %5629 = vmatprep.subr.mxu0 0.0
    %5630 = vmatpush1.msra.mxu0 0.0
    %5631 = vmatprep.subr.mxu0 0.0
    %5632 = vmatpush1.msra.mxu0 0.0
    %5633 = vmatprep.subr.mxu0 0.0
    %5634 = vmatpush1.msra.mxu0 0.0
    %5635 = vmatprep.subr.mxu0 0.0
    %5636 = vmatpush1.msra.mxu0 0.0
    %5637 = vmatprep.subr.mxu0 0.0
    %5638 = vmatpush1.msra.mxu0 0.0
    %5639 = vmatprep.subr.mxu0 0.0
    %5640 = vmatpush1.msra.mxu0 0.0
    %5641 = vmatprep.subr.mxu0 0.0
    %5642 = vmatpush1.msra.mxu0 0.0
    %5643 = vmatprep.subr.mxu0 0.0
    %5644 = vmatpush1.msra.mxu0 0.0
    %5645 = vmatprep.subr.mxu0 0.0
    %5646 = vmatpush1.msra.mxu0 0.0
    %5647 = vmatprep.subr.mxu0 0.0
    %5648 = vmatpush1.msra.mxu0 0.0
    %5649 = vmatprep.subr.mxu0 0.0
    %5650 = vmatpush1.msra.mxu0 0.0
    %5651 = vmatprep.subr.mxu0 0.0
    %5652 = vmatpush1.msra.mxu0 0.0
    %5653 = vmatprep.subr.mxu0 0.0
    %5654 = vmatpush1.msra.mxu0 0.0
    %5655 = vmatprep.subr.mxu0 0.0
    %5656 = vmatpush1.msra.mxu0 0.0
    %5657 = vmatprep.subr.mxu0 0.0
    %5658 = vmatpush1.msra.mxu0 0.0
    %5659 = vmatprep.subr.mxu0 0.0
    %5660 = vmatpush1.msra.mxu0 0.0
    %5661 = vmatprep.mubr.f32.mxu0 0.0
    %5662 = vmatmul.mubr.f32.gmra.mrb[0].mxu0 %v5523
    %v5663 = vpop.f32.mrb[0].mxu0
    %v5664 = vadd.f32 0.0, %v5663
    %v5665 = vpop.f32.mrb[0].mxu0
    %5666 = vdwg.mxu0
    %5667 = vmatprep.subr.mxu0 0.0
    %5668 = vmatpush1.msra.mxu0 %v99
    %5669 = vmatprep.subr.mxu0 0.0
    %5670 = vmatpush1.msra.mxu0 %v100
    %5671 = vmatprep.subr.mxu0 0.0
    %5672 = vmatpush1.msra.mxu0 %v101
    %5673 = vmatprep.subr.mxu0 0.0
    %5674 = vmatpush1.msra.mxu0 %v102
    %5675 = vmatprep.subr.mxu0 0.0
    %5676 = vmatpush1.msra.mxu0 0.0
    %5677 = vmatprep.subr.mxu0 0.0
    %5678 = vmatpush1.msra.mxu0 0.0
    %5679 = vmatprep.subr.mxu0 0.0
    %5680 = vmatpush1.msra.mxu0 0.0
    %5681 = vmatprep.subr.mxu0 0.0
    %5682 = vmatpush1.msra.mxu0 0.0
    %5683 = vmatprep.subr.mxu0 0.0
    %5684 = vmatpush1.msra.mxu0 0.0
    %5685 = vmatprep.subr.mxu0 0.0
    %5686 = vmatpush1.msra.mxu0 0.0
    %5687 = vmatprep.subr.mxu0 0.0
    %5688 = vmatpush1.msra.mxu0 0.0
    %5689 = vmatprep.subr.mxu0 0.0
    %5690 = vmatpush1.msra.mxu0 0.0
    %5691 = vmatprep.subr.mxu0 0.0
    %5692 = vmatpush1.msra.mxu0 0.0
    %5693 = vmatprep.subr.mxu0 0.0
    %5694 = vmatpush1.msra.mxu0 0.0
    %5695 = vmatprep.subr.mxu0 0.0
    %5696 = vmatpush1.msra.mxu0 0.0
    %5697 = vmatprep.subr.mxu0 0.0
    %5698 = vmatpush1.msra.mxu0 0.0
    %5699 = vmatprep.subr.mxu0 0.0
    %5700 = vmatpush1.msra.mxu0 0.0
    %5701 = vmatprep.subr.mxu0 0.0
    %5702 = vmatpush1.msra.mxu0 0.0
    %5703 = vmatprep.subr.mxu0 0.0
    %5704 = vmatpush1.msra.mxu0 0.0
    %5705 = vmatprep.subr.mxu0 0.0
    %5706 = vmatpush1.msra.mxu0 0.0
    %5707 = vmatprep.subr.mxu0 0.0
    %5708 = vmatpush1.msra.mxu0 0.0
    %5709 = vmatprep.subr.mxu0 0.0
    %5710 = vmatpush1.msra.mxu0 0.0
    %5711 = vmatprep.subr.mxu0 0.0
    %5712 = vmatpush1.msra.mxu0 0.0
    %5713 = vmatprep.subr.mxu0 0.0
    %5714 = vmatpush1.msra.mxu0 0.0
    %5715 = vmatprep.subr.mxu0 0.0
    %5716 = vmatpush1.msra.mxu0 0.0
    %5717 = vmatprep.subr.mxu0 0.0
    %5718 = vmatpush1.msra.mxu0 0.0
    %5719 = vmatprep.subr.mxu0 0.0
    %5720 = vmatpush1.msra.mxu0 0.0
    %5721 = vmatprep.subr.mxu0 0.0
    %5722 = vmatpush1.msra.mxu0 0.0
    %5723 = vmatprep.subr.mxu0 0.0
    %5724 = vmatpush1.msra.mxu0 0.0
    %5725 = vmatprep.subr.mxu0 0.0
    %5726 = vmatpush1.msra.mxu0 0.0
    %5727 = vmatprep.subr.mxu0 0.0
    %5728 = vmatpush1.msra.mxu0 0.0
    %5729 = vmatprep.subr.mxu0 0.0
    %5730 = vmatpush1.msra.mxu0 0.0
    %5731 = vmatprep.mubr.f32.mxu0 0.0
    %5732 = vmatmul.mubr.f32.gmra.mrb[0].mxu0 %v5523
    %v5733 = vpop.f32.mrb[0].mxu0
    %v5734 = vadd.f32 %v5664, %v5733
    %v5735 = vpop.f32.mrb[0].mxu0
    %5736 = vdwg.mxu0
    %v5737 = vadd.f32 %v5734, %v4761
    %v5738 = vsub.f32 0.0, %v5737
    %v5739 = vmul.f32 %v5738, 1.442695
    %v5740 = vpow.pop %v5739
    %v5741 = vadd.f32 %v5740, 1.0
    %v5742 = vrcp.pop %v5741
    %v5743 = vmul.f32 1.0, %v5742
    %v5744 = vtanh.pop %v5737
    %v5745 = vmul.f32 %v5743, %v5513
    %5747 = vrot.lane.b32.xlu0 %v5744, 64
    %v5748 = vpop.permute.xlu0 %5747
    %v5750 = vmul.f32 %v5743, %v5748
    %5752 = vrot.lane.b32.xlu0 %v5750, 32
    %v5753 = vpop.permute.xlu0 %5752
    %v5755 = vadd.f32 %v5745, %v5753
    %v5756 = vtanh.pop %v5755
    %5758 = vrot.lane.b32.xlu0 %v5756, 64
    %v5759 = vpop.permute.xlu0 %5758
    %v5761 = vmul.f32 %v5743, %v5759
    %5763 = vrot.lane.b32.xlu0 %v5761, 32
    %v5764 = vpop.permute.xlu0 %5763
    %v5765 = vsel %vm126, %v5764, 0
    %5767 = vmatprep.subr.mxu0 0.0
    %5768 = vmatpush1.msra.mxu0 %v108
    %5769 = vmatprep.subr.mxu0 0.0
    %5770 = vmatpush1.msra.mxu0 %v109
    %5771 = vmatprep.subr.mxu0 0.0
    %5772 = vmatpush1.msra.mxu0 %v110
    %5773 = vmatprep.subr.mxu0 0.0
    %5774 = vmatpush1.msra.mxu0 %v111
    %5775 = vmatprep.subr.mxu0 0.0
    %5776 = vmatpush1.msra.mxu0 0.0
    %5777 = vmatprep.subr.mxu0 0.0
    %5778 = vmatpush1.msra.mxu0 0.0
    %5779 = vmatprep.subr.mxu0 0.0
    %5780 = vmatpush1.msra.mxu0 0.0
    %5781 = vmatprep.subr.mxu0 0.0
    %5782 = vmatpush1.msra.mxu0 0.0
    %5783 = vmatprep.subr.mxu0 0.0
    %5784 = vmatpush1.msra.mxu0 0.0
    %5785 = vmatprep.subr.mxu0 0.0
    %5786 = vmatpush1.msra.mxu0 0.0
    %5787 = vmatprep.subr.mxu0 0.0
    %5788 = vmatpush1.msra.mxu0 0.0
    %5789 = vmatprep.subr.mxu0 0.0
    %5790 = vmatpush1.msra.mxu0 0.0
    %5791 = vmatprep.subr.mxu0 0.0
    %5792 = vmatpush1.msra.mxu0 0.0
    %5793 = vmatprep.subr.mxu0 0.0
    %5794 = vmatpush1.msra.mxu0 0.0
    %5795 = vmatprep.subr.mxu0 0.0
    %5796 = vmatpush1.msra.mxu0 0.0
    %5797 = vmatprep.subr.mxu0 0.0
    %5798 = vmatpush1.msra.mxu0 0.0
    %5799 = vmatprep.subr.mxu0 0.0
    %5800 = vmatpush1.msra.mxu0 0.0
    %5801 = vmatprep.subr.mxu0 0.0
    %5802 = vmatpush1.msra.mxu0 0.0
    %5803 = vmatprep.subr.mxu0 0.0
    %5804 = vmatpush1.msra.mxu0 0.0
    %5805 = vmatprep.subr.mxu0 0.0
    %5806 = vmatpush1.msra.mxu0 0.0
    %5807 = vmatprep.subr.mxu0 0.0
    %5808 = vmatpush1.msra.mxu0 0.0
    %5809 = vmatprep.subr.mxu0 0.0
    %5810 = vmatpush1.msra.mxu0 0.0
    %5811 = vmatprep.subr.mxu0 0.0
    %5812 = vmatpush1.msra.mxu0 0.0
    %5813 = vmatprep.subr.mxu0 0.0
    %5814 = vmatpush1.msra.mxu0 0.0
    %5815 = vmatprep.subr.mxu0 0.0
    %5816 = vmatpush1.msra.mxu0 0.0
    %5817 = vmatprep.subr.mxu0 0.0
    %5818 = vmatpush1.msra.mxu0 0.0
    %5819 = vmatprep.subr.mxu0 0.0
    %5820 = vmatpush1.msra.mxu0 0.0
    %5821 = vmatprep.subr.mxu0 0.0
    %5822 = vmatpush1.msra.mxu0 0.0
    %5823 = vmatprep.subr.mxu0 0.0
    %5824 = vmatpush1.msra.mxu0 0.0
    %5825 = vmatprep.subr.mxu0 0.0
    %5826 = vmatpush1.msra.mxu0 0.0
    %5827 = vmatprep.subr.mxu0 0.0
    %5828 = vmatpush1.msra.mxu0 0.0
    %5829 = vmatprep.subr.mxu0 0.0
    %5830 = vmatpush1.msra.mxu0 0.0
    %5831 = vmatprep.mubr.f32.mxu0 0.0
    %5832 = vmatmul.mubr.f32.gmra.mrb[0].mxu0 %v5765
    %v5833 = vpop.f32.mrb[0].mxu0
    %v5834 = vadd.f32 %v4792, %v5833
    %v5835 = vpop.f32.mrb[0].mxu0
    %5836 = vdwg.mxu0
    %s5837 = scalar_lea.vmem %s10, 8
    %5838 = vst.msk [vmem:[%s5837] sm:$0x3] %vm4869, %v5834
    %5839 = vmatprep.subr.mxu0 0.0
    %5840 = vmatpush1.msra.mxu0 %v103
    %5841 = vmatprep.subr.mxu0 0.0
    %5842 = vmatpush1.msra.mxu0 %v104
    %5843 = vmatprep.subr.mxu0 0.0
    %5844 = vmatpush1.msra.mxu0 %v105
    %5845 = vmatprep.subr.mxu0 0.0
    %5846 = vmatpush1.msra.mxu0 %v106
    %5847 = vmatprep.subr.mxu0 0.0
    %5848 = vmatpush1.msra.mxu0 0.0
    %5849 = vmatprep.subr.mxu0 0.0
    %5850 = vmatpush1.msra.mxu0 0.0
    %5851 = vmatprep.subr.mxu0 0.0
    %5852 = vmatpush1.msra.mxu0 0.0
    %5853 = vmatprep.subr.mxu0 0.0
    %5854 = vmatpush1.msra.mxu0 0.0
    %5855 = vmatprep.subr.mxu0 0.0
    %5856 = vmatpush1.msra.mxu0 0.0
    %5857 = vmatprep.subr.mxu0 0.0
    %5858 = vmatpush1.msra.mxu0 0.0
    %5859 = vmatprep.subr.mxu0 0.0
    %5860 = vmatpush1.msra.mxu0 0.0
    %5861 = vmatprep.subr.mxu0 0.0
    %5862 = vmatpush1.msra.mxu0 0.0
    %5863 = vmatprep.subr.mxu0 0.0
    %5864 = vmatpush1.msra.mxu0 0.0
    %5865 = vmatprep.subr.mxu0 0.0
    %5866 = vmatpush1.msra.mxu0 0.0
    %5867 = vmatprep.subr.mxu0 0.0
    %5868 = vmatpush1.msra.mxu0 0.0
    %5869 = vmatprep.subr.mxu0 0.0
    %5870 = vmatpush1.msra.mxu0 0.0
    %5871 = vmatprep.subr.mxu0 0.0
    %5872 = vmatpush1.msra.mxu0 0.0
    %5873 = vmatprep.subr.mxu0 0.0
    %5874 = vmatpush1.msra.mxu0 0.0
    %5875 = vmatprep.subr.mxu0 0.0
    %5876 = vmatpush1.msra.mxu0 0.0
    %5877 = vmatprep.subr.mxu0 0.0
    %5878 = vmatpush1.msra.mxu0 0.0
    %5879 = vmatprep.subr.mxu0 0.0
    %5880 = vmatpush1.msra.mxu0 0.0
    %5881 = vmatprep.subr.mxu0 0.0
    %5882 = vmatpush1.msra.mxu0 0.0
    %5883 = vmatprep.subr.mxu0 0.0
    %5884 = vmatpush1.msra.mxu0 0.0
    %5885 = vmatprep.subr.mxu0 0.0
    %5886 = vmatpush1.msra.mxu0 0.0
    %5887 = vmatprep.subr.mxu0 0.0
    %5888 = vmatpush1.msra.mxu0 0.0
    %5889 = vmatprep.subr.mxu0 0.0
    %5890 = vmatpush1.msra.mxu0 0.0
    %5891 = vmatprep.subr.mxu0 0.0
    %5892 = vmatpush1.msra.mxu0 0.0
    %5893 = vmatprep.subr.mxu0 0.0
    %5894 = vmatpush1.msra.mxu0 0.0
    %5895 = vmatprep.subr.mxu0 0.0
    %5896 = vmatpush1.msra.mxu0 0.0
    %5897 = vmatprep.subr.mxu0 0.0
    %5898 = vmatpush1.msra.mxu0 0.0
    %5899 = vmatprep.subr.mxu0 0.0
    %5900 = vmatpush1.msra.mxu0 0.0
    %5901 = vmatprep.subr.mxu0 0.0
    %5902 = vmatpush1.msra.mxu0 0.0
    %5903 = vmatprep.mubr.f32.mxu0 0.0
    %5904 = vmatmul.mubr.f32.gmra.mrb[0].mxu0 %v5765
    %v5905 = vpop.f32.mrb[0].mxu0
    %v5906 = vadd.f32 0.0, %v5905
    %v5907 = vpop.f32.mrb[0].mxu0
    %5908 = vdwg.mxu0
    %5909 = vmatprep.subr.mxu0 0.0
    %5910 = vmatpush1.msra.mxu0 %v99
    %5911 = vmatprep.subr.mxu0 0.0
    %5912 = vmatpush1.msra.mxu0 %v100
    %5913 = vmatprep.subr.mxu0 0.0
    %5914 = vmatpush1.msra.mxu0 %v101
    %5915 = vmatprep.subr.mxu0 0.0
    %5916 = vmatpush1.msra.mxu0 %v102
    %5917 = vmatprep.subr.mxu0 0.0
    %5918 = vmatpush1.msra.mxu0 0.0
    %5919 = vmatprep.subr.mxu0 0.0
    %5920 = vmatpush1.msra.mxu0 0.0
    %5921 = vmatprep.subr.mxu0 0.0
    %5922 = vmatpush1.msra.mxu0 0.0
    %5923 = vmatprep.subr.mxu0 0.0
    %5924 = vmatpush1.msra.mxu0 0.0
    %5925 = vmatprep.subr.mxu0 0.0
    %5926 = vmatpush1.msra.mxu0 0.0
    %5927 = vmatprep.subr.mxu0 0.0
    %5928 = vmatpush1.msra.mxu0 0.0
    %5929 = vmatprep.subr.mxu0 0.0
    %5930 = vmatpush1.msra.mxu0 0.0
    %5931 = vmatprep.subr.mxu0 0.0
    %5932 = vmatpush1.msra.mxu0 0.0
    %5933 = vmatprep.subr.mxu0 0.0
    %5934 = vmatpush1.msra.mxu0 0.0
    %5935 = vmatprep.subr.mxu0 0.0
    %5936 = vmatpush1.msra.mxu0 0.0
    %5937 = vmatprep.subr.mxu0 0.0
    %5938 = vmatpush1.msra.mxu0 0.0
    %5939 = vmatprep.subr.mxu0 0.0
    %5940 = vmatpush1.msra.mxu0 0.0
    %5941 = vmatprep.subr.mxu0 0.0
    %5942 = vmatpush1.msra.mxu0 0.0
    %5943 = vmatprep.subr.mxu0 0.0
    %5944 = vmatpush1.msra.mxu0 0.0
    %5945 = vmatprep.subr.mxu0 0.0
    %5946 = vmatpush1.msra.mxu0 0.0
    %5947 = vmatprep.subr.mxu0 0.0
    %5948 = vmatpush1.msra.mxu0 0.0
    %5949 = vmatprep.subr.mxu0 0.0
    %5950 = vmatpush1.msra.mxu0 0.0
    %5951 = vmatprep.subr.mxu0 0.0
    %5952 = vmatpush1.msra.mxu0 0.0
    %5953 = vmatprep.subr.mxu0 0.0
    %5954 = vmatpush1.msra.mxu0 0.0
    %5955 = vmatprep.subr.mxu0 0.0
    %5956 = vmatpush1.msra.mxu0 0.0
    %5957 = vmatprep.subr.mxu0 0.0
    %5958 = vmatpush1.msra.mxu0 0.0
    %5959 = vmatprep.subr.mxu0 0.0
    %5960 = vmatpush1.msra.mxu0 0.0
    %5961 = vmatprep.subr.mxu0 0.0
    %5962 = vmatpush1.msra.mxu0 0.0
    %5963 = vmatprep.subr.mxu0 0.0
    %5964 = vmatpush1.msra.mxu0 0.0
    %5965 = vmatprep.subr.mxu0 0.0
    %5966 = vmatpush1.msra.mxu0 0.0
    %5967 = vmatprep.subr.mxu0 0.0
    %5968 = vmatpush1.msra.mxu0 0.0
    %5969 = vmatprep.subr.mxu0 0.0
    %5970 = vmatpush1.msra.mxu0 0.0
    %5971 = vmatprep.subr.mxu0 0.0
    %5972 = vmatpush1.msra.mxu0 0.0
    %5973 = vmatprep.mubr.f32.mxu0 0.0
    %5974 = vmatmul.mubr.f32.gmra.mrb[0].mxu0 %v5765
    %v5975 = vpop.f32.mrb[0].mxu0
    %v5976 = vadd.f32 %v5906, %v5975
    %v5977 = vpop.f32.mrb[0].mxu0
    %5978 = vdwg.mxu0
    %v5979 = vadd.f32 %v5976, %v4761
    %v5980 = vsub.f32 0.0, %v5979
    %v5981 = vmul.f32 %v5980, 1.442695
    %v5982 = vpow.pop %v5981
    %v5983 = vadd.f32 %v5982, 1.0
    %v5984 = vrcp.pop %v5983
    %v5985 = vmul.f32 1.0, %v5984
    %v5986 = vtanh.pop %v5979
    %v5987 = vmul.f32 %v5985, %v5755
    %5989 = vrot.lane.b32.xlu0 %v5986, 64
    %v5990 = vpop.permute.xlu0 %5989
    %v5992 = vmul.f32 %v5985, %v5990
    %5994 = vrot.lane.b32.xlu0 %v5992, 32
    %v5995 = vpop.permute.xlu0 %5994
    %v5997 = vadd.f32 %v5987, %v5995
    %v5998 = vtanh.pop %v5997
    %6000 = vrot.lane.b32.xlu0 %v5998, 64
    %v6001 = vpop.permute.xlu0 %6000
    %v6003 = vmul.f32 %v5985, %v6001
    %6005 = vrot.lane.b32.xlu0 %v6003, 32
    %v6006 = vpop.permute.xlu0 %6005
    %v6007 = vsel %vm126, %v6006, 0
    %6009 = vmatprep.subr.mxu0 0.0
    %6010 = vmatpush1.msra.mxu0 %v108
    %6011 = vmatprep.subr.mxu0 0.0
    %6012 = vmatpush1.msra.mxu0 %v109
    %6013 = vmatprep.subr.mxu0 0.0
    %6014 = vmatpush1.msra.mxu0 %v110
    %6015 = vmatprep.subr.mxu0 0.0
    %6016 = vmatpush1.msra.mxu0 %v111
    %6017 = vmatprep.subr.mxu0 0.0
    %6018 = vmatpush1.msra.mxu0 0.0
    %6019 = vmatprep.subr.mxu0 0.0
    %6020 = vmatpush1.msra.mxu0 0.0
    %6021 = vmatprep.subr.mxu0 0.0
    %6022 = vmatpush1.msra.mxu0 0.0
    %6023 = vmatprep.subr.mxu0 0.0
    %6024 = vmatpush1.msra.mxu0 0.0
    %6025 = vmatprep.subr.mxu0 0.0
    %6026 = vmatpush1.msra.mxu0 0.0
    %6027 = vmatprep.subr.mxu0 0.0
    %6028 = vmatpush1.msra.mxu0 0.0
    %6029 = vmatprep.subr.mxu0 0.0
    %6030 = vmatpush1.msra.mxu0 0.0
    %6031 = vmatprep.subr.mxu0 0.0
    %6032 = vmatpush1.msra.mxu0 0.0
    %6033 = vmatprep.subr.mxu0 0.0
    %6034 = vmatpush1.msra.mxu0 0.0
    %6035 = vmatprep.subr.mxu0 0.0
    %6036 = vmatpush1.msra.mxu0 0.0
    %6037 = vmatprep.subr.mxu0 0.0
    %6038 = vmatpush1.msra.mxu0 0.0
    %6039 = vmatprep.subr.mxu0 0.0
    %6040 = vmatpush1.msra.mxu0 0.0
    %6041 = vmatprep.subr.mxu0 0.0
    %6042 = vmatpush1.msra.mxu0 0.0
    %6043 = vmatprep.subr.mxu0 0.0
    %6044 = vmatpush1.msra.mxu0 0.0
    %6045 = vmatprep.subr.mxu0 0.0
    %6046 = vmatpush1.msra.mxu0 0.0
    %6047 = vmatprep.subr.mxu0 0.0
    %6048 = vmatpush1.msra.mxu0 0.0
    %6049 = vmatprep.subr.mxu0 0.0
    %6050 = vmatpush1.msra.mxu0 0.0
    %6051 = vmatprep.subr.mxu0 0.0
    %6052 = vmatpush1.msra.mxu0 0.0
    %6053 = vmatprep.subr.mxu0 0.0
    %6054 = vmatpush1.msra.mxu0 0.0
    %6055 = vmatprep.subr.mxu0 0.0
    %6056 = vmatpush1.msra.mxu0 0.0
    %6057 = vmatprep.subr.mxu0 0.0
    %6058 = vmatpush1.msra.mxu0 0.0
    %6059 = vmatprep.subr.mxu0 0.0
    %6060 = vmatpush1.msra.mxu0 0.0
    %6061 = vmatprep.subr.mxu0 0.0
    %6062 = vmatpush1.msra.mxu0 0.0
    %6063 = vmatprep.subr.mxu0 0.0
    %6064 = vmatpush1.msra.mxu0 0.0
    %6065 = vmatprep.subr.mxu0 0.0
    %6066 = vmatpush1.msra.mxu0 0.0
    %6067 = vmatprep.subr.mxu0 0.0
    %6068 = vmatpush1.msra.mxu0 0.0
    %6069 = vmatprep.subr.mxu0 0.0
    %6070 = vmatpush1.msra.mxu0 0.0
    %6071 = vmatprep.subr.mxu0 0.0
    %6072 = vmatpush1.msra.mxu0 0.0
    %6073 = vmatprep.mubr.f32.mxu0 0.0
    %6074 = vmatmul.mubr.f32.gmra.mrb[0].mxu0 %v6007
    %v6075 = vpop.f32.mrb[0].mxu0
    %v6076 = vadd.f32 %v4792, %v6075
    %v6077 = vpop.f32.mrb[0].mxu0
    %6078 = vdwg.mxu0
    %s6079 = scalar_lea.vmem %s10, 10
    %6080 = vst.msk [vmem:[%s6079] sm:$0x3] %vm4869, %v6076
    %6081 = vmatprep.subr.mxu0 0.0
    %6082 = vmatpush1.msra.mxu0 %v103
    %6083 = vmatprep.subr.mxu0 0.0
    %6084 = vmatpush1.msra.mxu0 %v104
    %6085 = vmatprep.subr.mxu0 0.0
    %6086 = vmatpush1.msra.mxu0 %v105
    %6087 = vmatprep.subr.mxu0 0.0
    %6088 = vmatpush1.msra.mxu0 %v106
    %6089 = vmatprep.subr.mxu0 0.0
    %6090 = vmatpush1.msra.mxu0 0.0
    %6091 = vmatprep.subr.mxu0 0.0
    %6092 = vmatpush1.msra.mxu0 0.0
    %6093 = vmatprep.subr.mxu0 0.0
    %6094 = vmatpush1.msra.mxu0 0.0
    %6095 = vmatprep.subr.mxu0 0.0
    %6096 = vmatpush1.msra.mxu0 0.0
    %6097 = vmatprep.subr.mxu0 0.0
    %6098 = vmatpush1.msra.mxu0 0.0
    %6099 = vmatprep.subr.mxu0 0.0
    %6100 = vmatpush1.msra.mxu0 0.0
    %6101 = vmatprep.subr.mxu0 0.0
    %6102 = vmatpush1.msra.mxu0 0.0
    %6103 = vmatprep.subr.mxu0 0.0
    %6104 = vmatpush1.msra.mxu0 0.0
    %6105 = vmatprep.subr.mxu0 0.0
    %6106 = vmatpush1.msra.mxu0 0.0
    %6107 = vmatprep.subr.mxu0 0.0
    %6108 = vmatpush1.msra.mxu0 0.0
    %6109 = vmatprep.subr.mxu0 0.0
    %6110 = vmatpush1.msra.mxu0 0.0
    %6111 = vmatprep.subr.mxu0 0.0
    %6112 = vmatpush1.msra.mxu0 0.0
    %6113 = vmatprep.subr.mxu0 0.0
    %6114 = vmatpush1.msra.mxu0 0.0
    %6115 = vmatprep.subr.mxu0 0.0
    %6116 = vmatpush1.msra.mxu0 0.0
    %6117 = vmatprep.subr.mxu0 0.0
    %6118 = vmatpush1.msra.mxu0 0.0
    %6119 = vmatprep.subr.mxu0 0.0
    %6120 = vmatpush1.msra.mxu0 0.0
    %6121 = vmatprep.subr.mxu0 0.0
    %6122 = vmatpush1.msra.mxu0 0.0
    %6123 = vmatprep.subr.mxu0 0.0
    %6124 = vmatpush1.msra.mxu0 0.0
    %6125 = vmatprep.subr.mxu0 0.0
    %6126 = vmatpush1.msra.mxu0 0.0
    %6127 = vmatprep.subr.mxu0 0.0
    %6128 = vmatpush1.msra.mxu0 0.0
    %6129 = vmatprep.subr.mxu0 0.0
    %6130 = vmatpush1.msra.mxu0 0.0
    %6131 = vmatprep.subr.mxu0 0.0
    %6132 = vmatpush1.msra.mxu0 0.0
    %6133 = vmatprep.subr.mxu0 0.0
    %6134 = vmatpush1.msra.mxu0 0.0
    %6135 = vmatprep.subr.mxu0 0.0
    %6136 = vmatpush1.msra.mxu0 0.0
    %6137 = vmatprep.subr.mxu0 0.0
    %6138 = vmatpush1.msra.mxu0 0.0
    %6139 = vmatprep.subr.mxu0 0.0
    %6140 = vmatpush1.msra.mxu0 0.0
    %6141 = vmatprep.subr.mxu0 0.0
    %6142 = vmatpush1.msra.mxu0 0.0
    %6143 = vmatprep.subr.mxu0 0.0
    %6144 = vmatpush1.msra.mxu0 0.0
    %6145 = vmatprep.mubr.f32.mxu0 0.0
    %6146 = vmatmul.mubr.f32.gmra.mrb[0].mxu0 %v6007
    %v6147 = vpop.f32.mrb[0].mxu0
    %v6148 = vadd.f32 0.0, %v6147
    %v6149 = vpop.f32.mrb[0].mxu0
    %6150 = vdwg.mxu0
    %6151 = vmatprep.subr.mxu0 0.0
    %6152 = vmatpush1.msra.mxu0 %v99
    %6153 = vmatprep.subr.mxu0 0.0
    %6154 = vmatpush1.msra.mxu0 %v100
    %6155 = vmatprep.subr.mxu0 0.0
    %6156 = vmatpush1.msra.mxu0 %v101
    %6157 = vmatprep.subr.mxu0 0.0
    %6158 = vmatpush1.msra.mxu0 %v102
    %6159 = vmatprep.subr.mxu0 0.0
    %6160 = vmatpush1.msra.mxu0 0.0
    %6161 = vmatprep.subr.mxu0 0.0
    %6162 = vmatpush1.msra.mxu0 0.0
    %6163 = vmatprep.subr.mxu0 0.0
    %6164 = vmatpush1.msra.mxu0 0.0
    %6165 = vmatprep.subr.mxu0 0.0
    %6166 = vmatpush1.msra.mxu0 0.0
    %6167 = vmatprep.subr.mxu0 0.0
    %6168 = vmatpush1.msra.mxu0 0.0
    %6169 = vmatprep.subr.mxu0 0.0
    %6170 = vmatpush1.msra.mxu0 0.0
    %6171 = vmatprep.subr.mxu0 0.0
    %6172 = vmatpush1.msra.mxu0 0.0
    %6173 = vmatprep.subr.mxu0 0.0
    %6174 = vmatpush1.msra.mxu0 0.0
    %6175 = vmatprep.subr.mxu0 0.0
    %6176 = vmatpush1.msra.mxu0 0.0
    %6177 = vmatprep.subr.mxu0 0.0
    %6178 = vmatpush1.msra.mxu0 0.0
    %6179 = vmatprep.subr.mxu0 0.0
    %6180 = vmatpush1.msra.mxu0 0.0
    %6181 = vmatprep.subr.mxu0 0.0
    %6182 = vmatpush1.msra.mxu0 0.0
    %6183 = vmatprep.subr.mxu0 0.0
    %6184 = vmatpush1.msra.mxu0 0.0
    %6185 = vmatprep.subr.mxu0 0.0
    %6186 = vmatpush1.msra.mxu0 0.0
    %6187 = vmatprep.subr.mxu0 0.0
    %6188 = vmatpush1.msra.mxu0 0.0
    %6189 = vmatprep.subr.mxu0 0.0
    %6190 = vmatpush1.msra.mxu0 0.0
    %6191 = vmatprep.subr.mxu0 0.0
    %6192 = vmatpush1.msra.mxu0 0.0
    %6193 = vmatprep.subr.mxu0 0.0
    %6194 = vmatpush1.msra.mxu0 0.0
    %6195 = vmatprep.subr.mxu0 0.0
    %6196 = vmatpush1.msra.mxu0 0.0
    %6197 = vmatprep.subr.mxu0 0.0
    %6198 = vmatpush1.msra.mxu0 0.0
    %6199 = vmatprep.subr.mxu0 0.0
    %6200 = vmatpush1.msra.mxu0 0.0
    %6201 = vmatprep.subr.mxu0 0.0
    %6202 = vmatpush1.msra.mxu0 0.0
    %6203 = vmatprep.subr.mxu0 0.0
    %6204 = vmatpush1.msra.mxu0 0.0
    %6205 = vmatprep.subr.mxu0 0.0
    %6206 = vmatpush1.msra.mxu0 0.0
    %6207 = vmatprep.subr.mxu0 0.0
    %6208 = vmatpush1.msra.mxu0 0.0
    %6209 = vmatprep.subr.mxu0 0.0
    %6210 = vmatpush1.msra.mxu0 0.0
    %6211 = vmatprep.subr.mxu0 0.0
    %6212 = vmatpush1.msra.mxu0 0.0
    %6213 = vmatprep.subr.mxu0 0.0
    %6214 = vmatpush1.msra.mxu0 0.0
    %6215 = vmatprep.mubr.f32.mxu0 0.0
    %6216 = vmatmul.mubr.f32.gmra.mrb[0].mxu0 %v6007
    %v6217 = vpop.f32.mrb[0].mxu0
    %v6218 = vadd.f32 %v6148, %v6217
    %v6219 = vpop.f32.mrb[0].mxu0
    %6220 = vdwg.mxu0
    %v6221 = vadd.f32 %v6218, %v4761
    %v6222 = vsub.f32 0.0, %v6221
    %v6223 = vmul.f32 %v6222, 1.442695
    %v6224 = vpow.pop %v6223
    %v6225 = vadd.f32 %v6224, 1.0
    %v6226 = vrcp.pop %v6225
    %v6227 = vmul.f32 1.0, %v6226
    %v6228 = vtanh.pop %v6221
    %v6229 = vmul.f32 %v6227, %v5997
    %6231 = vrot.lane.b32.xlu0 %v6228, 64
    %v6232 = vpop.permute.xlu0 %6231
    %v6234 = vmul.f32 %v6227, %v6232
    %6236 = vrot.lane.b32.xlu0 %v6234, 32
    %v6237 = vpop.permute.xlu0 %6236
    %v6239 = vadd.f32 %v6229, %v6237
    %v6240 = vtanh.pop %v6239
    %6242 = vrot.lane.b32.xlu0 %v6240, 64
    %v6243 = vpop.permute.xlu0 %6242
    %v6245 = vmul.f32 %v6227, %v6243
    %6247 = vrot.lane.b32.xlu0 %v6245, 32
    %v6248 = vpop.permute.xlu0 %6247
    %v6249 = vsel %vm126, %v6248, 0
    %6251 = vmatprep.subr.mxu0 0.0
    %6252 = vmatpush1.msra.mxu0 %v108
    %6253 = vmatprep.subr.mxu0 0.0
    %6254 = vmatpush1.msra.mxu0 %v109
    %6255 = vmatprep.subr.mxu0 0.0
    %6256 = vmatpush1.msra.mxu0 %v110
    %6257 = vmatprep.subr.mxu0 0.0
    %6258 = vmatpush1.msra.mxu0 %v111
    %6259 = vmatprep.subr.mxu0 0.0
    %6260 = vmatpush1.msra.mxu0 0.0
    %6261 = vmatprep.subr.mxu0 0.0
    %6262 = vmatpush1.msra.mxu0 0.0
    %6263 = vmatprep.subr.mxu0 0.0
    %6264 = vmatpush1.msra.mxu0 0.0
    %6265 = vmatprep.subr.mxu0 0.0
    %6266 = vmatpush1.msra.mxu0 0.0
    %6267 = vmatprep.subr.mxu0 0.0
    %6268 = vmatpush1.msra.mxu0 0.0
    %6269 = vmatprep.subr.mxu0 0.0
    %6270 = vmatpush1.msra.mxu0 0.0
    %6271 = vmatprep.subr.mxu0 0.0
    %6272 = vmatpush1.msra.mxu0 0.0
    %6273 = vmatprep.subr.mxu0 0.0
    %6274 = vmatpush1.msra.mxu0 0.0
    %6275 = vmatprep.subr.mxu0 0.0
    %6276 = vmatpush1.msra.mxu0 0.0
    %6277 = vmatprep.subr.mxu0 0.0
    %6278 = vmatpush1.msra.mxu0 0.0
    %6279 = vmatprep.subr.mxu0 0.0
    %6280 = vmatpush1.msra.mxu0 0.0
    %6281 = vmatprep.subr.mxu0 0.0
    %6282 = vmatpush1.msra.mxu0 0.0
    %6283 = vmatprep.subr.mxu0 0.0
    %6284 = vmatpush1.msra.mxu0 0.0
    %6285 = vmatprep.subr.mxu0 0.0
    %6286 = vmatpush1.msra.mxu0 0.0
    %6287 = vmatprep.subr.mxu0 0.0
    %6288 = vmatpush1.msra.mxu0 0.0
    %6289 = vmatprep.subr.mxu0 0.0
    %6290 = vmatpush1.msra.mxu0 0.0
    %6291 = vmatprep.subr.mxu0 0.0
    %6292 = vmatpush1.msra.mxu0 0.0
    %6293 = vmatprep.subr.mxu0 0.0
    %6294 = vmatpush1.msra.mxu0 0.0
    %6295 = vmatprep.subr.mxu0 0.0
    %6296 = vmatpush1.msra.mxu0 0.0
    %6297 = vmatprep.subr.mxu0 0.0
    %6298 = vmatpush1.msra.mxu0 0.0
    %6299 = vmatprep.subr.mxu0 0.0
    %6300 = vmatpush1.msra.mxu0 0.0
    %6301 = vmatprep.subr.mxu0 0.0
    %6302 = vmatpush1.msra.mxu0 0.0
    %6303 = vmatprep.subr.mxu0 0.0
    %6304 = vmatpush1.msra.mxu0 0.0
    %6305 = vmatprep.subr.mxu0 0.0
    %6306 = vmatpush1.msra.mxu0 0.0
    %6307 = vmatprep.subr.mxu0 0.0
    %6308 = vmatpush1.msra.mxu0 0.0
    %6309 = vmatprep.subr.mxu0 0.0
    %6310 = vmatpush1.msra.mxu0 0.0
    %6311 = vmatprep.subr.mxu0 0.0
    %6312 = vmatpush1.msra.mxu0 0.0
    %6313 = vmatprep.subr.mxu0 0.0
    %6314 = vmatpush1.msra.mxu0 0.0
    %6315 = vmatprep.mubr.f32.mxu0 0.0
    %6316 = vmatmul.mubr.f32.gmra.mrb[0].mxu0 %v6249
    %v6317 = vpop.f32.mrb[0].mxu0
    %v6318 = vadd.f32 %v4792, %v6317
    %v6319 = vpop.f32.mrb[0].mxu0
    %6320 = vdwg.mxu0
    %s6321 = scalar_lea.vmem %s10, 12
    %6322 = vst.msk [vmem:[%s6321] sm:$0x3] %vm4869, %v6318
    %6323 = vmatprep.subr.mxu0 0.0
    %6324 = vmatpush1.msra.mxu0 %v103
    %6325 = vmatprep.subr.mxu0 0.0
    %6326 = vmatpush1.msra.mxu0 %v104
    %6327 = vmatprep.subr.mxu0 0.0
    %6328 = vmatpush1.msra.mxu0 %v105
    %6329 = vmatprep.subr.mxu0 0.0
    %6330 = vmatpush1.msra.mxu0 %v106
    %6331 = vmatprep.subr.mxu0 0.0
    %6332 = vmatpush1.msra.mxu0 0.0
    %6333 = vmatprep.subr.mxu0 0.0
    %6334 = vmatpush1.msra.mxu0 0.0
    %6335 = vmatprep.subr.mxu0 0.0
    %6336 = vmatpush1.msra.mxu0 0.0
    %6337 = vmatprep.subr.mxu0 0.0
    %6338 = vmatpush1.msra.mxu0 0.0
    %6339 = vmatprep.subr.mxu0 0.0
    %6340 = vmatpush1.msra.mxu0 0.0
    %6341 = vmatprep.subr.mxu0 0.0
    %6342 = vmatpush1.msra.mxu0 0.0
    %6343 = vmatprep.subr.mxu0 0.0
    %6344 = vmatpush1.msra.mxu0 0.0
    %6345 = vmatprep.subr.mxu0 0.0
    %6346 = vmatpush1.msra.mxu0 0.0
    %6347 = vmatprep.subr.mxu0 0.0
    %6348 = vmatpush1.msra.mxu0 0.0
    %6349 = vmatprep.subr.mxu0 0.0
    %6350 = vmatpush1.msra.mxu0 0.0
    %6351 = vmatprep.subr.mxu0 0.0
    %6352 = vmatpush1.msra.mxu0 0.0
    %6353 = vmatprep.subr.mxu0 0.0
    %6354 = vmatpush1.msra.mxu0 0.0
    %6355 = vmatprep.subr.mxu0 0.0
    %6356 = vmatpush1.msra.mxu0 0.0
    %6357 = vmatprep.subr.mxu0 0.0
    %6358 = vmatpush1.msra.mxu0 0.0
    %6359 = vmatprep.subr.mxu0 0.0
    %6360 = vmatpush1.msra.mxu0 0.0
    %6361 = vmatprep.subr.mxu0 0.0
    %6362 = vmatpush1.msra.mxu0 0.0
    %6363 = vmatprep.subr.mxu0 0.0
    %6364 = vmatpush1.msra.mxu0 0.0
    %6365 = vmatprep.subr.mxu0 0.0
    %6366 = vmatpush1.msra.mxu0 0.0
    %6367 = vmatprep.subr.mxu0 0.0
    %6368 = vmatpush1.msra.mxu0 0.0
    %6369 = vmatprep.subr.mxu0 0.0
    %6370 = vmatpush1.msra.mxu0 0.0
    %6371 = vmatprep.subr.mxu0 0.0
    %6372 = vmatpush1.msra.mxu0 0.0
    %6373 = vmatprep.subr.mxu0 0.0
    %6374 = vmatpush1.msra.mxu0 0.0
    %6375 = vmatprep.subr.mxu0 0.0
    %6376 = vmatpush1.msra.mxu0 0.0
    %6377 = vmatprep.subr.mxu0 0.0
    %6378 = vmatpush1.msra.mxu0 0.0
    %6379 = vmatprep.subr.mxu0 0.0
    %6380 = vmatpush1.msra.mxu0 0.0
    %6381 = vmatprep.subr.mxu0 0.0
    %6382 = vmatpush1.msra.mxu0 0.0
    %6383 = vmatprep.subr.mxu0 0.0
    %6384 = vmatpush1.msra.mxu0 0.0
    %6385 = vmatprep.subr.mxu0 0.0
    %6386 = vmatpush1.msra.mxu0 0.0
    %6387 = vmatprep.mubr.f32.mxu0 0.0
    %6388 = vmatmul.mubr.f32.gmra.mrb[0].mxu0 %v6249
    %v6389 = vpop.f32.mrb[0].mxu0
    %v6390 = vadd.f32 0.0, %v6389
    %v6391 = vpop.f32.mrb[0].mxu0
    %6392 = vdwg.mxu0
    %6393 = vmatprep.subr.mxu0 0.0
    %6394 = vmatpush1.msra.mxu0 %v99
    %6395 = vmatprep.subr.mxu0 0.0
    %6396 = vmatpush1.msra.mxu0 %v100
    %6397 = vmatprep.subr.mxu0 0.0
    %6398 = vmatpush1.msra.mxu0 %v101
    %6399 = vmatprep.subr.mxu0 0.0
    %6400 = vmatpush1.msra.mxu0 %v102
    %6401 = vmatprep.subr.mxu0 0.0
    %6402 = vmatpush1.msra.mxu0 0.0
    %6403 = vmatprep.subr.mxu0 0.0
    %6404 = vmatpush1.msra.mxu0 0.0
    %6405 = vmatprep.subr.mxu0 0.0
    %6406 = vmatpush1.msra.mxu0 0.0
    %6407 = vmatprep.subr.mxu0 0.0
    %6408 = vmatpush1.msra.mxu0 0.0
    %6409 = vmatprep.subr.mxu0 0.0
    %6410 = vmatpush1.msra.mxu0 0.0
    %6411 = vmatprep.subr.mxu0 0.0
    %6412 = vmatpush1.msra.mxu0 0.0
    %6413 = vmatprep.subr.mxu0 0.0
    %6414 = vmatpush1.msra.mxu0 0.0
    %6415 = vmatprep.subr.mxu0 0.0
    %6416 = vmatpush1.msra.mxu0 0.0
    %6417 = vmatprep.subr.mxu0 0.0
    %6418 = vmatpush1.msra.mxu0 0.0
    %6419 = vmatprep.subr.mxu0 0.0
    %6420 = vmatpush1.msra.mxu0 0.0
    %6421 = vmatprep.subr.mxu0 0.0
    %6422 = vmatpush1.msra.mxu0 0.0
    %6423 = vmatprep.subr.mxu0 0.0
    %6424 = vmatpush1.msra.mxu0 0.0
    %6425 = vmatprep.subr.mxu0 0.0
    %6426 = vmatpush1.msra.mxu0 0.0
    %6427 = vmatprep.subr.mxu0 0.0
    %6428 = vmatpush1.msra.mxu0 0.0
    %6429 = vmatprep.subr.mxu0 0.0
    %6430 = vmatpush1.msra.mxu0 0.0
    %6431 = vmatprep.subr.mxu0 0.0
    %6432 = vmatpush1.msra.mxu0 0.0
    %6433 = vmatprep.subr.mxu0 0.0
    %6434 = vmatpush1.msra.mxu0 0.0
    %6435 = vmatprep.subr.mxu0 0.0
    %6436 = vmatpush1.msra.mxu0 0.0
    %6437 = vmatprep.subr.mxu0 0.0
    %6438 = vmatpush1.msra.mxu0 0.0
    %6439 = vmatprep.subr.mxu0 0.0
    %6440 = vmatpush1.msra.mxu0 0.0
    %6441 = vmatprep.subr.mxu0 0.0
    %6442 = vmatpush1.msra.mxu0 0.0
    %6443 = vmatprep.subr.mxu0 0.0
    %6444 = vmatpush1.msra.mxu0 0.0
    %6445 = vmatprep.subr.mxu0 0.0
    %6446 = vmatpush1.msra.mxu0 0.0
    %6447 = vmatprep.subr.mxu0 0.0
    %6448 = vmatpush1.msra.mxu0 0.0
    %6449 = vmatprep.subr.mxu0 0.0
    %6450 = vmatpush1.msra.mxu0 0.0
    %6451 = vmatprep.subr.mxu0 0.0
    %6452 = vmatpush1.msra.mxu0 0.0
    %6453 = vmatprep.subr.mxu0 0.0
    %6454 = vmatpush1.msra.mxu0 0.0
    %6455 = vmatprep.subr.mxu0 0.0
    %6456 = vmatpush1.msra.mxu0 0.0
    %6457 = vmatprep.mubr.f32.mxu0 0.0
    %6458 = vmatmul.mubr.f32.gmra.mrb[0].mxu0 %v6249
    %v6459 = vpop.f32.mrb[0].mxu0
    %v6460 = vadd.f32 %v6390, %v6459
    %v6461 = vpop.f32.mrb[0].mxu0
    %6462 = vdwg.mxu0
    %v6463 = vadd.f32 %v6460, %v4761
    %v6464 = vsub.f32 0.0, %v6463
    %v6465 = vmul.f32 %v6464, 1.442695
    %v6466 = vpow.pop %v6465
    %v6467 = vadd.f32 %v6466, 1.0
    %v6468 = vrcp.pop %v6467
    %v6469 = vmul.f32 1.0, %v6468
    %v6470 = vtanh.pop %v6463
    %v6471 = vmul.f32 %v6469, %v6239
    %6473 = vrot.lane.b32.xlu0 %v6470, 64
    %v6474 = vpop.permute.xlu0 %6473
    %v6476 = vmul.f32 %v6469, %v6474
    %6478 = vrot.lane.b32.xlu0 %v6476, 32
    %v6479 = vpop.permute.xlu0 %6478
    %v6481 = vadd.f32 %v6471, %v6479
    %v6482 = vtanh.pop %v6481
    %6484 = vrot.lane.b32.xlu0 %v6482, 64
    %v6485 = vpop.permute.xlu0 %6484
    %v6487 = vmul.f32 %v6469, %v6485
    %6489 = vrot.lane.b32.xlu0 %v6487, 32
    %v6490 = vpop.permute.xlu0 %6489
    %v6491 = vsel %vm126, %v6490, 0
    %6493 = vmatprep.subr.mxu0 0.0
    %6494 = vmatpush1.msra.mxu0 %v108
    %6495 = vmatprep.subr.mxu0 0.0
    %6496 = vmatpush1.msra.mxu0 %v109
    %6497 = vmatprep.subr.mxu0 0.0
    %6498 = vmatpush1.msra.mxu0 %v110
    %6499 = vmatprep.subr.mxu0 0.0
    %6500 = vmatpush1.msra.mxu0 %v111
    %6501 = vmatprep.subr.mxu0 0.0
    %6502 = vmatpush1.msra.mxu0 0.0
    %6503 = vmatprep.subr.mxu0 0.0
    %6504 = vmatpush1.msra.mxu0 0.0
    %6505 = vmatprep.subr.mxu0 0.0
    %6506 = vmatpush1.msra.mxu0 0.0
    %6507 = vmatprep.subr.mxu0 0.0
    %6508 = vmatpush1.msra.mxu0 0.0
    %6509 = vmatprep.subr.mxu0 0.0
    %6510 = vmatpush1.msra.mxu0 0.0
    %6511 = vmatprep.subr.mxu0 0.0
    %6512 = vmatpush1.msra.mxu0 0.0
    %6513 = vmatprep.subr.mxu0 0.0
    %6514 = vmatpush1.msra.mxu0 0.0
    %6515 = vmatprep.subr.mxu0 0.0
    %6516 = vmatpush1.msra.mxu0 0.0
    %6517 = vmatprep.subr.mxu0 0.0
    %6518 = vmatpush1.msra.mxu0 0.0
    %6519 = vmatprep.subr.mxu0 0.0
    %6520 = vmatpush1.msra.mxu0 0.0
    %6521 = vmatprep.subr.mxu0 0.0
    %6522 = vmatpush1.msra.mxu0 0.0
    %6523 = vmatprep.subr.mxu0 0.0
    %6524 = vmatpush1.msra.mxu0 0.0
    %6525 = vmatprep.subr.mxu0 0.0
    %6526 = vmatpush1.msra.mxu0 0.0
    %6527 = vmatprep.subr.mxu0 0.0
    %6528 = vmatpush1.msra.mxu0 0.0
    %6529 = vmatprep.subr.mxu0 0.0
    %6530 = vmatpush1.msra.mxu0 0.0
    %6531 = vmatprep.subr.mxu0 0.0
    %6532 = vmatpush1.msra.mxu0 0.0
    %6533 = vmatprep.subr.mxu0 0.0
    %6534 = vmatpush1.msra.mxu0 0.0
    %6535 = vmatprep.subr.mxu0 0.0
    %6536 = vmatpush1.msra.mxu0 0.0
    %6537 = vmatprep.subr.mxu0 0.0
    %6538 = vmatpush1.msra.mxu0 0.0
    %6539 = vmatprep.subr.mxu0 0.0
    %6540 = vmatpush1.msra.mxu0 0.0
    %6541 = vmatprep.subr.mxu0 0.0
    %6542 = vmatpush1.msra.mxu0 0.0
    %6543 = vmatprep.subr.mxu0 0.0
    %6544 = vmatpush1.msra.mxu0 0.0
    %6545 = vmatprep.subr.mxu0 0.0
    %6546 = vmatpush1.msra.mxu0 0.0
    %6547 = vmatprep.subr.mxu0 0.0
    %6548 = vmatpush1.msra.mxu0 0.0
    %6549 = vmatprep.subr.mxu0 0.0
    %6550 = vmatpush1.msra.mxu0 0.0
    %6551 = vmatprep.subr.mxu0 0.0
    %6552 = vmatpush1.msra.mxu0 0.0
    %6553 = vmatprep.subr.mxu0 0.0
    %6554 = vmatpush1.msra.mxu0 0.0
    %6555 = vmatprep.subr.mxu0 0.0
    %6556 = vmatpush1.msra.mxu0 0.0
    %6557 = vmatprep.mubr.f32.mxu0 0.0
    %6558 = vmatmul.mubr.f32.gmra.mrb[0].mxu0 %v6491
    %v6559 = vpop.f32.mrb[0].mxu0
    %v6560 = vadd.f32 %v4792, %v6559
    %v6561 = vpop.f32.mrb[0].mxu0
    %6562 = vdwg.mxu0
    %s6563 = scalar_lea.vmem %s10, 14
    %6564 = vst.msk [vmem:[%s6563] sm:$0x3] %vm4869, %v6560
    %6565 = vmatprep.subr.mxu0 0.0
    %6566 = vmatpush1.msra.mxu0 %v103
    %6567 = vmatprep.subr.mxu0 0.0
    %6568 = vmatpush1.msra.mxu0 %v104
    %6569 = vmatprep.subr.mxu0 0.0
    %6570 = vmatpush1.msra.mxu0 %v105
    %6571 = vmatprep.subr.mxu0 0.0
    %6572 = vmatpush1.msra.mxu0 %v106
    %6573 = vmatprep.subr.mxu0 0.0
    %6574 = vmatpush1.msra.mxu0 0.0
    %6575 = vmatprep.subr.mxu0 0.0
    %6576 = vmatpush1.msra.mxu0 0.0
    %6577 = vmatprep.subr.mxu0 0.0
    %6578 = vmatpush1.msra.mxu0 0.0
    %6579 = vmatprep.subr.mxu0 0.0
    %6580 = vmatpush1.msra.mxu0 0.0
    %6581 = vmatprep.subr.mxu0 0.0
    %6582 = vmatpush1.msra.mxu0 0.0
    %6583 = vmatprep.subr.mxu0 0.0
    %6584 = vmatpush1.msra.mxu0 0.0
    %6585 = vmatprep.subr.mxu0 0.0
    %6586 = vmatpush1.msra.mxu0 0.0
    %6587 = vmatprep.subr.mxu0 0.0
    %6588 = vmatpush1.msra.mxu0 0.0
    %6589 = vmatprep.subr.mxu0 0.0
    %6590 = vmatpush1.msra.mxu0 0.0
    %6591 = vmatprep.subr.mxu0 0.0
    %6592 = vmatpush1.msra.mxu0 0.0
    %6593 = vmatprep.subr.mxu0 0.0
    %6594 = vmatpush1.msra.mxu0 0.0
    %6595 = vmatprep.subr.mxu0 0.0
    %6596 = vmatpush1.msra.mxu0 0.0
    %6597 = vmatprep.subr.mxu0 0.0
    %6598 = vmatpush1.msra.mxu0 0.0
    %6599 = vmatprep.subr.mxu0 0.0
    %6600 = vmatpush1.msra.mxu0 0.0
    %6601 = vmatprep.subr.mxu0 0.0
    %6602 = vmatpush1.msra.mxu0 0.0
    %6603 = vmatprep.subr.mxu0 0.0
    %6604 = vmatpush1.msra.mxu0 0.0
    %6605 = vmatprep.subr.mxu0 0.0
    %6606 = vmatpush1.msra.mxu0 0.0
    %6607 = vmatprep.subr.mxu0 0.0
    %6608 = vmatpush1.msra.mxu0 0.0
    %6609 = vmatprep.subr.mxu0 0.0
    %6610 = vmatpush1.msra.mxu0 0.0
    %6611 = vmatprep.subr.mxu0 0.0
    %6612 = vmatpush1.msra.mxu0 0.0
    %6613 = vmatprep.subr.mxu0 0.0
    %6614 = vmatpush1.msra.mxu0 0.0
    %6615 = vmatprep.subr.mxu0 0.0
    %6616 = vmatpush1.msra.mxu0 0.0
    %6617 = vmatprep.subr.mxu0 0.0
    %6618 = vmatpush1.msra.mxu0 0.0
    %6619 = vmatprep.subr.mxu0 0.0
    %6620 = vmatpush1.msra.mxu0 0.0
    %6621 = vmatprep.subr.mxu0 0.0
    %6622 = vmatpush1.msra.mxu0 0.0
    %6623 = vmatprep.subr.mxu0 0.0
    %6624 = vmatpush1.msra.mxu0 0.0
    %6625 = vmatprep.subr.mxu0 0.0
    %6626 = vmatpush1.msra.mxu0 0.0
    %6627 = vmatprep.subr.mxu0 0.0
    %6628 = vmatpush1.msra.mxu0 0.0
    %6629 = vmatprep.mubr.f32.mxu0 0.0
    %6630 = vmatmul.mubr.f32.gmra.mrb[0].mxu0 %v6491
    %v6631 = vpop.f32.mrb[0].mxu0
    %v6632 = vadd.f32 0.0, %v6631
    %v6633 = vpop.f32.mrb[0].mxu0
    %6634 = vdwg.mxu0
    %6635 = vmatprep.subr.mxu0 0.0
    %6636 = vmatpush1.msra.mxu0 %v99
    %6637 = vmatprep.subr.mxu0 0.0
    %6638 = vmatpush1.msra.mxu0 %v100
    %6639 = vmatprep.subr.mxu0 0.0
    %6640 = vmatpush1.msra.mxu0 %v101
    %6641 = vmatprep.subr.mxu0 0.0
    %6642 = vmatpush1.msra.mxu0 %v102
    %6643 = vmatprep.subr.mxu0 0.0
    %6644 = vmatpush1.msra.mxu0 0.0
    %6645 = vmatprep.subr.mxu0 0.0
    %6646 = vmatpush1.msra.mxu0 0.0
    %6647 = vmatprep.subr.mxu0 0.0
    %6648 = vmatpush1.msra.mxu0 0.0
    %6649 = vmatprep.subr.mxu0 0.0
    %6650 = vmatpush1.msra.mxu0 0.0
    %6651 = vmatprep.subr.mxu0 0.0
    %6652 = vmatpush1.msra.mxu0 0.0
    %6653 = vmatprep.subr.mxu0 0.0
    %6654 = vmatpush1.msra.mxu0 0.0
    %6655 = vmatprep.subr.mxu0 0.0
    %6656 = vmatpush1.msra.mxu0 0.0
    %6657 = vmatprep.subr.mxu0 0.0
    %6658 = vmatpush1.msra.mxu0 0.0
    %6659 = vmatprep.subr.mxu0 0.0
    %6660 = vmatpush1.msra.mxu0 0.0
    %6661 = vmatprep.subr.mxu0 0.0
    %6662 = vmatpush1.msra.mxu0 0.0
    %6663 = vmatprep.subr.mxu0 0.0
    %6664 = vmatpush1.msra.mxu0 0.0
    %6665 = vmatprep.subr.mxu0 0.0
    %6666 = vmatpush1.msra.mxu0 0.0
    %6667 = vmatprep.subr.mxu0 0.0
    %6668 = vmatpush1.msra.mxu0 0.0
    %6669 = vmatprep.subr.mxu0 0.0
    %6670 = vmatpush1.msra.mxu0 0.0
    %6671 = vmatprep.subr.mxu0 0.0
    %6672 = vmatpush1.msra.mxu0 0.0
    %6673 = vmatprep.subr.mxu0 0.0
    %6674 = vmatpush1.msra.mxu0 0.0
    %6675 = vmatprep.subr.mxu0 0.0
    %6676 = vmatpush1.msra.mxu0 0.0
    %6677 = vmatprep.subr.mxu0 0.0
    %6678 = vmatpush1.msra.mxu0 0.0
    %6679 = vmatprep.subr.mxu0 0.0
    %6680 = vmatpush1.msra.mxu0 0.0
    %6681 = vmatprep.subr.mxu0 0.0
    %6682 = vmatpush1.msra.mxu0 0.0
    %6683 = vmatprep.subr.mxu0 0.0
    %6684 = vmatpush1.msra.mxu0 0.0
    %6685 = vmatprep.subr.mxu0 0.0
    %6686 = vmatpush1.msra.mxu0 0.0
    %6687 = vmatprep.subr.mxu0 0.0
    %6688 = vmatpush1.msra.mxu0 0.0
    %6689 = vmatprep.subr.mxu0 0.0
    %6690 = vmatpush1.msra.mxu0 0.0
    %6691 = vmatprep.subr.mxu0 0.0
    %6692 = vmatpush1.msra.mxu0 0.0
    %6693 = vmatprep.subr.mxu0 0.0
    %6694 = vmatpush1.msra.mxu0 0.0
    %6695 = vmatprep.subr.mxu0 0.0
    %6696 = vmatpush1.msra.mxu0 0.0
    %6697 = vmatprep.subr.mxu0 0.0
    %6698 = vmatpush1.msra.mxu0 0.0
    %6699 = vmatprep.mubr.f32.mxu0 0.0
    %6700 = vmatmul.mubr.f32.gmra.mrb[0].mxu0 %v6491
    %v6701 = vpop.f32.mrb[0].mxu0
    %v6702 = vadd.f32 %v6632, %v6701
    %v6703 = vpop.f32.mrb[0].mxu0
    %6704 = vdwg.mxu0
    %v6705 = vadd.f32 %v6702, %v4761
    %v6706 = vsub.f32 0.0, %v6705
    %v6707 = vmul.f32 %v6706, 1.442695
    %v6708 = vpow.pop %v6707
    %v6709 = vadd.f32 %v6708, 1.0
    %v6710 = vrcp.pop %v6709
    %v6711 = vmul.f32 1.0, %v6710
    %v6712 = vtanh.pop %v6705
    %v6713 = vmul.f32 %v6711, %v6481
    %6715 = vrot.lane.b32.xlu0 %v6712, 64
    %v6716 = vpop.permute.xlu0 %6715
    %v6718 = vmul.f32 %v6711, %v6716
    %6720 = vrot.lane.b32.xlu0 %v6718, 32
    %v6721 = vpop.permute.xlu0 %6720
    %v6723 = vadd.f32 %v6713, %v6721
    %v6724 = vtanh.pop %v6723
    %6726 = vrot.lane.b32.xlu0 %v6724, 64
    %v6727 = vpop.permute.xlu0 %6726
    %v6729 = vmul.f32 %v6711, %v6727
    %6731 = vrot.lane.b32.xlu0 %v6729, 32
    %v6732 = vpop.permute.xlu0 %6731
    %v6733 = vsel %vm126, %v6732, 0
    %6735 = vmatprep.subr.mxu0 0.0
    %6736 = vmatpush1.msra.mxu0 %v108
    %6737 = vmatprep.subr.mxu0 0.0
    %6738 = vmatpush1.msra.mxu0 %v109
    %6739 = vmatprep.subr.mxu0 0.0
    %6740 = vmatpush1.msra.mxu0 %v110
    %6741 = vmatprep.subr.mxu0 0.0
    %6742 = vmatpush1.msra.mxu0 %v111
    %6743 = vmatprep.subr.mxu0 0.0
    %6744 = vmatpush1.msra.mxu0 0.0
    %6745 = vmatprep.subr.mxu0 0.0
    %6746 = vmatpush1.msra.mxu0 0.0
    %6747 = vmatprep.subr.mxu0 0.0
    %6748 = vmatpush1.msra.mxu0 0.0
    %6749 = vmatprep.subr.mxu0 0.0
    %6750 = vmatpush1.msra.mxu0 0.0
    %6751 = vmatprep.subr.mxu0 0.0
    %6752 = vmatpush1.msra.mxu0 0.0
    %6753 = vmatprep.subr.mxu0 0.0
    %6754 = vmatpush1.msra.mxu0 0.0
    %6755 = vmatprep.subr.mxu0 0.0
    %6756 = vmatpush1.msra.mxu0 0.0
    %6757 = vmatprep.subr.mxu0 0.0
    %6758 = vmatpush1.msra.mxu0 0.0
    %6759 = vmatprep.subr.mxu0 0.0
    %6760 = vmatpush1.msra.mxu0 0.0
    %6761 = vmatprep.subr.mxu0 0.0
    %6762 = vmatpush1.msra.mxu0 0.0
    %6763 = vmatprep.subr.mxu0 0.0
    %6764 = vmatpush1.msra.mxu0 0.0
    %6765 = vmatprep.subr.mxu0 0.0
    %6766 = vmatpush1.msra.mxu0 0.0
    %6767 = vmatprep.subr.mxu0 0.0
    %6768 = vmatpush1.msra.mxu0 0.0
    %6769 = vmatprep.subr.mxu0 0.0
    %6770 = vmatpush1.msra.mxu0 0.0
    %6771 = vmatprep.subr.mxu0 0.0
    %6772 = vmatpush1.msra.mxu0 0.0
    %6773 = vmatprep.subr.mxu0 0.0
    %6774 = vmatpush1.msra.mxu0 0.0
    %6775 = vmatprep.subr.mxu0 0.0
    %6776 = vmatpush1.msra.mxu0 0.0
    %6777 = vmatprep.subr.mxu0 0.0
    %6778 = vmatpush1.msra.mxu0 0.0
    %6779 = vmatprep.subr.mxu0 0.0
    %6780 = vmatpush1.msra.mxu0 0.0
    %6781 = vmatprep.subr.mxu0 0.0
    %6782 = vmatpush1.msra.mxu0 0.0
    %6783 = vmatprep.subr.mxu0 0.0
    %6784 = vmatpush1.msra.mxu0 0.0
    %6785 = vmatprep.subr.mxu0 0.0
    %6786 = vmatpush1.msra.mxu0 0.0
    %6787 = vmatprep.subr.mxu0 0.0
    %6788 = vmatpush1.msra.mxu0 0.0
    %6789 = vmatprep.subr.mxu0 0.0
    %6790 = vmatpush1.msra.mxu0 0.0
    %6791 = vmatprep.subr.mxu0 0.0
    %6792 = vmatpush1.msra.mxu0 0.0
    %6793 = vmatprep.subr.mxu0 0.0
    %6794 = vmatpush1.msra.mxu0 0.0
    %6795 = vmatprep.subr.mxu0 0.0
    %6796 = vmatpush1.msra.mxu0 0.0
    %6797 = vmatprep.subr.mxu0 0.0
    %6798 = vmatpush1.msra.mxu0 0.0
    %6799 = vmatprep.mubr.f32.mxu0 0.0
    %6800 = vmatmul.mubr.f32.gmra.mrb[0].mxu0 %v6733
    %v6801 = vpop.f32.mrb[0].mxu0
    %v6802 = vadd.f32 %v4792, %v6801
    %v6803 = vpop.f32.mrb[0].mxu0
    %6804 = vdwg.mxu0
    %s6805 = scalar_lea.vmem %s10, 16
    %6806 = vst.msk [vmem:[%s6805] sm:$0x3] %vm4869, %v6802
    %6807 = vmatprep.subr.mxu0 0.0
    %6808 = vmatpush1.msra.mxu0 %v103
    %6809 = vmatprep.subr.mxu0 0.0
    %6810 = vmatpush1.msra.mxu0 %v104
    %6811 = vmatprep.subr.mxu0 0.0
    %6812 = vmatpush1.msra.mxu0 %v105
    %6813 = vmatprep.subr.mxu0 0.0
    %6814 = vmatpush1.msra.mxu0 %v106
    %6815 = vmatprep.subr.mxu0 0.0
    %6816 = vmatpush1.msra.mxu0 0.0
    %6817 = vmatprep.subr.mxu0 0.0
    %6818 = vmatpush1.msra.mxu0 0.0
    %6819 = vmatprep.subr.mxu0 0.0
    %6820 = vmatpush1.msra.mxu0 0.0
    %6821 = vmatprep.subr.mxu0 0.0
    %6822 = vmatpush1.msra.mxu0 0.0
    %6823 = vmatprep.subr.mxu0 0.0
    %6824 = vmatpush1.msra.mxu0 0.0
    %6825 = vmatprep.subr.mxu0 0.0
    %6826 = vmatpush1.msra.mxu0 0.0
    %6827 = vmatprep.subr.mxu0 0.0
    %6828 = vmatpush1.msra.mxu0 0.0
    %6829 = vmatprep.subr.mxu0 0.0
    %6830 = vmatpush1.msra.mxu0 0.0
    %6831 = vmatprep.subr.mxu0 0.0
    %6832 = vmatpush1.msra.mxu0 0.0
    %6833 = vmatprep.subr.mxu0 0.0
    %6834 = vmatpush1.msra.mxu0 0.0
    %6835 = vmatprep.subr.mxu0 0.0
    %6836 = vmatpush1.msra.mxu0 0.0
    %6837 = vmatprep.subr.mxu0 0.0
    %6838 = vmatpush1.msra.mxu0 0.0
    %6839 = vmatprep.subr.mxu0 0.0
    %6840 = vmatpush1.msra.mxu0 0.0
    %6841 = vmatprep.subr.mxu0 0.0
    %6842 = vmatpush1.msra.mxu0 0.0
    %6843 = vmatprep.subr.mxu0 0.0
    %6844 = vmatpush1.msra.mxu0 0.0
    %6845 = vmatprep.subr.mxu0 0.0
    %6846 = vmatpush1.msra.mxu0 0.0
    %6847 = vmatprep.subr.mxu0 0.0
    %6848 = vmatpush1.msra.mxu0 0.0
    %6849 = vmatprep.subr.mxu0 0.0
    %6850 = vmatpush1.msra.mxu0 0.0
    %6851 = vmatprep.subr.mxu0 0.0
    %6852 = vmatpush1.msra.mxu0 0.0
    %6853 = vmatprep.subr.mxu0 0.0
    %6854 = vmatpush1.msra.mxu0 0.0
    %6855 = vmatprep.subr.mxu0 0.0
    %6856 = vmatpush1.msra.mxu0 0.0
    %6857 = vmatprep.subr.mxu0 0.0
    %6858 = vmatpush1.msra.mxu0 0.0
    %6859 = vmatprep.subr.mxu0 0.0
    %6860 = vmatpush1.msra.mxu0 0.0
    %6861 = vmatprep.subr.mxu0 0.0
    %6862 = vmatpush1.msra.mxu0 0.0
    %6863 = vmatprep.subr.mxu0 0.0
    %6864 = vmatpush1.msra.mxu0 0.0
    %6865 = vmatprep.subr.mxu0 0.0
    %6866 = vmatpush1.msra.mxu0 0.0
    %6867 = vmatprep.subr.mxu0 0.0
    %6868 = vmatpush1.msra.mxu0 0.0
    %6869 = vmatprep.subr.mxu0 0.0
    %6870 = vmatpush1.msra.mxu0 0.0
    %6871 = vmatprep.mubr.f32.mxu0 0.0
    %6872 = vmatmul.mubr.f32.gmra.mrb[0].mxu0 %v6733
    %v6873 = vpop.f32.mrb[0].mxu0
    %v6874 = vadd.f32 0.0, %v6873
    %v6875 = vpop.f32.mrb[0].mxu0
    %6876 = vdwg.mxu0
    %6877 = vmatprep.subr.mxu0 0.0
    %6878 = vmatpush1.msra.mxu0 %v99
    %6879 = vmatprep.subr.mxu0 0.0
    %6880 = vmatpush1.msra.mxu0 %v100
    %6881 = vmatprep.subr.mxu0 0.0
    %6882 = vmatpush1.msra.mxu0 %v101
    %6883 = vmatprep.subr.mxu0 0.0
    %6884 = vmatpush1.msra.mxu0 %v102
    %6885 = vmatprep.subr.mxu0 0.0
    %6886 = vmatpush1.msra.mxu0 0.0
    %6887 = vmatprep.subr.mxu0 0.0
    %6888 = vmatpush1.msra.mxu0 0.0
    %6889 = vmatprep.subr.mxu0 0.0
    %6890 = vmatpush1.msra.mxu0 0.0
    %6891 = vmatprep.subr.mxu0 0.0
    %6892 = vmatpush1.msra.mxu0 0.0
    %6893 = vmatprep.subr.mxu0 0.0
    %6894 = vmatpush1.msra.mxu0 0.0
    %6895 = vmatprep.subr.mxu0 0.0
    %6896 = vmatpush1.msra.mxu0 0.0
    %6897 = vmatprep.subr.mxu0 0.0
    %6898 = vmatpush1.msra.mxu0 0.0
    %6899 = vmatprep.subr.mxu0 0.0
    %6900 = vmatpush1.msra.mxu0 0.0
    %6901 = vmatprep.subr.mxu0 0.0
    %6902 = vmatpush1.msra.mxu0 0.0
    %6903 = vmatprep.subr.mxu0 0.0
    %6904 = vmatpush1.msra.mxu0 0.0
    %6905 = vmatprep.subr.mxu0 0.0
    %6906 = vmatpush1.msra.mxu0 0.0
    %6907 = vmatprep.subr.mxu0 0.0
    %6908 = vmatpush1.msra.mxu0 0.0
    %6909 = vmatprep.subr.mxu0 0.0
    %6910 = vmatpush1.msra.mxu0 0.0
    %6911 = vmatprep.subr.mxu0 0.0
    %6912 = vmatpush1.msra.mxu0 0.0
    %6913 = vmatprep.subr.mxu0 0.0
    %6914 = vmatpush1.msra.mxu0 0.0
    %6915 = vmatprep.subr.mxu0 0.0
    %6916 = vmatpush1.msra.mxu0 0.0
    %6917 = vmatprep.subr.mxu0 0.0
    %6918 = vmatpush1.msra.mxu0 0.0
    %6919 = vmatprep.subr.mxu0 0.0
    %6920 = vmatpush1.msra.mxu0 0.0
    %6921 = vmatprep.subr.mxu0 0.0
    %6922 = vmatpush1.msra.mxu0 0.0
    %6923 = vmatprep.subr.mxu0 0.0
    %6924 = vmatpush1.msra.mxu0 0.0
    %6925 = vmatprep.subr.mxu0 0.0
    %6926 = vmatpush1.msra.mxu0 0.0
    %6927 = vmatprep.subr.mxu0 0.0
    %6928 = vmatpush1.msra.mxu0 0.0
    %6929 = vmatprep.subr.mxu0 0.0
    %6930 = vmatpush1.msra.mxu0 0.0
    %6931 = vmatprep.subr.mxu0 0.0
    %6932 = vmatpush1.msra.mxu0 0.0
    %6933 = vmatprep.subr.mxu0 0.0
    %6934 = vmatpush1.msra.mxu0 0.0
    %6935 = vmatprep.subr.mxu0 0.0
    %6936 = vmatpush1.msra.mxu0 0.0
    %6937 = vmatprep.subr.mxu0 0.0
    %6938 = vmatpush1.msra.mxu0 0.0
    %6939 = vmatprep.subr.mxu0 0.0
    %6940 = vmatpush1.msra.mxu0 0.0
    %6941 = vmatprep.mubr.f32.mxu0 0.0
    %6942 = vmatmul.mubr.f32.gmra.mrb[0].mxu0 %v6733
    %v6943 = vpop.f32.mrb[0].mxu0
    %v6944 = vadd.f32 %v6874, %v6943
    %v6945 = vpop.f32.mrb[0].mxu0
    %6946 = vdwg.mxu0
    %v6947 = vadd.f32 %v6944, %v4761
    %v6948 = vsub.f32 0.0, %v6947
    %v6949 = vmul.f32 %v6948, 1.442695
    %v6950 = vpow.pop %v6949
    %v6951 = vadd.f32 %v6950, 1.0
    %v6952 = vrcp.pop %v6951
    %v6953 = vmul.f32 1.0, %v6952
    %v6954 = vtanh.pop %v6947
    %v6955 = vmul.f32 %v6953, %v6723
    %6957 = vrot.lane.b32.xlu0 %v6954, 64
    %v6958 = vpop.permute.xlu0 %6957
    %v6960 = vmul.f32 %v6953, %v6958
    %6962 = vrot.lane.b32.xlu0 %v6960, 32
    %v6963 = vpop.permute.xlu0 %6962
    %v6965 = vadd.f32 %v6955, %v6963
    %v6966 = vtanh.pop %v6965
    %6968 = vrot.lane.b32.xlu0 %v6966, 64
    %v6969 = vpop.permute.xlu0 %6968
    %v6971 = vmul.f32 %v6953, %v6969
    %6973 = vrot.lane.b32.xlu0 %v6971, 32
    %v6974 = vpop.permute.xlu0 %6973
    %v6975 = vsel %vm126, %v6974, 0
    %6977 = vmatprep.subr.mxu0 0.0
    %6978 = vmatpush1.msra.mxu0 %v108
    %6979 = vmatprep.subr.mxu0 0.0
    %6980 = vmatpush1.msra.mxu0 %v109
    %6981 = vmatprep.subr.mxu0 0.0
    %6982 = vmatpush1.msra.mxu0 %v110
    %6983 = vmatprep.subr.mxu0 0.0
    %6984 = vmatpush1.msra.mxu0 %v111
    %6985 = vmatprep.subr.mxu0 0.0
    %6986 = vmatpush1.msra.mxu0 0.0
    %6987 = vmatprep.subr.mxu0 0.0
    %6988 = vmatpush1.msra.mxu0 0.0
    %6989 = vmatprep.subr.mxu0 0.0
    %6990 = vmatpush1.msra.mxu0 0.0
    %6991 = vmatprep.subr.mxu0 0.0
    %6992 = vmatpush1.msra.mxu0 0.0
    %6993 = vmatprep.subr.mxu0 0.0
    %6994 = vmatpush1.msra.mxu0 0.0
    %6995 = vmatprep.subr.mxu0 0.0
    %6996 = vmatpush1.msra.mxu0 0.0
    %6997 = vmatprep.subr.mxu0 0.0
    %6998 = vmatpush1.msra.mxu0 0.0
    %6999 = vmatprep.subr.mxu0 0.0
    %7000 = vmatpush1.msra.mxu0 0.0
    %7001 = vmatprep.subr.mxu0 0.0
    %7002 = vmatpush1.msra.mxu0 0.0
    %7003 = vmatprep.subr.mxu0 0.0
    %7004 = vmatpush1.msra.mxu0 0.0
    %7005 = vmatprep.subr.mxu0 0.0
    %7006 = vmatpush1.msra.mxu0 0.0
    %7007 = vmatprep.subr.mxu0 0.0
    %7008 = vmatpush1.msra.mxu0 0.0
    %7009 = vmatprep.subr.mxu0 0.0
    %7010 = vmatpush1.msra.mxu0 0.0
    %7011 = vmatprep.subr.mxu0 0.0
    %7012 = vmatpush1.msra.mxu0 0.0
    %7013 = vmatprep.subr.mxu0 0.0
    %7014 = vmatpush1.msra.mxu0 0.0
    %7015 = vmatprep.subr.mxu0 0.0
    %7016 = vmatpush1.msra.mxu0 0.0
    %7017 = vmatprep.subr.mxu0 0.0
    %7018 = vmatpush1.msra.mxu0 0.0
    %7019 = vmatprep.subr.mxu0 0.0
    %7020 = vmatpush1.msra.mxu0 0.0
    %7021 = vmatprep.subr.mxu0 0.0
    %7022 = vmatpush1.msra.mxu0 0.0
    %7023 = vmatprep.subr.mxu0 0.0
    %7024 = vmatpush1.msra.mxu0 0.0
    %7025 = vmatprep.subr.mxu0 0.0
    %7026 = vmatpush1.msra.mxu0 0.0
    %7027 = vmatprep.subr.mxu0 0.0
    %7028 = vmatpush1.msra.mxu0 0.0
    %7029 = vmatprep.subr.mxu0 0.0
    %7030 = vmatpush1.msra.mxu0 0.0
    %7031 = vmatprep.subr.mxu0 0.0
    %7032 = vmatpush1.msra.mxu0 0.0
    %7033 = vmatprep.subr.mxu0 0.0
    %7034 = vmatpush1.msra.mxu0 0.0
    %7035 = vmatprep.subr.mxu0 0.0
    %7036 = vmatpush1.msra.mxu0 0.0
    %7037 = vmatprep.subr.mxu0 0.0
    %7038 = vmatpush1.msra.mxu0 0.0
    %7039 = vmatprep.subr.mxu0 0.0
    %7040 = vmatpush1.msra.mxu0 0.0
    %7041 = vmatprep.mubr.f32.mxu0 0.0
    %7042 = vmatmul.mubr.f32.gmra.mrb[0].mxu0 %v6975
    %v7043 = vpop.f32.mrb[0].mxu0
    %v7044 = vadd.f32 %v4792, %v7043
    %v7045 = vpop.f32.mrb[0].mxu0
    %7046 = vdwg.mxu0
    %s7047 = scalar_lea.vmem %s10, 18
    %7048 = vst.msk [vmem:[%s7047] sm:$0x3] %vm4869, %v7044
    %7049 = vmatprep.subr.mxu0 0.0
    %7050 = vmatpush1.msra.mxu0 %v103
    %7051 = vmatprep.subr.mxu0 0.0
    %7052 = vmatpush1.msra.mxu0 %v104
    %7053 = vmatprep.subr.mxu0 0.0
    %7054 = vmatpush1.msra.mxu0 %v105
    %7055 = vmatprep.subr.mxu0 0.0
    %7056 = vmatpush1.msra.mxu0 %v106
    %7057 = vmatprep.subr.mxu0 0.0
    %7058 = vmatpush1.msra.mxu0 0.0
    %7059 = vmatprep.subr.mxu0 0.0
    %7060 = vmatpush1.msra.mxu0 0.0
    %7061 = vmatprep.subr.mxu0 0.0
    %7062 = vmatpush1.msra.mxu0 0.0
    %7063 = vmatprep.subr.mxu0 0.0
    %7064 = vmatpush1.msra.mxu0 0.0
    %7065 = vmatprep.subr.mxu0 0.0
    %7066 = vmatpush1.msra.mxu0 0.0
    %7067 = vmatprep.subr.mxu0 0.0
    %7068 = vmatpush1.msra.mxu0 0.0
    %7069 = vmatprep.subr.mxu0 0.0
    %7070 = vmatpush1.msra.mxu0 0.0
    %7071 = vmatprep.subr.mxu0 0.0
    %7072 = vmatpush1.msra.mxu0 0.0
    %7073 = vmatprep.subr.mxu0 0.0
    %7074 = vmatpush1.msra.mxu0 0.0
    %7075 = vmatprep.subr.mxu0 0.0
    %7076 = vmatpush1.msra.mxu0 0.0
    %7077 = vmatprep.subr.mxu0 0.0
    %7078 = vmatpush1.msra.mxu0 0.0
    %7079 = vmatprep.subr.mxu0 0.0
    %7080 = vmatpush1.msra.mxu0 0.0
    %7081 = vmatprep.subr.mxu0 0.0
    %7082 = vmatpush1.msra.mxu0 0.0
    %7083 = vmatprep.subr.mxu0 0.0
    %7084 = vmatpush1.msra.mxu0 0.0
    %7085 = vmatprep.subr.mxu0 0.0
    %7086 = vmatpush1.msra.mxu0 0.0
    %7087 = vmatprep.subr.mxu0 0.0
    %7088 = vmatpush1.msra.mxu0 0.0
    %7089 = vmatprep.subr.mxu0 0.0
    %7090 = vmatpush1.msra.mxu0 0.0
    %7091 = vmatprep.subr.mxu0 0.0
    %7092 = vmatpush1.msra.mxu0 0.0
    %7093 = vmatprep.subr.mxu0 0.0
    %7094 = vmatpush1.msra.mxu0 0.0
    %7095 = vmatprep.subr.mxu0 0.0
    %7096 = vmatpush1.msra.mxu0 0.0
    %7097 = vmatprep.subr.mxu0 0.0
    %7098 = vmatpush1.msra.mxu0 0.0
    %7099 = vmatprep.subr.mxu0 0.0
    %7100 = vmatpush1.msra.mxu0 0.0
    %7101 = vmatprep.subr.mxu0 0.0
    %7102 = vmatpush1.msra.mxu0 0.0
    %7103 = vmatprep.subr.mxu0 0.0
    %7104 = vmatpush1.msra.mxu0 0.0
    %7105 = vmatprep.subr.mxu0 0.0
    %7106 = vmatpush1.msra.mxu0 0.0
    %7107 = vmatprep.subr.mxu0 0.0
    %7108 = vmatpush1.msra.mxu0 0.0
    %7109 = vmatprep.subr.mxu0 0.0
    %7110 = vmatpush1.msra.mxu0 0.0
    %7111 = vmatprep.subr.mxu0 0.0
    %7112 = vmatpush1.msra.mxu0 0.0
    %7113 = vmatprep.mubr.f32.mxu0 0.0
    %7114 = vmatmul.mubr.f32.gmra.mrb[0].mxu0 %v6975
    %v7115 = vpop.f32.mrb[0].mxu0
    %v7116 = vadd.f32 0.0, %v7115
    %v7117 = vpop.f32.mrb[0].mxu0
    %7118 = vdwg.mxu0
    %7119 = vmatprep.subr.mxu0 0.0
    %7120 = vmatpush1.msra.mxu0 %v99
    %7121 = vmatprep.subr.mxu0 0.0
    %7122 = vmatpush1.msra.mxu0 %v100
    %7123 = vmatprep.subr.mxu0 0.0
    %7124 = vmatpush1.msra.mxu0 %v101
    %7125 = vmatprep.subr.mxu0 0.0
    %7126 = vmatpush1.msra.mxu0 %v102
    %7127 = vmatprep.subr.mxu0 0.0
    %7128 = vmatpush1.msra.mxu0 0.0
    %7129 = vmatprep.subr.mxu0 0.0
    %7130 = vmatpush1.msra.mxu0 0.0
    %7131 = vmatprep.subr.mxu0 0.0
    %7132 = vmatpush1.msra.mxu0 0.0
    %7133 = vmatprep.subr.mxu0 0.0
    %7134 = vmatpush1.msra.mxu0 0.0
    %7135 = vmatprep.subr.mxu0 0.0
    %7136 = vmatpush1.msra.mxu0 0.0
    %7137 = vmatprep.subr.mxu0 0.0
    %7138 = vmatpush1.msra.mxu0 0.0
    %7139 = vmatprep.subr.mxu0 0.0
    %7140 = vmatpush1.msra.mxu0 0.0
    %7141 = vmatprep.subr.mxu0 0.0
    %7142 = vmatpush1.msra.mxu0 0.0
    %7143 = vmatprep.subr.mxu0 0.0
    %7144 = vmatpush1.msra.mxu0 0.0
    %7145 = vmatprep.subr.mxu0 0.0
    %7146 = vmatpush1.msra.mxu0 0.0
    %7147 = vmatprep.subr.mxu0 0.0
    %7148 = vmatpush1.msra.mxu0 0.0
    %7149 = vmatprep.subr.mxu0 0.0
    %7150 = vmatpush1.msra.mxu0 0.0
    %7151 = vmatprep.subr.mxu0 0.0
    %7152 = vmatpush1.msra.mxu0 0.0
    %7153 = vmatprep.subr.mxu0 0.0
    %7154 = vmatpush1.msra.mxu0 0.0
    %7155 = vmatprep.subr.mxu0 0.0
    %7156 = vmatpush1.msra.mxu0 0.0
    %7157 = vmatprep.subr.mxu0 0.0
    %7158 = vmatpush1.msra.mxu0 0.0
    %7159 = vmatprep.subr.mxu0 0.0
    %7160 = vmatpush1.msra.mxu0 0.0
    %7161 = vmatprep.subr.mxu0 0.0
    %7162 = vmatpush1.msra.mxu0 0.0
    %7163 = vmatprep.subr.mxu0 0.0
    %7164 = vmatpush1.msra.mxu0 0.0
    %7165 = vmatprep.subr.mxu0 0.0
    %7166 = vmatpush1.msra.mxu0 0.0
    %7167 = vmatprep.subr.mxu0 0.0
    %7168 = vmatpush1.msra.mxu0 0.0
    %7169 = vmatprep.subr.mxu0 0.0
    %7170 = vmatpush1.msra.mxu0 0.0
    %7171 = vmatprep.subr.mxu0 0.0
    %7172 = vmatpush1.msra.mxu0 0.0
    %7173 = vmatprep.subr.mxu0 0.0
    %7174 = vmatpush1.msra.mxu0 0.0
    %7175 = vmatprep.subr.mxu0 0.0
    %7176 = vmatpush1.msra.mxu0 0.0
    %7177 = vmatprep.subr.mxu0 0.0
    %7178 = vmatpush1.msra.mxu0 0.0
    %7179 = vmatprep.subr.mxu0 0.0
    %7180 = vmatpush1.msra.mxu0 0.0
    %7181 = vmatprep.subr.mxu0 0.0
    %7182 = vmatpush1.msra.mxu0 0.0
    %7183 = vmatprep.mubr.f32.mxu0 0.0
    %7184 = vmatmul.mubr.f32.gmra.mrb[0].mxu0 %v6975
    %v7185 = vpop.f32.mrb[0].mxu0
    %v7186 = vadd.f32 %v7116, %v7185
    %v7187 = vpop.f32.mrb[0].mxu0
    %7188 = vdwg.mxu0
    %v7189 = vadd.f32 %v7186, %v4761
    %v7190 = vsub.f32 0.0, %v7189
    %v7191 = vmul.f32 %v7190, 1.442695
    %v7192 = vpow.pop %v7191
    %v7193 = vadd.f32 %v7192, 1.0
    %v7194 = vrcp.pop %v7193
    %v7195 = vmul.f32 1.0, %v7194
    %v7196 = vtanh.pop %v7189
    %v7197 = vmul.f32 %v7195, %v6965
    %7199 = vrot.lane.b32.xlu0 %v7196, 64
    %v7200 = vpop.permute.xlu0 %7199
    %v7202 = vmul.f32 %v7195, %v7200
    %7204 = vrot.lane.b32.xlu0 %v7202, 32
    %v7205 = vpop.permute.xlu0 %7204
    %v7207 = vadd.f32 %v7197, %v7205
    %v7208 = vtanh.pop %v7207
    %7210 = vrot.lane.b32.xlu0 %v7208, 64
    %v7211 = vpop.permute.xlu0 %7210
    %v7213 = vmul.f32 %v7195, %v7211
    %7215 = vrot.lane.b32.xlu0 %v7213, 32
    %v7216 = vpop.permute.xlu0 %7215
    %v7217 = vsel %vm126, %v7216, 0
    %7219 = vmatprep.subr.mxu0 0.0
    %7220 = vmatpush1.msra.mxu0 %v108
    %7221 = vmatprep.subr.mxu0 0.0
    %7222 = vmatpush1.msra.mxu0 %v109
    %7223 = vmatprep.subr.mxu0 0.0
    %7224 = vmatpush1.msra.mxu0 %v110
    %7225 = vmatprep.subr.mxu0 0.0
    %7226 = vmatpush1.msra.mxu0 %v111
    %7227 = vmatprep.subr.mxu0 0.0
    %7228 = vmatpush1.msra.mxu0 0.0
    %7229 = vmatprep.subr.mxu0 0.0
    %7230 = vmatpush1.msra.mxu0 0.0
    %7231 = vmatprep.subr.mxu0 0.0
    %7232 = vmatpush1.msra.mxu0 0.0
    %7233 = vmatprep.subr.mxu0 0.0
    %7234 = vmatpush1.msra.mxu0 0.0
    %7235 = vmatprep.subr.mxu0 0.0
    %7236 = vmatpush1.msra.mxu0 0.0
    %7237 = vmatprep.subr.mxu0 0.0
    %7238 = vmatpush1.msra.mxu0 0.0
    %7239 = vmatprep.subr.mxu0 0.0
    %7240 = vmatpush1.msra.mxu0 0.0
    %7241 = vmatprep.subr.mxu0 0.0
    %7242 = vmatpush1.msra.mxu0 0.0
    %7243 = vmatprep.subr.mxu0 0.0
    %7244 = vmatpush1.msra.mxu0 0.0
    %7245 = vmatprep.subr.mxu0 0.0
    %7246 = vmatpush1.msra.mxu0 0.0
    %7247 = vmatprep.subr.mxu0 0.0
    %7248 = vmatpush1.msra.mxu0 0.0
    %7249 = vmatprep.subr.mxu0 0.0
    %7250 = vmatpush1.msra.mxu0 0.0
    %7251 = vmatprep.subr.mxu0 0.0
    %7252 = vmatpush1.msra.mxu0 0.0
    %7253 = vmatprep.subr.mxu0 0.0
    %7254 = vmatpush1.msra.mxu0 0.0
    %7255 = vmatprep.subr.mxu0 0.0
    %7256 = vmatpush1.msra.mxu0 0.0
    %7257 = vmatprep.subr.mxu0 0.0
    %7258 = vmatpush1.msra.mxu0 0.0
    %7259 = vmatprep.subr.mxu0 0.0
    %7260 = vmatpush1.msra.mxu0 0.0
    %7261 = vmatprep.subr.mxu0 0.0
    %7262 = vmatpush1.msra.mxu0 0.0
    %7263 = vmatprep.subr.mxu0 0.0
    %7264 = vmatpush1.msra.mxu0 0.0
    %7265 = vmatprep.subr.mxu0 0.0
    %7266 = vmatpush1.msra.mxu0 0.0
    %7267 = vmatprep.subr.mxu0 0.0
    %7268 = vmatpush1.msra.mxu0 0.0
    %7269 = vmatprep.subr.mxu0 0.0
    %7270 = vmatpush1.msra.mxu0 0.0
    %7271 = vmatprep.subr.mxu0 0.0
    %7272 = vmatpush1.msra.mxu0 0.0
    %7273 = vmatprep.subr.mxu0 0.0
    %7274 = vmatpush1.msra.mxu0 0.0
    %7275 = vmatprep.subr.mxu0 0.0
    %7276 = vmatpush1.msra.mxu0 0.0
    %7277 = vmatprep.subr.mxu0 0.0
    %7278 = vmatpush1.msra.mxu0 0.0
    %7279 = vmatprep.subr.mxu0 0.0
    %7280 = vmatpush1.msra.mxu0 0.0
    %7281 = vmatprep.subr.mxu0 0.0
    %7282 = vmatpush1.msra.mxu0 0.0
    %7283 = vmatprep.mubr.f32.mxu0 0.0
    %7284 = vmatmul.mubr.f32.gmra.mrb[0].mxu0 %v7217
    %v7285 = vpop.f32.mrb[0].mxu0
    %v7286 = vadd.f32 %v4792, %v7285
    %v7287 = vpop.f32.mrb[0].mxu0
    %7288 = vdwg.mxu0
    %s7289 = scalar_lea.vmem %s10, 20
    %7290 = vst.msk [vmem:[%s7289] sm:$0x3] %vm4869, %v7286
    %7291 = vmatprep.subr.mxu0 0.0
    %7292 = vmatpush1.msra.mxu0 %v103
    %7293 = vmatprep.subr.mxu0 0.0
    %7294 = vmatpush1.msra.mxu0 %v104
    %7295 = vmatprep.subr.mxu0 0.0
    %7296 = vmatpush1.msra.mxu0 %v105
    %7297 = vmatprep.subr.mxu0 0.0
    %7298 = vmatpush1.msra.mxu0 %v106
    %7299 = vmatprep.subr.mxu0 0.0
    %7300 = vmatpush1.msra.mxu0 0.0
    %7301 = vmatprep.subr.mxu0 0.0
    %7302 = vmatpush1.msra.mxu0 0.0
    %7303 = vmatprep.subr.mxu0 0.0
    %7304 = vmatpush1.msra.mxu0 0.0
    %7305 = vmatprep.subr.mxu0 0.0
    %7306 = vmatpush1.msra.mxu0 0.0
    %7307 = vmatprep.subr.mxu0 0.0
    %7308 = vmatpush1.msra.mxu0 0.0
    %7309 = vmatprep.subr.mxu0 0.0
    %7310 = vmatpush1.msra.mxu0 0.0
    %7311 = vmatprep.subr.mxu0 0.0
    %7312 = vmatpush1.msra.mxu0 0.0
    %7313 = vmatprep.subr.mxu0 0.0
    %7314 = vmatpush1.msra.mxu0 0.0
    %7315 = vmatprep.subr.mxu0 0.0
    %7316 = vmatpush1.msra.mxu0 0.0
    %7317 = vmatprep.subr.mxu0 0.0
    %7318 = vmatpush1.msra.mxu0 0.0
    %7319 = vmatprep.subr.mxu0 0.0
    %7320 = vmatpush1.msra.mxu0 0.0
    %7321 = vmatprep.subr.mxu0 0.0
    %7322 = vmatpush1.msra.mxu0 0.0
    %7323 = vmatprep.subr.mxu0 0.0
    %7324 = vmatpush1.msra.mxu0 0.0
    %7325 = vmatprep.subr.mxu0 0.0
    %7326 = vmatpush1.msra.mxu0 0.0
    %7327 = vmatprep.subr.mxu0 0.0
    %7328 = vmatpush1.msra.mxu0 0.0
    %7329 = vmatprep.subr.mxu0 0.0
    %7330 = vmatpush1.msra.mxu0 0.0
    %7331 = vmatprep.subr.mxu0 0.0
    %7332 = vmatpush1.msra.mxu0 0.0
    %7333 = vmatprep.subr.mxu0 0.0
    %7334 = vmatpush1.msra.mxu0 0.0
    %7335 = vmatprep.subr.mxu0 0.0
    %7336 = vmatpush1.msra.mxu0 0.0
    %7337 = vmatprep.subr.mxu0 0.0
    %7338 = vmatpush1.msra.mxu0 0.0
    %7339 = vmatprep.subr.mxu0 0.0
    %7340 = vmatpush1.msra.mxu0 0.0
    %7341 = vmatprep.subr.mxu0 0.0
    %7342 = vmatpush1.msra.mxu0 0.0
    %7343 = vmatprep.subr.mxu0 0.0
    %7344 = vmatpush1.msra.mxu0 0.0
    %7345 = vmatprep.subr.mxu0 0.0
    %7346 = vmatpush1.msra.mxu0 0.0
    %7347 = vmatprep.subr.mxu0 0.0
    %7348 = vmatpush1.msra.mxu0 0.0
    %7349 = vmatprep.subr.mxu0 0.0
    %7350 = vmatpush1.msra.mxu0 0.0
    %7351 = vmatprep.subr.mxu0 0.0
    %7352 = vmatpush1.msra.mxu0 0.0
    %7353 = vmatprep.subr.mxu0 0.0
    %7354 = vmatpush1.msra.mxu0 0.0
    %7355 = vmatprep.mubr.f32.mxu0 0.0
    %7356 = vmatmul.mubr.f32.gmra.mrb[0].mxu0 %v7217
    %v7357 = vpop.f32.mrb[0].mxu0
    %v7358 = vadd.f32 0.0, %v7357
    %v7359 = vpop.f32.mrb[0].mxu0
    %7360 = vdwg.mxu0
    %7361 = vmatprep.subr.mxu0 0.0
    %7362 = vmatpush1.msra.mxu0 %v99
    %7363 = vmatprep.subr.mxu0 0.0
    %7364 = vmatpush1.msra.mxu0 %v100
    %7365 = vmatprep.subr.mxu0 0.0
    %7366 = vmatpush1.msra.mxu0 %v101
    %7367 = vmatprep.subr.mxu0 0.0
    %7368 = vmatpush1.msra.mxu0 %v102
    %7369 = vmatprep.subr.mxu0 0.0
    %7370 = vmatpush1.msra.mxu0 0.0
    %7371 = vmatprep.subr.mxu0 0.0
    %7372 = vmatpush1.msra.mxu0 0.0
    %7373 = vmatprep.subr.mxu0 0.0
    %7374 = vmatpush1.msra.mxu0 0.0
    %7375 = vmatprep.subr.mxu0 0.0
    %7376 = vmatpush1.msra.mxu0 0.0
    %7377 = vmatprep.subr.mxu0 0.0
    %7378 = vmatpush1.msra.mxu0 0.0
    %7379 = vmatprep.subr.mxu0 0.0
    %7380 = vmatpush1.msra.mxu0 0.0
    %7381 = vmatprep.subr.mxu0 0.0
    %7382 = vmatpush1.msra.mxu0 0.0
    %7383 = vmatprep.subr.mxu0 0.0
    %7384 = vmatpush1.msra.mxu0 0.0
    %7385 = vmatprep.subr.mxu0 0.0
    %7386 = vmatpush1.msra.mxu0 0.0
    %7387 = vmatprep.subr.mxu0 0.0
    %7388 = vmatpush1.msra.mxu0 0.0
    %7389 = vmatprep.subr.mxu0 0.0
    %7390 = vmatpush1.msra.mxu0 0.0
    %7391 = vmatprep.subr.mxu0 0.0
    %7392 = vmatpush1.msra.mxu0 0.0
    %7393 = vmatprep.subr.mxu0 0.0
    %7394 = vmatpush1.msra.mxu0 0.0
    %7395 = vmatprep.subr.mxu0 0.0
    %7396 = vmatpush1.msra.mxu0 0.0
    %7397 = vmatprep.subr.mxu0 0.0
    %7398 = vmatpush1.msra.mxu0 0.0
    %7399 = vmatprep.subr.mxu0 0.0
    %7400 = vmatpush1.msra.mxu0 0.0
    %7401 = vmatprep.subr.mxu0 0.0
    %7402 = vmatpush1.msra.mxu0 0.0
    %7403 = vmatprep.subr.mxu0 0.0
    %7404 = vmatpush1.msra.mxu0 0.0
    %7405 = vmatprep.subr.mxu0 0.0
    %7406 = vmatpush1.msra.mxu0 0.0
    %7407 = vmatprep.subr.mxu0 0.0
    %7408 = vmatpush1.msra.mxu0 0.0
    %7409 = vmatprep.subr.mxu0 0.0
    %7410 = vmatpush1.msra.mxu0 0.0
    %7411 = vmatprep.subr.mxu0 0.0
    %7412 = vmatpush1.msra.mxu0 0.0
    %7413 = vmatprep.subr.mxu0 0.0
    %7414 = vmatpush1.msra.mxu0 0.0
    %7415 = vmatprep.subr.mxu0 0.0
    %7416 = vmatpush1.msra.mxu0 0.0
    %7417 = vmatprep.subr.mxu0 0.0
    %7418 = vmatpush1.msra.mxu0 0.0
    %7419 = vmatprep.subr.mxu0 0.0
    %7420 = vmatpush1.msra.mxu0 0.0
    %7421 = vmatprep.subr.mxu0 0.0
    %7422 = vmatpush1.msra.mxu0 0.0
    %7423 = vmatprep.subr.mxu0 0.0
    %7424 = vmatpush1.msra.mxu0 0.0
    %7425 = vmatprep.mubr.f32.mxu0 0.0
    %7426 = vmatmul.mubr.f32.gmra.mrb[0].mxu0 %v7217
    %v7427 = vpop.f32.mrb[0].mxu0
    %v7428 = vadd.f32 %v7358, %v7427
    %v7429 = vpop.f32.mrb[0].mxu0
    %7430 = vdwg.mxu0
    %v7431 = vadd.f32 %v7428, %v4761
    %v7432 = vsub.f32 0.0, %v7431
    %v7433 = vmul.f32 %v7432, 1.442695
    %v7434 = vpow.pop %v7433
    %v7435 = vadd.f32 %v7434, 1.0
    %v7436 = vrcp.pop %v7435
    %v7437 = vmul.f32 1.0, %v7436
    %v7438 = vtanh.pop %v7431
    %v7439 = vmul.f32 %v7437, %v7207
    %7441 = vrot.lane.b32.xlu0 %v7438, 64
    %v7442 = vpop.permute.xlu0 %7441
    %v7444 = vmul.f32 %v7437, %v7442
    %7446 = vrot.lane.b32.xlu0 %v7444, 32
    %v7447 = vpop.permute.xlu0 %7446
    %v7449 = vadd.f32 %v7439, %v7447
    %v7450 = vtanh.pop %v7449
    %7452 = vrot.lane.b32.xlu0 %v7450, 64
    %v7453 = vpop.permute.xlu0 %7452
    %v7455 = vmul.f32 %v7437, %v7453
    %7457 = vrot.lane.b32.xlu0 %v7455, 32
    %v7458 = vpop.permute.xlu0 %7457
    %v7459 = vsel %vm126, %v7458, 0
    %7461 = vmatprep.subr.mxu0 0.0
    %7462 = vmatpush1.msra.mxu0 %v108
    %7463 = vmatprep.subr.mxu0 0.0
    %7464 = vmatpush1.msra.mxu0 %v109
    %7465 = vmatprep.subr.mxu0 0.0
    %7466 = vmatpush1.msra.mxu0 %v110
    %7467 = vmatprep.subr.mxu0 0.0
    %7468 = vmatpush1.msra.mxu0 %v111
    %7469 = vmatprep.subr.mxu0 0.0
    %7470 = vmatpush1.msra.mxu0 0.0
    %7471 = vmatprep.subr.mxu0 0.0
    %7472 = vmatpush1.msra.mxu0 0.0
    %7473 = vmatprep.subr.mxu0 0.0
    %7474 = vmatpush1.msra.mxu0 0.0
    %7475 = vmatprep.subr.mxu0 0.0
    %7476 = vmatpush1.msra.mxu0 0.0
    %7477 = vmatprep.subr.mxu0 0.0
    %7478 = vmatpush1.msra.mxu0 0.0
    %7479 = vmatprep.subr.mxu0 0.0
    %7480 = vmatpush1.msra.mxu0 0.0
    %7481 = vmatprep.subr.mxu0 0.0
    %7482 = vmatpush1.msra.mxu0 0.0
    %7483 = vmatprep.subr.mxu0 0.0
    %7484 = vmatpush1.msra.mxu0 0.0
    %7485 = vmatprep.subr.mxu0 0.0
    %7486 = vmatpush1.msra.mxu0 0.0
    %7487 = vmatprep.subr.mxu0 0.0
    %7488 = vmatpush1.msra.mxu0 0.0
    %7489 = vmatprep.subr.mxu0 0.0
    %7490 = vmatpush1.msra.mxu0 0.0
    %7491 = vmatprep.subr.mxu0 0.0
    %7492 = vmatpush1.msra.mxu0 0.0
    %7493 = vmatprep.subr.mxu0 0.0
    %7494 = vmatpush1.msra.mxu0 0.0
    %7495 = vmatprep.subr.mxu0 0.0
    %7496 = vmatpush1.msra.mxu0 0.0
    %7497 = vmatprep.subr.mxu0 0.0
    %7498 = vmatpush1.msra.mxu0 0.0
    %7499 = vmatprep.subr.mxu0 0.0
    %7500 = vmatpush1.msra.mxu0 0.0
    %7501 = vmatprep.subr.mxu0 0.0
    %7502 = vmatpush1.msra.mxu0 0.0
    %7503 = vmatprep.subr.mxu0 0.0
    %7504 = vmatpush1.msra.mxu0 0.0
    %7505 = vmatprep.subr.mxu0 0.0
    %7506 = vmatpush1.msra.mxu0 0.0
    %7507 = vmatprep.subr.mxu0 0.0
    %7508 = vmatpush1.msra.mxu0 0.0
    %7509 = vmatprep.subr.mxu0 0.0
    %7510 = vmatpush1.msra.mxu0 0.0
    %7511 = vmatprep.subr.mxu0 0.0
    %7512 = vmatpush1.msra.mxu0 0.0
    %7513 = vmatprep.subr.mxu0 0.0
    %7514 = vmatpush1.msra.mxu0 0.0
    %7515 = vmatprep.subr.mxu0 0.0
    %7516 = vmatpush1.msra.mxu0 0.0
    %7517 = vmatprep.subr.mxu0 0.0
    %7518 = vmatpush1.msra.mxu0 0.0
    %7519 = vmatprep.subr.mxu0 0.0
    %7520 = vmatpush1.msra.mxu0 0.0
    %7521 = vmatprep.subr.mxu0 0.0
    %7522 = vmatpush1.msra.mxu0 0.0
    %7523 = vmatprep.subr.mxu0 0.0
    %7524 = vmatpush1.msra.mxu0 0.0
    %7525 = vmatprep.mubr.f32.mxu0 0.0
    %7526 = vmatmul.mubr.f32.gmra.mrb[0].mxu0 %v7459
    %v7527 = vpop.f32.mrb[0].mxu0
    %v7528 = vadd.f32 %v4792, %v7527
    %v7529 = vpop.f32.mrb[0].mxu0
    %7530 = vdwg.mxu0
    %s7531 = scalar_lea.vmem %s10, 22
    %7532 = vst.msk [vmem:[%s7531] sm:$0x3] %vm4869, %v7528
    %7533 = vmatprep.subr.mxu0 0.0
    %7534 = vmatpush1.msra.mxu0 %v103
    %7535 = vmatprep.subr.mxu0 0.0
    %7536 = vmatpush1.msra.mxu0 %v104
    %7537 = vmatprep.subr.mxu0 0.0
    %7538 = vmatpush1.msra.mxu0 %v105
    %7539 = vmatprep.subr.mxu0 0.0
    %7540 = vmatpush1.msra.mxu0 %v106
    %7541 = vmatprep.subr.mxu0 0.0
    %7542 = vmatpush1.msra.mxu0 0.0
    %7543 = vmatprep.subr.mxu0 0.0
    %7544 = vmatpush1.msra.mxu0 0.0
    %7545 = vmatprep.subr.mxu0 0.0
    %7546 = vmatpush1.msra.mxu0 0.0
    %7547 = vmatprep.subr.mxu0 0.0
    %7548 = vmatpush1.msra.mxu0 0.0
    %7549 = vmatprep.subr.mxu0 0.0
    %7550 = vmatpush1.msra.mxu0 0.0
    %7551 = vmatprep.subr.mxu0 0.0
    %7552 = vmatpush1.msra.mxu0 0.0
    %7553 = vmatprep.subr.mxu0 0.0
    %7554 = vmatpush1.msra.mxu0 0.0
    %7555 = vmatprep.subr.mxu0 0.0
    %7556 = vmatpush1.msra.mxu0 0.0
    %7557 = vmatprep.subr.mxu0 0.0
    %7558 = vmatpush1.msra.mxu0 0.0
    %7559 = vmatprep.subr.mxu0 0.0
    %7560 = vmatpush1.msra.mxu0 0.0
    %7561 = vmatprep.subr.mxu0 0.0
    %7562 = vmatpush1.msra.mxu0 0.0
    %7563 = vmatprep.subr.mxu0 0.0
    %7564 = vmatpush1.msra.mxu0 0.0
    %7565 = vmatprep.subr.mxu0 0.0
    %7566 = vmatpush1.msra.mxu0 0.0
    %7567 = vmatprep.subr.mxu0 0.0
    %7568 = vmatpush1.msra.mxu0 0.0
    %7569 = vmatprep.subr.mxu0 0.0
    %7570 = vmatpush1.msra.mxu0 0.0
    %7571 = vmatprep.subr.mxu0 0.0
    %7572 = vmatpush1.msra.mxu0 0.0
    %7573 = vmatprep.subr.mxu0 0.0
    %7574 = vmatpush1.msra.mxu0 0.0
    %7575 = vmatprep.subr.mxu0 0.0
    %7576 = vmatpush1.msra.mxu0 0.0
    %7577 = vmatprep.subr.mxu0 0.0
    %7578 = vmatpush1.msra.mxu0 0.0
    %7579 = vmatprep.subr.mxu0 0.0
    %7580 = vmatpush1.msra.mxu0 0.0
    %7581 = vmatprep.subr.mxu0 0.0
    %7582 = vmatpush1.msra.mxu0 0.0
    %7583 = vmatprep.subr.mxu0 0.0
    %7584 = vmatpush1.msra.mxu0 0.0
    %7585 = vmatprep.subr.mxu0 0.0
    %7586 = vmatpush1.msra.mxu0 0.0
    %7587 = vmatprep.subr.mxu0 0.0
    %7588 = vmatpush1.msra.mxu0 0.0
    %7589 = vmatprep.subr.mxu0 0.0
    %7590 = vmatpush1.msra.mxu0 0.0
    %7591 = vmatprep.subr.mxu0 0.0
    %7592 = vmatpush1.msra.mxu0 0.0
    %7593 = vmatprep.subr.mxu0 0.0
    %7594 = vmatpush1.msra.mxu0 0.0
    %7595 = vmatprep.subr.mxu0 0.0
    %7596 = vmatpush1.msra.mxu0 0.0
    %7597 = vmatprep.mubr.f32.mxu0 0.0
    %7598 = vmatmul.mubr.f32.gmra.mrb[0].mxu0 %v7459
    %v7599 = vpop.f32.mrb[0].mxu0
    %v7600 = vadd.f32 0.0, %v7599
    %v7601 = vpop.f32.mrb[0].mxu0
    %7602 = vdwg.mxu0
    %7603 = vmatprep.subr.mxu0 0.0
    %7604 = vmatpush1.msra.mxu0 %v99
    %7605 = vmatprep.subr.mxu0 0.0
    %7606 = vmatpush1.msra.mxu0 %v100
    %7607 = vmatprep.subr.mxu0 0.0
    %7608 = vmatpush1.msra.mxu0 %v101
    %7609 = vmatprep.subr.mxu0 0.0
    %7610 = vmatpush1.msra.mxu0 %v102
    %7611 = vmatprep.subr.mxu0 0.0
    %7612 = vmatpush1.msra.mxu0 0.0
    %7613 = vmatprep.subr.mxu0 0.0
    %7614 = vmatpush1.msra.mxu0 0.0
    %7615 = vmatprep.subr.mxu0 0.0
    %7616 = vmatpush1.msra.mxu0 0.0
    %7617 = vmatprep.subr.mxu0 0.0
    %7618 = vmatpush1.msra.mxu0 0.0
    %7619 = vmatprep.subr.mxu0 0.0
    %7620 = vmatpush1.msra.mxu0 0.0
    %7621 = vmatprep.subr.mxu0 0.0
    %7622 = vmatpush1.msra.mxu0 0.0
    %7623 = vmatprep.subr.mxu0 0.0
    %7624 = vmatpush1.msra.mxu0 0.0
    %7625 = vmatprep.subr.mxu0 0.0
    %7626 = vmatpush1.msra.mxu0 0.0
    %7627 = vmatprep.subr.mxu0 0.0
    %7628 = vmatpush1.msra.mxu0 0.0
    %7629 = vmatprep.subr.mxu0 0.0
    %7630 = vmatpush1.msra.mxu0 0.0
    %7631 = vmatprep.subr.mxu0 0.0
    %7632 = vmatpush1.msra.mxu0 0.0
    %7633 = vmatprep.subr.mxu0 0.0
    %7634 = vmatpush1.msra.mxu0 0.0
    %7635 = vmatprep.subr.mxu0 0.0
    %7636 = vmatpush1.msra.mxu0 0.0
    %7637 = vmatprep.subr.mxu0 0.0
    %7638 = vmatpush1.msra.mxu0 0.0
    %7639 = vmatprep.subr.mxu0 0.0
    %7640 = vmatpush1.msra.mxu0 0.0
    %7641 = vmatprep.subr.mxu0 0.0
    %7642 = vmatpush1.msra.mxu0 0.0
    %7643 = vmatprep.subr.mxu0 0.0
    %7644 = vmatpush1.msra.mxu0 0.0
    %7645 = vmatprep.subr.mxu0 0.0
    %7646 = vmatpush1.msra.mxu0 0.0
    %7647 = vmatprep.subr.mxu0 0.0
    %7648 = vmatpush1.msra.mxu0 0.0
    %7649 = vmatprep.subr.mxu0 0.0
    %7650 = vmatpush1.msra.mxu0 0.0
    %7651 = vmatprep.subr.mxu0 0.0
    %7652 = vmatpush1.msra.mxu0 0.0
    %7653 = vmatprep.subr.mxu0 0.0
    %7654 = vmatpush1.msra.mxu0 0.0
    %7655 = vmatprep.subr.mxu0 0.0
    %7656 = vmatpush1.msra.mxu0 0.0
    %7657 = vmatprep.subr.mxu0 0.0
    %7658 = vmatpush1.msra.mxu0 0.0
    %7659 = vmatprep.subr.mxu0 0.0
    %7660 = vmatpush1.msra.mxu0 0.0
    %7661 = vmatprep.subr.mxu0 0.0
    %7662 = vmatpush1.msra.mxu0 0.0
    %7663 = vmatprep.subr.mxu0 0.0
    %7664 = vmatpush1.msra.mxu0 0.0
    %7665 = vmatprep.subr.mxu0 0.0
    %7666 = vmatpush1.msra.mxu0 0.0
    %7667 = vmatprep.mubr.f32.mxu0 0.0
    %7668 = vmatmul.mubr.f32.gmra.mrb[0].mxu0 %v7459
    %v7669 = vpop.f32.mrb[0].mxu0
    %v7670 = vadd.f32 %v7600, %v7669
    %v7671 = vpop.f32.mrb[0].mxu0
    %7672 = vdwg.mxu0
    %v7673 = vadd.f32 %v7670, %v4761
    %v7674 = vsub.f32 0.0, %v7673
    %v7675 = vmul.f32 %v7674, 1.442695
    %v7676 = vpow.pop %v7675
    %v7677 = vadd.f32 %v7676, 1.0
    %v7678 = vrcp.pop %v7677
    %v7679 = vmul.f32 1.0, %v7678
    %v7680 = vtanh.pop %v7673
    %v7681 = vmul.f32 %v7679, %v7449
    %7683 = vrot.lane.b32.xlu0 %v7680, 64
    %v7684 = vpop.permute.xlu0 %7683
    %v7686 = vmul.f32 %v7679, %v7684
    %7688 = vrot.lane.b32.xlu0 %v7686, 32
    %v7689 = vpop.permute.xlu0 %7688
    %v7691 = vadd.f32 %v7681, %v7689
    %v7692 = vtanh.pop %v7691
    %7694 = vrot.lane.b32.xlu0 %v7692, 64
    %v7695 = vpop.permute.xlu0 %7694
    %v7697 = vmul.f32 %v7679, %v7695
    %7699 = vrot.lane.b32.xlu0 %v7697, 32
    %v7700 = vpop.permute.xlu0 %7699
    %v7701 = vsel %vm126, %v7700, 0
    %7703 = vmatprep.subr.mxu0 0.0
    %7704 = vmatpush1.msra.mxu0 %v108
    %7705 = vmatprep.subr.mxu0 0.0
    %7706 = vmatpush1.msra.mxu0 %v109
    %7707 = vmatprep.subr.mxu0 0.0
    %7708 = vmatpush1.msra.mxu0 %v110
    %7709 = vmatprep.subr.mxu0 0.0
    %7710 = vmatpush1.msra.mxu0 %v111
    %7711 = vmatprep.subr.mxu0 0.0
    %7712 = vmatpush1.msra.mxu0 0.0
    %7713 = vmatprep.subr.mxu0 0.0
    %7714 = vmatpush1.msra.mxu0 0.0
    %7715 = vmatprep.subr.mxu0 0.0
    %7716 = vmatpush1.msra.mxu0 0.0
    %7717 = vmatprep.subr.mxu0 0.0
    %7718 = vmatpush1.msra.mxu0 0.0
    %7719 = vmatprep.subr.mxu0 0.0
    %7720 = vmatpush1.msra.mxu0 0.0
    %7721 = vmatprep.subr.mxu0 0.0
    %7722 = vmatpush1.msra.mxu0 0.0
    %7723 = vmatprep.subr.mxu0 0.0
    %7724 = vmatpush1.msra.mxu0 0.0
    %7725 = vmatprep.subr.mxu0 0.0
    %7726 = vmatpush1.msra.mxu0 0.0
    %7727 = vmatprep.subr.mxu0 0.0
    %7728 = vmatpush1.msra.mxu0 0.0
    %7729 = vmatprep.subr.mxu0 0.0
    %7730 = vmatpush1.msra.mxu0 0.0
    %7731 = vmatprep.subr.mxu0 0.0
    %7732 = vmatpush1.msra.mxu0 0.0
    %7733 = vmatprep.subr.mxu0 0.0
    %7734 = vmatpush1.msra.mxu0 0.0
    %7735 = vmatprep.subr.mxu0 0.0
    %7736 = vmatpush1.msra.mxu0 0.0
    %7737 = vmatprep.subr.mxu0 0.0
    %7738 = vmatpush1.msra.mxu0 0.0
    %7739 = vmatprep.subr.mxu0 0.0
    %7740 = vmatpush1.msra.mxu0 0.0
    %7741 = vmatprep.subr.mxu0 0.0
    %7742 = vmatpush1.msra.mxu0 0.0
    %7743 = vmatprep.subr.mxu0 0.0
    %7744 = vmatpush1.msra.mxu0 0.0
    %7745 = vmatprep.subr.mxu0 0.0
    %7746 = vmatpush1.msra.mxu0 0.0
    %7747 = vmatprep.subr.mxu0 0.0
    %7748 = vmatpush1.msra.mxu0 0.0
    %7749 = vmatprep.subr.mxu0 0.0
    %7750 = vmatpush1.msra.mxu0 0.0
    %7751 = vmatprep.subr.mxu0 0.0
    %7752 = vmatpush1.msra.mxu0 0.0
    %7753 = vmatprep.subr.mxu0 0.0
    %7754 = vmatpush1.msra.mxu0 0.0
    %7755 = vmatprep.subr.mxu0 0.0
    %7756 = vmatpush1.msra.mxu0 0.0
    %7757 = vmatprep.subr.mxu0 0.0
    %7758 = vmatpush1.msra.mxu0 0.0
    %7759 = vmatprep.subr.mxu0 0.0
    %7760 = vmatpush1.msra.mxu0 0.0
    %7761 = vmatprep.subr.mxu0 0.0
    %7762 = vmatpush1.msra.mxu0 0.0
    %7763 = vmatprep.subr.mxu0 0.0
    %7764 = vmatpush1.msra.mxu0 0.0
    %7765 = vmatprep.subr.mxu0 0.0
    %7766 = vmatpush1.msra.mxu0 0.0
    %7767 = vmatprep.mubr.f32.mxu0 0.0
    %7768 = vmatmul.mubr.f32.gmra.mrb[0].mxu0 %v7701
    %v7769 = vpop.f32.mrb[0].mxu0
    %v7770 = vadd.f32 %v4792, %v7769
    %v7771 = vpop.f32.mrb[0].mxu0
    %7772 = vdwg.mxu0
    %s7773 = scalar_lea.vmem %s10, 24
    %7774 = vst.msk [vmem:[%s7773] sm:$0x3] %vm4869, %v7770
    %7775 = vmatprep.subr.mxu0 0.0
    %7776 = vmatpush1.msra.mxu0 %v103
    %7777 = vmatprep.subr.mxu0 0.0
    %7778 = vmatpush1.msra.mxu0 %v104
    %7779 = vmatprep.subr.mxu0 0.0
    %7780 = vmatpush1.msra.mxu0 %v105
    %7781 = vmatprep.subr.mxu0 0.0
    %7782 = vmatpush1.msra.mxu0 %v106
    %7783 = vmatprep.subr.mxu0 0.0
    %7784 = vmatpush1.msra.mxu0 0.0
    %7785 = vmatprep.subr.mxu0 0.0
    %7786 = vmatpush1.msra.mxu0 0.0
    %7787 = vmatprep.subr.mxu0 0.0
    %7788 = vmatpush1.msra.mxu0 0.0
    %7789 = vmatprep.subr.mxu0 0.0
    %7790 = vmatpush1.msra.mxu0 0.0
    %7791 = vmatprep.subr.mxu0 0.0
    %7792 = vmatpush1.msra.mxu0 0.0
    %7793 = vmatprep.subr.mxu0 0.0
    %7794 = vmatpush1.msra.mxu0 0.0
    %7795 = vmatprep.subr.mxu0 0.0
    %7796 = vmatpush1.msra.mxu0 0.0
    %7797 = vmatprep.subr.mxu0 0.0
    %7798 = vmatpush1.msra.mxu0 0.0
    %7799 = vmatprep.subr.mxu0 0.0
    %7800 = vmatpush1.msra.mxu0 0.0
    %7801 = vmatprep.subr.mxu0 0.0
    %7802 = vmatpush1.msra.mxu0 0.0
    %7803 = vmatprep.subr.mxu0 0.0
    %7804 = vmatpush1.msra.mxu0 0.0
    %7805 = vmatprep.subr.mxu0 0.0
    %7806 = vmatpush1.msra.mxu0 0.0
    %7807 = vmatprep.subr.mxu0 0.0
    %7808 = vmatpush1.msra.mxu0 0.0
    %7809 = vmatprep.subr.mxu0 0.0
    %7810 = vmatpush1.msra.mxu0 0.0
    %7811 = vmatprep.subr.mxu0 0.0
    %7812 = vmatpush1.msra.mxu0 0.0
    %7813 = vmatprep.subr.mxu0 0.0
    %7814 = vmatpush1.msra.mxu0 0.0
    %7815 = vmatprep.subr.mxu0 0.0
    %7816 = vmatpush1.msra.mxu0 0.0
    %7817 = vmatprep.subr.mxu0 0.0
    %7818 = vmatpush1.msra.mxu0 0.0
    %7819 = vmatprep.subr.mxu0 0.0
    %7820 = vmatpush1.msra.mxu0 0.0
    %7821 = vmatprep.subr.mxu0 0.0
    %7822 = vmatpush1.msra.mxu0 0.0
    %7823 = vmatprep.subr.mxu0 0.0
    %7824 = vmatpush1.msra.mxu0 0.0
    %7825 = vmatprep.subr.mxu0 0.0
    %7826 = vmatpush1.msra.mxu0 0.0
    %7827 = vmatprep.subr.mxu0 0.0
    %7828 = vmatpush1.msra.mxu0 0.0
    %7829 = vmatprep.subr.mxu0 0.0
    %7830 = vmatpush1.msra.mxu0 0.0
    %7831 = vmatprep.subr.mxu0 0.0
    %7832 = vmatpush1.msra.mxu0 0.0
    %7833 = vmatprep.subr.mxu0 0.0
    %7834 = vmatpush1.msra.mxu0 0.0
    %7835 = vmatprep.subr.mxu0 0.0
    %7836 = vmatpush1.msra.mxu0 0.0
    %7837 = vmatprep.subr.mxu0 0.0
    %7838 = vmatpush1.msra.mxu0 0.0
    %7839 = vmatprep.mubr.f32.mxu0 0.0
    %7840 = vmatmul.mubr.f32.gmra.mrb[0].mxu0 %v7701
    %v7841 = vpop.f32.mrb[0].mxu0
    %v7842 = vadd.f32 0.0, %v7841
    %v7843 = vpop.f32.mrb[0].mxu0
    %7844 = vdwg.mxu0
    %7845 = vmatprep.subr.mxu0 0.0
    %7846 = vmatpush1.msra.mxu0 %v99
    %7847 = vmatprep.subr.mxu0 0.0
    %7848 = vmatpush1.msra.mxu0 %v100
    %7849 = vmatprep.subr.mxu0 0.0
    %7850 = vmatpush1.msra.mxu0 %v101
    %7851 = vmatprep.subr.mxu0 0.0
    %7852 = vmatpush1.msra.mxu0 %v102
    %7853 = vmatprep.subr.mxu0 0.0
    %7854 = vmatpush1.msra.mxu0 0.0
    %7855 = vmatprep.subr.mxu0 0.0
    %7856 = vmatpush1.msra.mxu0 0.0
    %7857 = vmatprep.subr.mxu0 0.0
    %7858 = vmatpush1.msra.mxu0 0.0
    %7859 = vmatprep.subr.mxu0 0.0
    %7860 = vmatpush1.msra.mxu0 0.0
    %7861 = vmatprep.subr.mxu0 0.0
    %7862 = vmatpush1.msra.mxu0 0.0
    %7863 = vmatprep.subr.mxu0 0.0
    %7864 = vmatpush1.msra.mxu0 0.0
    %7865 = vmatprep.subr.mxu0 0.0
    %7866 = vmatpush1.msra.mxu0 0.0
    %7867 = vmatprep.subr.mxu0 0.0
    %7868 = vmatpush1.msra.mxu0 0.0
    %7869 = vmatprep.subr.mxu0 0.0
    %7870 = vmatpush1.msra.mxu0 0.0
    %7871 = vmatprep.subr.mxu0 0.0
    %7872 = vmatpush1.msra.mxu0 0.0
    %7873 = vmatprep.subr.mxu0 0.0
    %7874 = vmatpush1.msra.mxu0 0.0
    %7875 = vmatprep.subr.mxu0 0.0
    %7876 = vmatpush1.msra.mxu0 0.0
    %7877 = vmatprep.subr.mxu0 0.0
    %7878 = vmatpush1.msra.mxu0 0.0
    %7879 = vmatprep.subr.mxu0 0.0
    %7880 = vmatpush1.msra.mxu0 0.0
    %7881 = vmatprep.subr.mxu0 0.0
    %7882 = vmatpush1.msra.mxu0 0.0
    %7883 = vmatprep.subr.mxu0 0.0
    %7884 = vmatpush1.msra.mxu0 0.0
    %7885 = vmatprep.subr.mxu0 0.0
    %7886 = vmatpush1.msra.mxu0 0.0
    %7887 = vmatprep.subr.mxu0 0.0
    %7888 = vmatpush1.msra.mxu0 0.0
    %7889 = vmatprep.subr.mxu0 0.0
    %7890 = vmatpush1.msra.mxu0 0.0
    %7891 = vmatprep.subr.mxu0 0.0
    %7892 = vmatpush1.msra.mxu0 0.0
    %7893 = vmatprep.subr.mxu0 0.0
    %7894 = vmatpush1.msra.mxu0 0.0
    %7895 = vmatprep.subr.mxu0 0.0
    %7896 = vmatpush1.msra.mxu0 0.0
    %7897 = vmatprep.subr.mxu0 0.0
    %7898 = vmatpush1.msra.mxu0 0.0
    %7899 = vmatprep.subr.mxu0 0.0
    %7900 = vmatpush1.msra.mxu0 0.0
    %7901 = vmatprep.subr.mxu0 0.0
    %7902 = vmatpush1.msra.mxu0 0.0
    %7903 = vmatprep.subr.mxu0 0.0
    %7904 = vmatpush1.msra.mxu0 0.0
    %7905 = vmatprep.subr.mxu0 0.0
    %7906 = vmatpush1.msra.mxu0 0.0
    %7907 = vmatprep.subr.mxu0 0.0
    %7908 = vmatpush1.msra.mxu0 0.0
    %7909 = vmatprep.mubr.f32.mxu0 0.0
    %7910 = vmatmul.mubr.f32.gmra.mrb[0].mxu0 %v7701
    %v7911 = vpop.f32.mrb[0].mxu0
    %v7912 = vadd.f32 %v7842, %v7911
    %v7913 = vpop.f32.mrb[0].mxu0
    %7914 = vdwg.mxu0
    %v7915 = vadd.f32 %v7912, %v4761
    %v7916 = vsub.f32 0.0, %v7915
    %v7917 = vmul.f32 %v7916, 1.442695
    %v7918 = vpow.pop %v7917
    %v7919 = vadd.f32 %v7918, 1.0
    %v7920 = vrcp.pop %v7919
    %v7921 = vmul.f32 1.0, %v7920
    %v7922 = vtanh.pop %v7915
    %v7923 = vmul.f32 %v7921, %v7691
    %7925 = vrot.lane.b32.xlu0 %v7922, 64
    %v7926 = vpop.permute.xlu0 %7925
    %v7928 = vmul.f32 %v7921, %v7926
    %7930 = vrot.lane.b32.xlu0 %v7928, 32
    %v7931 = vpop.permute.xlu0 %7930
    %v7933 = vadd.f32 %v7923, %v7931
    %v7934 = vtanh.pop %v7933
    %7936 = vrot.lane.b32.xlu0 %v7934, 64
    %v7937 = vpop.permute.xlu0 %7936
    %v7939 = vmul.f32 %v7921, %v7937
    %7941 = vrot.lane.b32.xlu0 %v7939, 32
    %v7942 = vpop.permute.xlu0 %7941
    %v7943 = vsel %vm126, %v7942, 0
    %7945 = vmatprep.subr.mxu0 0.0
    %7946 = vmatpush1.msra.mxu0 %v108
    %7947 = vmatprep.subr.mxu0 0.0
    %7948 = vmatpush1.msra.mxu0 %v109
    %7949 = vmatprep.subr.mxu0 0.0
    %7950 = vmatpush1.msra.mxu0 %v110
    %7951 = vmatprep.subr.mxu0 0.0
    %7952 = vmatpush1.msra.mxu0 %v111
    %7953 = vmatprep.subr.mxu0 0.0
    %7954 = vmatpush1.msra.mxu0 0.0
    %7955 = vmatprep.subr.mxu0 0.0
    %7956 = vmatpush1.msra.mxu0 0.0
    %7957 = vmatprep.subr.mxu0 0.0
    %7958 = vmatpush1.msra.mxu0 0.0
    %7959 = vmatprep.subr.mxu0 0.0
    %7960 = vmatpush1.msra.mxu0 0.0
    %7961 = vmatprep.subr.mxu0 0.0
    %7962 = vmatpush1.msra.mxu0 0.0
    %7963 = vmatprep.subr.mxu0 0.0
    %7964 = vmatpush1.msra.mxu0 0.0
    %7965 = vmatprep.subr.mxu0 0.0
    %7966 = vmatpush1.msra.mxu0 0.0
    %7967 = vmatprep.subr.mxu0 0.0
    %7968 = vmatpush1.msra.mxu0 0.0
    %7969 = vmatprep.subr.mxu0 0.0
    %7970 = vmatpush1.msra.mxu0 0.0
    %7971 = vmatprep.subr.mxu0 0.0
    %7972 = vmatpush1.msra.mxu0 0.0
    %7973 = vmatprep.subr.mxu0 0.0
    %7974 = vmatpush1.msra.mxu0 0.0
    %7975 = vmatprep.subr.mxu0 0.0
    %7976 = vmatpush1.msra.mxu0 0.0
    %7977 = vmatprep.subr.mxu0 0.0
    %7978 = vmatpush1.msra.mxu0 0.0
    %7979 = vmatprep.subr.mxu0 0.0
    %7980 = vmatpush1.msra.mxu0 0.0
    %7981 = vmatprep.subr.mxu0 0.0
    %7982 = vmatpush1.msra.mxu0 0.0
    %7983 = vmatprep.subr.mxu0 0.0
    %7984 = vmatpush1.msra.mxu0 0.0
    %7985 = vmatprep.subr.mxu0 0.0
    %7986 = vmatpush1.msra.mxu0 0.0
    %7987 = vmatprep.subr.mxu0 0.0
    %7988 = vmatpush1.msra.mxu0 0.0
    %7989 = vmatprep.subr.mxu0 0.0
    %7990 = vmatpush1.msra.mxu0 0.0
    %7991 = vmatprep.subr.mxu0 0.0
    %7992 = vmatpush1.msra.mxu0 0.0
    %7993 = vmatprep.subr.mxu0 0.0
    %7994 = vmatpush1.msra.mxu0 0.0
    %7995 = vmatprep.subr.mxu0 0.0
    %7996 = vmatpush1.msra.mxu0 0.0
    %7997 = vmatprep.subr.mxu0 0.0
    %7998 = vmatpush1.msra.mxu0 0.0
    %7999 = vmatprep.subr.mxu0 0.0
    %8000 = vmatpush1.msra.mxu0 0.0
    %8001 = vmatprep.subr.mxu0 0.0
    %8002 = vmatpush1.msra.mxu0 0.0
    %8003 = vmatprep.subr.mxu0 0.0
    %8004 = vmatpush1.msra.mxu0 0.0
    %8005 = vmatprep.subr.mxu0 0.0
    %8006 = vmatpush1.msra.mxu0 0.0
    %8007 = vmatprep.subr.mxu0 0.0
    %8008 = vmatpush1.msra.mxu0 0.0
    %8009 = vmatprep.mubr.f32.mxu0 0.0
    %8010 = vmatmul.mubr.f32.gmra.mrb[0].mxu0 %v7943
    %v8011 = vpop.f32.mrb[0].mxu0
    %v8012 = vadd.f32 %v4792, %v8011
    %v8013 = vpop.f32.mrb[0].mxu0
    %8014 = vdwg.mxu0
    %s8015 = scalar_lea.vmem %s10, 26
    %8016 = vst.msk [vmem:[%s8015] sm:$0x3] %vm4869, %v8012
    %8017 = vmatprep.subr.mxu0 0.0
    %8018 = vmatpush1.msra.mxu0 %v103
    %8019 = vmatprep.subr.mxu0 0.0
    %8020 = vmatpush1.msra.mxu0 %v104
    %8021 = vmatprep.subr.mxu0 0.0
    %8022 = vmatpush1.msra.mxu0 %v105
    %8023 = vmatprep.subr.mxu0 0.0
    %8024 = vmatpush1.msra.mxu0 %v106
    %8025 = vmatprep.subr.mxu0 0.0
    %8026 = vmatpush1.msra.mxu0 0.0
    %8027 = vmatprep.subr.mxu0 0.0
    %8028 = vmatpush1.msra.mxu0 0.0
    %8029 = vmatprep.subr.mxu0 0.0
    %8030 = vmatpush1.msra.mxu0 0.0
    %8031 = vmatprep.subr.mxu0 0.0
    %8032 = vmatpush1.msra.mxu0 0.0
    %8033 = vmatprep.subr.mxu0 0.0
    %8034 = vmatpush1.msra.mxu0 0.0
    %8035 = vmatprep.subr.mxu0 0.0
    %8036 = vmatpush1.msra.mxu0 0.0
    %8037 = vmatprep.subr.mxu0 0.0
    %8038 = vmatpush1.msra.mxu0 0.0
    %8039 = vmatprep.subr.mxu0 0.0
    %8040 = vmatpush1.msra.mxu0 0.0
    %8041 = vmatprep.subr.mxu0 0.0
    %8042 = vmatpush1.msra.mxu0 0.0
    %8043 = vmatprep.subr.mxu0 0.0
    %8044 = vmatpush1.msra.mxu0 0.0
    %8045 = vmatprep.subr.mxu0 0.0
    %8046 = vmatpush1.msra.mxu0 0.0
    %8047 = vmatprep.subr.mxu0 0.0
    %8048 = vmatpush1.msra.mxu0 0.0
    %8049 = vmatprep.subr.mxu0 0.0
    %8050 = vmatpush1.msra.mxu0 0.0
    %8051 = vmatprep.subr.mxu0 0.0
    %8052 = vmatpush1.msra.mxu0 0.0
    %8053 = vmatprep.subr.mxu0 0.0
    %8054 = vmatpush1.msra.mxu0 0.0
    %8055 = vmatprep.subr.mxu0 0.0
    %8056 = vmatpush1.msra.mxu0 0.0
    %8057 = vmatprep.subr.mxu0 0.0
    %8058 = vmatpush1.msra.mxu0 0.0
    %8059 = vmatprep.subr.mxu0 0.0
    %8060 = vmatpush1.msra.mxu0 0.0
    %8061 = vmatprep.subr.mxu0 0.0
    %8062 = vmatpush1.msra.mxu0 0.0
    %8063 = vmatprep.subr.mxu0 0.0
    %8064 = vmatpush1.msra.mxu0 0.0
    %8065 = vmatprep.subr.mxu0 0.0
    %8066 = vmatpush1.msra.mxu0 0.0
    %8067 = vmatprep.subr.mxu0 0.0
    %8068 = vmatpush1.msra.mxu0 0.0
    %8069 = vmatprep.subr.mxu0 0.0
    %8070 = vmatpush1.msra.mxu0 0.0
    %8071 = vmatprep.subr.mxu0 0.0
    %8072 = vmatpush1.msra.mxu0 0.0
    %8073 = vmatprep.subr.mxu0 0.0
    %8074 = vmatpush1.msra.mxu0 0.0
    %8075 = vmatprep.subr.mxu0 0.0
    %8076 = vmatpush1.msra.mxu0 0.0
    %8077 = vmatprep.subr.mxu0 0.0
    %8078 = vmatpush1.msra.mxu0 0.0
    %8079 = vmatprep.subr.mxu0 0.0
    %8080 = vmatpush1.msra.mxu0 0.0
    %8081 = vmatprep.mubr.f32.mxu0 0.0
    %8082 = vmatmul.mubr.f32.gmra.mrb[0].mxu0 %v7943
    %v8083 = vpop.f32.mrb[0].mxu0
    %v8084 = vadd.f32 0.0, %v8083
    %v8085 = vpop.f32.mrb[0].mxu0
    %8086 = vdwg.mxu0
    %8087 = vmatprep.subr.mxu0 0.0
    %8088 = vmatpush1.msra.mxu0 %v99
    %8089 = vmatprep.subr.mxu0 0.0
    %8090 = vmatpush1.msra.mxu0 %v100
    %8091 = vmatprep.subr.mxu0 0.0
    %8092 = vmatpush1.msra.mxu0 %v101
    %8093 = vmatprep.subr.mxu0 0.0
    %8094 = vmatpush1.msra.mxu0 %v102
    %8095 = vmatprep.subr.mxu0 0.0
    %8096 = vmatpush1.msra.mxu0 0.0
    %8097 = vmatprep.subr.mxu0 0.0
    %8098 = vmatpush1.msra.mxu0 0.0
    %8099 = vmatprep.subr.mxu0 0.0
    %8100 = vmatpush1.msra.mxu0 0.0
    %8101 = vmatprep.subr.mxu0 0.0
    %8102 = vmatpush1.msra.mxu0 0.0
    %8103 = vmatprep.subr.mxu0 0.0
    %8104 = vmatpush1.msra.mxu0 0.0
    %8105 = vmatprep.subr.mxu0 0.0
    %8106 = vmatpush1.msra.mxu0 0.0
    %8107 = vmatprep.subr.mxu0 0.0
    %8108 = vmatpush1.msra.mxu0 0.0
    %8109 = vmatprep.subr.mxu0 0.0
    %8110 = vmatpush1.msra.mxu0 0.0
    %8111 = vmatprep.subr.mxu0 0.0
    %8112 = vmatpush1.msra.mxu0 0.0
    %8113 = vmatprep.subr.mxu0 0.0
    %8114 = vmatpush1.msra.mxu0 0.0
    %8115 = vmatprep.subr.mxu0 0.0
    %8116 = vmatpush1.msra.mxu0 0.0
    %8117 = vmatprep.subr.mxu0 0.0
    %8118 = vmatpush1.msra.mxu0 0.0
    %8119 = vmatprep.subr.mxu0 0.0
    %8120 = vmatpush1.msra.mxu0 0.0
    %8121 = vmatprep.subr.mxu0 0.0
    %8122 = vmatpush1.msra.mxu0 0.0
    %8123 = vmatprep.subr.mxu0 0.0
    %8124 = vmatpush1.msra.mxu0 0.0
    %8125 = vmatprep.subr.mxu0 0.0
    %8126 = vmatpush1.msra.mxu0 0.0
    %8127 = vmatprep.subr.mxu0 0.0
    %8128 = vmatpush1.msra.mxu0 0.0
    %8129 = vmatprep.subr.mxu0 0.0
    %8130 = vmatpush1.msra.mxu0 0.0
    %8131 = vmatprep.subr.mxu0 0.0
    %8132 = vmatpush1.msra.mxu0 0.0
    %8133 = vmatprep.subr.mxu0 0.0
    %8134 = vmatpush1.msra.mxu0 0.0
    %8135 = vmatprep.subr.mxu0 0.0
    %8136 = vmatpush1.msra.mxu0 0.0
    %8137 = vmatprep.subr.mxu0 0.0
    %8138 = vmatpush1.msra.mxu0 0.0
    %8139 = vmatprep.subr.mxu0 0.0
    %8140 = vmatpush1.msra.mxu0 0.0
    %8141 = vmatprep.subr.mxu0 0.0
    %8142 = vmatpush1.msra.mxu0 0.0
    %8143 = vmatprep.subr.mxu0 0.0
    %8144 = vmatpush1.msra.mxu0 0.0
    %8145 = vmatprep.subr.mxu0 0.0
    %8146 = vmatpush1.msra.mxu0 0.0
    %8147 = vmatprep.subr.mxu0 0.0
    %8148 = vmatpush1.msra.mxu0 0.0
    %8149 = vmatprep.subr.mxu0 0.0
    %8150 = vmatpush1.msra.mxu0 0.0
    %8151 = vmatprep.mubr.f32.mxu0 0.0
    %8152 = vmatmul.mubr.f32.gmra.mrb[0].mxu0 %v7943
    %v8153 = vpop.f32.mrb[0].mxu0
    %v8154 = vadd.f32 %v8084, %v8153
    %v8155 = vpop.f32.mrb[0].mxu0
    %8156 = vdwg.mxu0
    %v8157 = vadd.f32 %v8154, %v4761
    %v8158 = vsub.f32 0.0, %v8157
    %v8159 = vmul.f32 %v8158, 1.442695
    %v8160 = vpow.pop %v8159
    %v8161 = vadd.f32 %v8160, 1.0
    %v8162 = vrcp.pop %v8161
    %v8163 = vmul.f32 1.0, %v8162
    %v8164 = vtanh.pop %v8157
    %v8165 = vmul.f32 %v8163, %v7933
    %8167 = vrot.lane.b32.xlu0 %v8164, 64
    %v8168 = vpop.permute.xlu0 %8167
    %v8170 = vmul.f32 %v8163, %v8168
    %8172 = vrot.lane.b32.xlu0 %v8170, 32
    %v8173 = vpop.permute.xlu0 %8172
    %v8175 = vadd.f32 %v8165, %v8173
    %v8176 = vtanh.pop %v8175
    %8178 = vrot.lane.b32.xlu0 %v8176, 64
    %v8179 = vpop.permute.xlu0 %8178
    %v8181 = vmul.f32 %v8163, %v8179
    %8183 = vrot.lane.b32.xlu0 %v8181, 32
    %v8184 = vpop.permute.xlu0 %8183
    %v8185 = vsel %vm126, %v8184, 0
    %8187 = vmatprep.subr.mxu0 0.0
    %8188 = vmatpush1.msra.mxu0 %v108
    %8189 = vmatprep.subr.mxu0 0.0
    %8190 = vmatpush1.msra.mxu0 %v109
    %8191 = vmatprep.subr.mxu0 0.0
    %8192 = vmatpush1.msra.mxu0 %v110
    %8193 = vmatprep.subr.mxu0 0.0
    %8194 = vmatpush1.msra.mxu0 %v111
    %8195 = vmatprep.subr.mxu0 0.0
    %8196 = vmatpush1.msra.mxu0 0.0
    %8197 = vmatprep.subr.mxu0 0.0
    %8198 = vmatpush1.msra.mxu0 0.0
    %8199 = vmatprep.subr.mxu0 0.0
    %8200 = vmatpush1.msra.mxu0 0.0
    %8201 = vmatprep.subr.mxu0 0.0
    %8202 = vmatpush1.msra.mxu0 0.0
    %8203 = vmatprep.subr.mxu0 0.0
    %8204 = vmatpush1.msra.mxu0 0.0
    %8205 = vmatprep.subr.mxu0 0.0
    %8206 = vmatpush1.msra.mxu0 0.0
    %8207 = vmatprep.subr.mxu0 0.0
    %8208 = vmatpush1.msra.mxu0 0.0
    %8209 = vmatprep.subr.mxu0 0.0
    %8210 = vmatpush1.msra.mxu0 0.0
    %8211 = vmatprep.subr.mxu0 0.0
    %8212 = vmatpush1.msra.mxu0 0.0
    %8213 = vmatprep.subr.mxu0 0.0
    %8214 = vmatpush1.msra.mxu0 0.0
    %8215 = vmatprep.subr.mxu0 0.0
    %8216 = vmatpush1.msra.mxu0 0.0
    %8217 = vmatprep.subr.mxu0 0.0
    %8218 = vmatpush1.msra.mxu0 0.0
    %8219 = vmatprep.subr.mxu0 0.0
    %8220 = vmatpush1.msra.mxu0 0.0
    %8221 = vmatprep.subr.mxu0 0.0
    %8222 = vmatpush1.msra.mxu0 0.0
    %8223 = vmatprep.subr.mxu0 0.0
    %8224 = vmatpush1.msra.mxu0 0.0
    %8225 = vmatprep.subr.mxu0 0.0
    %8226 = vmatpush1.msra.mxu0 0.0
    %8227 = vmatprep.subr.mxu0 0.0
    %8228 = vmatpush1.msra.mxu0 0.0
    %8229 = vmatprep.subr.mxu0 0.0
    %8230 = vmatpush1.msra.mxu0 0.0
    %8231 = vmatprep.subr.mxu0 0.0
    %8232 = vmatpush1.msra.mxu0 0.0
    %8233 = vmatprep.subr.mxu0 0.0
    %8234 = vmatpush1.msra.mxu0 0.0
    %8235 = vmatprep.subr.mxu0 0.0
    %8236 = vmatpush1.msra.mxu0 0.0
    %8237 = vmatprep.subr.mxu0 0.0
    %8238 = vmatpush1.msra.mxu0 0.0
    %8239 = vmatprep.subr.mxu0 0.0
    %8240 = vmatpush1.msra.mxu0 0.0
    %8241 = vmatprep.subr.mxu0 0.0
    %8242 = vmatpush1.msra.mxu0 0.0
    %8243 = vmatprep.subr.mxu0 0.0
    %8244 = vmatpush1.msra.mxu0 0.0
    %8245 = vmatprep.subr.mxu0 0.0
    %8246 = vmatpush1.msra.mxu0 0.0
    %8247 = vmatprep.subr.mxu0 0.0
    %8248 = vmatpush1.msra.mxu0 0.0
    %8249 = vmatprep.subr.mxu0 0.0
    %8250 = vmatpush1.msra.mxu0 0.0
    %8251 = vmatprep.mubr.f32.mxu0 0.0
    %8252 = vmatmul.mubr.f32.gmra.mrb[0].mxu0 %v8185
    %v8253 = vpop.f32.mrb[0].mxu0
    %v8254 = vadd.f32 %v4792, %v8253
    %v8255 = vpop.f32.mrb[0].mxu0
    %8256 = vdwg.mxu0
    %s8257 = scalar_lea.vmem %s10, 28
    %8258 = vst.msk [vmem:[%s8257] sm:$0x3] %vm4869, %v8254
    %8259 = vmatprep.subr.mxu0 0.0
    %8260 = vmatpush1.msra.mxu0 %v103
    %8261 = vmatprep.subr.mxu0 0.0
    %8262 = vmatpush1.msra.mxu0 %v104
    %8263 = vmatprep.subr.mxu0 0.0
    %8264 = vmatpush1.msra.mxu0 %v105
    %8265 = vmatprep.subr.mxu0 0.0
    %8266 = vmatpush1.msra.mxu0 %v106
    %8267 = vmatprep.subr.mxu0 0.0
    %8268 = vmatpush1.msra.mxu0 0.0
    %8269 = vmatprep.subr.mxu0 0.0
    %8270 = vmatpush1.msra.mxu0 0.0
    %8271 = vmatprep.subr.mxu0 0.0
    %8272 = vmatpush1.msra.mxu0 0.0
    %8273 = vmatprep.subr.mxu0 0.0
    %8274 = vmatpush1.msra.mxu0 0.0
    %8275 = vmatprep.subr.mxu0 0.0
    %8276 = vmatpush1.msra.mxu0 0.0
    %8277 = vmatprep.subr.mxu0 0.0
    %8278 = vmatpush1.msra.mxu0 0.0
    %8279 = vmatprep.subr.mxu0 0.0
    %8280 = vmatpush1.msra.mxu0 0.0
    %8281 = vmatprep.subr.mxu0 0.0
    %8282 = vmatpush1.msra.mxu0 0.0
    %8283 = vmatprep.subr.mxu0 0.0
    %8284 = vmatpush1.msra.mxu0 0.0
    %8285 = vmatprep.subr.mxu0 0.0
    %8286 = vmatpush1.msra.mxu0 0.0
    %8287 = vmatprep.subr.mxu0 0.0
    %8288 = vmatpush1.msra.mxu0 0.0
    %8289 = vmatprep.subr.mxu0 0.0
    %8290 = vmatpush1.msra.mxu0 0.0
    %8291 = vmatprep.subr.mxu0 0.0
    %8292 = vmatpush1.msra.mxu0 0.0
    %8293 = vmatprep.subr.mxu0 0.0
    %8294 = vmatpush1.msra.mxu0 0.0
    %8295 = vmatprep.subr.mxu0 0.0
    %8296 = vmatpush1.msra.mxu0 0.0
    %8297 = vmatprep.subr.mxu0 0.0
    %8298 = vmatpush1.msra.mxu0 0.0
    %8299 = vmatprep.subr.mxu0 0.0
    %8300 = vmatpush1.msra.mxu0 0.0
    %8301 = vmatprep.subr.mxu0 0.0
    %8302 = vmatpush1.msra.mxu0 0.0
    %8303 = vmatprep.subr.mxu0 0.0
    %8304 = vmatpush1.msra.mxu0 0.0
    %8305 = vmatprep.subr.mxu0 0.0
    %8306 = vmatpush1.msra.mxu0 0.0
    %8307 = vmatprep.subr.mxu0 0.0
    %8308 = vmatpush1.msra.mxu0 0.0
    %8309 = vmatprep.subr.mxu0 0.0
    %8310 = vmatpush1.msra.mxu0 0.0
    %8311 = vmatprep.subr.mxu0 0.0
    %8312 = vmatpush1.msra.mxu0 0.0
    %8313 = vmatprep.subr.mxu0 0.0
    %8314 = vmatpush1.msra.mxu0 0.0
    %8315 = vmatprep.subr.mxu0 0.0
    %8316 = vmatpush1.msra.mxu0 0.0
    %8317 = vmatprep.subr.mxu0 0.0
    %8318 = vmatpush1.msra.mxu0 0.0
    %8319 = vmatprep.subr.mxu0 0.0
    %8320 = vmatpush1.msra.mxu0 0.0
    %8321 = vmatprep.subr.mxu0 0.0
    %8322 = vmatpush1.msra.mxu0 0.0
    %8323 = vmatprep.mubr.f32.mxu0 0.0
    %8324 = vmatmul.mubr.f32.gmra.mrb[0].mxu0 %v8185
    %v8325 = vpop.f32.mrb[0].mxu0
    %v8326 = vadd.f32 0.0, %v8325
    %v8327 = vpop.f32.mrb[0].mxu0
    %8328 = vdwg.mxu0
    %8329 = vmatprep.subr.mxu0 0.0
    %8330 = vmatpush1.msra.mxu0 %v99
    %8331 = vmatprep.subr.mxu0 0.0
    %8332 = vmatpush1.msra.mxu0 %v100
    %8333 = vmatprep.subr.mxu0 0.0
    %8334 = vmatpush1.msra.mxu0 %v101
    %8335 = vmatprep.subr.mxu0 0.0
    %8336 = vmatpush1.msra.mxu0 %v102
    %8337 = vmatprep.subr.mxu0 0.0
    %8338 = vmatpush1.msra.mxu0 0.0
    %8339 = vmatprep.subr.mxu0 0.0
    %8340 = vmatpush1.msra.mxu0 0.0
    %8341 = vmatprep.subr.mxu0 0.0
    %8342 = vmatpush1.msra.mxu0 0.0
    %8343 = vmatprep.subr.mxu0 0.0
    %8344 = vmatpush1.msra.mxu0 0.0
    %8345 = vmatprep.subr.mxu0 0.0
    %8346 = vmatpush1.msra.mxu0 0.0
    %8347 = vmatprep.subr.mxu0 0.0
    %8348 = vmatpush1.msra.mxu0 0.0
    %8349 = vmatprep.subr.mxu0 0.0
    %8350 = vmatpush1.msra.mxu0 0.0
    %8351 = vmatprep.subr.mxu0 0.0
    %8352 = vmatpush1.msra.mxu0 0.0
    %8353 = vmatprep.subr.mxu0 0.0
    %8354 = vmatpush1.msra.mxu0 0.0
    %8355 = vmatprep.subr.mxu0 0.0
    %8356 = vmatpush1.msra.mxu0 0.0
    %8357 = vmatprep.subr.mxu0 0.0
    %8358 = vmatpush1.msra.mxu0 0.0
    %8359 = vmatprep.subr.mxu0 0.0
    %8360 = vmatpush1.msra.mxu0 0.0
    %8361 = vmatprep.subr.mxu0 0.0
    %8362 = vmatpush1.msra.mxu0 0.0
    %8363 = vmatprep.subr.mxu0 0.0
    %8364 = vmatpush1.msra.mxu0 0.0
    %8365 = vmatprep.subr.mxu0 0.0
    %8366 = vmatpush1.msra.mxu0 0.0
    %8367 = vmatprep.subr.mxu0 0.0
    %8368 = vmatpush1.msra.mxu0 0.0
    %8369 = vmatprep.subr.mxu0 0.0
    %8370 = vmatpush1.msra.mxu0 0.0
    %8371 = vmatprep.subr.mxu0 0.0
    %8372 = vmatpush1.msra.mxu0 0.0
    %8373 = vmatprep.subr.mxu0 0.0
    %8374 = vmatpush1.msra.mxu0 0.0
    %8375 = vmatprep.subr.mxu0 0.0
    %8376 = vmatpush1.msra.mxu0 0.0
    %8377 = vmatprep.subr.mxu0 0.0
    %8378 = vmatpush1.msra.mxu0 0.0
    %8379 = vmatprep.subr.mxu0 0.0
    %8380 = vmatpush1.msra.mxu0 0.0
    %8381 = vmatprep.subr.mxu0 0.0
    %8382 = vmatpush1.msra.mxu0 0.0
    %8383 = vmatprep.subr.mxu0 0.0
    %8384 = vmatpush1.msra.mxu0 0.0
    %8385 = vmatprep.subr.mxu0 0.0
    %8386 = vmatpush1.msra.mxu0 0.0
    %8387 = vmatprep.subr.mxu0 0.0
    %8388 = vmatpush1.msra.mxu0 0.0
    %8389 = vmatprep.subr.mxu0 0.0
    %8390 = vmatpush1.msra.mxu0 0.0
    %8391 = vmatprep.subr.mxu0 0.0
    %8392 = vmatpush1.msra.mxu0 0.0
    %8393 = vmatprep.mubr.f32.mxu0 0.0
    %8394 = vmatmul.mubr.f32.gmra.mrb[0].mxu0 %v8185
    %v8395 = vpop.f32.mrb[0].mxu0
    %v8396 = vadd.f32 %v8326, %v8395
    %v8397 = vpop.f32.mrb[0].mxu0
    %8398 = vdwg.mxu0
    %v8399 = vadd.f32 %v8396, %v4761
    %v8400 = vsub.f32 0.0, %v8399
    %v8401 = vmul.f32 %v8400, 1.442695
    %v8402 = vpow.pop %v8401
    %v8403 = vadd.f32 %v8402, 1.0
    %v8404 = vrcp.pop %v8403
    %v8405 = vmul.f32 1.0, %v8404
    %v8406 = vtanh.pop %v8399
    %v8407 = vmul.f32 %v8405, %v8175
    %8409 = vrot.lane.b32.xlu0 %v8406, 64
    %v8410 = vpop.permute.xlu0 %8409
    %v8412 = vmul.f32 %v8405, %v8410
    %8414 = vrot.lane.b32.xlu0 %v8412, 32
    %v8415 = vpop.permute.xlu0 %8414
    %v8417 = vadd.f32 %v8407, %v8415
    %v8418 = vtanh.pop %v8417
    %8420 = vrot.lane.b32.xlu0 %v8418, 64
    %v8421 = vpop.permute.xlu0 %8420
    %v8423 = vmul.f32 %v8405, %v8421
    %8425 = vrot.lane.b32.xlu0 %v8423, 32
    %v8426 = vpop.permute.xlu0 %8425
    %v8427 = vsel %vm126, %v8426, 0
    %8429 = vmatprep.subr.mxu0 0.0
    %8430 = vmatpush1.msra.mxu0 %v108
    %8431 = vmatprep.subr.mxu0 0.0
    %8432 = vmatpush1.msra.mxu0 %v109
    %8433 = vmatprep.subr.mxu0 0.0
    %8434 = vmatpush1.msra.mxu0 %v110
    %8435 = vmatprep.subr.mxu0 0.0
    %8436 = vmatpush1.msra.mxu0 %v111
    %8437 = vmatprep.subr.mxu0 0.0
    %8438 = vmatpush1.msra.mxu0 0.0
    %8439 = vmatprep.subr.mxu0 0.0
    %8440 = vmatpush1.msra.mxu0 0.0
    %8441 = vmatprep.subr.mxu0 0.0
    %8442 = vmatpush1.msra.mxu0 0.0
    %8443 = vmatprep.subr.mxu0 0.0
    %8444 = vmatpush1.msra.mxu0 0.0
    %8445 = vmatprep.subr.mxu0 0.0
    %8446 = vmatpush1.msra.mxu0 0.0
    %8447 = vmatprep.subr.mxu0 0.0
    %8448 = vmatpush1.msra.mxu0 0.0
    %8449 = vmatprep.subr.mxu0 0.0
    %8450 = vmatpush1.msra.mxu0 0.0
    %8451 = vmatprep.subr.mxu0 0.0
    %8452 = vmatpush1.msra.mxu0 0.0
    %8453 = vmatprep.subr.mxu0 0.0
    %8454 = vmatpush1.msra.mxu0 0.0
    %8455 = vmatprep.subr.mxu0 0.0
    %8456 = vmatpush1.msra.mxu0 0.0
    %8457 = vmatprep.subr.mxu0 0.0
    %8458 = vmatpush1.msra.mxu0 0.0
    %8459 = vmatprep.subr.mxu0 0.0
    %8460 = vmatpush1.msra.mxu0 0.0
    %8461 = vmatprep.subr.mxu0 0.0
    %8462 = vmatpush1.msra.mxu0 0.0
    %8463 = vmatprep.subr.mxu0 0.0
    %8464 = vmatpush1.msra.mxu0 0.0
    %8465 = vmatprep.subr.mxu0 0.0
    %8466 = vmatpush1.msra.mxu0 0.0
    %8467 = vmatprep.subr.mxu0 0.0
    %8468 = vmatpush1.msra.mxu0 0.0
    %8469 = vmatprep.subr.mxu0 0.0
    %8470 = vmatpush1.msra.mxu0 0.0
    %8471 = vmatprep.subr.mxu0 0.0
    %8472 = vmatpush1.msra.mxu0 0.0
    %8473 = vmatprep.subr.mxu0 0.0
    %8474 = vmatpush1.msra.mxu0 0.0
    %8475 = vmatprep.subr.mxu0 0.0
    %8476 = vmatpush1.msra.mxu0 0.0
    %8477 = vmatprep.subr.mxu0 0.0
    %8478 = vmatpush1.msra.mxu0 0.0
    %8479 = vmatprep.subr.mxu0 0.0
    %8480 = vmatpush1.msra.mxu0 0.0
    %8481 = vmatprep.subr.mxu0 0.0
    %8482 = vmatpush1.msra.mxu0 0.0
    %8483 = vmatprep.subr.mxu0 0.0
    %8484 = vmatpush1.msra.mxu0 0.0
    %8485 = vmatprep.subr.mxu0 0.0
    %8486 = vmatpush1.msra.mxu0 0.0
    %8487 = vmatprep.subr.mxu0 0.0
    %8488 = vmatpush1.msra.mxu0 0.0
    %8489 = vmatprep.subr.mxu0 0.0
    %8490 = vmatpush1.msra.mxu0 0.0
    %8491 = vmatprep.subr.mxu0 0.0
    %8492 = vmatpush1.msra.mxu0 0.0
    %8493 = vmatprep.mubr.f32.mxu0 0.0
    %8494 = vmatmul.mubr.f32.gmra.mrb[0].mxu0 %v8427
    %v8495 = vpop.f32.mrb[0].mxu0
    %v8496 = vadd.f32 %v4792, %v8495
    %v8497 = vpop.f32.mrb[0].mxu0
    %8498 = vdwg.mxu0
    %s8499 = scalar_lea.vmem %s10, 30
    %8500 = vst.msk [vmem:[%s8499] sm:$0x3] %vm4869, %v8496
    // Predicated region
    $region54: #{tpu_custom_call.1} parent=1 // pred_check
      _
    $region55: #{tpu_custom_call.1} parent=1 // pred_check_branch
      %8502 = sbr.rel (0) target = $region57
    $region56: #{tpu_custom_call.1} parent=1 // pred_region
      _
    $region57: #{tpu_custom_call.1} parent=1 // pred_fallthru
      _
    // Predicated region
    $region58: #{tpu_custom_call.1} parent=1 // pred_check
      _
    $region59: #{tpu_custom_call.1} parent=1 // pred_check_branch
      %8504 = sbr.rel (0) target = $region61
    $region60: #{tpu_custom_call.1} parent=1 // pred_region
      %s8506 = ssub.s32 32, 32
      %8507 = vsyncadd [#allocation5], %s8506
      %s8509 = sshll.u32 [#allocation9], 4
      %s8510 = int_to_ptr.vmem [resolvable:$true] %s8509
      %8512 = dma.vmem_to_hbm [thread:$0]  %s8510, 32, %s11, [#allocation5]
    $region61: #{tpu_custom_call.1} parent=1 // pred_fallthru
      _
    // Predicated region
    $region62: #{tpu_custom_call.1} parent=1 // pred_check
      _
    $region63: #{tpu_custom_call.1} parent=1 // pred_check_branch
      %8514 = sbr.rel (0) target = $region65
    $region64: #{tpu_custom_call.1} parent=1 // pred_region
      _
    $region65: #{tpu_custom_call.1} parent=1 // pred_fallthru
      _
    // Predicated region
    $region66: #{tpu_custom_call.1} parent=1 // pred_check
      _
    $region67: #{tpu_custom_call.1} parent=1 // pred_check_branch
      %8516 = sbr.rel (0) target = $region69
    $region68: #{tpu_custom_call.1} parent=1 // pred_region
      %8517 = dma.done [#allocation5], 32
    $region69: #{tpu_custom_call.1} parent=1 // pred_fallthru
      _
    %8518 = vsyncpa [#allocation4], 1
    %8519 = vsyncpa [#allocation7], 1
    %8520 = vsyncpa [#allocation5], 1

</llo_original>
